<compile_context>
chip_gen: v7x
topology: tpu7x:2x2x1
jax: 0.10.0
libtpu: 0.0.40
codegen_flags: <defaults>
</compile_context>

<pallas_src>
import functools

import jax
import jax.numpy as jnp
from jax.experimental import pallas as pl
from jax.experimental.pallas import tpu as pltpu

KSIZE = 7            # spatial-attention conv kernel size
PAD = KSIZE // 2     # padding = 3
REDUCTION = 2        # channel-attention MLP reduction ratio (small channels)


# ----------------------------- Pallas kernel --------------------------------
def _scbam_kernel(x_ref, w1_ref, b1_ref, w2_ref, b2_ref, wsp_ref, bsp_ref,
                  o_ref, *, H, W):
    """One batch element; x_ref / o_ref are lane-dense (C, H*W) VMEM tiles."""
    HW = H * W
    x = x_ref[...].astype(jnp.float32)                         # (C, HW)
    C = x.shape[0]

    # ---------------- channel attention ------------------------------------
    # fused single lane reduces over the flattened spatial axis
    avg_c = jnp.sum(x, axis=1, keepdims=True) * (1.0 / HW)     # (C, 1)
    max_c = jnp.max(x, axis=1, keepdims=True)                  # (C, 1)

    # pack [avg | max] side by side -> one MLP pass with N=2 (2 matmuls total)
    lane2 = jax.lax.broadcasted_iota(jnp.int32, (C, 2), 1)
    stats = jnp.where(lane2 == 0, avg_c, max_c)                # (C, 2)

    w1 = w1_ref[...]                                           # (Cr, C)
    b1 = b1_ref[...]                                           # (Cr, 1)
    w2 = w2_ref[...]                                           # (C, Cr)
    b2 = b2_ref[...]                                           # (C, 1)

    h = jnp.maximum(
        jnp.dot(w1, stats, preferred_element_type=jnp.float32) + b1, 0.0)
    logits = jnp.dot(w2, h, preferred_element_type=jnp.float32) + b2   # (C, 2)
    ch_attn = jax.nn.sigmoid(logits[:, 0:1] + logits[:, 1:2])          # (C, 1)

    xc = x * ch_attn                                           # (C, HW)

    # ---------------- spatial attention ------------------------------------
    avg_s = jnp.mean(xc, axis=0, keepdims=True)                # (1, HW)
    max_s = jnp.max(xc, axis=0, keepdims=True)                 # (1, HW)
    row2 = jax.lax.broadcasted_iota(jnp.int32, (2, HW), 0)
    s2 = jnp.where(row2 == 0, avg_s, max_s)                    # (2, HW)

    # row / column index of every flattened position; f32 arithmetic avoids
    # vector integer div/mod (exact for these magnitudes).
    p = jax.lax.broadcasted_iota(jnp.int32, (1, HW), 1).astype(jnp.float32)
    row_f = jnp.floor((p + 0.5) * (1.0 / W))
    col_f = p - row_f * W

    # boundary masks, computed once and shared across all 98 taps
    col_masks = [
        (col_f + float(dj - PAD) >= 0.0) & (col_f + float(dj - PAD) <= W - 1.0)
        for dj in range(KSIZE)
    ]
    row_masks = [
        (row_f + float(di - PAD) >= 0.0) & (row_f + float(di - PAD) <= H - 1.0)
        for di in range(KSIZE)
    ]

    acc = jnp.full((1, HW), bsp_ref[0], jnp.float32)           # bias splat once
    for dj in range(KSIZE):
        oj = dj - PAD
        # column shift (lane roll) shared across all 7 row offsets
        cshift = pltpu.roll(s2, shift=(-oj) % HW, axis=1)      # (2, HW)
        cshift = jnp.where(col_masks[dj], cshift, 0.0)         # zero-pad cols
        for di in range(KSIZE):
            oi = di - PAD
            shifted = pltpu.roll(cshift, shift=(-(oi * W)) % HW, axis=1)
            shifted = jnp.where(row_masks[di], shifted, 0.0)   # zero-pad rows
            w_avg = wsp_ref[di * KSIZE + dj]                   # SMEM scalar
            w_max = wsp_ref[KSIZE * KSIZE + di * KSIZE + dj]
            acc = acc + w_avg * shifted[0:1, :] + w_max * shifted[1:2, :]

    sp_attn = jax.nn.sigmoid(acc)                              # (1, HW)

    # single lane-dense full-tile store
    o_ref[...] = (xc * sp_attn).astype(o_ref.dtype)


# ----------------------------- wrapper ---------------------------------------
def scbam_level(x, params):
    """Apply one SCBAMM (CBAM) block to a single NCHW feature map."""
    B, C, H, W = x.shape
    HW = H * W
    w1, b1, w2, b2, wsp, bsp = params
    Cr = w1.shape[0]

    # lane-dense layout: flatten spatial dims so the last (lane) axis is H*W
    x_flat = x.reshape(B, C, HW)

    blk_bytes = C * HW * x.dtype.itemsize
    # in + out blocks double-buffered + params + internal-scratch headroom
    vmem_limit = int(min(max(4 * blk_bytes + (8 << 20), 32 << 20), 64 << 20))

    kernel = functools.partial(_scbam_kernel, H=H, W=W)

    out_flat = pl.pallas_call(
        kernel,
        out_shape=jax.ShapeDtypeStruct((B, C, HW), x.dtype),
        grid_spec=pltpu.PrefetchScalarGridSpec(
            num_scalar_prefetch=0,
            grid=(B,),
            in_specs=[
                pl.BlockSpec((None, C, HW), lambda b: (b, 0, 0)),   # x
                pl.BlockSpec((Cr, C), lambda b: (0, 0)),            # w1
                pl.BlockSpec((Cr, 1), lambda b: (0, 0)),            # b1
                pl.BlockSpec((C, Cr), lambda b: (0, 0)),            # w2
                pl.BlockSpec((C, 1), lambda b: (0, 0)),             # b2
                pl.BlockSpec(memory_space=pltpu.MemorySpace.SMEM),  # conv w (98,)
                pl.BlockSpec(memory_space=pltpu.MemorySpace.SMEM),  # conv b (1,)
            ],
            out_specs=pl.BlockSpec((None, C, HW), lambda b: (b, 0, 0)),
        ),
        compiler_params=pltpu.CompilerParams(
            dimension_semantics=("parallel",),   # batch elems are independent
            vmem_limit_bytes=vmem_limit),
    )(x_flat, w1, b1, w2, b2, wsp, bsp)

    return out_flat.reshape(B, C, H, W)


def init_scbam_params(key, C, reduction=REDUCTION):
    """Deterministic synthetic parameters for one SCBAMM block."""
    Cr = max(C // reduction, 1)
    k1, k2, k3 = jax.random.split(key, 3)
    w1 = 0.1 * jax.random.normal(k1, (Cr, C), jnp.float32)
    b1 = jnp.zeros((Cr, 1), jnp.float32)
    w2 = 0.1 * jax.random.normal(k2, (C, Cr), jnp.float32)
    b2 = jnp.zeros((C, 1), jnp.float32)
    wsp = (0.1 * jax.random.normal(k3, (2, KSIZE, KSIZE), jnp.float32)).reshape(-1)
    bsp = jnp.zeros((1,), jnp.float32)
    return (w1, b1, w2, b2, wsp, bsp)


class SCBAMModulePallas:
    """Mirror of the PyTorch SCBAM_Module: one attention block per FPN level."""

    def __init__(self, in_channels_list, key, reduction=REDUCTION):
        keys = jax.random.split(key, len(in_channels_list))
        self.params = [init_scbam_params(k, c, reduction)
                       for c, k in zip(in_channels_list, keys)]

    def __call__(self, fpn_features):
        out = list(fpn_features)
        for idx, (feat, p) in enumerate(zip(fpn_features, self.params)):
            out[idx] = scbam_level(feat, p)
        return out


# ----------------------------- pure-JAX reference ---------------------------
def scbam_level_ref(x, params):
    w1, b1, w2, b2, wsp, bsp = params
    xf = x.astype(jnp.float32)
    avg_c = jnp.mean(xf, axis=(2, 3))   # (B, C)
    max_c = jnp.max(xf, axis=(2, 3))    # (B, C)

    def mlp(v):
        h = jnp.maximum(v @ w1.T + b1[:, 0], 0.0)
        return h @ w2.T + b2[:, 0]

    ch = jax.nn.sigmoid(mlp(avg_c) + mlp(max_c))        # (B, C)
    xc = xf * ch[:, :, None, None]

    avg_s = jnp.mean(xc, axis=1, keepdims=True)
    max_s = jnp.max(xc, axis=1, keepdims=True)
    s = jnp.concatenate([avg_s, max_s], axis=1)          # (B, 2, H, W)
    wk = wsp.reshape(1, 2, KSIZE, KSIZE)
    sp = jax.lax.conv_general_dilated(
        s, wk, (1, 1), [(PAD, PAD), (PAD, PAD)],
        dimension_numbers=("NCHW", "OIHW", "NCHW")) + bsp[0]
    sp = jax.nn.sigmoid(sp)
    return (xc * sp).astype(x.dtype)


# ----------------------------- demo ------------------------------------------
if __name__ == "__main__":
    key = jax.random.PRNGKey(0)
    in_channels_list = [4, 8]
    spatial_list = [32, 16]

    k_feat, k_param = jax.random.split(key)
    feat_keys = jax.random.split(k_feat, len(in_channels_list))
    fpn_features = [
        jax.random.normal(fk, (2, c, s, s), jnp.float32)
        for fk, c, s in zip(feat_keys, in_channels_list, spatial_list)
    ]

    module = SCBAMModulePallas(in_channels_list, k_param)

    outs = module(list(fpn_features))
    outs = jax.block_until_ready(outs)

    # numerical sanity-check against a pure-JAX reference
    for feat, p, out in zip(fpn_features, module.params, outs):
        ref = scbam_level_ref(feat, p)
        assert out.shape == feat.shape and out.dtype == feat.dtype
        err = float(jnp.max(jnp.abs(out - ref)))
        assert jnp.allclose(out, ref, atol=2e-3, rtol=2e-3), err

    print("KERNEL_OK")
</pallas_src>

<mosaic_0001>
module attributes {stable_mosaic.version = 11 : i64} {
  func.func @_scbam_kernel(%arg0: i32, %arg1: memref<1x4x1024xf32, #tpu.memory_space<vmem>>, %arg2: memref<2x4xf32, #tpu.memory_space<vmem>>, %arg3: memref<2x1xf32, #tpu.memory_space<vmem>>, %arg4: memref<4x2xf32, #tpu.memory_space<vmem>>, %arg5: memref<4x1xf32, #tpu.memory_space<vmem>>, %arg6: memref<98xf32, #tpu.memory_space<smem>>, %arg7: memref<1xf32, #tpu.memory_space<smem>>, %arg8: memref<1x4x1024xf32, #tpu.memory_space<vmem>>) attributes {dimension_semantics = [#tpu.dimension_semantics<parallel>], iteration_bounds = array<i64: 2>, scalar_prefetch = 0 : i64, scratch_operands = 0 : i64, tpu.core_type = #tpu.core_type<tc>, window_params = [{transform_indices = @transform_0, window_bounds = array<i64: 1, 4, 1024>}, {pipeline_mode = #tpu.pipeline_mode<synchronous>, transform_indices = @transform_1, window_bounds = array<i64: 2, 4>}, {pipeline_mode = #tpu.pipeline_mode<synchronous>, transform_indices = @transform_2, window_bounds = array<i64: 2, 1>}, {pipeline_mode = #tpu.pipeline_mode<synchronous>, transform_indices = @transform_3, window_bounds = array<i64: 4, 2>}, {pipeline_mode = #tpu.pipeline_mode<synchronous>, transform_indices = @transform_4, window_bounds = array<i64: 4, 1>}, {transform_indices = @transform_5, window_bounds = array<i64: 98>}, {transform_indices = @transform_6, window_bounds = array<i64: 1>}, {transform_indices = @transform_7, window_bounds = array<i64: 1, 4, 1024>}]} {
    %c0 = arith.constant 0 : index
    %c0_0 = arith.constant 0 : index
    %c0_1 = arith.constant 0 : index
    %0 = vector.load %arg1[%c0, %c0_0, %c0_1] : memref<1x4x1024xf32, #tpu.memory_space<vmem>>, vector<1x4x1024xf32>
    %1 = vector.shape_cast %0 : vector<1x4x1024xf32> to vector<4x1024xf32>
    %cst = arith.constant dense<0.000000e+00> : vector<4xf32>
    %2 = vector.multi_reduction <add>, %1, %cst [1] : vector<4x1024xf32> to vector<4xf32>
    %3 = vector.shape_cast %2 : vector<4xf32> to vector<4x1xf32>
    %cst_2 = arith.constant 9.765625E-4 : f32
    %4 = vector.broadcast %cst_2 : f32 to vector<4x1xf32>
    %5 = arith.mulf %3, %4 : vector<4x1xf32>
    %cst_3 = arith.constant dense<0xFF800000> : vector<4xf32>
    %6 = vector.multi_reduction <maximumf>, %1, %cst_3 [1] : vector<4x1024xf32> to vector<4xf32>
    %7 = vector.shape_cast %6 : vector<4xf32> to vector<4x1xf32>
    %8 = tpu.iota {dimensions = array<i32: 1>} : vector<4x2xi32>
    %c0_i32 = arith.constant 0 : i32
    %9 = vector.broadcast %c0_i32 : i32 to vector<4x2xi32>
    %10 = arith.cmpi eq, %8, %9 : vector<4x2xi32>
    %11 = vector.shape_cast %5 : vector<4x1xf32> to vector<4x1xf32>
    %12 = vector.broadcast %11 : vector<4x1xf32> to vector<4x2xf32>
    %13 = vector.shape_cast %7 : vector<4x1xf32> to vector<4x1xf32>
    %14 = vector.broadcast %13 : vector<4x1xf32> to vector<4x2xf32>
    %15 = arith.select %10, %12, %14 : vector<4x2xi1>, vector<4x2xf32>
    %c0_4 = arith.constant 0 : index
    %c0_5 = arith.constant 0 : index
    %16 = vector.load %arg2[%c0_4, %c0_5] : memref<2x4xf32, #tpu.memory_space<vmem>>, vector<2x4xf32>
    %c0_6 = arith.constant 0 : index
    %c0_7 = arith.constant 0 : index
    %17 = vector.load %arg3[%c0_6, %c0_7] : memref<2x1xf32, #tpu.memory_space<vmem>>, vector<2x1xf32>
    %c0_8 = arith.constant 0 : index
    %c0_9 = arith.constant 0 : index
    %18 = vector.load %arg4[%c0_8, %c0_9] : memref<4x2xf32, #tpu.memory_space<vmem>>, vector<4x2xf32>
    %c0_10 = arith.constant 0 : index
    %c0_11 = arith.constant 0 : index
    %19 = vector.load %arg5[%c0_10, %c0_11] : memref<4x1xf32, #tpu.memory_space<vmem>>, vector<4x1xf32>
    %cst_12 = arith.constant dense<0.000000e+00> : vector<2x2xf32>
    %20 = tpu.matmul %16, %15, %cst_12 {dimension_numbers = #tpu.dot_dimension_numbers<[1], [0], [0], [1], [0, 0, 1, 1], [], []>} : vector<2x4xf32>, vector<4x2xf32>, vector<2x2xf32> -> vector<2x2xf32>
    %21 = vector.broadcast %17 : vector<2x1xf32> to vector<2x2xf32>
    %22 = arith.addf %20, %21 : vector<2x2xf32>
    %cst_13 = arith.constant 0.000000e+00 : f32
    %23 = vector.broadcast %cst_13 : f32 to vector<2x2xf32>
    %24 = arith.maximumf %22, %23 : vector<2x2xf32>
    %cst_14 = arith.constant dense<0.000000e+00> : vector<4x2xf32>
    %25 = tpu.matmul %18, %24, %cst_14 {dimension_numbers = #tpu.dot_dimension_numbers<[1], [0], [0], [1], [0, 0, 1, 1], [], []>} : vector<4x2xf32>, vector<2x2xf32>, vector<4x2xf32> -> vector<4x2xf32>
    %26 = vector.broadcast %19 : vector<4x1xf32> to vector<4x2xf32>
    %27 = arith.addf %25, %26 : vector<4x2xf32>
    %28 = vector.extract_strided_slice %27 {offsets = [0, 0], sizes = [4, 1], strides = [1, 1]} : vector<4x2xf32> to vector<4x1xf32>
    %29 = vector.extract_strided_slice %27 {offsets = [0, 1], sizes = [4, 1], strides = [1, 1]} : vector<4x2xf32> to vector<4x1xf32>
    %30 = arith.addf %28, %29 : vector<4x1xf32>
    %31 = arith.negf %30 : vector<4x1xf32>
    %32 = math.exp %31 : vector<4x1xf32>
    %cst_15 = arith.constant 1.000000e+00 : f32
    %33 = vector.broadcast %cst_15 : f32 to vector<4x1xf32>
    %34 = arith.addf %33, %32 : vector<4x1xf32>
    %35 = arith.divf %33, %34 : vector<4x1xf32>
    %36 = vector.broadcast %35 : vector<4x1xf32> to vector<4x1024xf32>
    %37 = arith.mulf %1, %36 : vector<4x1024xf32>
    %cst_16 = arith.constant dense<0.000000e+00> : vector<1024xf32>
    %38 = vector.multi_reduction <add>, %37, %cst_16 [0] : vector<4x1024xf32> to vector<1024xf32>
    %39 = vector.shape_cast %38 : vector<1024xf32> to vector<1x1024xf32>
    %cst_17 = arith.constant 4.000000e+00 : f32
    %40 = vector.broadcast %cst_17 : f32 to vector<1x1024xf32>
    %41 = arith.divf %39, %40 : vector<1x1024xf32>
    %cst_18 = arith.constant dense<0xFF800000> : vector<1024xf32>
    %42 = vector.multi_reduction <maximumf>, %37, %cst_18 [0] : vector<4x1024xf32> to vector<1024xf32>
    %43 = vector.shape_cast %42 : vector<1024xf32> to vector<1x1024xf32>
    %44 = tpu.iota {dimensions = array<i32: 0>} : vector<2x1024xi32>
    %c0_i32_19 = arith.constant 0 : i32
    %45 = vector.broadcast %c0_i32_19 : i32 to vector<2x1024xi32>
    %46 = arith.cmpi eq, %44, %45 : vector<2x1024xi32>
    %47 = vector.shape_cast %41 : vector<1x1024xf32> to vector<1x1024xf32>
    %48 = vector.broadcast %47 : vector<1x1024xf32> to vector<2x1024xf32>
    %49 = vector.shape_cast %43 : vector<1x1024xf32> to vector<1x1024xf32>
    %50 = vector.broadcast %49 : vector<1x1024xf32> to vector<2x1024xf32>
    %51 = arith.select %46, %48, %50 : vector<2x1024xi1>, vector<2x1024xf32>
    %52 = tpu.iota {dimensions = array<i32: 1>} : vector<1x1024xi32>
    %53 = arith.sitofp %52 : vector<1x1024xi32> to vector<1x1024xf32>
    %cst_20 = arith.constant 5.000000e-01 : f32
    %54 = vector.broadcast %cst_20 : f32 to vector<1x1024xf32>
    %55 = arith.addf %53, %54 : vector<1x1024xf32>
    %cst_21 = arith.constant 3.125000e-02 : f32
    %56 = vector.broadcast %cst_21 : f32 to vector<1x1024xf32>
    %57 = arith.mulf %55, %56 : vector<1x1024xf32>
    %58 = math.floor %57 : vector<1x1024xf32>
    %cst_22 = arith.constant 3.200000e+01 : f32
    %59 = vector.broadcast %cst_22 : f32 to vector<1x1024xf32>
    %60 = arith.mulf %58, %59 : vector<1x1024xf32>
    %61 = arith.subf %53, %60 : vector<1x1024xf32>
    %cst_23 = arith.constant -3.000000e+00 : f32
    %62 = vector.broadcast %cst_23 : f32 to vector<1x1024xf32>
    %63 = arith.addf %61, %62 : vector<1x1024xf32>
    %cst_24 = arith.constant 0.000000e+00 : f32
    %64 = vector.broadcast %cst_24 : f32 to vector<1x1024xf32>
    %65 = arith.cmpf oge, %63, %64 : vector<1x1024xf32>
    %cst_25 = arith.constant -3.000000e+00 : f32
    %66 = vector.broadcast %cst_25 : f32 to vector<1x1024xf32>
    %67 = arith.addf %61, %66 : vector<1x1024xf32>
    %cst_26 = arith.constant 3.100000e+01 : f32
    %68 = vector.broadcast %cst_26 : f32 to vector<1x1024xf32>
    %69 = arith.cmpf ole, %67, %68 : vector<1x1024xf32>
    %70 = arith.andi %65, %69 : vector<1x1024xi1>
    %cst_27 = arith.constant -2.000000e+00 : f32
    %71 = vector.broadcast %cst_27 : f32 to vector<1x1024xf32>
    %72 = arith.addf %61, %71 : vector<1x1024xf32>
    %cst_28 = arith.constant 0.000000e+00 : f32
    %73 = vector.broadcast %cst_28 : f32 to vector<1x1024xf32>
    %74 = arith.cmpf oge, %72, %73 : vector<1x1024xf32>
    %cst_29 = arith.constant -2.000000e+00 : f32
    %75 = vector.broadcast %cst_29 : f32 to vector<1x1024xf32>
    %76 = arith.addf %61, %75 : vector<1x1024xf32>
    %cst_30 = arith.constant 3.100000e+01 : f32
    %77 = vector.broadcast %cst_30 : f32 to vector<1x1024xf32>
    %78 = arith.cmpf ole, %76, %77 : vector<1x1024xf32>
    %79 = arith.andi %74, %78 : vector<1x1024xi1>
    %cst_31 = arith.constant -1.000000e+00 : f32
    %80 = vector.broadcast %cst_31 : f32 to vector<1x1024xf32>
    %81 = arith.addf %61, %80 : vector<1x1024xf32>
    %cst_32 = arith.constant 0.000000e+00 : f32
    %82 = vector.broadcast %cst_32 : f32 to vector<1x1024xf32>
    %83 = arith.cmpf oge, %81, %82 : vector<1x1024xf32>
    %cst_33 = arith.constant -1.000000e+00 : f32
    %84 = vector.broadcast %cst_33 : f32 to vector<1x1024xf32>
    %85 = arith.addf %61, %84 : vector<1x1024xf32>
    %cst_34 = arith.constant 3.100000e+01 : f32
    %86 = vector.broadcast %cst_34 : f32 to vector<1x1024xf32>
    %87 = arith.cmpf ole, %85, %86 : vector<1x1024xf32>
    %88 = arith.andi %83, %87 : vector<1x1024xi1>
    %cst_35 = arith.constant 0.000000e+00 : f32
    %89 = vector.broadcast %cst_35 : f32 to vector<1x1024xf32>
    %90 = arith.addf %61, %89 : vector<1x1024xf32>
    %cst_36 = arith.constant 0.000000e+00 : f32
    %91 = vector.broadcast %cst_36 : f32 to vector<1x1024xf32>
    %92 = arith.cmpf oge, %90, %91 : vector<1x1024xf32>
    %cst_37 = arith.constant 0.000000e+00 : f32
    %93 = vector.broadcast %cst_37 : f32 to vector<1x1024xf32>
    %94 = arith.addf %61, %93 : vector<1x1024xf32>
    %cst_38 = arith.constant 3.100000e+01 : f32
    %95 = vector.broadcast %cst_38 : f32 to vector<1x1024xf32>
    %96 = arith.cmpf ole, %94, %95 : vector<1x1024xf32>
    %97 = arith.andi %92, %96 : vector<1x1024xi1>
    %cst_39 = arith.constant 1.000000e+00 : f32
    %98 = vector.broadcast %cst_39 : f32 to vector<1x1024xf32>
    %99 = arith.addf %61, %98 : vector<1x1024xf32>
    %cst_40 = arith.constant 0.000000e+00 : f32
    %100 = vector.broadcast %cst_40 : f32 to vector<1x1024xf32>
    %101 = arith.cmpf oge, %99, %100 : vector<1x1024xf32>
    %cst_41 = arith.constant 1.000000e+00 : f32
    %102 = vector.broadcast %cst_41 : f32 to vector<1x1024xf32>
    %103 = arith.addf %61, %102 : vector<1x1024xf32>
    %cst_42 = arith.constant 3.100000e+01 : f32
    %104 = vector.broadcast %cst_42 : f32 to vector<1x1024xf32>
    %105 = arith.cmpf ole, %103, %104 : vector<1x1024xf32>
    %106 = arith.andi %101, %105 : vector<1x1024xi1>
    %cst_43 = arith.constant 2.000000e+00 : f32
    %107 = vector.broadcast %cst_43 : f32 to vector<1x1024xf32>
    %108 = arith.addf %61, %107 : vector<1x1024xf32>
    %cst_44 = arith.constant 0.000000e+00 : f32
    %109 = vector.broadcast %cst_44 : f32 to vector<1x1024xf32>
    %110 = arith.cmpf oge, %108, %109 : vector<1x1024xf32>
    %cst_45 = arith.constant 2.000000e+00 : f32
    %111 = vector.broadcast %cst_45 : f32 to vector<1x1024xf32>
    %112 = arith.addf %61, %111 : vector<1x1024xf32>
    %cst_46 = arith.constant 3.100000e+01 : f32
    %113 = vector.broadcast %cst_46 : f32 to vector<1x1024xf32>
    %114 = arith.cmpf ole, %112, %113 : vector<1x1024xf32>
    %115 = arith.andi %110, %114 : vector<1x1024xi1>
    %cst_47 = arith.constant 3.000000e+00 : f32
    %116 = vector.broadcast %cst_47 : f32 to vector<1x1024xf32>
    %117 = arith.addf %61, %116 : vector<1x1024xf32>
    %cst_48 = arith.constant 0.000000e+00 : f32
    %118 = vector.broadcast %cst_48 : f32 to vector<1x1024xf32>
    %119 = arith.cmpf oge, %117, %118 : vector<1x1024xf32>
    %cst_49 = arith.constant 3.000000e+00 : f32
    %120 = vector.broadcast %cst_49 : f32 to vector<1x1024xf32>
    %121 = arith.addf %61, %120 : vector<1x1024xf32>
    %cst_50 = arith.constant 3.100000e+01 : f32
    %122 = vector.broadcast %cst_50 : f32 to vector<1x1024xf32>
    %123 = arith.cmpf ole, %121, %122 : vector<1x1024xf32>
    %124 = arith.andi %119, %123 : vector<1x1024xi1>
    %cst_51 = arith.constant -3.000000e+00 : f32
    %125 = vector.broadcast %cst_51 : f32 to vector<1x1024xf32>
    %126 = arith.addf %58, %125 : vector<1x1024xf32>
    %cst_52 = arith.constant 0.000000e+00 : f32
    %127 = vector.broadcast %cst_52 : f32 to vector<1x1024xf32>
    %128 = arith.cmpf oge, %126, %127 : vector<1x1024xf32>
    %cst_53 = arith.constant -3.000000e+00 : f32
    %129 = vector.broadcast %cst_53 : f32 to vector<1x1024xf32>
    %130 = arith.addf %58, %129 : vector<1x1024xf32>
    %cst_54 = arith.constant 3.100000e+01 : f32
    %131 = vector.broadcast %cst_54 : f32 to vector<1x1024xf32>
    %132 = arith.cmpf ole, %130, %131 : vector<1x1024xf32>
    %133 = arith.andi %128, %132 : vector<1x1024xi1>
    %cst_55 = arith.constant -2.000000e+00 : f32
    %134 = vector.broadcast %cst_55 : f32 to vector<1x1024xf32>
    %135 = arith.addf %58, %134 : vector<1x1024xf32>
    %cst_56 = arith.constant 0.000000e+00 : f32
    %136 = vector.broadcast %cst_56 : f32 to vector<1x1024xf32>
    %137 = arith.cmpf oge, %135, %136 : vector<1x1024xf32>
    %cst_57 = arith.constant -2.000000e+00 : f32
    %138 = vector.broadcast %cst_57 : f32 to vector<1x1024xf32>
    %139 = arith.addf %58, %138 : vector<1x1024xf32>
    %cst_58 = arith.constant 3.100000e+01 : f32
    %140 = vector.broadcast %cst_58 : f32 to vector<1x1024xf32>
    %141 = arith.cmpf ole, %139, %140 : vector<1x1024xf32>
    %142 = arith.andi %137, %141 : vector<1x1024xi1>
    %cst_59 = arith.constant -1.000000e+00 : f32
    %143 = vector.broadcast %cst_59 : f32 to vector<1x1024xf32>
    %144 = arith.addf %58, %143 : vector<1x1024xf32>
    %cst_60 = arith.constant 0.000000e+00 : f32
    %145 = vector.broadcast %cst_60 : f32 to vector<1x1024xf32>
    %146 = arith.cmpf oge, %144, %145 : vector<1x1024xf32>
    %cst_61 = arith.constant -1.000000e+00 : f32
    %147 = vector.broadcast %cst_61 : f32 to vector<1x1024xf32>
    %148 = arith.addf %58, %147 : vector<1x1024xf32>
    %cst_62 = arith.constant 3.100000e+01 : f32
    %149 = vector.broadcast %cst_62 : f32 to vector<1x1024xf32>
    %150 = arith.cmpf ole, %148, %149 : vector<1x1024xf32>
    %151 = arith.andi %146, %150 : vector<1x1024xi1>
    %cst_63 = arith.constant 0.000000e+00 : f32
    %152 = vector.broadcast %cst_63 : f32 to vector<1x1024xf32>
    %153 = arith.addf %58, %152 : vector<1x1024xf32>
    %cst_64 = arith.constant 0.000000e+00 : f32
    %154 = vector.broadcast %cst_64 : f32 to vector<1x1024xf32>
    %155 = arith.cmpf oge, %153, %154 : vector<1x1024xf32>
    %cst_65 = arith.constant 0.000000e+00 : f32
    %156 = vector.broadcast %cst_65 : f32 to vector<1x1024xf32>
    %157 = arith.addf %58, %156 : vector<1x1024xf32>
    %cst_66 = arith.constant 3.100000e+01 : f32
    %158 = vector.broadcast %cst_66 : f32 to vector<1x1024xf32>
    %159 = arith.cmpf ole, %157, %158 : vector<1x1024xf32>
    %160 = arith.andi %155, %159 : vector<1x1024xi1>
    %cst_67 = arith.constant 1.000000e+00 : f32
    %161 = vector.broadcast %cst_67 : f32 to vector<1x1024xf32>
    %162 = arith.addf %58, %161 : vector<1x1024xf32>
    %cst_68 = arith.constant 0.000000e+00 : f32
    %163 = vector.broadcast %cst_68 : f32 to vector<1x1024xf32>
    %164 = arith.cmpf oge, %162, %163 : vector<1x1024xf32>
    %cst_69 = arith.constant 1.000000e+00 : f32
    %165 = vector.broadcast %cst_69 : f32 to vector<1x1024xf32>
    %166 = arith.addf %58, %165 : vector<1x1024xf32>
    %cst_70 = arith.constant 3.100000e+01 : f32
    %167 = vector.broadcast %cst_70 : f32 to vector<1x1024xf32>
    %168 = arith.cmpf ole, %166, %167 : vector<1x1024xf32>
    %169 = arith.andi %164, %168 : vector<1x1024xi1>
    %cst_71 = arith.constant 2.000000e+00 : f32
    %170 = vector.broadcast %cst_71 : f32 to vector<1x1024xf32>
    %171 = arith.addf %58, %170 : vector<1x1024xf32>
    %cst_72 = arith.constant 0.000000e+00 : f32
    %172 = vector.broadcast %cst_72 : f32 to vector<1x1024xf32>
    %173 = arith.cmpf oge, %171, %172 : vector<1x1024xf32>
    %cst_73 = arith.constant 2.000000e+00 : f32
    %174 = vector.broadcast %cst_73 : f32 to vector<1x1024xf32>
    %175 = arith.addf %58, %174 : vector<1x1024xf32>
    %cst_74 = arith.constant 3.100000e+01 : f32
    %176 = vector.broadcast %cst_74 : f32 to vector<1x1024xf32>
    %177 = arith.cmpf ole, %175, %176 : vector<1x1024xf32>
    %178 = arith.andi %173, %177 : vector<1x1024xi1>
    %cst_75 = arith.constant 3.000000e+00 : f32
    %179 = vector.broadcast %cst_75 : f32 to vector<1x1024xf32>
    %180 = arith.addf %58, %179 : vector<1x1024xf32>
    %cst_76 = arith.constant 0.000000e+00 : f32
    %181 = vector.broadcast %cst_76 : f32 to vector<1x1024xf32>
    %182 = arith.cmpf oge, %180, %181 : vector<1x1024xf32>
    %cst_77 = arith.constant 3.000000e+00 : f32
    %183 = vector.broadcast %cst_77 : f32 to vector<1x1024xf32>
    %184 = arith.addf %58, %183 : vector<1x1024xf32>
    %cst_78 = arith.constant 3.100000e+01 : f32
    %185 = vector.broadcast %cst_78 : f32 to vector<1x1024xf32>
    %186 = arith.cmpf ole, %184, %185 : vector<1x1024xf32>
    %187 = arith.andi %182, %186 : vector<1x1024xi1>
    %c0_79 = arith.constant 0 : index
    %188 = memref.load %arg7[%c0_79] : memref<1xf32, #tpu.memory_space<smem>>
    %189 = vector.broadcast %188 : f32 to vector<1x1024xf32>
    %c3_i32 = arith.constant 3 : i32
    %190 = tpu.dynamic_rotate %51 by %c3_i32 dim 1 : vector<2x1024xf32>, i32 -> vector<2x1024xf32>
    %cst_80 = arith.constant 0.000000e+00 : f32
    %191 = vector.shape_cast %70 : vector<1x1024xi1> to vector<1x1024xi1>
    %192 = vector.broadcast %191 : vector<1x1024xi1> to vector<2x1024xi1>
    %193 = vector.broadcast %cst_80 : f32 to vector<2x1024xf32>
    %194 = arith.select %192, %190, %193 : vector<2x1024xi1>, vector<2x1024xf32>
    %c96_i32 = arith.constant 96 : i32
    %195 = tpu.dynamic_rotate %194 by %c96_i32 dim 1 : vector<2x1024xf32>, i32 -> vector<2x1024xf32>
    %cst_81 = arith.constant 0.000000e+00 : f32
    %196 = vector.shape_cast %133 : vector<1x1024xi1> to vector<1x1024xi1>
    %197 = vector.broadcast %196 : vector<1x1024xi1> to vector<2x1024xi1>
    %198 = vector.broadcast %cst_81 : f32 to vector<2x1024xf32>
    %199 = arith.select %197, %195, %198 : vector<2x1024xi1>, vector<2x1024xf32>
    %c0_82 = arith.constant 0 : index
    %200 = memref.load %arg6[%c0_82] : memref<98xf32, #tpu.memory_space<smem>>
    %c49 = arith.constant 49 : index
    %201 = memref.load %arg6[%c49] : memref<98xf32, #tpu.memory_space<smem>>
    %202 = vector.extract_strided_slice %199 {offsets = [0, 0], sizes = [1, 1024], strides = [1, 1]} : vector<2x1024xf32> to vector<1x1024xf32>
    %203 = vector.broadcast %200 : f32 to vector<1x1024xf32>
    %204 = arith.mulf %203, %202 : vector<1x1024xf32>
    %205 = arith.addf %189, %204 : vector<1x1024xf32>
    %206 = vector.extract_strided_slice %199 {offsets = [1, 0], sizes = [1, 1024], strides = [1, 1]} : vector<2x1024xf32> to vector<1x1024xf32>
    %207 = vector.broadcast %201 : f32 to vector<1x1024xf32>
    %208 = arith.mulf %207, %206 : vector<1x1024xf32>
    %209 = arith.addf %205, %208 : vector<1x1024xf32>
    %c64_i32 = arith.constant 64 : i32
    %210 = tpu.dynamic_rotate %194 by %c64_i32 dim 1 : vector<2x1024xf32>, i32 -> vector<2x1024xf32>
    %cst_83 = arith.constant 0.000000e+00 : f32
    %211 = vector.shape_cast %142 : vector<1x1024xi1> to vector<1x1024xi1>
    %212 = vector.broadcast %211 : vector<1x1024xi1> to vector<2x1024xi1>
    %213 = vector.broadcast %cst_83 : f32 to vector<2x1024xf32>
    %214 = arith.select %212, %210, %213 : vector<2x1024xi1>, vector<2x1024xf32>
    %c7 = arith.constant 7 : index
    %215 = memref.load %arg6[%c7] : memref<98xf32, #tpu.memory_space<smem>>
    %c56 = arith.constant 56 : index
    %216 = memref.load %arg6[%c56] : memref<98xf32, #tpu.memory_space<smem>>
    %217 = vector.extract_strided_slice %214 {offsets = [0, 0], sizes = [1, 1024], strides = [1, 1]} : vector<2x1024xf32> to vector<1x1024xf32>
    %218 = vector.broadcast %215 : f32 to vector<1x1024xf32>
    %219 = arith.mulf %218, %217 : vector<1x1024xf32>
    %220 = arith.addf %209, %219 : vector<1x1024xf32>
    %221 = vector.extract_strided_slice %214 {offsets = [1, 0], sizes = [1, 1024], strides = [1, 1]} : vector<2x1024xf32> to vector<1x1024xf32>
    %222 = vector.broadcast %216 : f32 to vector<1x1024xf32>
    %223 = arith.mulf %222, %221 : vector<1x1024xf32>
    %224 = arith.addf %220, %223 : vector<1x1024xf32>
    %c32_i32 = arith.constant 32 : i32
    %225 = tpu.dynamic_rotate %194 by %c32_i32 dim 1 : vector<2x1024xf32>, i32 -> vector<2x1024xf32>
    %cst_84 = arith.constant 0.000000e+00 : f32
    %226 = vector.shape_cast %151 : vector<1x1024xi1> to vector<1x1024xi1>
    %227 = vector.broadcast %226 : vector<1x1024xi1> to vector<2x1024xi1>
    %228 = vector.broadcast %cst_84 : f32 to vector<2x1024xf32>
    %229 = arith.select %227, %225, %228 : vector<2x1024xi1>, vector<2x1024xf32>
    %c14 = arith.constant 14 : index
    %230 = memref.load %arg6[%c14] : memref<98xf32, #tpu.memory_space<smem>>
    %c63 = arith.constant 63 : index
    %231 = memref.load %arg6[%c63] : memref<98xf32, #tpu.memory_space<smem>>
    %232 = vector.extract_strided_slice %229 {offsets = [0, 0], sizes = [1, 1024], strides = [1, 1]} : vector<2x1024xf32> to vector<1x1024xf32>
    %233 = vector.broadcast %230 : f32 to vector<1x1024xf32>
    %234 = arith.mulf %233, %232 : vector<1x1024xf32>
    %235 = arith.addf %224, %234 : vector<1x1024xf32>
    %236 = vector.extract_strided_slice %229 {offsets = [1, 0], sizes = [1, 1024], strides = [1, 1]} : vector<2x1024xf32> to vector<1x1024xf32>
    %237 = vector.broadcast %231 : f32 to vector<1x1024xf32>
    %238 = arith.mulf %237, %236 : vector<1x1024xf32>
    %239 = arith.addf %235, %238 : vector<1x1024xf32>
    %c0_i32_85 = arith.constant 0 : i32
    %240 = tpu.dynamic_rotate %194 by %c0_i32_85 dim 1 : vector<2x1024xf32>, i32 -> vector<2x1024xf32>
    %cst_86 = arith.constant 0.000000e+00 : f32
    %241 = vector.shape_cast %160 : vector<1x1024xi1> to vector<1x1024xi1>
    %242 = vector.broadcast %241 : vector<1x1024xi1> to vector<2x1024xi1>
    %243 = vector.broadcast %cst_86 : f32 to vector<2x1024xf32>
    %244 = arith.select %242, %240, %243 : vector<2x1024xi1>, vector<2x1024xf32>
    %c21 = arith.constant 21 : index
    %245 = memref.load %arg6[%c21] : memref<98xf32, #tpu.memory_space<smem>>
    %c70 = arith.constant 70 : index
    %246 = memref.load %arg6[%c70] : memref<98xf32, #tpu.memory_space<smem>>
    %247 = vector.extract_strided_slice %244 {offsets = [0, 0], sizes = [1, 1024], strides = [1, 1]} : vector<2x1024xf32> to vector<1x1024xf32>
    %248 = vector.broadcast %245 : f32 to vector<1x1024xf32>
    %249 = arith.mulf %248, %247 : vector<1x1024xf32>
    %250 = arith.addf %239, %249 : vector<1x1024xf32>
    %251 = vector.extract_strided_slice %244 {offsets = [1, 0], sizes = [1, 1024], strides = [1, 1]} : vector<2x1024xf32> to vector<1x1024xf32>
    %252 = vector.broadcast %246 : f32 to vector<1x1024xf32>
    %253 = arith.mulf %252, %251 : vector<1x1024xf32>
    %254 = arith.addf %250, %253 : vector<1x1024xf32>
    %c992_i32 = arith.constant 992 : i32
    %255 = tpu.dynamic_rotate %194 by %c992_i32 dim 1 : vector<2x1024xf32>, i32 -> vector<2x1024xf32>
    %cst_87 = arith.constant 0.000000e+00 : f32
    %256 = vector.shape_cast %169 : vector<1x1024xi1> to vector<1x1024xi1>
    %257 = vector.broadcast %256 : vector<1x1024xi1> to vector<2x1024xi1>
    %258 = vector.broadcast %cst_87 : f32 to vector<2x1024xf32>
    %259 = arith.select %257, %255, %258 : vector<2x1024xi1>, vector<2x1024xf32>
    %c28 = arith.constant 28 : index
    %260 = memref.load %arg6[%c28] : memref<98xf32, #tpu.memory_space<smem>>
    %c77 = arith.constant 77 : index
    %261 = memref.load %arg6[%c77] : memref<98xf32, #tpu.memory_space<smem>>
    %262 = vector.extract_strided_slice %259 {offsets = [0, 0], sizes = [1, 1024], strides = [1, 1]} : vector<2x1024xf32> to vector<1x1024xf32>
    %263 = vector.broadcast %260 : f32 to vector<1x1024xf32>
    %264 = arith.mulf %263, %262 : vector<1x1024xf32>
    %265 = arith.addf %254, %264 : vector<1x1024xf32>
    %266 = vector.extract_strided_slice %259 {offsets = [1, 0], sizes = [1, 1024], strides = [1, 1]} : vector<2x1024xf32> to vector<1x1024xf32>
    %267 = vector.broadcast %261 : f32 to vector<1x1024xf32>
    %268 = arith.mulf %267, %266 : vector<1x1024xf32>
    %269 = arith.addf %265, %268 : vector<1x1024xf32>
    %c960_i32 = arith.constant 960 : i32
    %270 = tpu.dynamic_rotate %194 by %c960_i32 dim 1 : vector<2x1024xf32>, i32 -> vector<2x1024xf32>
    %cst_88 = arith.constant 0.000000e+00 : f32
    %271 = vector.shape_cast %178 : vector<1x1024xi1> to vector<1x1024xi1>
    %272 = vector.broadcast %271 : vector<1x1024xi1> to vector<2x1024xi1>
    %273 = vector.broadcast %cst_88 : f32 to vector<2x1024xf32>
    %274 = arith.select %272, %270, %273 : vector<2x1024xi1>, vector<2x1024xf32>
    %c35 = arith.constant 35 : index
    %275 = memref.load %arg6[%c35] : memref<98xf32, #tpu.memory_space<smem>>
    %c84 = arith.constant 84 : index
    %276 = memref.load %arg6[%c84] : memref<98xf32, #tpu.memory_space<smem>>
    %277 = vector.extract_strided_slice %274 {offsets = [0, 0], sizes = [1, 1024], strides = [1, 1]} : vector<2x1024xf32> to vector<1x1024xf32>
    %278 = vector.broadcast %275 : f32 to vector<1x1024xf32>
    %279 = arith.mulf %278, %277 : vector<1x1024xf32>
    %280 = arith.addf %269, %279 : vector<1x1024xf32>
    %281 = vector.extract_strided_slice %274 {offsets = [1, 0], sizes = [1, 1024], strides = [1, 1]} : vector<2x1024xf32> to vector<1x1024xf32>
    %282 = vector.broadcast %276 : f32 to vector<1x1024xf32>
    %283 = arith.mulf %282, %281 : vector<1x1024xf32>
    %284 = arith.addf %280, %283 : vector<1x1024xf32>
    %c928_i32 = arith.constant 928 : i32
    %285 = tpu.dynamic_rotate %194 by %c928_i32 dim 1 : vector<2x1024xf32>, i32 -> vector<2x1024xf32>
    %cst_89 = arith.constant 0.000000e+00 : f32
    %286 = vector.shape_cast %187 : vector<1x1024xi1> to vector<1x1024xi1>
    %287 = vector.broadcast %286 : vector<1x1024xi1> to vector<2x1024xi1>
    %288 = vector.broadcast %cst_89 : f32 to vector<2x1024xf32>
    %289 = arith.select %287, %285, %288 : vector<2x1024xi1>, vector<2x1024xf32>
    %c42 = arith.constant 42 : index
    %290 = memref.load %arg6[%c42] : memref<98xf32, #tpu.memory_space<smem>>
    %c91 = arith.constant 91 : index
    %291 = memref.load %arg6[%c91] : memref<98xf32, #tpu.memory_space<smem>>
    %292 = vector.extract_strided_slice %289 {offsets = [0, 0], sizes = [1, 1024], strides = [1, 1]} : vector<2x1024xf32> to vector<1x1024xf32>
    %293 = vector.broadcast %290 : f32 to vector<1x1024xf32>
    %294 = arith.mulf %293, %292 : vector<1x1024xf32>
    %295 = arith.addf %284, %294 : vector<1x1024xf32>
    %296 = vector.extract_strided_slice %289 {offsets = [1, 0], sizes = [1, 1024], strides = [1, 1]} : vector<2x1024xf32> to vector<1x1024xf32>
    %297 = vector.broadcast %291 : f32 to vector<1x1024xf32>
    %298 = arith.mulf %297, %296 : vector<1x1024xf32>
    %299 = arith.addf %295, %298 : vector<1x1024xf32>
    %c2_i32 = arith.constant 2 : i32
    %300 = tpu.dynamic_rotate %51 by %c2_i32 dim 1 : vector<2x1024xf32>, i32 -> vector<2x1024xf32>
    %cst_90 = arith.constant 0.000000e+00 : f32
    %301 = vector.shape_cast %79 : vector<1x1024xi1> to vector<1x1024xi1>
    %302 = vector.broadcast %301 : vector<1x1024xi1> to vector<2x1024xi1>
    %303 = vector.broadcast %cst_90 : f32 to vector<2x1024xf32>
    %304 = arith.select %302, %300, %303 : vector<2x1024xi1>, vector<2x1024xf32>
    %c96_i32_91 = arith.constant 96 : i32
    %305 = tpu.dynamic_rotate %304 by %c96_i32_91 dim 1 : vector<2x1024xf32>, i32 -> vector<2x1024xf32>
    %cst_92 = arith.constant 0.000000e+00 : f32
    %306 = vector.shape_cast %133 : vector<1x1024xi1> to vector<1x1024xi1>
    %307 = vector.broadcast %306 : vector<1x1024xi1> to vector<2x1024xi1>
    %308 = vector.broadcast %cst_92 : f32 to vector<2x1024xf32>
    %309 = arith.select %307, %305, %308 : vector<2x1024xi1>, vector<2x1024xf32>
    %c1 = arith.constant 1 : index
    %310 = memref.load %arg6[%c1] : memref<98xf32, #tpu.memory_space<smem>>
    %c50 = arith.constant 50 : index
    %311 = memref.load %arg6[%c50] : memref<98xf32, #tpu.memory_space<smem>>
    %312 = vector.extract_strided_slice %309 {offsets = [0, 0], sizes = [1, 1024], strides = [1, 1]} : vector<2x1024xf32> to vector<1x1024xf32>
    %313 = vector.broadcast %310 : f32 to vector<1x1024xf32>
    %314 = arith.mulf %313, %312 : vector<1x1024xf32>
    %315 = arith.addf %299, %314 : vector<1x1024xf32>
    %316 = vector.extract_strided_slice %309 {offsets = [1, 0], sizes = [1, 1024], strides = [1, 1]} : vector<2x1024xf32> to vector<1x1024xf32>
    %317 = vector.broadcast %311 : f32 to vector<1x1024xf32>
    %318 = arith.mulf %317, %316 : vector<1x1024xf32>
    %319 = arith.addf %315, %318 : vector<1x1024xf32>
    %c64_i32_93 = arith.constant 64 : i32
    %320 = tpu.dynamic_rotate %304 by %c64_i32_93 dim 1 : vector<2x1024xf32>, i32 -> vector<2x1024xf32>
    %cst_94 = arith.constant 0.000000e+00 : f32
    %321 = vector.shape_cast %142 : vector<1x1024xi1> to vector<1x1024xi1>
    %322 = vector.broadcast %321 : vector<1x1024xi1> to vector<2x1024xi1>
    %323 = vector.broadcast %cst_94 : f32 to vector<2x1024xf32>
    %324 = arith.select %322, %320, %323 : vector<2x1024xi1>, vector<2x1024xf32>
    %c8 = arith.constant 8 : index
    %325 = memref.load %arg6[%c8] : memref<98xf32, #tpu.memory_space<smem>>
    %c57 = arith.constant 57 : index
    %326 = memref.load %arg6[%c57] : memref<98xf32, #tpu.memory_space<smem>>
    %327 = vector.extract_strided_slice %324 {offsets = [0, 0], sizes = [1, 1024], strides = [1, 1]} : vector<2x1024xf32> to vector<1x1024xf32>
    %328 = vector.broadcast %325 : f32 to vector<1x1024xf32>
    %329 = arith.mulf %328, %327 : vector<1x1024xf32>
    %330 = arith.addf %319, %329 : vector<1x1024xf32>
    %331 = vector.extract_strided_slice %324 {offsets = [1, 0], sizes = [1, 1024], strides = [1, 1]} : vector<2x1024xf32> to vector<1x1024xf32>
    %332 = vector.broadcast %326 : f32 to vector<1x1024xf32>
    %333 = arith.mulf %332, %331 : vector<1x1024xf32>
    %334 = arith.addf %330, %333 : vector<1x1024xf32>
    %c32_i32_95 = arith.constant 32 : i32
    %335 = tpu.dynamic_rotate %304 by %c32_i32_95 dim 1 : vector<2x1024xf32>, i32 -> vector<2x1024xf32>
    %cst_96 = arith.constant 0.000000e+00 : f32
    %336 = vector.shape_cast %151 : vector<1x1024xi1> to vector<1x1024xi1>
    %337 = vector.broadcast %336 : vector<1x1024xi1> to vector<2x1024xi1>
    %338 = vector.broadcast %cst_96 : f32 to vector<2x1024xf32>
    %339 = arith.select %337, %335, %338 : vector<2x1024xi1>, vector<2x1024xf32>
    %c15 = arith.constant 15 : index
    %340 = memref.load %arg6[%c15] : memref<98xf32, #tpu.memory_space<smem>>
    %c64 = arith.constant 64 : index
    %341 = memref.load %arg6[%c64] : memref<98xf32, #tpu.memory_space<smem>>
    %342 = vector.extract_strided_slice %339 {offsets = [0, 0], sizes = [1, 1024], strides = [1, 1]} : vector<2x1024xf32> to vector<1x1024xf32>
    %343 = vector.broadcast %340 : f32 to vector<1x1024xf32>
    %344 = arith.mulf %343, %342 : vector<1x1024xf32>
    %345 = arith.addf %334, %344 : vector<1x1024xf32>
    %346 = vector.extract_strided_slice %339 {offsets = [1, 0], sizes = [1, 1024], strides = [1, 1]} : vector<2x1024xf32> to vector<1x1024xf32>
    %347 = vector.broadcast %341 : f32 to vector<1x1024xf32>
    %348 = arith.mulf %347, %346 : vector<1x1024xf32>
    %349 = arith.addf %345, %348 : vector<1x1024xf32>
    %c0_i32_97 = arith.constant 0 : i32
    %350 = tpu.dynamic_rotate %304 by %c0_i32_97 dim 1 : vector<2x1024xf32>, i32 -> vector<2x1024xf32>
    %cst_98 = arith.constant 0.000000e+00 : f32
    %351 = vector.shape_cast %160 : vector<1x1024xi1> to vector<1x1024xi1>
    %352 = vector.broadcast %351 : vector<1x1024xi1> to vector<2x1024xi1>
    %353 = vector.broadcast %cst_98 : f32 to vector<2x1024xf32>
    %354 = arith.select %352, %350, %353 : vector<2x1024xi1>, vector<2x1024xf32>
    %c22 = arith.constant 22 : index
    %355 = memref.load %arg6[%c22] : memref<98xf32, #tpu.memory_space<smem>>
    %c71 = arith.constant 71 : index
    %356 = memref.load %arg6[%c71] : memref<98xf32, #tpu.memory_space<smem>>
    %357 = vector.extract_strided_slice %354 {offsets = [0, 0], sizes = [1, 1024], strides = [1, 1]} : vector<2x1024xf32> to vector<1x1024xf32>
    %358 = vector.broadcast %355 : f32 to vector<1x1024xf32>
    %359 = arith.mulf %358, %357 : vector<1x1024xf32>
    %360 = arith.addf %349, %359 : vector<1x1024xf32>
    %361 = vector.extract_strided_slice %354 {offsets = [1, 0], sizes = [1, 1024], strides = [1, 1]} : vector<2x1024xf32> to vector<1x1024xf32>
    %362 = vector.broadcast %356 : f32 to vector<1x1024xf32>
    %363 = arith.mulf %362, %361 : vector<1x1024xf32>
    %364 = arith.addf %360, %363 : vector<1x1024xf32>
    %c992_i32_99 = arith.constant 992 : i32
    %365 = tpu.dynamic_rotate %304 by %c992_i32_99 dim 1 : vector<2x1024xf32>, i32 -> vector<2x1024xf32>
    %cst_100 = arith.constant 0.000000e+00 : f32
    %366 = vector.shape_cast %169 : vector<1x1024xi1> to vector<1x1024xi1>
    %367 = vector.broadcast %366 : vector<1x1024xi1> to vector<2x1024xi1>
    %368 = vector.broadcast %cst_100 : f32 to vector<2x1024xf32>
    %369 = arith.select %367, %365, %368 : vector<2x1024xi1>, vector<2x1024xf32>
    %c29 = arith.constant 29 : index
    %370 = memref.load %arg6[%c29] : memref<98xf32, #tpu.memory_space<smem>>
    %c78 = arith.constant 78 : index
    %371 = memref.load %arg6[%c78] : memref<98xf32, #tpu.memory_space<smem>>
    %372 = vector.extract_strided_slice %369 {offsets = [0, 0], sizes = [1, 1024], strides = [1, 1]} : vector<2x1024xf32> to vector<1x1024xf32>
    %373 = vector.broadcast %370 : f32 to vector<1x1024xf32>
    %374 = arith.mulf %373, %372 : vector<1x1024xf32>
    %375 = arith.addf %364, %374 : vector<1x1024xf32>
    %376 = vector.extract_strided_slice %369 {offsets = [1, 0], sizes = [1, 1024], strides = [1, 1]} : vector<2x1024xf32> to vector<1x1024xf32>
    %377 = vector.broadcast %371 : f32 to vector<1x1024xf32>
    %378 = arith.mulf %377, %376 : vector<1x1024xf32>
    %379 = arith.addf %375, %378 : vector<1x1024xf32>
    %c960_i32_101 = arith.constant 960 : i32
    %380 = tpu.dynamic_rotate %304 by %c960_i32_101 dim 1 : vector<2x1024xf32>, i32 -> vector<2x1024xf32>
    %cst_102 = arith.constant 0.000000e+00 : f32
    %381 = vector.shape_cast %178 : vector<1x1024xi1> to vector<1x1024xi1>
    %382 = vector.broadcast %381 : vector<1x1024xi1> to vector<2x1024xi1>
    %383 = vector.broadcast %cst_102 : f32 to vector<2x1024xf32>
    %384 = arith.select %382, %380, %383 : vector<2x1024xi1>, vector<2x1024xf32>
    %c36 = arith.constant 36 : index
    %385 = memref.load %arg6[%c36] : memref<98xf32, #tpu.memory_space<smem>>
    %c85 = arith.constant 85 : index
    %386 = memref.load %arg6[%c85] : memref<98xf32, #tpu.memory_space<smem>>
    %387 = vector.extract_strided_slice %384 {offsets = [0, 0], sizes = [1, 1024], strides = [1, 1]} : vector<2x1024xf32> to vector<1x1024xf32>
    %388 = vector.broadcast %385 : f32 to vector<1x1024xf32>
    %389 = arith.mulf %388, %387 : vector<1x1024xf32>
    %390 = arith.addf %379, %389 : vector<1x1024xf32>
    %391 = vector.extract_strided_slice %384 {offsets = [1, 0], sizes = [1, 1024], strides = [1, 1]} : vector<2x1024xf32> to vector<1x1024xf32>
    %392 = vector.broadcast %386 : f32 to vector<1x1024xf32>
    %393 = arith.mulf %392, %391 : vector<1x1024xf32>
    %394 = arith.addf %390, %393 : vector<1x1024xf32>
    %c928_i32_103 = arith.constant 928 : i32
    %395 = tpu.dynamic_rotate %304 by %c928_i32_103 dim 1 : vector<2x1024xf32>, i32 -> vector<2x1024xf32>
    %cst_104 = arith.constant 0.000000e+00 : f32
    %396 = vector.shape_cast %187 : vector<1x1024xi1> to vector<1x1024xi1>
    %397 = vector.broadcast %396 : vector<1x1024xi1> to vector<2x1024xi1>
    %398 = vector.broadcast %cst_104 : f32 to vector<2x1024xf32>
    %399 = arith.select %397, %395, %398 : vector<2x1024xi1>, vector<2x1024xf32>
    %c43 = arith.constant 43 : index
    %400 = memref.load %arg6[%c43] : memref<98xf32, #tpu.memory_space<smem>>
    %c92 = arith.constant 92 : index
    %401 = memref.load %arg6[%c92] : memref<98xf32, #tpu.memory_space<smem>>
    %402 = vector.extract_strided_slice %399 {offsets = [0, 0], sizes = [1, 1024], strides = [1, 1]} : vector<2x1024xf32> to vector<1x1024xf32>
    %403 = vector.broadcast %400 : f32 to vector<1x1024xf32>
    %404 = arith.mulf %403, %402 : vector<1x1024xf32>
    %405 = arith.addf %394, %404 : vector<1x1024xf32>
    %406 = vector.extract_strided_slice %399 {offsets = [1, 0], sizes = [1, 1024], strides = [1, 1]} : vector<2x1024xf32> to vector<1x1024xf32>
    %407 = vector.broadcast %401 : f32 to vector<1x1024xf32>
    %408 = arith.mulf %407, %406 : vector<1x1024xf32>
    %409 = arith.addf %405, %408 : vector<1x1024xf32>
    %c1_i32 = arith.constant 1 : i32
    %410 = tpu.dynamic_rotate %51 by %c1_i32 dim 1 : vector<2x1024xf32>, i32 -> vector<2x1024xf32>
    %cst_105 = arith.constant 0.000000e+00 : f32
    %411 = vector.shape_cast %88 : vector<1x1024xi1> to vector<1x1024xi1>
    %412 = vector.broadcast %411 : vector<1x1024xi1> to vector<2x1024xi1>
    %413 = vector.broadcast %cst_105 : f32 to vector<2x1024xf32>
    %414 = arith.select %412, %410, %413 : vector<2x1024xi1>, vector<2x1024xf32>
    %c96_i32_106 = arith.constant 96 : i32
    %415 = tpu.dynamic_rotate %414 by %c96_i32_106 dim 1 : vector<2x1024xf32>, i32 -> vector<2x1024xf32>
    %cst_107 = arith.constant 0.000000e+00 : f32
    %416 = vector.shape_cast %133 : vector<1x1024xi1> to vector<1x1024xi1>
    %417 = vector.broadcast %416 : vector<1x1024xi1> to vector<2x1024xi1>
    %418 = vector.broadcast %cst_107 : f32 to vector<2x1024xf32>
    %419 = arith.select %417, %415, %418 : vector<2x1024xi1>, vector<2x1024xf32>
    %c2 = arith.constant 2 : index
    %420 = memref.load %arg6[%c2] : memref<98xf32, #tpu.memory_space<smem>>
    %c51 = arith.constant 51 : index
    %421 = memref.load %arg6[%c51] : memref<98xf32, #tpu.memory_space<smem>>
    %422 = vector.extract_strided_slice %419 {offsets = [0, 0], sizes = [1, 1024], strides = [1, 1]} : vector<2x1024xf32> to vector<1x1024xf32>
    %423 = vector.broadcast %420 : f32 to vector<1x1024xf32>
    %424 = arith.mulf %423, %422 : vector<1x1024xf32>
    %425 = arith.addf %409, %424 : vector<1x1024xf32>
    %426 = vector.extract_strided_slice %419 {offsets = [1, 0], sizes = [1, 1024], strides = [1, 1]} : vector<2x1024xf32> to vector<1x1024xf32>
    %427 = vector.broadcast %421 : f32 to vector<1x1024xf32>
    %428 = arith.mulf %427, %426 : vector<1x1024xf32>
    %429 = arith.addf %425, %428 : vector<1x1024xf32>
    %c64_i32_108 = arith.constant 64 : i32
    %430 = tpu.dynamic_rotate %414 by %c64_i32_108 dim 1 : vector<2x1024xf32>, i32 -> vector<2x1024xf32>
    %cst_109 = arith.constant 0.000000e+00 : f32
    %431 = vector.shape_cast %142 : vector<1x1024xi1> to vector<1x1024xi1>
    %432 = vector.broadcast %431 : vector<1x1024xi1> to vector<2x1024xi1>
    %433 = vector.broadcast %cst_109 : f32 to vector<2x1024xf32>
    %434 = arith.select %432, %430, %433 : vector<2x1024xi1>, vector<2x1024xf32>
    %c9 = arith.constant 9 : index
    %435 = memref.load %arg6[%c9] : memref<98xf32, #tpu.memory_space<smem>>
    %c58 = arith.constant 58 : index
    %436 = memref.load %arg6[%c58] : memref<98xf32, #tpu.memory_space<smem>>
    %437 = vector.extract_strided_slice %434 {offsets = [0, 0], sizes = [1, 1024], strides = [1, 1]} : vector<2x1024xf32> to vector<1x1024xf32>
    %438 = vector.broadcast %435 : f32 to vector<1x1024xf32>
    %439 = arith.mulf %438, %437 : vector<1x1024xf32>
    %440 = arith.addf %429, %439 : vector<1x1024xf32>
    %441 = vector.extract_strided_slice %434 {offsets = [1, 0], sizes = [1, 1024], strides = [1, 1]} : vector<2x1024xf32> to vector<1x1024xf32>
    %442 = vector.broadcast %436 : f32 to vector<1x1024xf32>
    %443 = arith.mulf %442, %441 : vector<1x1024xf32>
    %444 = arith.addf %440, %443 : vector<1x1024xf32>
    %c32_i32_110 = arith.constant 32 : i32
    %445 = tpu.dynamic_rotate %414 by %c32_i32_110 dim 1 : vector<2x1024xf32>, i32 -> vector<2x1024xf32>
    %cst_111 = arith.constant 0.000000e+00 : f32
    %446 = vector.shape_cast %151 : vector<1x1024xi1> to vector<1x1024xi1>
    %447 = vector.broadcast %446 : vector<1x1024xi1> to vector<2x1024xi1>
    %448 = vector.broadcast %cst_111 : f32 to vector<2x1024xf32>
    %449 = arith.select %447, %445, %448 : vector<2x1024xi1>, vector<2x1024xf32>
    %c16 = arith.constant 16 : index
    %450 = memref.load %arg6[%c16] : memref<98xf32, #tpu.memory_space<smem>>
    %c65 = arith.constant 65 : index
    %451 = memref.load %arg6[%c65] : memref<98xf32, #tpu.memory_space<smem>>
    %452 = vector.extract_strided_slice %449 {offsets = [0, 0], sizes = [1, 1024], strides = [1, 1]} : vector<2x1024xf32> to vector<1x1024xf32>
    %453 = vector.broadcast %450 : f32 to vector<1x1024xf32>
    %454 = arith.mulf %453, %452 : vector<1x1024xf32>
    %455 = arith.addf %444, %454 : vector<1x1024xf32>
    %456 = vector.extract_strided_slice %449 {offsets = [1, 0], sizes = [1, 1024], strides = [1, 1]} : vector<2x1024xf32> to vector<1x1024xf32>
    %457 = vector.broadcast %451 : f32 to vector<1x1024xf32>
    %458 = arith.mulf %457, %456 : vector<1x1024xf32>
    %459 = arith.addf %455, %458 : vector<1x1024xf32>
    %c0_i32_112 = arith.constant 0 : i32
    %460 = tpu.dynamic_rotate %414 by %c0_i32_112 dim 1 : vector<2x1024xf32>, i32 -> vector<2x1024xf32>
    %cst_113 = arith.constant 0.000000e+00 : f32
    %461 = vector.shape_cast %160 : vector<1x1024xi1> to vector<1x1024xi1>
    %462 = vector.broadcast %461 : vector<1x1024xi1> to vector<2x1024xi1>
    %463 = vector.broadcast %cst_113 : f32 to vector<2x1024xf32>
    %464 = arith.select %462, %460, %463 : vector<2x1024xi1>, vector<2x1024xf32>
    %c23 = arith.constant 23 : index
    %465 = memref.load %arg6[%c23] : memref<98xf32, #tpu.memory_space<smem>>
    %c72 = arith.constant 72 : index
    %466 = memref.load %arg6[%c72] : memref<98xf32, #tpu.memory_space<smem>>
    %467 = vector.extract_strided_slice %464 {offsets = [0, 0], sizes = [1, 1024], strides = [1, 1]} : vector<2x1024xf32> to vector<1x1024xf32>
    %468 = vector.broadcast %465 : f32 to vector<1x1024xf32>
    %469 = arith.mulf %468, %467 : vector<1x1024xf32>
    %470 = arith.addf %459, %469 : vector<1x1024xf32>
    %471 = vector.extract_strided_slice %464 {offsets = [1, 0], sizes = [1, 1024], strides = [1, 1]} : vector<2x1024xf32> to vector<1x1024xf32>
    %472 = vector.broadcast %466 : f32 to vector<1x1024xf32>
    %473 = arith.mulf %472, %471 : vector<1x1024xf32>
    %474 = arith.addf %470, %473 : vector<1x1024xf32>
    %c992_i32_114 = arith.constant 992 : i32
    %475 = tpu.dynamic_rotate %414 by %c992_i32_114 dim 1 : vector<2x1024xf32>, i32 -> vector<2x1024xf32>
    %cst_115 = arith.constant 0.000000e+00 : f32
    %476 = vector.shape_cast %169 : vector<1x1024xi1> to vector<1x1024xi1>
    %477 = vector.broadcast %476 : vector<1x1024xi1> to vector<2x1024xi1>
    %478 = vector.broadcast %cst_115 : f32 to vector<2x1024xf32>
    %479 = arith.select %477, %475, %478 : vector<2x1024xi1>, vector<2x1024xf32>
    %c30 = arith.constant 30 : index
    %480 = memref.load %arg6[%c30] : memref<98xf32, #tpu.memory_space<smem>>
    %c79 = arith.constant 79 : index
    %481 = memref.load %arg6[%c79] : memref<98xf32, #tpu.memory_space<smem>>
    %482 = vector.extract_strided_slice %479 {offsets = [0, 0], sizes = [1, 1024], strides = [1, 1]} : vector<2x1024xf32> to vector<1x1024xf32>
    %483 = vector.broadcast %480 : f32 to vector<1x1024xf32>
    %484 = arith.mulf %483, %482 : vector<1x1024xf32>
    %485 = arith.addf %474, %484 : vector<1x1024xf32>
    %486 = vector.extract_strided_slice %479 {offsets = [1, 0], sizes = [1, 1024], strides = [1, 1]} : vector<2x1024xf32> to vector<1x1024xf32>
    %487 = vector.broadcast %481 : f32 to vector<1x1024xf32>
    %488 = arith.mulf %487, %486 : vector<1x1024xf32>
    %489 = arith.addf %485, %488 : vector<1x1024xf32>
    %c960_i32_116 = arith.constant 960 : i32
    %490 = tpu.dynamic_rotate %414 by %c960_i32_116 dim 1 : vector<2x1024xf32>, i32 -> vector<2x1024xf32>
    %cst_117 = arith.constant 0.000000e+00 : f32
    %491 = vector.shape_cast %178 : vector<1x1024xi1> to vector<1x1024xi1>
    %492 = vector.broadcast %491 : vector<1x1024xi1> to vector<2x1024xi1>
    %493 = vector.broadcast %cst_117 : f32 to vector<2x1024xf32>
    %494 = arith.select %492, %490, %493 : vector<2x1024xi1>, vector<2x1024xf32>
    %c37 = arith.constant 37 : index
    %495 = memref.load %arg6[%c37] : memref<98xf32, #tpu.memory_space<smem>>
    %c86 = arith.constant 86 : index
    %496 = memref.load %arg6[%c86] : memref<98xf32, #tpu.memory_space<smem>>
    %497 = vector.extract_strided_slice %494 {offsets = [0, 0], sizes = [1, 1024], strides = [1, 1]} : vector<2x1024xf32> to vector<1x1024xf32>
    %498 = vector.broadcast %495 : f32 to vector<1x1024xf32>
    %499 = arith.mulf %498, %497 : vector<1x1024xf32>
    %500 = arith.addf %489, %499 : vector<1x1024xf32>
    %501 = vector.extract_strided_slice %494 {offsets = [1, 0], sizes = [1, 1024], strides = [1, 1]} : vector<2x1024xf32> to vector<1x1024xf32>
    %502 = vector.broadcast %496 : f32 to vector<1x1024xf32>
    %503 = arith.mulf %502, %501 : vector<1x1024xf32>
    %504 = arith.addf %500, %503 : vector<1x1024xf32>
    %c928_i32_118 = arith.constant 928 : i32
    %505 = tpu.dynamic_rotate %414 by %c928_i32_118 dim 1 : vector<2x1024xf32>, i32 -> vector<2x1024xf32>
    %cst_119 = arith.constant 0.000000e+00 : f32
    %506 = vector.shape_cast %187 : vector<1x1024xi1> to vector<1x1024xi1>
    %507 = vector.broadcast %506 : vector<1x1024xi1> to vector<2x1024xi1>
    %508 = vector.broadcast %cst_119 : f32 to vector<2x1024xf32>
    %509 = arith.select %507, %505, %508 : vector<2x1024xi1>, vector<2x1024xf32>
    %c44 = arith.constant 44 : index
    %510 = memref.load %arg6[%c44] : memref<98xf32, #tpu.memory_space<smem>>
    %c93 = arith.constant 93 : index
    %511 = memref.load %arg6[%c93] : memref<98xf32, #tpu.memory_space<smem>>
    %512 = vector.extract_strided_slice %509 {offsets = [0, 0], sizes = [1, 1024], strides = [1, 1]} : vector<2x1024xf32> to vector<1x1024xf32>
    %513 = vector.broadcast %510 : f32 to vector<1x1024xf32>
    %514 = arith.mulf %513, %512 : vector<1x1024xf32>
    %515 = arith.addf %504, %514 : vector<1x1024xf32>
    %516 = vector.extract_strided_slice %509 {offsets = [1, 0], sizes = [1, 1024], strides = [1, 1]} : vector<2x1024xf32> to vector<1x1024xf32>
    %517 = vector.broadcast %511 : f32 to vector<1x1024xf32>
    %518 = arith.mulf %517, %516 : vector<1x1024xf32>
    %519 = arith.addf %515, %518 : vector<1x1024xf32>
    %c0_i32_120 = arith.constant 0 : i32
    %520 = tpu.dynamic_rotate %51 by %c0_i32_120 dim 1 : vector<2x1024xf32>, i32 -> vector<2x1024xf32>
    %cst_121 = arith.constant 0.000000e+00 : f32
    %521 = vector.shape_cast %97 : vector<1x1024xi1> to vector<1x1024xi1>
    %522 = vector.broadcast %521 : vector<1x1024xi1> to vector<2x1024xi1>
    %523 = vector.broadcast %cst_121 : f32 to vector<2x1024xf32>
    %524 = arith.select %522, %520, %523 : vector<2x1024xi1>, vector<2x1024xf32>
    %c96_i32_122 = arith.constant 96 : i32
    %525 = tpu.dynamic_rotate %524 by %c96_i32_122 dim 1 : vector<2x1024xf32>, i32 -> vector<2x1024xf32>
    %cst_123 = arith.constant 0.000000e+00 : f32
    %526 = vector.shape_cast %133 : vector<1x1024xi1> to vector<1x1024xi1>
    %527 = vector.broadcast %526 : vector<1x1024xi1> to vector<2x1024xi1>
    %528 = vector.broadcast %cst_123 : f32 to vector<2x1024xf32>
    %529 = arith.select %527, %525, %528 : vector<2x1024xi1>, vector<2x1024xf32>
    %c3 = arith.constant 3 : index
    %530 = memref.load %arg6[%c3] : memref<98xf32, #tpu.memory_space<smem>>
    %c52 = arith.constant 52 : index
    %531 = memref.load %arg6[%c52] : memref<98xf32, #tpu.memory_space<smem>>
    %532 = vector.extract_strided_slice %529 {offsets = [0, 0], sizes = [1, 1024], strides = [1, 1]} : vector<2x1024xf32> to vector<1x1024xf32>
    %533 = vector.broadcast %530 : f32 to vector<1x1024xf32>
    %534 = arith.mulf %533, %532 : vector<1x1024xf32>
    %535 = arith.addf %519, %534 : vector<1x1024xf32>
    %536 = vector.extract_strided_slice %529 {offsets = [1, 0], sizes = [1, 1024], strides = [1, 1]} : vector<2x1024xf32> to vector<1x1024xf32>
    %537 = vector.broadcast %531 : f32 to vector<1x1024xf32>
    %538 = arith.mulf %537, %536 : vector<1x1024xf32>
    %539 = arith.addf %535, %538 : vector<1x1024xf32>
    %c64_i32_124 = arith.constant 64 : i32
    %540 = tpu.dynamic_rotate %524 by %c64_i32_124 dim 1 : vector<2x1024xf32>, i32 -> vector<2x1024xf32>
    %cst_125 = arith.constant 0.000000e+00 : f32
    %541 = vector.shape_cast %142 : vector<1x1024xi1> to vector<1x1024xi1>
    %542 = vector.broadcast %541 : vector<1x1024xi1> to vector<2x1024xi1>
    %543 = vector.broadcast %cst_125 : f32 to vector<2x1024xf32>
    %544 = arith.select %542, %540, %543 : vector<2x1024xi1>, vector<2x1024xf32>
    %c10 = arith.constant 10 : index
    %545 = memref.load %arg6[%c10] : memref<98xf32, #tpu.memory_space<smem>>
    %c59 = arith.constant 59 : index
    %546 = memref.load %arg6[%c59] : memref<98xf32, #tpu.memory_space<smem>>
    %547 = vector.extract_strided_slice %544 {offsets = [0, 0], sizes = [1, 1024], strides = [1, 1]} : vector<2x1024xf32> to vector<1x1024xf32>
    %548 = vector.broadcast %545 : f32 to vector<1x1024xf32>
    %549 = arith.mulf %548, %547 : vector<1x1024xf32>
    %550 = arith.addf %539, %549 : vector<1x1024xf32>
    %551 = vector.extract_strided_slice %544 {offsets = [1, 0], sizes = [1, 1024], strides = [1, 1]} : vector<2x1024xf32> to vector<1x1024xf32>
    %552 = vector.broadcast %546 : f32 to vector<1x1024xf32>
    %553 = arith.mulf %552, %551 : vector<1x1024xf32>
    %554 = arith.addf %550, %553 : vector<1x1024xf32>
    %c32_i32_126 = arith.constant 32 : i32
    %555 = tpu.dynamic_rotate %524 by %c32_i32_126 dim 1 : vector<2x1024xf32>, i32 -> vector<2x1024xf32>
    %cst_127 = arith.constant 0.000000e+00 : f32
    %556 = vector.shape_cast %151 : vector<1x1024xi1> to vector<1x1024xi1>
    %557 = vector.broadcast %556 : vector<1x1024xi1> to vector<2x1024xi1>
    %558 = vector.broadcast %cst_127 : f32 to vector<2x1024xf32>
    %559 = arith.select %557, %555, %558 : vector<2x1024xi1>, vector<2x1024xf32>
    %c17 = arith.constant 17 : index
    %560 = memref.load %arg6[%c17] : memref<98xf32, #tpu.memory_space<smem>>
    %c66 = arith.constant 66 : index
    %561 = memref.load %arg6[%c66] : memref<98xf32, #tpu.memory_space<smem>>
    %562 = vector.extract_strided_slice %559 {offsets = [0, 0], sizes = [1, 1024], strides = [1, 1]} : vector<2x1024xf32> to vector<1x1024xf32>
    %563 = vector.broadcast %560 : f32 to vector<1x1024xf32>
    %564 = arith.mulf %563, %562 : vector<1x1024xf32>
    %565 = arith.addf %554, %564 : vector<1x1024xf32>
    %566 = vector.extract_strided_slice %559 {offsets = [1, 0], sizes = [1, 1024], strides = [1, 1]} : vector<2x1024xf32> to vector<1x1024xf32>
    %567 = vector.broadcast %561 : f32 to vector<1x1024xf32>
    %568 = arith.mulf %567, %566 : vector<1x1024xf32>
    %569 = arith.addf %565, %568 : vector<1x1024xf32>
    %c0_i32_128 = arith.constant 0 : i32
    %570 = tpu.dynamic_rotate %524 by %c0_i32_128 dim 1 : vector<2x1024xf32>, i32 -> vector<2x1024xf32>
    %cst_129 = arith.constant 0.000000e+00 : f32
    %571 = vector.shape_cast %160 : vector<1x1024xi1> to vector<1x1024xi1>
    %572 = vector.broadcast %571 : vector<1x1024xi1> to vector<2x1024xi1>
    %573 = vector.broadcast %cst_129 : f32 to vector<2x1024xf32>
    %574 = arith.select %572, %570, %573 : vector<2x1024xi1>, vector<2x1024xf32>
    %c24 = arith.constant 24 : index
    %575 = memref.load %arg6[%c24] : memref<98xf32, #tpu.memory_space<smem>>
    %c73 = arith.constant 73 : index
    %576 = memref.load %arg6[%c73] : memref<98xf32, #tpu.memory_space<smem>>
    %577 = vector.extract_strided_slice %574 {offsets = [0, 0], sizes = [1, 1024], strides = [1, 1]} : vector<2x1024xf32> to vector<1x1024xf32>
    %578 = vector.broadcast %575 : f32 to vector<1x1024xf32>
    %579 = arith.mulf %578, %577 : vector<1x1024xf32>
    %580 = arith.addf %569, %579 : vector<1x1024xf32>
    %581 = vector.extract_strided_slice %574 {offsets = [1, 0], sizes = [1, 1024], strides = [1, 1]} : vector<2x1024xf32> to vector<1x1024xf32>
    %582 = vector.broadcast %576 : f32 to vector<1x1024xf32>
    %583 = arith.mulf %582, %581 : vector<1x1024xf32>
    %584 = arith.addf %580, %583 : vector<1x1024xf32>
    %c992_i32_130 = arith.constant 992 : i32
    %585 = tpu.dynamic_rotate %524 by %c992_i32_130 dim 1 : vector<2x1024xf32>, i32 -> vector<2x1024xf32>
    %cst_131 = arith.constant 0.000000e+00 : f32
    %586 = vector.shape_cast %169 : vector<1x1024xi1> to vector<1x1024xi1>
    %587 = vector.broadcast %586 : vector<1x1024xi1> to vector<2x1024xi1>
    %588 = vector.broadcast %cst_131 : f32 to vector<2x1024xf32>
    %589 = arith.select %587, %585, %588 : vector<2x1024xi1>, vector<2x1024xf32>
    %c31 = arith.constant 31 : index
    %590 = memref.load %arg6[%c31] : memref<98xf32, #tpu.memory_space<smem>>
    %c80 = arith.constant 80 : index
    %591 = memref.load %arg6[%c80] : memref<98xf32, #tpu.memory_space<smem>>
    %592 = vector.extract_strided_slice %589 {offsets = [0, 0], sizes = [1, 1024], strides = [1, 1]} : vector<2x1024xf32> to vector<1x1024xf32>
    %593 = vector.broadcast %590 : f32 to vector<1x1024xf32>
    %594 = arith.mulf %593, %592 : vector<1x1024xf32>
    %595 = arith.addf %584, %594 : vector<1x1024xf32>
    %596 = vector.extract_strided_slice %589 {offsets = [1, 0], sizes = [1, 1024], strides = [1, 1]} : vector<2x1024xf32> to vector<1x1024xf32>
    %597 = vector.broadcast %591 : f32 to vector<1x1024xf32>
    %598 = arith.mulf %597, %596 : vector<1x1024xf32>
    %599 = arith.addf %595, %598 : vector<1x1024xf32>
    %c960_i32_132 = arith.constant 960 : i32
    %600 = tpu.dynamic_rotate %524 by %c960_i32_132 dim 1 : vector<2x1024xf32>, i32 -> vector<2x1024xf32>
    %cst_133 = arith.constant 0.000000e+00 : f32
    %601 = vector.shape_cast %178 : vector<1x1024xi1> to vector<1x1024xi1>
    %602 = vector.broadcast %601 : vector<1x1024xi1> to vector<2x1024xi1>
    %603 = vector.broadcast %cst_133 : f32 to vector<2x1024xf32>
    %604 = arith.select %602, %600, %603 : vector<2x1024xi1>, vector<2x1024xf32>
    %c38 = arith.constant 38 : index
    %605 = memref.load %arg6[%c38] : memref<98xf32, #tpu.memory_space<smem>>
    %c87 = arith.constant 87 : index
    %606 = memref.load %arg6[%c87] : memref<98xf32, #tpu.memory_space<smem>>
    %607 = vector.extract_strided_slice %604 {offsets = [0, 0], sizes = [1, 1024], strides = [1, 1]} : vector<2x1024xf32> to vector<1x1024xf32>
    %608 = vector.broadcast %605 : f32 to vector<1x1024xf32>
    %609 = arith.mulf %608, %607 : vector<1x1024xf32>
    %610 = arith.addf %599, %609 : vector<1x1024xf32>
    %611 = vector.extract_strided_slice %604 {offsets = [1, 0], sizes = [1, 1024], strides = [1, 1]} : vector<2x1024xf32> to vector<1x1024xf32>
    %612 = vector.broadcast %606 : f32 to vector<1x1024xf32>
    %613 = arith.mulf %612, %611 : vector<1x1024xf32>
    %614 = arith.addf %610, %613 : vector<1x1024xf32>
    %c928_i32_134 = arith.constant 928 : i32
    %615 = tpu.dynamic_rotate %524 by %c928_i32_134 dim 1 : vector<2x1024xf32>, i32 -> vector<2x1024xf32>
    %cst_135 = arith.constant 0.000000e+00 : f32
    %616 = vector.shape_cast %187 : vector<1x1024xi1> to vector<1x1024xi1>
    %617 = vector.broadcast %616 : vector<1x1024xi1> to vector<2x1024xi1>
    %618 = vector.broadcast %cst_135 : f32 to vector<2x1024xf32>
    %619 = arith.select %617, %615, %618 : vector<2x1024xi1>, vector<2x1024xf32>
    %c45 = arith.constant 45 : index
    %620 = memref.load %arg6[%c45] : memref<98xf32, #tpu.memory_space<smem>>
    %c94 = arith.constant 94 : index
    %621 = memref.load %arg6[%c94] : memref<98xf32, #tpu.memory_space<smem>>
    %622 = vector.extract_strided_slice %619 {offsets = [0, 0], sizes = [1, 1024], strides = [1, 1]} : vector<2x1024xf32> to vector<1x1024xf32>
    %623 = vector.broadcast %620 : f32 to vector<1x1024xf32>
    %624 = arith.mulf %623, %622 : vector<1x1024xf32>
    %625 = arith.addf %614, %624 : vector<1x1024xf32>
    %626 = vector.extract_strided_slice %619 {offsets = [1, 0], sizes = [1, 1024], strides = [1, 1]} : vector<2x1024xf32> to vector<1x1024xf32>
    %627 = vector.broadcast %621 : f32 to vector<1x1024xf32>
    %628 = arith.mulf %627, %626 : vector<1x1024xf32>
    %629 = arith.addf %625, %628 : vector<1x1024xf32>
    %c1023_i32 = arith.constant 1023 : i32
    %630 = tpu.dynamic_rotate %51 by %c1023_i32 dim 1 : vector<2x1024xf32>, i32 -> vector<2x1024xf32>
    %cst_136 = arith.constant 0.000000e+00 : f32
    %631 = vector.shape_cast %106 : vector<1x1024xi1> to vector<1x1024xi1>
    %632 = vector.broadcast %631 : vector<1x1024xi1> to vector<2x1024xi1>
    %633 = vector.broadcast %cst_136 : f32 to vector<2x1024xf32>
    %634 = arith.select %632, %630, %633 : vector<2x1024xi1>, vector<2x1024xf32>
    %c96_i32_137 = arith.constant 96 : i32
    %635 = tpu.dynamic_rotate %634 by %c96_i32_137 dim 1 : vector<2x1024xf32>, i32 -> vector<2x1024xf32>
    %cst_138 = arith.constant 0.000000e+00 : f32
    %636 = vector.shape_cast %133 : vector<1x1024xi1> to vector<1x1024xi1>
    %637 = vector.broadcast %636 : vector<1x1024xi1> to vector<2x1024xi1>
    %638 = vector.broadcast %cst_138 : f32 to vector<2x1024xf32>
    %639 = arith.select %637, %635, %638 : vector<2x1024xi1>, vector<2x1024xf32>
    %c4 = arith.constant 4 : index
    %640 = memref.load %arg6[%c4] : memref<98xf32, #tpu.memory_space<smem>>
    %c53 = arith.constant 53 : index
    %641 = memref.load %arg6[%c53] : memref<98xf32, #tpu.memory_space<smem>>
    %642 = vector.extract_strided_slice %639 {offsets = [0, 0], sizes = [1, 1024], strides = [1, 1]} : vector<2x1024xf32> to vector<1x1024xf32>
    %643 = vector.broadcast %640 : f32 to vector<1x1024xf32>
    %644 = arith.mulf %643, %642 : vector<1x1024xf32>
    %645 = arith.addf %629, %644 : vector<1x1024xf32>
    %646 = vector.extract_strided_slice %639 {offsets = [1, 0], sizes = [1, 1024], strides = [1, 1]} : vector<2x1024xf32> to vector<1x1024xf32>
    %647 = vector.broadcast %641 : f32 to vector<1x1024xf32>
    %648 = arith.mulf %647, %646 : vector<1x1024xf32>
    %649 = arith.addf %645, %648 : vector<1x1024xf32>
    %c64_i32_139 = arith.constant 64 : i32
    %650 = tpu.dynamic_rotate %634 by %c64_i32_139 dim 1 : vector<2x1024xf32>, i32 -> vector<2x1024xf32>
    %cst_140 = arith.constant 0.000000e+00 : f32
    %651 = vector.shape_cast %142 : vector<1x1024xi1> to vector<1x1024xi1>
    %652 = vector.broadcast %651 : vector<1x1024xi1> to vector<2x1024xi1>
    %653 = vector.broadcast %cst_140 : f32 to vector<2x1024xf32>
    %654 = arith.select %652, %650, %653 : vector<2x1024xi1>, vector<2x1024xf32>
    %c11 = arith.constant 11 : index
    %655 = memref.load %arg6[%c11] : memref<98xf32, #tpu.memory_space<smem>>
    %c60 = arith.constant 60 : index
    %656 = memref.load %arg6[%c60] : memref<98xf32, #tpu.memory_space<smem>>
    %657 = vector.extract_strided_slice %654 {offsets = [0, 0], sizes = [1, 1024], strides = [1, 1]} : vector<2x1024xf32> to vector<1x1024xf32>
    %658 = vector.broadcast %655 : f32 to vector<1x1024xf32>
    %659 = arith.mulf %658, %657 : vector<1x1024xf32>
    %660 = arith.addf %649, %659 : vector<1x1024xf32>
    %661 = vector.extract_strided_slice %654 {offsets = [1, 0], sizes = [1, 1024], strides = [1, 1]} : vector<2x1024xf32> to vector<1x1024xf32>
    %662 = vector.broadcast %656 : f32 to vector<1x1024xf32>
    %663 = arith.mulf %662, %661 : vector<1x1024xf32>
    %664 = arith.addf %660, %663 : vector<1x1024xf32>
    %c32_i32_141 = arith.constant 32 : i32
    %665 = tpu.dynamic_rotate %634 by %c32_i32_141 dim 1 : vector<2x1024xf32>, i32 -> vector<2x1024xf32>
    %cst_142 = arith.constant 0.000000e+00 : f32
    %666 = vector.shape_cast %151 : vector<1x1024xi1> to vector<1x1024xi1>
    %667 = vector.broadcast %666 : vector<1x1024xi1> to vector<2x1024xi1>
    %668 = vector.broadcast %cst_142 : f32 to vector<2x1024xf32>
    %669 = arith.select %667, %665, %668 : vector<2x1024xi1>, vector<2x1024xf32>
    %c18 = arith.constant 18 : index
    %670 = memref.load %arg6[%c18] : memref<98xf32, #tpu.memory_space<smem>>
    %c67 = arith.constant 67 : index
    %671 = memref.load %arg6[%c67] : memref<98xf32, #tpu.memory_space<smem>>
    %672 = vector.extract_strided_slice %669 {offsets = [0, 0], sizes = [1, 1024], strides = [1, 1]} : vector<2x1024xf32> to vector<1x1024xf32>
    %673 = vector.broadcast %670 : f32 to vector<1x1024xf32>
    %674 = arith.mulf %673, %672 : vector<1x1024xf32>
    %675 = arith.addf %664, %674 : vector<1x1024xf32>
    %676 = vector.extract_strided_slice %669 {offsets = [1, 0], sizes = [1, 1024], strides = [1, 1]} : vector<2x1024xf32> to vector<1x1024xf32>
    %677 = vector.broadcast %671 : f32 to vector<1x1024xf32>
    %678 = arith.mulf %677, %676 : vector<1x1024xf32>
    %679 = arith.addf %675, %678 : vector<1x1024xf32>
    %c0_i32_143 = arith.constant 0 : i32
    %680 = tpu.dynamic_rotate %634 by %c0_i32_143 dim 1 : vector<2x1024xf32>, i32 -> vector<2x1024xf32>
    %cst_144 = arith.constant 0.000000e+00 : f32
    %681 = vector.shape_cast %160 : vector<1x1024xi1> to vector<1x1024xi1>
    %682 = vector.broadcast %681 : vector<1x1024xi1> to vector<2x1024xi1>
    %683 = vector.broadcast %cst_144 : f32 to vector<2x1024xf32>
    %684 = arith.select %682, %680, %683 : vector<2x1024xi1>, vector<2x1024xf32>
    %c25 = arith.constant 25 : index
    %685 = memref.load %arg6[%c25] : memref<98xf32, #tpu.memory_space<smem>>
    %c74 = arith.constant 74 : index
    %686 = memref.load %arg6[%c74] : memref<98xf32, #tpu.memory_space<smem>>
    %687 = vector.extract_strided_slice %684 {offsets = [0, 0], sizes = [1, 1024], strides = [1, 1]} : vector<2x1024xf32> to vector<1x1024xf32>
    %688 = vector.broadcast %685 : f32 to vector<1x1024xf32>
    %689 = arith.mulf %688, %687 : vector<1x1024xf32>
    %690 = arith.addf %679, %689 : vector<1x1024xf32>
    %691 = vector.extract_strided_slice %684 {offsets = [1, 0], sizes = [1, 1024], strides = [1, 1]} : vector<2x1024xf32> to vector<1x1024xf32>
    %692 = vector.broadcast %686 : f32 to vector<1x1024xf32>
    %693 = arith.mulf %692, %691 : vector<1x1024xf32>
    %694 = arith.addf %690, %693 : vector<1x1024xf32>
    %c992_i32_145 = arith.constant 992 : i32
    %695 = tpu.dynamic_rotate %634 by %c992_i32_145 dim 1 : vector<2x1024xf32>, i32 -> vector<2x1024xf32>
    %cst_146 = arith.constant 0.000000e+00 : f32
    %696 = vector.shape_cast %169 : vector<1x1024xi1> to vector<1x1024xi1>
    %697 = vector.broadcast %696 : vector<1x1024xi1> to vector<2x1024xi1>
    %698 = vector.broadcast %cst_146 : f32 to vector<2x1024xf32>
    %699 = arith.select %697, %695, %698 : vector<2x1024xi1>, vector<2x1024xf32>
    %c32 = arith.constant 32 : index
    %700 = memref.load %arg6[%c32] : memref<98xf32, #tpu.memory_space<smem>>
    %c81 = arith.constant 81 : index
    %701 = memref.load %arg6[%c81] : memref<98xf32, #tpu.memory_space<smem>>
    %702 = vector.extract_strided_slice %699 {offsets = [0, 0], sizes = [1, 1024], strides = [1, 1]} : vector<2x1024xf32> to vector<1x1024xf32>
    %703 = vector.broadcast %700 : f32 to vector<1x1024xf32>
    %704 = arith.mulf %703, %702 : vector<1x1024xf32>
    %705 = arith.addf %694, %704 : vector<1x1024xf32>
    %706 = vector.extract_strided_slice %699 {offsets = [1, 0], sizes = [1, 1024], strides = [1, 1]} : vector<2x1024xf32> to vector<1x1024xf32>
    %707 = vector.broadcast %701 : f32 to vector<1x1024xf32>
    %708 = arith.mulf %707, %706 : vector<1x1024xf32>
    %709 = arith.addf %705, %708 : vector<1x1024xf32>
    %c960_i32_147 = arith.constant 960 : i32
    %710 = tpu.dynamic_rotate %634 by %c960_i32_147 dim 1 : vector<2x1024xf32>, i32 -> vector<2x1024xf32>
    %cst_148 = arith.constant 0.000000e+00 : f32
    %711 = vector.shape_cast %178 : vector<1x1024xi1> to vector<1x1024xi1>
    %712 = vector.broadcast %711 : vector<1x1024xi1> to vector<2x1024xi1>
    %713 = vector.broadcast %cst_148 : f32 to vector<2x1024xf32>
    %714 = arith.select %712, %710, %713 : vector<2x1024xi1>, vector<2x1024xf32>
    %c39 = arith.constant 39 : index
    %715 = memref.load %arg6[%c39] : memref<98xf32, #tpu.memory_space<smem>>
    %c88 = arith.constant 88 : index
    %716 = memref.load %arg6[%c88] : memref<98xf32, #tpu.memory_space<smem>>
    %717 = vector.extract_strided_slice %714 {offsets = [0, 0], sizes = [1, 1024], strides = [1, 1]} : vector<2x1024xf32> to vector<1x1024xf32>
    %718 = vector.broadcast %715 : f32 to vector<1x1024xf32>
    %719 = arith.mulf %718, %717 : vector<1x1024xf32>
    %720 = arith.addf %709, %719 : vector<1x1024xf32>
    %721 = vector.extract_strided_slice %714 {offsets = [1, 0], sizes = [1, 1024], strides = [1, 1]} : vector<2x1024xf32> to vector<1x1024xf32>
    %722 = vector.broadcast %716 : f32 to vector<1x1024xf32>
    %723 = arith.mulf %722, %721 : vector<1x1024xf32>
    %724 = arith.addf %720, %723 : vector<1x1024xf32>
    %c928_i32_149 = arith.constant 928 : i32
    %725 = tpu.dynamic_rotate %634 by %c928_i32_149 dim 1 : vector<2x1024xf32>, i32 -> vector<2x1024xf32>
    %cst_150 = arith.constant 0.000000e+00 : f32
    %726 = vector.shape_cast %187 : vector<1x1024xi1> to vector<1x1024xi1>
    %727 = vector.broadcast %726 : vector<1x1024xi1> to vector<2x1024xi1>
    %728 = vector.broadcast %cst_150 : f32 to vector<2x1024xf32>
    %729 = arith.select %727, %725, %728 : vector<2x1024xi1>, vector<2x1024xf32>
    %c46 = arith.constant 46 : index
    %730 = memref.load %arg6[%c46] : memref<98xf32, #tpu.memory_space<smem>>
    %c95 = arith.constant 95 : index
    %731 = memref.load %arg6[%c95] : memref<98xf32, #tpu.memory_space<smem>>
    %732 = vector.extract_strided_slice %729 {offsets = [0, 0], sizes = [1, 1024], strides = [1, 1]} : vector<2x1024xf32> to vector<1x1024xf32>
    %733 = vector.broadcast %730 : f32 to vector<1x1024xf32>
    %734 = arith.mulf %733, %732 : vector<1x1024xf32>
    %735 = arith.addf %724, %734 : vector<1x1024xf32>
    %736 = vector.extract_strided_slice %729 {offsets = [1, 0], sizes = [1, 1024], strides = [1, 1]} : vector<2x1024xf32> to vector<1x1024xf32>
    %737 = vector.broadcast %731 : f32 to vector<1x1024xf32>
    %738 = arith.mulf %737, %736 : vector<1x1024xf32>
    %739 = arith.addf %735, %738 : vector<1x1024xf32>
    %c1022_i32 = arith.constant 1022 : i32
    %740 = tpu.dynamic_rotate %51 by %c1022_i32 dim 1 : vector<2x1024xf32>, i32 -> vector<2x1024xf32>
    %cst_151 = arith.constant 0.000000e+00 : f32
    %741 = vector.shape_cast %115 : vector<1x1024xi1> to vector<1x1024xi1>
    %742 = vector.broadcast %741 : vector<1x1024xi1> to vector<2x1024xi1>
    %743 = vector.broadcast %cst_151 : f32 to vector<2x1024xf32>
    %744 = arith.select %742, %740, %743 : vector<2x1024xi1>, vector<2x1024xf32>
    %c96_i32_152 = arith.constant 96 : i32
    %745 = tpu.dynamic_rotate %744 by %c96_i32_152 dim 1 : vector<2x1024xf32>, i32 -> vector<2x1024xf32>
    %cst_153 = arith.constant 0.000000e+00 : f32
    %746 = vector.shape_cast %133 : vector<1x1024xi1> to vector<1x1024xi1>
    %747 = vector.broadcast %746 : vector<1x1024xi1> to vector<2x1024xi1>
    %748 = vector.broadcast %cst_153 : f32 to vector<2x1024xf32>
    %749 = arith.select %747, %745, %748 : vector<2x1024xi1>, vector<2x1024xf32>
    %c5 = arith.constant 5 : index
    %750 = memref.load %arg6[%c5] : memref<98xf32, #tpu.memory_space<smem>>
    %c54 = arith.constant 54 : index
    %751 = memref.load %arg6[%c54] : memref<98xf32, #tpu.memory_space<smem>>
    %752 = vector.extract_strided_slice %749 {offsets = [0, 0], sizes = [1, 1024], strides = [1, 1]} : vector<2x1024xf32> to vector<1x1024xf32>
    %753 = vector.broadcast %750 : f32 to vector<1x1024xf32>
    %754 = arith.mulf %753, %752 : vector<1x1024xf32>
    %755 = arith.addf %739, %754 : vector<1x1024xf32>
    %756 = vector.extract_strided_slice %749 {offsets = [1, 0], sizes = [1, 1024], strides = [1, 1]} : vector<2x1024xf32> to vector<1x1024xf32>
    %757 = vector.broadcast %751 : f32 to vector<1x1024xf32>
    %758 = arith.mulf %757, %756 : vector<1x1024xf32>
    %759 = arith.addf %755, %758 : vector<1x1024xf32>
    %c64_i32_154 = arith.constant 64 : i32
    %760 = tpu.dynamic_rotate %744 by %c64_i32_154 dim 1 : vector<2x1024xf32>, i32 -> vector<2x1024xf32>
    %cst_155 = arith.constant 0.000000e+00 : f32
    %761 = vector.shape_cast %142 : vector<1x1024xi1> to vector<1x1024xi1>
    %762 = vector.broadcast %761 : vector<1x1024xi1> to vector<2x1024xi1>
    %763 = vector.broadcast %cst_155 : f32 to vector<2x1024xf32>
    %764 = arith.select %762, %760, %763 : vector<2x1024xi1>, vector<2x1024xf32>
    %c12 = arith.constant 12 : index
    %765 = memref.load %arg6[%c12] : memref<98xf32, #tpu.memory_space<smem>>
    %c61 = arith.constant 61 : index
    %766 = memref.load %arg6[%c61] : memref<98xf32, #tpu.memory_space<smem>>
    %767 = vector.extract_strided_slice %764 {offsets = [0, 0], sizes = [1, 1024], strides = [1, 1]} : vector<2x1024xf32> to vector<1x1024xf32>
    %768 = vector.broadcast %765 : f32 to vector<1x1024xf32>
    %769 = arith.mulf %768, %767 : vector<1x1024xf32>
    %770 = arith.addf %759, %769 : vector<1x1024xf32>
    %771 = vector.extract_strided_slice %764 {offsets = [1, 0], sizes = [1, 1024], strides = [1, 1]} : vector<2x1024xf32> to vector<1x1024xf32>
    %772 = vector.broadcast %766 : f32 to vector<1x1024xf32>
    %773 = arith.mulf %772, %771 : vector<1x1024xf32>
    %774 = arith.addf %770, %773 : vector<1x1024xf32>
    %c32_i32_156 = arith.constant 32 : i32
    %775 = tpu.dynamic_rotate %744 by %c32_i32_156 dim 1 : vector<2x1024xf32>, i32 -> vector<2x1024xf32>
    %cst_157 = arith.constant 0.000000e+00 : f32
    %776 = vector.shape_cast %151 : vector<1x1024xi1> to vector<1x1024xi1>
    %777 = vector.broadcast %776 : vector<1x1024xi1> to vector<2x1024xi1>
    %778 = vector.broadcast %cst_157 : f32 to vector<2x1024xf32>
    %779 = arith.select %777, %775, %778 : vector<2x1024xi1>, vector<2x1024xf32>
    %c19 = arith.constant 19 : index
    %780 = memref.load %arg6[%c19] : memref<98xf32, #tpu.memory_space<smem>>
    %c68 = arith.constant 68 : index
    %781 = memref.load %arg6[%c68] : memref<98xf32, #tpu.memory_space<smem>>
    %782 = vector.extract_strided_slice %779 {offsets = [0, 0], sizes = [1, 1024], strides = [1, 1]} : vector<2x1024xf32> to vector<1x1024xf32>
    %783 = vector.broadcast %780 : f32 to vector<1x1024xf32>
    %784 = arith.mulf %783, %782 : vector<1x1024xf32>
    %785 = arith.addf %774, %784 : vector<1x1024xf32>
    %786 = vector.extract_strided_slice %779 {offsets = [1, 0], sizes = [1, 1024], strides = [1, 1]} : vector<2x1024xf32> to vector<1x1024xf32>
    %787 = vector.broadcast %781 : f32 to vector<1x1024xf32>
    %788 = arith.mulf %787, %786 : vector<1x1024xf32>
    %789 = arith.addf %785, %788 : vector<1x1024xf32>
    %c0_i32_158 = arith.constant 0 : i32
    %790 = tpu.dynamic_rotate %744 by %c0_i32_158 dim 1 : vector<2x1024xf32>, i32 -> vector<2x1024xf32>
    %cst_159 = arith.constant 0.000000e+00 : f32
    %791 = vector.shape_cast %160 : vector<1x1024xi1> to vector<1x1024xi1>
    %792 = vector.broadcast %791 : vector<1x1024xi1> to vector<2x1024xi1>
    %793 = vector.broadcast %cst_159 : f32 to vector<2x1024xf32>
    %794 = arith.select %792, %790, %793 : vector<2x1024xi1>, vector<2x1024xf32>
    %c26 = arith.constant 26 : index
    %795 = memref.load %arg6[%c26] : memref<98xf32, #tpu.memory_space<smem>>
    %c75 = arith.constant 75 : index
    %796 = memref.load %arg6[%c75] : memref<98xf32, #tpu.memory_space<smem>>
    %797 = vector.extract_strided_slice %794 {offsets = [0, 0], sizes = [1, 1024], strides = [1, 1]} : vector<2x1024xf32> to vector<1x1024xf32>
    %798 = vector.broadcast %795 : f32 to vector<1x1024xf32>
    %799 = arith.mulf %798, %797 : vector<1x1024xf32>
    %800 = arith.addf %789, %799 : vector<1x1024xf32>
    %801 = vector.extract_strided_slice %794 {offsets = [1, 0], sizes = [1, 1024], strides = [1, 1]} : vector<2x1024xf32> to vector<1x1024xf32>
    %802 = vector.broadcast %796 : f32 to vector<1x1024xf32>
    %803 = arith.mulf %802, %801 : vector<1x1024xf32>
    %804 = arith.addf %800, %803 : vector<1x1024xf32>
    %c992_i32_160 = arith.constant 992 : i32
    %805 = tpu.dynamic_rotate %744 by %c992_i32_160 dim 1 : vector<2x1024xf32>, i32 -> vector<2x1024xf32>
    %cst_161 = arith.constant 0.000000e+00 : f32
    %806 = vector.shape_cast %169 : vector<1x1024xi1> to vector<1x1024xi1>
    %807 = vector.broadcast %806 : vector<1x1024xi1> to vector<2x1024xi1>
    %808 = vector.broadcast %cst_161 : f32 to vector<2x1024xf32>
    %809 = arith.select %807, %805, %808 : vector<2x1024xi1>, vector<2x1024xf32>
    %c33 = arith.constant 33 : index
    %810 = memref.load %arg6[%c33] : memref<98xf32, #tpu.memory_space<smem>>
    %c82 = arith.constant 82 : index
    %811 = memref.load %arg6[%c82] : memref<98xf32, #tpu.memory_space<smem>>
    %812 = vector.extract_strided_slice %809 {offsets = [0, 0], sizes = [1, 1024], strides = [1, 1]} : vector<2x1024xf32> to vector<1x1024xf32>
    %813 = vector.broadcast %810 : f32 to vector<1x1024xf32>
    %814 = arith.mulf %813, %812 : vector<1x1024xf32>
    %815 = arith.addf %804, %814 : vector<1x1024xf32>
    %816 = vector.extract_strided_slice %809 {offsets = [1, 0], sizes = [1, 1024], strides = [1, 1]} : vector<2x1024xf32> to vector<1x1024xf32>
    %817 = vector.broadcast %811 : f32 to vector<1x1024xf32>
    %818 = arith.mulf %817, %816 : vector<1x1024xf32>
    %819 = arith.addf %815, %818 : vector<1x1024xf32>
    %c960_i32_162 = arith.constant 960 : i32
    %820 = tpu.dynamic_rotate %744 by %c960_i32_162 dim 1 : vector<2x1024xf32>, i32 -> vector<2x1024xf32>
    %cst_163 = arith.constant 0.000000e+00 : f32
    %821 = vector.shape_cast %178 : vector<1x1024xi1> to vector<1x1024xi1>
    %822 = vector.broadcast %821 : vector<1x1024xi1> to vector<2x1024xi1>
    %823 = vector.broadcast %cst_163 : f32 to vector<2x1024xf32>
    %824 = arith.select %822, %820, %823 : vector<2x1024xi1>, vector<2x1024xf32>
    %c40 = arith.constant 40 : index
    %825 = memref.load %arg6[%c40] : memref<98xf32, #tpu.memory_space<smem>>
    %c89 = arith.constant 89 : index
    %826 = memref.load %arg6[%c89] : memref<98xf32, #tpu.memory_space<smem>>
    %827 = vector.extract_strided_slice %824 {offsets = [0, 0], sizes = [1, 1024], strides = [1, 1]} : vector<2x1024xf32> to vector<1x1024xf32>
    %828 = vector.broadcast %825 : f32 to vector<1x1024xf32>
    %829 = arith.mulf %828, %827 : vector<1x1024xf32>
    %830 = arith.addf %819, %829 : vector<1x1024xf32>
    %831 = vector.extract_strided_slice %824 {offsets = [1, 0], sizes = [1, 1024], strides = [1, 1]} : vector<2x1024xf32> to vector<1x1024xf32>
    %832 = vector.broadcast %826 : f32 to vector<1x1024xf32>
    %833 = arith.mulf %832, %831 : vector<1x1024xf32>
    %834 = arith.addf %830, %833 : vector<1x1024xf32>
    %c928_i32_164 = arith.constant 928 : i32
    %835 = tpu.dynamic_rotate %744 by %c928_i32_164 dim 1 : vector<2x1024xf32>, i32 -> vector<2x1024xf32>
    %cst_165 = arith.constant 0.000000e+00 : f32
    %836 = vector.shape_cast %187 : vector<1x1024xi1> to vector<1x1024xi1>
    %837 = vector.broadcast %836 : vector<1x1024xi1> to vector<2x1024xi1>
    %838 = vector.broadcast %cst_165 : f32 to vector<2x1024xf32>
    %839 = arith.select %837, %835, %838 : vector<2x1024xi1>, vector<2x1024xf32>
    %c47 = arith.constant 47 : index
    %840 = memref.load %arg6[%c47] : memref<98xf32, #tpu.memory_space<smem>>
    %c96 = arith.constant 96 : index
    %841 = memref.load %arg6[%c96] : memref<98xf32, #tpu.memory_space<smem>>
    %842 = vector.extract_strided_slice %839 {offsets = [0, 0], sizes = [1, 1024], strides = [1, 1]} : vector<2x1024xf32> to vector<1x1024xf32>
    %843 = vector.broadcast %840 : f32 to vector<1x1024xf32>
    %844 = arith.mulf %843, %842 : vector<1x1024xf32>
    %845 = arith.addf %834, %844 : vector<1x1024xf32>
    %846 = vector.extract_strided_slice %839 {offsets = [1, 0], sizes = [1, 1024], strides = [1, 1]} : vector<2x1024xf32> to vector<1x1024xf32>
    %847 = vector.broadcast %841 : f32 to vector<1x1024xf32>
    %848 = arith.mulf %847, %846 : vector<1x1024xf32>
    %849 = arith.addf %845, %848 : vector<1x1024xf32>
    %c1021_i32 = arith.constant 1021 : i32
    %850 = tpu.dynamic_rotate %51 by %c1021_i32 dim 1 : vector<2x1024xf32>, i32 -> vector<2x1024xf32>
    %cst_166 = arith.constant 0.000000e+00 : f32
    %851 = vector.shape_cast %124 : vector<1x1024xi1> to vector<1x1024xi1>
    %852 = vector.broadcast %851 : vector<1x1024xi1> to vector<2x1024xi1>
    %853 = vector.broadcast %cst_166 : f32 to vector<2x1024xf32>
    %854 = arith.select %852, %850, %853 : vector<2x1024xi1>, vector<2x1024xf32>
    %c96_i32_167 = arith.constant 96 : i32
    %855 = tpu.dynamic_rotate %854 by %c96_i32_167 dim 1 : vector<2x1024xf32>, i32 -> vector<2x1024xf32>
    %cst_168 = arith.constant 0.000000e+00 : f32
    %856 = vector.shape_cast %133 : vector<1x1024xi1> to vector<1x1024xi1>
    %857 = vector.broadcast %856 : vector<1x1024xi1> to vector<2x1024xi1>
    %858 = vector.broadcast %cst_168 : f32 to vector<2x1024xf32>
    %859 = arith.select %857, %855, %858 : vector<2x1024xi1>, vector<2x1024xf32>
    %c6 = arith.constant 6 : index
    %860 = memref.load %arg6[%c6] : memref<98xf32, #tpu.memory_space<smem>>
    %c55 = arith.constant 55 : index
    %861 = memref.load %arg6[%c55] : memref<98xf32, #tpu.memory_space<smem>>
    %862 = vector.extract_strided_slice %859 {offsets = [0, 0], sizes = [1, 1024], strides = [1, 1]} : vector<2x1024xf32> to vector<1x1024xf32>
    %863 = vector.broadcast %860 : f32 to vector<1x1024xf32>
    %864 = arith.mulf %863, %862 : vector<1x1024xf32>
    %865 = arith.addf %849, %864 : vector<1x1024xf32>
    %866 = vector.extract_strided_slice %859 {offsets = [1, 0], sizes = [1, 1024], strides = [1, 1]} : vector<2x1024xf32> to vector<1x1024xf32>
    %867 = vector.broadcast %861 : f32 to vector<1x1024xf32>
    %868 = arith.mulf %867, %866 : vector<1x1024xf32>
    %869 = arith.addf %865, %868 : vector<1x1024xf32>
    %c64_i32_169 = arith.constant 64 : i32
    %870 = tpu.dynamic_rotate %854 by %c64_i32_169 dim 1 : vector<2x1024xf32>, i32 -> vector<2x1024xf32>
    %cst_170 = arith.constant 0.000000e+00 : f32
    %871 = vector.shape_cast %142 : vector<1x1024xi1> to vector<1x1024xi1>
    %872 = vector.broadcast %871 : vector<1x1024xi1> to vector<2x1024xi1>
    %873 = vector.broadcast %cst_170 : f32 to vector<2x1024xf32>
    %874 = arith.select %872, %870, %873 : vector<2x1024xi1>, vector<2x1024xf32>
    %c13 = arith.constant 13 : index
    %875 = memref.load %arg6[%c13] : memref<98xf32, #tpu.memory_space<smem>>
    %c62 = arith.constant 62 : index
    %876 = memref.load %arg6[%c62] : memref<98xf32, #tpu.memory_space<smem>>
    %877 = vector.extract_strided_slice %874 {offsets = [0, 0], sizes = [1, 1024], strides = [1, 1]} : vector<2x1024xf32> to vector<1x1024xf32>
    %878 = vector.broadcast %875 : f32 to vector<1x1024xf32>
    %879 = arith.mulf %878, %877 : vector<1x1024xf32>
    %880 = arith.addf %869, %879 : vector<1x1024xf32>
    %881 = vector.extract_strided_slice %874 {offsets = [1, 0], sizes = [1, 1024], strides = [1, 1]} : vector<2x1024xf32> to vector<1x1024xf32>
    %882 = vector.broadcast %876 : f32 to vector<1x1024xf32>
    %883 = arith.mulf %882, %881 : vector<1x1024xf32>
    %884 = arith.addf %880, %883 : vector<1x1024xf32>
    %c32_i32_171 = arith.constant 32 : i32
    %885 = tpu.dynamic_rotate %854 by %c32_i32_171 dim 1 : vector<2x1024xf32>, i32 -> vector<2x1024xf32>
    %cst_172 = arith.constant 0.000000e+00 : f32
    %886 = vector.shape_cast %151 : vector<1x1024xi1> to vector<1x1024xi1>
    %887 = vector.broadcast %886 : vector<1x1024xi1> to vector<2x1024xi1>
    %888 = vector.broadcast %cst_172 : f32 to vector<2x1024xf32>
    %889 = arith.select %887, %885, %888 : vector<2x1024xi1>, vector<2x1024xf32>
    %c20 = arith.constant 20 : index
    %890 = memref.load %arg6[%c20] : memref<98xf32, #tpu.memory_space<smem>>
    %c69 = arith.constant 69 : index
    %891 = memref.load %arg6[%c69] : memref<98xf32, #tpu.memory_space<smem>>
    %892 = vector.extract_strided_slice %889 {offsets = [0, 0], sizes = [1, 1024], strides = [1, 1]} : vector<2x1024xf32> to vector<1x1024xf32>
    %893 = vector.broadcast %890 : f32 to vector<1x1024xf32>
    %894 = arith.mulf %893, %892 : vector<1x1024xf32>
    %895 = arith.addf %884, %894 : vector<1x1024xf32>
    %896 = vector.extract_strided_slice %889 {offsets = [1, 0], sizes = [1, 1024], strides = [1, 1]} : vector<2x1024xf32> to vector<1x1024xf32>
    %897 = vector.broadcast %891 : f32 to vector<1x1024xf32>
    %898 = arith.mulf %897, %896 : vector<1x1024xf32>
    %899 = arith.addf %895, %898 : vector<1x1024xf32>
    %c0_i32_173 = arith.constant 0 : i32
    %900 = tpu.dynamic_rotate %854 by %c0_i32_173 dim 1 : vector<2x1024xf32>, i32 -> vector<2x1024xf32>
    %cst_174 = arith.constant 0.000000e+00 : f32
    %901 = vector.shape_cast %160 : vector<1x1024xi1> to vector<1x1024xi1>
    %902 = vector.broadcast %901 : vector<1x1024xi1> to vector<2x1024xi1>
    %903 = vector.broadcast %cst_174 : f32 to vector<2x1024xf32>
    %904 = arith.select %902, %900, %903 : vector<2x1024xi1>, vector<2x1024xf32>
    %c27 = arith.constant 27 : index
    %905 = memref.load %arg6[%c27] : memref<98xf32, #tpu.memory_space<smem>>
    %c76 = arith.constant 76 : index
    %906 = memref.load %arg6[%c76] : memref<98xf32, #tpu.memory_space<smem>>
    %907 = vector.extract_strided_slice %904 {offsets = [0, 0], sizes = [1, 1024], strides = [1, 1]} : vector<2x1024xf32> to vector<1x1024xf32>
    %908 = vector.broadcast %905 : f32 to vector<1x1024xf32>
    %909 = arith.mulf %908, %907 : vector<1x1024xf32>
    %910 = arith.addf %899, %909 : vector<1x1024xf32>
    %911 = vector.extract_strided_slice %904 {offsets = [1, 0], sizes = [1, 1024], strides = [1, 1]} : vector<2x1024xf32> to vector<1x1024xf32>
    %912 = vector.broadcast %906 : f32 to vector<1x1024xf32>
    %913 = arith.mulf %912, %911 : vector<1x1024xf32>
    %914 = arith.addf %910, %913 : vector<1x1024xf32>
    %c992_i32_175 = arith.constant 992 : i32
    %915 = tpu.dynamic_rotate %854 by %c992_i32_175 dim 1 : vector<2x1024xf32>, i32 -> vector<2x1024xf32>
    %cst_176 = arith.constant 0.000000e+00 : f32
    %916 = vector.shape_cast %169 : vector<1x1024xi1> to vector<1x1024xi1>
    %917 = vector.broadcast %916 : vector<1x1024xi1> to vector<2x1024xi1>
    %918 = vector.broadcast %cst_176 : f32 to vector<2x1024xf32>
    %919 = arith.select %917, %915, %918 : vector<2x1024xi1>, vector<2x1024xf32>
    %c34 = arith.constant 34 : index
    %920 = memref.load %arg6[%c34] : memref<98xf32, #tpu.memory_space<smem>>
    %c83 = arith.constant 83 : index
    %921 = memref.load %arg6[%c83] : memref<98xf32, #tpu.memory_space<smem>>
    %922 = vector.extract_strided_slice %919 {offsets = [0, 0], sizes = [1, 1024], strides = [1, 1]} : vector<2x1024xf32> to vector<1x1024xf32>
    %923 = vector.broadcast %920 : f32 to vector<1x1024xf32>
    %924 = arith.mulf %923, %922 : vector<1x1024xf32>
    %925 = arith.addf %914, %924 : vector<1x1024xf32>
    %926 = vector.extract_strided_slice %919 {offsets = [1, 0], sizes = [1, 1024], strides = [1, 1]} : vector<2x1024xf32> to vector<1x1024xf32>
    %927 = vector.broadcast %921 : f32 to vector<1x1024xf32>
    %928 = arith.mulf %927, %926 : vector<1x1024xf32>
    %929 = arith.addf %925, %928 : vector<1x1024xf32>
    %c960_i32_177 = arith.constant 960 : i32
    %930 = tpu.dynamic_rotate %854 by %c960_i32_177 dim 1 : vector<2x1024xf32>, i32 -> vector<2x1024xf32>
    %cst_178 = arith.constant 0.000000e+00 : f32
    %931 = vector.shape_cast %178 : vector<1x1024xi1> to vector<1x1024xi1>
    %932 = vector.broadcast %931 : vector<1x1024xi1> to vector<2x1024xi1>
    %933 = vector.broadcast %cst_178 : f32 to vector<2x1024xf32>
    %934 = arith.select %932, %930, %933 : vector<2x1024xi1>, vector<2x1024xf32>
    %c41 = arith.constant 41 : index
    %935 = memref.load %arg6[%c41] : memref<98xf32, #tpu.memory_space<smem>>
    %c90 = arith.constant 90 : index
    %936 = memref.load %arg6[%c90] : memref<98xf32, #tpu.memory_space<smem>>
    %937 = vector.extract_strided_slice %934 {offsets = [0, 0], sizes = [1, 1024], strides = [1, 1]} : vector<2x1024xf32> to vector<1x1024xf32>
    %938 = vector.broadcast %935 : f32 to vector<1x1024xf32>
    %939 = arith.mulf %938, %937 : vector<1x1024xf32>
    %940 = arith.addf %929, %939 : vector<1x1024xf32>
    %941 = vector.extract_strided_slice %934 {offsets = [1, 0], sizes = [1, 1024], strides = [1, 1]} : vector<2x1024xf32> to vector<1x1024xf32>
    %942 = vector.broadcast %936 : f32 to vector<1x1024xf32>
    %943 = arith.mulf %942, %941 : vector<1x1024xf32>
    %944 = arith.addf %940, %943 : vector<1x1024xf32>
    %c928_i32_179 = arith.constant 928 : i32
    %945 = tpu.dynamic_rotate %854 by %c928_i32_179 dim 1 : vector<2x1024xf32>, i32 -> vector<2x1024xf32>
    %cst_180 = arith.constant 0.000000e+00 : f32
    %946 = vector.shape_cast %187 : vector<1x1024xi1> to vector<1x1024xi1>
    %947 = vector.broadcast %946 : vector<1x1024xi1> to vector<2x1024xi1>
    %948 = vector.broadcast %cst_180 : f32 to vector<2x1024xf32>
    %949 = arith.select %947, %945, %948 : vector<2x1024xi1>, vector<2x1024xf32>
    %c48 = arith.constant 48 : index
    %950 = memref.load %arg6[%c48] : memref<98xf32, #tpu.memory_space<smem>>
    %c97 = arith.constant 97 : index
    %951 = memref.load %arg6[%c97] : memref<98xf32, #tpu.memory_space<smem>>
    %952 = vector.extract_strided_slice %949 {offsets = [0, 0], sizes = [1, 1024], strides = [1, 1]} : vector<2x1024xf32> to vector<1x1024xf32>
    %953 = vector.broadcast %950 : f32 to vector<1x1024xf32>
    %954 = arith.mulf %953, %952 : vector<1x1024xf32>
    %955 = arith.addf %944, %954 : vector<1x1024xf32>
    %956 = vector.extract_strided_slice %949 {offsets = [1, 0], sizes = [1, 1024], strides = [1, 1]} : vector<2x1024xf32> to vector<1x1024xf32>
    %957 = vector.broadcast %951 : f32 to vector<1x1024xf32>
    %958 = arith.mulf %957, %956 : vector<1x1024xf32>
    %959 = arith.addf %955, %958 : vector<1x1024xf32>
    %960 = arith.negf %959 : vector<1x1024xf32>
    %961 = math.exp %960 : vector<1x1024xf32>
    %cst_181 = arith.constant 1.000000e+00 : f32
    %962 = vector.broadcast %cst_181 : f32 to vector<1x1024xf32>
    %963 = arith.addf %962, %961 : vector<1x1024xf32>
    %964 = arith.divf %962, %963 : vector<1x1024xf32>
    %965 = vector.broadcast %964 : vector<1x1024xf32> to vector<4x1024xf32>
    %966 = arith.mulf %37, %965 : vector<4x1024xf32>
    %c0_182 = arith.constant 0 : index
    %c0_183 = arith.constant 0 : index
    %c0_184 = arith.constant 0 : index
    %967 = vector.load %arg8[%c0_182, %c0_183, %c0_184] : memref<1x4x1024xf32, #tpu.memory_space<vmem>>, vector<1x4x1024xf32>
    %968 = vector.shape_cast %967 : vector<1x4x1024xf32> to vector<4x1024xf32>
    %969 = vector.shape_cast %966 : vector<4x1024xf32> to vector<1x4x1024xf32>
    tpu.vector_store %arg8[%c0_182, %c0_183, %c0_184], %969 {strides = array<i32>} : memref<1x4x1024xf32, #tpu.memory_space<vmem>>, vector<1x4x1024xf32>,
    return
  }
  func.func @transform_0(%arg0: i32) -> (i32, i32, i32) {
    %c0_i32 = arith.constant 0 : i32
    %c0_i32_0 = arith.constant 0 : i32
    %c0_i32_1 = arith.constant 0 : i32
    return %arg0, %c0_i32, %c0_i32_0 : i32, i32, i32
  }
  func.func @transform_1(%arg0: i32) -> (i32, i32) {
    %c0_i32 = arith.constant 0 : i32
    %c0_i32_0 = arith.constant 0 : i32
    %c0_i32_1 = arith.constant 0 : i32
    return %c0_i32, %c0_i32_0 : i32, i32
  }
  func.func @transform_2(%arg0: i32) -> (i32, i32) {
    %c0_i32 = arith.constant 0 : i32
    %c0_i32_0 = arith.constant 0 : i32
    %c0_i32_1 = arith.constant 0 : i32
    return %c0_i32, %c0_i32_0 : i32, i32
  }
  func.func @transform_3(%arg0: i32) -> (i32, i32) {
    %c0_i32 = arith.constant 0 : i32
    %c0_i32_0 = arith.constant 0 : i32
    %c0_i32_1 = arith.constant 0 : i32
    return %c0_i32, %c0_i32_0 : i32, i32
  }
  func.func @transform_4(%arg0: i32) -> (i32, i32) {
    %c0_i32 = arith.constant 0 : i32
    %c0_i32_0 = arith.constant 0 : i32
    %c0_i32_1 = arith.constant 0 : i32
    return %c0_i32, %c0_i32_0 : i32, i32
  }
  func.func @transform_5(%arg0: i32) -> i32 {
    %c0_i32 = arith.constant 0 : i32
    %c0_i32_0 = arith.constant 0 : i32
    return %c0_i32 : i32
  }
  func.func @transform_6(%arg0: i32) -> i32 {
    %c0_i32 = arith.constant 0 : i32
    %c0_i32_0 = arith.constant 0 : i32
    return %c0_i32 : i32
  }
  func.func @transform_7(%arg0: i32) -> (i32, i32, i32) {
    %c0_i32 = arith.constant 0 : i32
    %c0_i32_0 = arith.constant 0 : i32
    %c0_i32_1 = arith.constant 0 : i32
    return %arg0, %c0_i32, %c0_i32_0 : i32, i32, i32
  }
}

</mosaic_0001>

<llo_original>
// kernel: tpu_custom_call.1
$region0: #{tpu_custom_call.1}
  #allocation0 [shape = 'u32[]', space=smem, size = 0x4, offset = 0x4, fixed_abs, tag = 'smem constant byte address 0x4 - core index']
  #allocation1 [shape = 'u32[144,128]{1,0:T(1,128)}', space=vmem, size = 0x12000, scoped, tag = 'internal scratch']
  #allocation2 [shape = 'f32[1]{0:T(128)S(6)}', space=smem, size = 0x200, scoped, tag = 'scoped memory for tpu_custom_call.1']
  %s0 = inlined_call_operand.hbm [shape: f32[2,4,1024], index: 0, kind: input, shape index: {}]
  %s1 = inlined_call_operand.vmem [shape: f32[2,4], index: 1, kind: input, shape index: {}]
  %s2 = inlined_call_operand.vmem [shape: f32[2,1], index: 2, kind: input, shape index: {}]
  %s3 = inlined_call_operand.vmem [shape: f32[4,2], index: 3, kind: input, shape index: {}]
  %s4 = inlined_call_operand.vmem [shape: f32[4,1], index: 4, kind: input, shape index: {}]
  %s5 = inlined_call_operand.vmem [shape: f32[98], index: 5, kind: input, shape index: {}]
  %s6 = inlined_call_operand.<no memory space> [shape: f32[1], index: 6, kind: input, shape index: {}]
  %s7 = inlined_call_operand.hbm [shape: f32[2,4,1024], index: 7, kind: output, shape index: {}]
  %s8 = sld [smem:[#allocation0]]
  $region69: #{tpu_custom_call.1} parent=0
    _
  %s10 = ssub.s32 1, %s8
  %s11 = scalar_select 0, %s10, %s8
  %12 = sst [smem:[#allocation2]] %s6
  $region1: #{tpu_custom_call.1} parent=0
    #allocation3 [shape = 'u8[32768]{0}', space=vmem, size = 0x8000, scoped, tag = 'input window, operand 0']
    #allocation4 [shape = 's32[2]{0}', space=sflag, size = 0x8, scoped, tag = 'scoped memory for tpu_custom_call.1']
    #allocation5 [shape = 's32[2]{0}', space=sflag, size = 0x8, scoped, tag = 'scoped memory for tpu_custom_call.1']
    #allocation6 [shape = 's32[2]{0}', space=sflag, size = 0x8, scoped, tag = 'scoped memory for tpu_custom_call.1']
    #allocation7 [shape = 'u8[512]{0}', space=smem, size = 0x200, scoped, tag = 'input window, operand 5, single buffered']
    #allocation8 [shape = 'u8[32768]{0}', space=vmem, size = 0x8000, scoped, tag = 'output window, operand 0']
    %13 = vsyncpa [#allocation4], 0
    %s14 = scalar_lea.sflag [#allocation4], 1
    %15 = vsyncpa %s14, 0
    %16 = vsyncpa [#allocation6], 0
    %17 = vsyncpa [#allocation5], 0
    %s18 = scalar_lea.sflag [#allocation5], 1
    %19 = vsyncpa %s18, 0
    loop: start=0, step=1, limit=4
    $region2: #{tpu_custom_call.1} parent=1 // loop_pre_header
      _
    $region3: #{tpu_custom_call.1} parent=1 // loop_header
      %s21 = sphi 0, %s25
      %p22 = scmp.ge.s32.totalorder %s21, 4
      %s31 = sphi 0, %s33
      %s34 = sphi 0, %s31
      %s35 = sphi 0, %s34
      %s51 = sphi 0, %s35
      %s55 = sphi 0, %s55
      %s57 = sphi 0, %s55
      %s58 = sphi 0, %s57
      %s72 = sphi 0, %s58
      %s76 = sphi 0, %s76
      %s78 = sphi 0, %s76
      %s79 = sphi 0, %s78
      %s93 = sphi 0, %s79
      %s97 = sphi 0, %s97
      %s99 = sphi 0, %s97
      %s100 = sphi 0, %s99
      %s114 = sphi 0, %s100
      %s118 = sphi 0, %s118
      %s120 = sphi 0, %s118
      %s121 = sphi 0, %s120
      %s135 = sphi 0, %s121
      %s139 = sphi 0, %s139
      %s141 = sphi 0, %s139
      %s142 = sphi 0, %s141
      %s156 = sphi 0, %s142
      %s160 = sphi 0, %s160
      %s162 = sphi 0, %s160
      %s163 = sphi 0, %s162
      %s177 = sphi 0, %s163
      %s183 = sphi 0, %s185
      %s186 = sphi 0, %s183
      %s187 = sphi 0, %s186
      %s203 = sphi 0, %s187
    $region4: #{tpu_custom_call.1} parent=1 // loop_header_branch
      %24 = sbr.rel (%p22) target = $region8
    $region5: #{tpu_custom_call.1} parent=1 // loop_body
      %s26 = ssub.s32 %s21, 1
      %s27 = ssub.s32 %s21, 2
      %s28 = sadd.s32 %s21, 1
      %s29 = ssub.s32 %s21, %s28
      %p30 = scmp.eq.s32.totalorder %s29, 0
      %s32 = sadd.s32 %s31, 1
      %s33 = scalar_select %p30, %s31, %s32
      %p36 = pneg %p30
      %p37 = scmp.eq.s32.totalorder %s21, 1
      %p38 = por %p36, %p37
      %p39 = scmp.ne.s32.totalorder %s31, %s34
      %p40 = scmp.eq.s32.totalorder %s21, 0
      %p41 = por %p39, %p40
      %p42 = scmp.ne.s32.totalorder %s31, %s34
      %p43 = scmp.eq.s32.totalorder %s26, 1
      %p44 = por %p42, %p43
      %p45 = scmp.ne.s32.totalorder %s34, %s35
      %p46 = scmp.eq.s32.totalorder %s26, 0
      %p47 = por %p45, %p46
      %p48 = scmp.ne.s32.totalorder %s34, %s35
      %p49 = scmp.eq.s32.totalorder %s27, 1
      %p50 = por %p48, %p49
      %p52 = scmp.ne.s32.totalorder %s35, %s51
      %p53 = scmp.eq.s32.totalorder %s27, 0
      %p54 = por %p52, %p53
      %s56 = sadd.s32 %s55, 1
      %p59 = scmp.eq.s32.totalorder %s21, 1
      %p60 = scmp.ne.s32.totalorder %s55, %s57
      %p61 = scmp.eq.s32.totalorder %s21, 0
      %p62 = por %p60, %p61
      %p63 = scmp.ne.s32.totalorder %s55, %s57
      %p64 = scmp.eq.s32.totalorder %s26, 1
      %p65 = por %p63, %p64
      %p66 = scmp.ne.s32.totalorder %s57, %s58
      %p67 = scmp.eq.s32.totalorder %s26, 0
      %p68 = por %p66, %p67
      %p69 = scmp.ne.s32.totalorder %s57, %s58
      %p70 = scmp.eq.s32.totalorder %s27, 1
      %p71 = por %p69, %p70
      %p73 = scmp.ne.s32.totalorder %s58, %s72
      %p74 = scmp.eq.s32.totalorder %s27, 0
      %p75 = por %p73, %p74
      %s77 = sadd.s32 %s76, 1
      %p80 = scmp.eq.s32.totalorder %s21, 1
      %p81 = scmp.ne.s32.totalorder %s76, %s78
      %p82 = scmp.eq.s32.totalorder %s21, 0
      %p83 = por %p81, %p82
      %p84 = scmp.ne.s32.totalorder %s76, %s78
      %p85 = scmp.eq.s32.totalorder %s26, 1
      %p86 = por %p84, %p85
      %p87 = scmp.ne.s32.totalorder %s78, %s79
      %p88 = scmp.eq.s32.totalorder %s26, 0
      %p89 = por %p87, %p88
      %p90 = scmp.ne.s32.totalorder %s78, %s79
      %p91 = scmp.eq.s32.totalorder %s27, 1
      %p92 = por %p90, %p91
      %p94 = scmp.ne.s32.totalorder %s79, %s93
      %p95 = scmp.eq.s32.totalorder %s27, 0
      %p96 = por %p94, %p95
      %s98 = sadd.s32 %s97, 1
      %p101 = scmp.eq.s32.totalorder %s21, 1
      %p102 = scmp.ne.s32.totalorder %s97, %s99
      %p103 = scmp.eq.s32.totalorder %s21, 0
      %p104 = por %p102, %p103
      %p105 = scmp.ne.s32.totalorder %s97, %s99
      %p106 = scmp.eq.s32.totalorder %s26, 1
      %p107 = por %p105, %p106
      %p108 = scmp.ne.s32.totalorder %s99, %s100
      %p109 = scmp.eq.s32.totalorder %s26, 0
      %p110 = por %p108, %p109
      %p111 = scmp.ne.s32.totalorder %s99, %s100
      %p112 = scmp.eq.s32.totalorder %s27, 1
      %p113 = por %p111, %p112
      %p115 = scmp.ne.s32.totalorder %s100, %s114
      %p116 = scmp.eq.s32.totalorder %s27, 0
      %p117 = por %p115, %p116
      %s119 = sadd.s32 %s118, 1
      %p122 = scmp.eq.s32.totalorder %s21, 1
      %p123 = scmp.ne.s32.totalorder %s118, %s120
      %p124 = scmp.eq.s32.totalorder %s21, 0
      %p125 = por %p123, %p124
      %p126 = scmp.ne.s32.totalorder %s118, %s120
      %p127 = scmp.eq.s32.totalorder %s26, 1
      %p128 = por %p126, %p127
      %p129 = scmp.ne.s32.totalorder %s120, %s121
      %p130 = scmp.eq.s32.totalorder %s26, 0
      %p131 = por %p129, %p130
      %p132 = scmp.ne.s32.totalorder %s120, %s121
      %p133 = scmp.eq.s32.totalorder %s27, 1
      %p134 = por %p132, %p133
      %p136 = scmp.ne.s32.totalorder %s121, %s135
      %p137 = scmp.eq.s32.totalorder %s27, 0
      %p138 = por %p136, %p137
      %s140 = sadd.s32 %s139, 1
      %p143 = scmp.eq.s32.totalorder %s21, 1
      %p144 = scmp.ne.s32.totalorder %s139, %s141
      %p145 = scmp.eq.s32.totalorder %s21, 0
      %p146 = por %p144, %p145
      %p147 = scmp.ne.s32.totalorder %s139, %s141
      %p148 = scmp.eq.s32.totalorder %s26, 1
      %p149 = por %p147, %p148
      %p150 = scmp.ne.s32.totalorder %s141, %s142
      %p151 = scmp.eq.s32.totalorder %s26, 0
      %p152 = por %p150, %p151
      %p153 = scmp.ne.s32.totalorder %s141, %s142
      %p154 = scmp.eq.s32.totalorder %s27, 1
      %p155 = por %p153, %p154
      %p157 = scmp.ne.s32.totalorder %s142, %s156
      %p158 = scmp.eq.s32.totalorder %s27, 0
      %p159 = por %p157, %p158
      %s161 = sadd.s32 %s160, 1
      %p164 = scmp.eq.s32.totalorder %s21, 1
      %p165 = scmp.ne.s32.totalorder %s160, %s162
      %p166 = scmp.eq.s32.totalorder %s21, 0
      %p167 = por %p165, %p166
      %p168 = scmp.ne.s32.totalorder %s160, %s162
      %p169 = scmp.eq.s32.totalorder %s26, 1
      %p170 = por %p168, %p169
      %p171 = scmp.ne.s32.totalorder %s162, %s163
      %p172 = scmp.eq.s32.totalorder %s26, 0
      %p173 = por %p171, %p172
      %p174 = scmp.ne.s32.totalorder %s162, %s163
      %p175 = scmp.eq.s32.totalorder %s27, 1
      %p176 = por %p174, %p175
      %p178 = scmp.ne.s32.totalorder %s163, %s177
      %p179 = scmp.eq.s32.totalorder %s27, 0
      %p180 = por %p178, %p179
      %s181 = ssub.s32 %s21, %s28
      %p182 = scmp.eq.s32.totalorder %s181, 0
      %s184 = sadd.s32 %s183, 1
      %s185 = scalar_select %p182, %s183, %s184
      %p188 = pneg %p182
      %p189 = scmp.eq.s32.totalorder %s21, 1
      %p190 = por %p188, %p189
      %p191 = scmp.ne.s32.totalorder %s183, %s186
      %p192 = scmp.eq.s32.totalorder %s21, 0
      %p193 = por %p191, %p192
      %p194 = scmp.ne.s32.totalorder %s183, %s186
      %p195 = scmp.eq.s32.totalorder %s26, 1
      %p196 = por %p194, %p195
      %p197 = scmp.ne.s32.totalorder %s186, %s187
      %p198 = scmp.eq.s32.totalorder %s26, 0
      %p199 = por %p197, %p198
      %p200 = scmp.ne.s32.totalorder %s186, %s187
      %p201 = scmp.eq.s32.totalorder %s27, 1
      %p202 = por %p200, %p201
      %p204 = scmp.ne.s32.totalorder %s187, %s203
      %p205 = scmp.eq.s32.totalorder %s27, 0
      %p206 = por %p204, %p205
      %p207 = scmp.le.s32.totalorder 1, %s21
      %p208 = scmp.lt.s32.totalorder %s21, 3
      %p209 = pnand %p207, %p208
      %p210 = pneg %p209
      // Predicated region
      $region9: #{tpu_custom_call.1} parent=5 // pred_check
        _
      $region10: #{tpu_custom_call.1} parent=5 // pred_check_branch
        %212 = sbr.rel (%p209) target = $region12
      $region11: #{tpu_custom_call.1} parent=5 // pred_region
        %s213 = ssub.s32 %s21, 1
        // Predicated region
        $region13: #{tpu_custom_call.1} parent=11 // pred_check
          %p214 = pneg %p68
        $region14: #{tpu_custom_call.1} parent=11 // pred_check_branch
          %216 = sbr.rel (%p214) target = $region16
        $region15: #{tpu_custom_call.1} parent=11 // pred_region
          _
        $region16: #{tpu_custom_call.1} parent=11 // pred_fallthru
          _
        // Predicated region
        $region17: #{tpu_custom_call.1} parent=11 // pred_check
          %p217 = pneg %p89
        $region18: #{tpu_custom_call.1} parent=11 // pred_check_branch
          %219 = sbr.rel (%p217) target = $region20
        $region19: #{tpu_custom_call.1} parent=11 // pred_region
          _
        $region20: #{tpu_custom_call.1} parent=11 // pred_fallthru
          _
        // Predicated region
        $region21: #{tpu_custom_call.1} parent=11 // pred_check
          %p220 = pneg %p110
        $region22: #{tpu_custom_call.1} parent=11 // pred_check_branch
          %222 = sbr.rel (%p220) target = $region24
        $region23: #{tpu_custom_call.1} parent=11 // pred_region
          _
        $region24: #{tpu_custom_call.1} parent=11 // pred_fallthru
          _
        // Predicated region
        $region25: #{tpu_custom_call.1} parent=11 // pred_check
          %p223 = pneg %p131
        $region26: #{tpu_custom_call.1} parent=11 // pred_check_branch
          %225 = sbr.rel (%p223) target = $region28
        $region27: #{tpu_custom_call.1} parent=11 // pred_region
          _
        $region28: #{tpu_custom_call.1} parent=11 // pred_fallthru
          _
        // Predicated region
        $region29: #{tpu_custom_call.1} parent=11 // pred_check
          %p226 = pneg %p152
        $region30: #{tpu_custom_call.1} parent=11 // pred_check_branch
          %228 = sbr.rel (%p226) target = $region32
        $region31: #{tpu_custom_call.1} parent=11 // pred_region
          %s230 = ssub.s32 16, 16
          %231 = vsyncadd [#allocation6], %s230
          %s233 = sshll.u32 %s5, 4
          %s234 = int_to_ptr.vmem [resolvable:$true] %s233
          %236 = dma.vmem_to_smem %s234, 16, [#allocation7], [#allocation6]
        $region32: #{tpu_custom_call.1} parent=11 // pred_fallthru
          _
        // Predicated region
        $region33: #{tpu_custom_call.1} parent=11 // pred_check
          %p237 = pneg %p173
        $region34: #{tpu_custom_call.1} parent=11 // pred_check_branch
          %239 = sbr.rel (%p237) target = $region36
        $region35: #{tpu_custom_call.1} parent=11 // pred_region
          _
        $region36: #{tpu_custom_call.1} parent=11 // pred_fallthru
          _
      $region12: #{tpu_custom_call.1} parent=5 // pred_fallthru
        _
      %p240 = scmp.lt.s32.totalorder %s21, 2
      // Predicated region
      $region37: #{tpu_custom_call.1} parent=5 // pred_check
        %p241 = pneg %p240
      $region38: #{tpu_custom_call.1} parent=5 // pred_check_branch
        %243 = sbr.rel (%p241) target = $region40
      $region39: #{tpu_custom_call.1} parent=5 // pred_region
        // Predicated region
        $region41: #{tpu_custom_call.1} parent=39 // pred_check
          %p244 = pneg %p41
        $region42: #{tpu_custom_call.1} parent=39 // pred_check_branch
          %246 = sbr.rel (%p244) target = $region44
        $region43: #{tpu_custom_call.1} parent=39 // pred_region
          %s247 = sand.u32 %s31, 1
          %s248 = scalar_lea.sflag [#allocation4], %s247
          %s249 = sand.u32 %s31, 1
          %s250 = smul.addr %s249, 32
          %s251 = scalar_lea.vmem [#allocation3], %s250
          %s253 = ssub.s32 512, 512
          %254 = vsyncadd %s248, %s253
          %s255 = smul.addr %s21, 8
          %s256 = smul.addr %s255, 64
          %s257 = scalar_lea.hbm %s0, %s256
          %s259 = sshll.u32 %s251, 4
          %s260 = int_to_ptr.vmem [resolvable:$true] %s259
          %262 = dma.hbm_to_vmem [thread:$0]  %s257, 512, %s260, %s248
        $region44: #{tpu_custom_call.1} parent=39 // pred_fallthru
          _
      $region40: #{tpu_custom_call.1} parent=5 // pred_fallthru
        _
      %p263 = scmp.le.s32.totalorder 1, %s21
      %p264 = scmp.lt.s32.totalorder %s21, 3
      %p265 = pnand %p263, %p264
      %p266 = pneg %p265
      // Predicated region
      $region45: #{tpu_custom_call.1} parent=5 // pred_check
        _
      $region46: #{tpu_custom_call.1} parent=5 // pred_check_branch
        %268 = sbr.rel (%p265) target = $region48
      $region47: #{tpu_custom_call.1} parent=5 // pred_region
        %s269 = ssub.s32 %s21, 1
        %s270 = sand.u32 %s34, 1
        %s271 = scalar_lea.sflag [#allocation4], %s270
        %s272 = sand.u32 %s34, 1
        %s273 = smul.addr %s272, 32
        %s274 = scalar_lea.vmem [#allocation3], %s273
        // Predicated region
        $region49: #{tpu_custom_call.1} parent=47 // pred_check
          %p275 = pneg %p47
        $region50: #{tpu_custom_call.1} parent=47 // pred_check_branch
          %277 = sbr.rel (%p275) target = $region52
        $region51: #{tpu_custom_call.1} parent=47 // pred_region
          %278 = dma.done %s271, 512
        $region52: #{tpu_custom_call.1} parent=47 // pred_fallthru
          _
        // Predicated region
        $region53: #{tpu_custom_call.1} parent=47 // pred_check
          %p279 = pneg %p152
        $region54: #{tpu_custom_call.1} parent=47 // pred_check_branch
          %281 = sbr.rel (%p279) target = $region56
        $region55: #{tpu_custom_call.1} parent=47 // pred_region
          %282 = dma.done [#allocation6], 16
        $region56: #{tpu_custom_call.1} parent=47 // pred_fallthru
          _
        %283 = sfence
        %s284 = sand.u32 %s34, 1
        %s285 = scalar_lea.sflag [#allocation4], %s284
        %s286 = sand.u32 %s34, 1
        %s287 = smul.addr %s286, 32
        %s288 = scalar_lea.vmem [#allocation3], %s287
        %p289 = pneg %p47
        %p290 = pneg %p44
        %p291 = pneg %p68
        %p292 = pneg %p65
        %p293 = pneg %p89
        %p294 = pneg %p86
        %p295 = pneg %p110
        %p296 = pneg %p107
        %p297 = pneg %p131
        %p298 = pneg %p128
        %p299 = pneg %p152
        %p300 = pneg %p149
        %p301 = pneg %p173
        %p302 = pneg %p170
        %p303 = pneg %p199
        %p304 = pneg %p196
        %s305 = sand.u32 %s186, 1
        %s306 = scalar_lea.sflag [#allocation5], %s305
        %s307 = sand.u32 %s186, 1
        %s308 = smul.addr %s307, 32
        %s309 = scalar_lea.vmem [#allocation8], %s308
        %v310 = vld [vmem:[%s274] sm:$0xff]
        %v311 = vld [vmem:[%s274 + $0x8] sm:$0xff]
        %v312 = vld [vmem:[%s274 + $0x10] sm:$0xff]
        %v313 = vld [vmem:[%s274 + $0x18] sm:$0xff]
        %v318 = vcombine.high %v310, %v310
        %v319 = vcombine.high %v311, %v311
        %v320 = vcombine.high %v312, %v312
        %v321 = vcombine.high %v313, %v313
        %vm326 = vcmask 1043456
        %v327 = vsel %vm326, %v310, 0.0
        %v328 = vsel %vm326, %v318, 0.0
        %v329 = vadd.f32 %v327, %v328
        %v330 = vsel %vm326, %v311, 0.0
        %v331 = vadd.f32 %v329, %v330
        %v332 = vsel %vm326, %v319, 0.0
        %v333 = vadd.f32 %v331, %v332
        %v334 = vsel %vm326, %v312, 0.0
        %v335 = vadd.f32 %v333, %v334
        %v336 = vsel %vm326, %v320, 0.0
        %v337 = vadd.f32 %v335, %v336
        %v338 = vsel %vm326, %v313, 0.0
        %v339 = vadd.f32 %v337, %v338
        %v340 = vsel %vm326, %v321, 0.0
        %v341 = vadd.f32 %v339, %v340
        %342 = vadd.xlane.f32.xlu0 %v341
        %v343 = vpop.xlane.xlu0 %342
        %v344 = vmul.f32 %v343, 0.0009765625
        %v345 = vsel %vm326, %v310, -inf
        %v346 = vsel %vm326, %v318, -inf
        %v347 = vsel %vm326, %v311, -inf
        %v348 = vsel %vm326, %v319, -inf
        %v349 = vsel %vm326, %v312, -inf
        %v350 = vmax.f32 %v345, %v349
        %v351 = vsel %vm326, %v320, -inf
        %v352 = vmax.f32 %v346, %v351
        %v353 = vsel %vm326, %v313, -inf
        %v354 = vmax.f32 %v347, %v353
        %v355 = vsel %vm326, %v321, -inf
        %v356 = vmax.f32 %v348, %v355
        %v357 = vmax.f32 %v350, %v352
        %v358 = vmax.f32 %v354, %v356
        %v359 = vmax.f32 %v357, %v358
        %360 = vmax.xlane.f32.xlu0 %v359
        %v361 = vpop.xlane.xlu0 %360
        %v362 = vlaneseq
        %v363 = vand.u32 %v362, 127
        %vm364 = vcmp.eq.s32.totalorder %v363, 0
        %v365 = vsel %vm364, %v344, %v361
        %v366 = vld [vmem:[%s1] sm:$0x3]
        %v367 = vld [vmem:[%s2] sm:$0x3]
        %v368 = vld [vmem:[%s3] sm:$0xf]
        %v369 = vld [vmem:[%s4] sm:$0xf]
        %371 = vset.pattern.permute.xlu0 0
        %372 = vperm.xlu0 %371, %v367
        %v373 = vpop.permute.xlu0 %372
        %vm375 = vcmask 31744
        %v377 = vsel %vm375, %v366, 0
        %v380 = vsel %vm326, %v365, 0
        %382 = vmatprep.subr.mxu0 0.0
        %383 = vmatpush1.msra.mxu0 %v380
        %384 = vmatprep.subr.mxu0 0.0
        %385 = vmatpush1.msra.mxu0 0.0
        %386 = vmatprep.subr.mxu0 0.0
        %387 = vmatpush1.msra.mxu0 0.0
        %388 = vmatprep.subr.mxu0 0.0
        %389 = vmatpush1.msra.mxu0 0.0
        %390 = vmatprep.subr.mxu0 0.0
        %391 = vmatpush1.msra.mxu0 0.0
        %392 = vmatprep.subr.mxu0 0.0
        %393 = vmatpush1.msra.mxu0 0.0
        %394 = vmatprep.subr.mxu0 0.0
        %395 = vmatpush1.msra.mxu0 0.0
        %396 = vmatprep.subr.mxu0 0.0
        %397 = vmatpush1.msra.mxu0 0.0
        %398 = vmatprep.subr.mxu0 0.0
        %399 = vmatpush1.msra.mxu0 0.0
        %400 = vmatprep.subr.mxu0 0.0
        %401 = vmatpush1.msra.mxu0 0.0
        %402 = vmatprep.subr.mxu0 0.0
        %403 = vmatpush1.msra.mxu0 0.0
        %404 = vmatprep.subr.mxu0 0.0
        %405 = vmatpush1.msra.mxu0 0.0
        %406 = vmatprep.subr.mxu0 0.0
        %407 = vmatpush1.msra.mxu0 0.0
        %408 = vmatprep.subr.mxu0 0.0
        %409 = vmatpush1.msra.mxu0 0.0
        %410 = vmatprep.subr.mxu0 0.0
        %411 = vmatpush1.msra.mxu0 0.0
        %412 = vmatprep.subr.mxu0 0.0
        %413 = vmatpush1.msra.mxu0 0.0
        %414 = vmatprep.subr.mxu0 0.0
        %415 = vmatpush1.msra.mxu0 0.0
        %416 = vmatprep.subr.mxu0 0.0
        %417 = vmatpush1.msra.mxu0 0.0
        %418 = vmatprep.subr.mxu0 0.0
        %419 = vmatpush1.msra.mxu0 0.0
        %420 = vmatprep.subr.mxu0 0.0
        %421 = vmatpush1.msra.mxu0 0.0
        %422 = vmatprep.subr.mxu0 0.0
        %423 = vmatpush1.msra.mxu0 0.0
        %424 = vmatprep.subr.mxu0 0.0
        %425 = vmatpush1.msra.mxu0 0.0
        %426 = vmatprep.subr.mxu0 0.0
        %427 = vmatpush1.msra.mxu0 0.0
        %428 = vmatprep.subr.mxu0 0.0
        %429 = vmatpush1.msra.mxu0 0.0
        %430 = vmatprep.subr.mxu0 0.0
        %431 = vmatpush1.msra.mxu0 0.0
        %432 = vmatprep.subr.mxu0 0.0
        %433 = vmatpush1.msra.mxu0 0.0
        %434 = vmatprep.subr.mxu0 0.0
        %435 = vmatpush1.msra.mxu0 0.0
        %436 = vmatprep.subr.mxu0 0.0
        %437 = vmatpush1.msra.mxu0 0.0
        %438 = vmatprep.subr.mxu0 0.0
        %439 = vmatpush1.msra.mxu0 0.0
        %440 = vmatprep.subr.mxu0 0.0
        %441 = vmatpush1.msra.mxu0 0.0
        %442 = vmatprep.subr.mxu0 0.0
        %443 = vmatpush1.msra.mxu0 0.0
        %444 = vmatprep.subr.mxu0 0.0
        %445 = vmatpush1.msra.mxu0 0.0
        %446 = vmatprep.mubr.f32.mxu0 0.0
        %447 = vmatmul.mubr.f32.gmra.mrb[0].mxu0 %v377
        %v448 = vpop.f32.mrb[0].mxu0
        %v449 = vadd.f32 %v373, %v448
        %v450 = vpop.f32.mrb[0].mxu0
        %451 = vdwg.mxu0
        %v452 = vmax.f32 %v449, 0.0
        %454 = vset.pattern.permute.xlu0 0
        %455 = vperm.xlu0 %454, %v369
        %v456 = vpop.permute.xlu0 %455
        %vm458 = vcmask 15360
        %v460 = vsel %vm458, %v368, 0
        %vm462 = vcmask 1041408
        %v464 = vsel %vm462, %v452, 0
        %466 = vmatprep.subr.mxu0 0.0
        %467 = vmatpush1.msra.mxu0 %v464
        %468 = vmatprep.subr.mxu0 0.0
        %469 = vmatpush1.msra.mxu0 0.0
        %470 = vmatprep.subr.mxu0 0.0
        %471 = vmatpush1.msra.mxu0 0.0
        %472 = vmatprep.subr.mxu0 0.0
        %473 = vmatpush1.msra.mxu0 0.0
        %474 = vmatprep.subr.mxu0 0.0
        %475 = vmatpush1.msra.mxu0 0.0
        %476 = vmatprep.subr.mxu0 0.0
        %477 = vmatpush1.msra.mxu0 0.0
        %478 = vmatprep.subr.mxu0 0.0
        %479 = vmatpush1.msra.mxu0 0.0
        %480 = vmatprep.subr.mxu0 0.0
        %481 = vmatpush1.msra.mxu0 0.0
        %482 = vmatprep.subr.mxu0 0.0
        %483 = vmatpush1.msra.mxu0 0.0
        %484 = vmatprep.subr.mxu0 0.0
        %485 = vmatpush1.msra.mxu0 0.0
        %486 = vmatprep.subr.mxu0 0.0
        %487 = vmatpush1.msra.mxu0 0.0
        %488 = vmatprep.subr.mxu0 0.0
        %489 = vmatpush1.msra.mxu0 0.0
        %490 = vmatprep.subr.mxu0 0.0
        %491 = vmatpush1.msra.mxu0 0.0
        %492 = vmatprep.subr.mxu0 0.0
        %493 = vmatpush1.msra.mxu0 0.0
        %494 = vmatprep.subr.mxu0 0.0
        %495 = vmatpush1.msra.mxu0 0.0
        %496 = vmatprep.subr.mxu0 0.0
        %497 = vmatpush1.msra.mxu0 0.0
        %498 = vmatprep.subr.mxu0 0.0
        %499 = vmatpush1.msra.mxu0 0.0
        %500 = vmatprep.subr.mxu0 0.0
        %501 = vmatpush1.msra.mxu0 0.0
        %502 = vmatprep.subr.mxu0 0.0
        %503 = vmatpush1.msra.mxu0 0.0
        %504 = vmatprep.subr.mxu0 0.0
        %505 = vmatpush1.msra.mxu0 0.0
        %506 = vmatprep.subr.mxu0 0.0
        %507 = vmatpush1.msra.mxu0 0.0
        %508 = vmatprep.subr.mxu0 0.0
        %509 = vmatpush1.msra.mxu0 0.0
        %510 = vmatprep.subr.mxu0 0.0
        %511 = vmatpush1.msra.mxu0 0.0
        %512 = vmatprep.subr.mxu0 0.0
        %513 = vmatpush1.msra.mxu0 0.0
        %514 = vmatprep.subr.mxu0 0.0
        %515 = vmatpush1.msra.mxu0 0.0
        %516 = vmatprep.subr.mxu0 0.0
        %517 = vmatpush1.msra.mxu0 0.0
        %518 = vmatprep.subr.mxu0 0.0
        %519 = vmatpush1.msra.mxu0 0.0
        %520 = vmatprep.subr.mxu0 0.0
        %521 = vmatpush1.msra.mxu0 0.0
        %522 = vmatprep.subr.mxu0 0.0
        %523 = vmatpush1.msra.mxu0 0.0
        %524 = vmatprep.subr.mxu0 0.0
        %525 = vmatpush1.msra.mxu0 0.0
        %526 = vmatprep.subr.mxu0 0.0
        %527 = vmatpush1.msra.mxu0 0.0
        %528 = vmatprep.subr.mxu0 0.0
        %529 = vmatpush1.msra.mxu0 0.0
        %530 = vmatprep.mubr.f32.mxu0 0.0
        %531 = vmatmul.mubr.f32.gmra.mrb[0].mxu0 %v460
        %v532 = vpop.f32.mrb[0].mxu0
        %v533 = vadd.f32 %v456, %v532
        %v534 = vpop.f32.mrb[0].mxu0
        %535 = vdwg.mxu0
        %537 = vrot.lane.b32.xlu0 %v533, 127
        %v538 = vpop.permute.xlu0 %537
        %v540 = vadd.f32 %v533, %v538
        %v541 = vxor.u32 %v540, 2147483648
        %v542 = vmul.f32 %v541, 1.442695
        %v543 = vpow.pop %v542
        %v544 = vadd.f32 %v543, 1.0
        %v545 = vrcp.pop %v544
        %v546 = vmul.f32 1.0, %v545
        %548 = vset.pattern.permute.xlu0 0
        %549 = vperm.xlu0 %548, %v546
        %v550 = vpop.permute.xlu0 %549
        %v552 = vunpack.c.l.s4 839922192
        %v553 = vunpack.c.0.s8 %v552
        %v554 = vlaneseq
        %v555 = vshrl.u32 %v554, 7
        %v556 = vsub.s32 %v553, %v555
        %v557 = vrot.slane %v550, %v556
        %v559 = vmul.f32 %v310, %v557
        %v560 = vmul.f32 %v311, %v557
        %v561 = vmul.f32 %v312, %v557
        %v562 = vmul.f32 %v313, %v557
        %v567 = vcombine.high %v559, %v559
        %v568 = vcombine.high %v560, %v560
        %v569 = vcombine.high %v561, %v561
        %v570 = vcombine.high %v562, %v562
        %v575 = vsel %vm326, %v559, 0.0
        %v576 = vrot.slane %v575, 4
        %v577 = vadd.f32 %v575, %v576
        %v578 = vrot.slane %v577, 2
        %v579 = vadd.f32 %v577, %v578
        %v580 = vrot.slane %v579, 1
        %v581 = vadd.f32 %v579, %v580
        %v582 = vsel %vm326, %v567, 0.0
        %v583 = vrot.slane %v582, 4
        %v584 = vadd.f32 %v582, %v583
        %v585 = vrot.slane %v584, 2
        %v586 = vadd.f32 %v584, %v585
        %v587 = vrot.slane %v586, 1
        %v588 = vadd.f32 %v586, %v587
        %v589 = vsel %vm326, %v560, 0.0
        %v590 = vrot.slane %v589, 4
        %v591 = vadd.f32 %v589, %v590
        %v592 = vrot.slane %v591, 2
        %v593 = vadd.f32 %v591, %v592
        %v594 = vrot.slane %v593, 1
        %v595 = vadd.f32 %v593, %v594
        %v596 = vsel %vm326, %v568, 0.0
        %v597 = vrot.slane %v596, 4
        %v598 = vadd.f32 %v596, %v597
        %v599 = vrot.slane %v598, 2
        %v600 = vadd.f32 %v598, %v599
        %v601 = vrot.slane %v600, 1
        %v602 = vadd.f32 %v600, %v601
        %v603 = vsel %vm326, %v561, 0.0
        %v604 = vrot.slane %v603, 4
        %v605 = vadd.f32 %v603, %v604
        %v606 = vrot.slane %v605, 2
        %v607 = vadd.f32 %v605, %v606
        %v608 = vrot.slane %v607, 1
        %v609 = vadd.f32 %v607, %v608
        %v610 = vsel %vm326, %v569, 0.0
        %v611 = vrot.slane %v610, 4
        %v612 = vadd.f32 %v610, %v611
        %v613 = vrot.slane %v612, 2
        %v614 = vadd.f32 %v612, %v613
        %v615 = vrot.slane %v614, 1
        %v616 = vadd.f32 %v614, %v615
        %v617 = vsel %vm326, %v562, 0.0
        %v618 = vrot.slane %v617, 4
        %v619 = vadd.f32 %v617, %v618
        %v620 = vrot.slane %v619, 2
        %v621 = vadd.f32 %v619, %v620
        %v622 = vrot.slane %v621, 1
        %v623 = vadd.f32 %v621, %v622
        %v624 = vsel %vm326, %v570, 0.0
        %v625 = vrot.slane %v624, 4
        %v626 = vadd.f32 %v624, %v625
        %v627 = vrot.slane %v626, 2
        %v628 = vadd.f32 %v626, %v627
        %v629 = vrot.slane %v628, 1
        %v630 = vadd.f32 %v628, %v629
        %v631 = vrcp.pop 4.0
        %v632 = vmul.f32 %v581, %v631
        %v633 = vmul.f32 %v588, %v631
        %v634 = vmul.f32 %v595, %v631
        %v635 = vmul.f32 %v602, %v631
        %v636 = vmul.f32 %v609, %v631
        %v637 = vmul.f32 %v616, %v631
        %v638 = vmul.f32 %v623, %v631
        %v639 = vmul.f32 %v630, %v631
        %v640 = vsel %vm326, %v559, -inf
        %v641 = vrot.slane %v640, 4
        %v642 = vmax.f32 %v640, %v641
        %v643 = vrot.slane %v642, 2
        %v644 = vmax.f32 %v642, %v643
        %v645 = vrot.slane %v644, 1
        %v646 = vmax.f32 %v644, %v645
        %v647 = vsel %vm326, %v567, -inf
        %v648 = vrot.slane %v647, 4
        %v649 = vmax.f32 %v647, %v648
        %v650 = vrot.slane %v649, 2
        %v651 = vmax.f32 %v649, %v650
        %v652 = vrot.slane %v651, 1
        %v653 = vmax.f32 %v651, %v652
        %v654 = vsel %vm326, %v560, -inf
        %v655 = vrot.slane %v654, 4
        %v656 = vmax.f32 %v654, %v655
        %v657 = vrot.slane %v656, 2
        %v658 = vmax.f32 %v656, %v657
        %v659 = vrot.slane %v658, 1
        %v660 = vmax.f32 %v658, %v659
        %v661 = vsel %vm326, %v568, -inf
        %v662 = vrot.slane %v661, 4
        %v663 = vmax.f32 %v661, %v662
        %v664 = vrot.slane %v663, 2
        %v665 = vmax.f32 %v663, %v664
        %v666 = vrot.slane %v665, 1
        %v667 = vmax.f32 %v665, %v666
        %v668 = vsel %vm326, %v561, -inf
        %v669 = vrot.slane %v668, 4
        %v670 = vmax.f32 %v668, %v669
        %v671 = vrot.slane %v670, 2
        %v672 = vmax.f32 %v670, %v671
        %v673 = vrot.slane %v672, 1
        %v674 = vmax.f32 %v672, %v673
        %v675 = vsel %vm326, %v569, -inf
        %v676 = vrot.slane %v675, 4
        %v677 = vmax.f32 %v675, %v676
        %v678 = vrot.slane %v677, 2
        %v679 = vmax.f32 %v677, %v678
        %v680 = vrot.slane %v679, 1
        %v681 = vmax.f32 %v679, %v680
        %v682 = vsel %vm326, %v562, -inf
        %v683 = vrot.slane %v682, 4
        %v684 = vmax.f32 %v682, %v683
        %v685 = vrot.slane %v684, 2
        %v686 = vmax.f32 %v684, %v685
        %v687 = vrot.slane %v686, 1
        %v688 = vmax.f32 %v686, %v687
        %v689 = vsel %vm326, %v570, -inf
        %v690 = vrot.slane %v689, 4
        %v691 = vmax.f32 %v689, %v690
        %v692 = vrot.slane %v691, 2
        %v693 = vmax.f32 %v691, %v692
        %v694 = vrot.slane %v693, 1
        %v695 = vmax.f32 %v693, %v694
        %v696 = vlaneseq
        %v697 = vshrl.u32 %v696, 7
        %vm698 = vcmp.eq.s32.totalorder %v697, 0
        %v699 = vsel %vm698, %v632, %v646
        %v700 = vsel %vm698, %v633, %v653
        %v701 = vsel %vm698, %v634, %v660
        %v702 = vsel %vm698, %v635, %v667
        %v703 = vsel %vm698, %v636, %v674
        %v704 = vsel %vm698, %v637, %v681
        %v705 = vsel %vm698, %v638, %v688
        %v706 = vsel %vm698, %v639, %v695
        %v707 = vadd.s32 %v363, 128
        %v708 = vadd.s32 %v363, 256
        %v709 = vadd.s32 %v363, 384
        %v710 = vadd.s32 %v363, 512
        %v711 = vadd.s32 %v363, 640
        %v712 = vadd.s32 %v363, 768
        %v713 = vadd.s32 %v363, 896
        %v714 = vcvt.s32.f32 %v363
        %v715 = vcvt.s32.f32 %v707
        %v716 = vcvt.s32.f32 %v708
        %v717 = vcvt.s32.f32 %v709
        %v718 = vcvt.s32.f32 %v710
        %v719 = vcvt.s32.f32 %v711
        %v720 = vcvt.s32.f32 %v712
        %v721 = vcvt.s32.f32 %v713
        %v722 = vadd.f32 %v714, 0.5
        %v723 = vadd.f32 %v715, 0.5
        %v724 = vadd.f32 %v716, 0.5
        %v725 = vadd.f32 %v717, 0.5
        %v726 = vadd.f32 %v718, 0.5
        %v727 = vadd.f32 %v719, 0.5
        %v728 = vadd.f32 %v720, 0.5
        %v729 = vadd.f32 %v721, 0.5
        %v730 = vmul.f32 %v722, 0.03125
        %v731 = vmul.f32 %v723, 0.03125
        %v732 = vmul.f32 %v724, 0.03125
        %v733 = vmul.f32 %v725, 0.03125
        %v734 = vmul.f32 %v726, 0.03125
        %v735 = vmul.f32 %v727, 0.03125
        %v736 = vmul.f32 %v728, 0.03125
        %v737 = vmul.f32 %v729, 0.03125
        %v738 = vfloor.f32 %v730
        %v739 = vfloor.f32 %v731
        %v740 = vfloor.f32 %v732
        %v741 = vfloor.f32 %v733
        %v742 = vfloor.f32 %v734
        %v743 = vfloor.f32 %v735
        %v744 = vfloor.f32 %v736
        %v745 = vfloor.f32 %v737
        %v746 = vmul.f32 %v738, 32.0
        %v747 = vmul.f32 %v739, 32.0
        %v748 = vmul.f32 %v740, 32.0
        %v749 = vmul.f32 %v741, 32.0
        %v750 = vmul.f32 %v742, 32.0
        %v751 = vmul.f32 %v743, 32.0
        %v752 = vmul.f32 %v744, 32.0
        %v753 = vmul.f32 %v745, 32.0
        %v754 = vsub.f32 %v714, %v746
        %v755 = vsub.f32 %v715, %v747
        %v756 = vsub.f32 %v716, %v748
        %v757 = vsub.f32 %v717, %v749
        %v758 = vsub.f32 %v718, %v750
        %v759 = vsub.f32 %v719, %v751
        %v760 = vsub.f32 %v720, %v752
        %v761 = vsub.f32 %v721, %v753
        %v762 = vadd.f32 %v754, -3.0
        %v763 = vadd.f32 %v755, -3.0
        %v764 = vadd.f32 %v756, -3.0
        %v765 = vadd.f32 %v757, -3.0
        %v766 = vadd.f32 %v758, -3.0
        %v767 = vadd.f32 %v759, -3.0
        %v768 = vadd.f32 %v760, -3.0
        %v769 = vadd.f32 %v761, -3.0
        %vm770 = vcmp.ge.f32.partialorder %v762, 0.0
        %vm771 = vcmp.ge.f32.partialorder %v763, 0.0
        %vm772 = vcmp.ge.f32.partialorder %v764, 0.0
        %vm773 = vcmp.ge.f32.partialorder %v765, 0.0
        %vm774 = vcmp.ge.f32.partialorder %v766, 0.0
        %vm775 = vcmp.ge.f32.partialorder %v767, 0.0
        %vm776 = vcmp.ge.f32.partialorder %v768, 0.0
        %vm777 = vcmp.ge.f32.partialorder %v769, 0.0
        %vm778 = vcmp.le.f32.partialorder %v762, 31.0
        %vm779 = vcmp.le.f32.partialorder %v763, 31.0
        %vm780 = vcmp.le.f32.partialorder %v764, 31.0
        %vm781 = vcmp.le.f32.partialorder %v765, 31.0
        %vm782 = vcmp.le.f32.partialorder %v766, 31.0
        %vm783 = vcmp.le.f32.partialorder %v767, 31.0
        %vm784 = vcmp.le.f32.partialorder %v768, 31.0
        %vm785 = vcmp.le.f32.partialorder %v769, 31.0
        %vm786 = vmand %vm770, %vm778
        %vm787 = vmand %vm771, %vm779
        %vm788 = vmand %vm772, %vm780
        %vm789 = vmand %vm773, %vm781
        %vm790 = vmand %vm774, %vm782
        %vm791 = vmand %vm775, %vm783
        %vm792 = vmand %vm776, %vm784
        %vm793 = vmand %vm777, %vm785
        %v794 = vadd.f32 %v754, -2.0
        %v795 = vadd.f32 %v755, -2.0
        %v796 = vadd.f32 %v756, -2.0
        %v797 = vadd.f32 %v757, -2.0
        %v798 = vadd.f32 %v758, -2.0
        %v799 = vadd.f32 %v759, -2.0
        %v800 = vadd.f32 %v760, -2.0
        %v801 = vadd.f32 %v761, -2.0
        %vm802 = vcmp.ge.f32.partialorder %v794, 0.0
        %vm803 = vcmp.ge.f32.partialorder %v795, 0.0
        %vm804 = vcmp.ge.f32.partialorder %v796, 0.0
        %vm805 = vcmp.ge.f32.partialorder %v797, 0.0
        %vm806 = vcmp.ge.f32.partialorder %v798, 0.0
        %vm807 = vcmp.ge.f32.partialorder %v799, 0.0
        %vm808 = vcmp.ge.f32.partialorder %v800, 0.0
        %vm809 = vcmp.ge.f32.partialorder %v801, 0.0
        %vm810 = vcmp.le.f32.partialorder %v794, 31.0
        %vm811 = vcmp.le.f32.partialorder %v795, 31.0
        %vm812 = vcmp.le.f32.partialorder %v796, 31.0
        %vm813 = vcmp.le.f32.partialorder %v797, 31.0
        %vm814 = vcmp.le.f32.partialorder %v798, 31.0
        %vm815 = vcmp.le.f32.partialorder %v799, 31.0
        %vm816 = vcmp.le.f32.partialorder %v800, 31.0
        %vm817 = vcmp.le.f32.partialorder %v801, 31.0
        %vm818 = vmand %vm802, %vm810
        %vm819 = vmand %vm803, %vm811
        %vm820 = vmand %vm804, %vm812
        %vm821 = vmand %vm805, %vm813
        %vm822 = vmand %vm806, %vm814
        %vm823 = vmand %vm807, %vm815
        %vm824 = vmand %vm808, %vm816
        %vm825 = vmand %vm809, %vm817
        %v826 = vadd.f32 %v754, -1.0
        %v827 = vadd.f32 %v755, -1.0
        %v828 = vadd.f32 %v756, -1.0
        %v829 = vadd.f32 %v757, -1.0
        %v830 = vadd.f32 %v758, -1.0
        %v831 = vadd.f32 %v759, -1.0
        %v832 = vadd.f32 %v760, -1.0
        %v833 = vadd.f32 %v761, -1.0
        %vm834 = vcmp.ge.f32.partialorder %v826, 0.0
        %vm835 = vcmp.ge.f32.partialorder %v827, 0.0
        %vm836 = vcmp.ge.f32.partialorder %v828, 0.0
        %vm837 = vcmp.ge.f32.partialorder %v829, 0.0
        %vm838 = vcmp.ge.f32.partialorder %v830, 0.0
        %vm839 = vcmp.ge.f32.partialorder %v831, 0.0
        %vm840 = vcmp.ge.f32.partialorder %v832, 0.0
        %vm841 = vcmp.ge.f32.partialorder %v833, 0.0
        %vm842 = vcmp.le.f32.partialorder %v826, 31.0
        %vm843 = vcmp.le.f32.partialorder %v827, 31.0
        %vm844 = vcmp.le.f32.partialorder %v828, 31.0
        %vm845 = vcmp.le.f32.partialorder %v829, 31.0
        %vm846 = vcmp.le.f32.partialorder %v830, 31.0
        %vm847 = vcmp.le.f32.partialorder %v831, 31.0
        %vm848 = vcmp.le.f32.partialorder %v832, 31.0
        %vm849 = vcmp.le.f32.partialorder %v833, 31.0
        %vm850 = vmand %vm834, %vm842
        %vm851 = vmand %vm835, %vm843
        %vm852 = vmand %vm836, %vm844
        %vm853 = vmand %vm837, %vm845
        %vm854 = vmand %vm838, %vm846
        %vm855 = vmand %vm839, %vm847
        %vm856 = vmand %vm840, %vm848
        %vm857 = vmand %vm841, %vm849
        %v858 = vadd.f32 %v754, 0.0
        %v859 = vadd.f32 %v755, 0.0
        %v860 = vadd.f32 %v756, 0.0
        %v861 = vadd.f32 %v757, 0.0
        %v862 = vadd.f32 %v758, 0.0
        %v863 = vadd.f32 %v759, 0.0
        %v864 = vadd.f32 %v760, 0.0
        %v865 = vadd.f32 %v761, 0.0
        %vm866 = vcmp.ge.f32.partialorder %v858, 0.0
        %vm867 = vcmp.ge.f32.partialorder %v859, 0.0
        %vm868 = vcmp.ge.f32.partialorder %v860, 0.0
        %vm869 = vcmp.ge.f32.partialorder %v861, 0.0
        %vm870 = vcmp.ge.f32.partialorder %v862, 0.0
        %vm871 = vcmp.ge.f32.partialorder %v863, 0.0
        %vm872 = vcmp.ge.f32.partialorder %v864, 0.0
        %vm873 = vcmp.ge.f32.partialorder %v865, 0.0
        %vm874 = vcmp.le.f32.partialorder %v858, 31.0
        %vm875 = vcmp.le.f32.partialorder %v859, 31.0
        %vm876 = vcmp.le.f32.partialorder %v860, 31.0
        %vm877 = vcmp.le.f32.partialorder %v861, 31.0
        %vm878 = vcmp.le.f32.partialorder %v862, 31.0
        %vm879 = vcmp.le.f32.partialorder %v863, 31.0
        %vm880 = vcmp.le.f32.partialorder %v864, 31.0
        %vm881 = vcmp.le.f32.partialorder %v865, 31.0
        %vm882 = vmand %vm866, %vm874
        %vm883 = vmand %vm867, %vm875
        %vm884 = vmand %vm868, %vm876
        %vm885 = vmand %vm869, %vm877
        %vm886 = vmand %vm870, %vm878
        %vm887 = vmand %vm871, %vm879
        %vm888 = vmand %vm872, %vm880
        %vm889 = vmand %vm873, %vm881
        %v890 = vadd.f32 %v754, 1.0
        %v891 = vadd.f32 %v755, 1.0
        %v892 = vadd.f32 %v756, 1.0
        %v893 = vadd.f32 %v757, 1.0
        %v894 = vadd.f32 %v758, 1.0
        %v895 = vadd.f32 %v759, 1.0
        %v896 = vadd.f32 %v760, 1.0
        %v897 = vadd.f32 %v761, 1.0
        %vm898 = vcmp.ge.f32.partialorder %v890, 0.0
        %vm899 = vcmp.ge.f32.partialorder %v891, 0.0
        %vm900 = vcmp.ge.f32.partialorder %v892, 0.0
        %vm901 = vcmp.ge.f32.partialorder %v893, 0.0
        %vm902 = vcmp.ge.f32.partialorder %v894, 0.0
        %vm903 = vcmp.ge.f32.partialorder %v895, 0.0
        %vm904 = vcmp.ge.f32.partialorder %v896, 0.0
        %vm905 = vcmp.ge.f32.partialorder %v897, 0.0
        %vm906 = vcmp.le.f32.partialorder %v890, 31.0
        %vm907 = vcmp.le.f32.partialorder %v891, 31.0
        %vm908 = vcmp.le.f32.partialorder %v892, 31.0
        %vm909 = vcmp.le.f32.partialorder %v893, 31.0
        %vm910 = vcmp.le.f32.partialorder %v894, 31.0
        %vm911 = vcmp.le.f32.partialorder %v895, 31.0
        %vm912 = vcmp.le.f32.partialorder %v896, 31.0
        %vm913 = vcmp.le.f32.partialorder %v897, 31.0
        %vm914 = vmand %vm898, %vm906
        %vm915 = vmand %vm899, %vm907
        %vm916 = vmand %vm900, %vm908
        %vm917 = vmand %vm901, %vm909
        %vm918 = vmand %vm902, %vm910
        %vm919 = vmand %vm903, %vm911
        %vm920 = vmand %vm904, %vm912
        %vm921 = vmand %vm905, %vm913
        %v922 = vadd.f32 %v754, 2.0
        %v923 = vadd.f32 %v755, 2.0
        %v924 = vadd.f32 %v756, 2.0
        %v925 = vadd.f32 %v757, 2.0
        %v926 = vadd.f32 %v758, 2.0
        %v927 = vadd.f32 %v759, 2.0
        %v928 = vadd.f32 %v760, 2.0
        %v929 = vadd.f32 %v761, 2.0
        %vm930 = vcmp.ge.f32.partialorder %v922, 0.0
        %vm931 = vcmp.ge.f32.partialorder %v923, 0.0
        %vm932 = vcmp.ge.f32.partialorder %v924, 0.0
        %vm933 = vcmp.ge.f32.partialorder %v925, 0.0
        %vm934 = vcmp.ge.f32.partialorder %v926, 0.0
        %vm935 = vcmp.ge.f32.partialorder %v927, 0.0
        %vm936 = vcmp.ge.f32.partialorder %v928, 0.0
        %vm937 = vcmp.ge.f32.partialorder %v929, 0.0
        %vm938 = vcmp.le.f32.partialorder %v922, 31.0
        %vm939 = vcmp.le.f32.partialorder %v923, 31.0
        %vm940 = vcmp.le.f32.partialorder %v924, 31.0
        %vm941 = vcmp.le.f32.partialorder %v925, 31.0
        %vm942 = vcmp.le.f32.partialorder %v926, 31.0
        %vm943 = vcmp.le.f32.partialorder %v927, 31.0
        %vm944 = vcmp.le.f32.partialorder %v928, 31.0
        %vm945 = vcmp.le.f32.partialorder %v929, 31.0
        %vm946 = vmand %vm930, %vm938
        %vm947 = vmand %vm931, %vm939
        %vm948 = vmand %vm932, %vm940
        %vm949 = vmand %vm933, %vm941
        %vm950 = vmand %vm934, %vm942
        %vm951 = vmand %vm935, %vm943
        %vm952 = vmand %vm936, %vm944
        %vm953 = vmand %vm937, %vm945
        %v954 = vadd.f32 %v754, 3.0
        %v955 = vadd.f32 %v755, 3.0
        %v956 = vadd.f32 %v756, 3.0
        %v957 = vadd.f32 %v757, 3.0
        %v958 = vadd.f32 %v758, 3.0
        %v959 = vadd.f32 %v759, 3.0
        %v960 = vadd.f32 %v760, 3.0
        %v961 = vadd.f32 %v761, 3.0
        %vm962 = vcmp.ge.f32.partialorder %v954, 0.0
        %vm963 = vcmp.ge.f32.partialorder %v955, 0.0
        %vm964 = vcmp.ge.f32.partialorder %v956, 0.0
        %vm965 = vcmp.ge.f32.partialorder %v957, 0.0
        %vm966 = vcmp.ge.f32.partialorder %v958, 0.0
        %vm967 = vcmp.ge.f32.partialorder %v959, 0.0
        %vm968 = vcmp.ge.f32.partialorder %v960, 0.0
        %vm969 = vcmp.ge.f32.partialorder %v961, 0.0
        %vm970 = vcmp.le.f32.partialorder %v954, 31.0
        %vm971 = vcmp.le.f32.partialorder %v955, 31.0
        %vm972 = vcmp.le.f32.partialorder %v956, 31.0
        %vm973 = vcmp.le.f32.partialorder %v957, 31.0
        %vm974 = vcmp.le.f32.partialorder %v958, 31.0
        %vm975 = vcmp.le.f32.partialorder %v959, 31.0
        %vm976 = vcmp.le.f32.partialorder %v960, 31.0
        %vm977 = vcmp.le.f32.partialorder %v961, 31.0
        %vm978 = vmand %vm962, %vm970
        %vm979 = vmand %vm963, %vm971
        %vm980 = vmand %vm964, %vm972
        %vm981 = vmand %vm965, %vm973
        %vm982 = vmand %vm966, %vm974
        %vm983 = vmand %vm967, %vm975
        %vm984 = vmand %vm968, %vm976
        %vm985 = vmand %vm969, %vm977
        %v986 = vadd.f32 %v738, -3.0
        %v987 = vadd.f32 %v739, -3.0
        %v988 = vadd.f32 %v740, -3.0
        %v989 = vadd.f32 %v741, -3.0
        %v990 = vadd.f32 %v742, -3.0
        %v991 = vadd.f32 %v743, -3.0
        %v992 = vadd.f32 %v744, -3.0
        %v993 = vadd.f32 %v745, -3.0
        %vm994 = vcmp.ge.f32.partialorder %v986, 0.0
        %vm995 = vcmp.ge.f32.partialorder %v987, 0.0
        %vm996 = vcmp.ge.f32.partialorder %v988, 0.0
        %vm997 = vcmp.ge.f32.partialorder %v989, 0.0
        %vm998 = vcmp.ge.f32.partialorder %v990, 0.0
        %vm999 = vcmp.ge.f32.partialorder %v991, 0.0
        %vm1000 = vcmp.ge.f32.partialorder %v992, 0.0
        %vm1001 = vcmp.ge.f32.partialorder %v993, 0.0
        %vm1002 = vcmp.le.f32.partialorder %v986, 31.0
        %vm1003 = vcmp.le.f32.partialorder %v987, 31.0
        %vm1004 = vcmp.le.f32.partialorder %v988, 31.0
        %vm1005 = vcmp.le.f32.partialorder %v989, 31.0
        %vm1006 = vcmp.le.f32.partialorder %v990, 31.0
        %vm1007 = vcmp.le.f32.partialorder %v991, 31.0
        %vm1008 = vcmp.le.f32.partialorder %v992, 31.0
        %vm1009 = vcmp.le.f32.partialorder %v993, 31.0
        %vm1010 = vmand %vm994, %vm1002
        %vm1011 = vmand %vm995, %vm1003
        %vm1012 = vmand %vm996, %vm1004
        %vm1013 = vmand %vm997, %vm1005
        %vm1014 = vmand %vm998, %vm1006
        %vm1015 = vmand %vm999, %vm1007
        %vm1016 = vmand %vm1000, %vm1008
        %vm1017 = vmand %vm1001, %vm1009
        %v1018 = vadd.f32 %v738, -2.0
        %v1019 = vadd.f32 %v739, -2.0
        %v1020 = vadd.f32 %v740, -2.0
        %v1021 = vadd.f32 %v741, -2.0
        %v1022 = vadd.f32 %v742, -2.0
        %v1023 = vadd.f32 %v743, -2.0
        %v1024 = vadd.f32 %v744, -2.0
        %v1025 = vadd.f32 %v745, -2.0
        %vm1026 = vcmp.ge.f32.partialorder %v1018, 0.0
        %vm1027 = vcmp.ge.f32.partialorder %v1019, 0.0
        %vm1028 = vcmp.ge.f32.partialorder %v1020, 0.0
        %vm1029 = vcmp.ge.f32.partialorder %v1021, 0.0
        %vm1030 = vcmp.ge.f32.partialorder %v1022, 0.0
        %vm1031 = vcmp.ge.f32.partialorder %v1023, 0.0
        %vm1032 = vcmp.ge.f32.partialorder %v1024, 0.0
        %vm1033 = vcmp.ge.f32.partialorder %v1025, 0.0
        %vm1034 = vcmp.le.f32.partialorder %v1018, 31.0
        %vm1035 = vcmp.le.f32.partialorder %v1019, 31.0
        %vm1036 = vcmp.le.f32.partialorder %v1020, 31.0
        %vm1037 = vcmp.le.f32.partialorder %v1021, 31.0
        %vm1038 = vcmp.le.f32.partialorder %v1022, 31.0
        %vm1039 = vcmp.le.f32.partialorder %v1023, 31.0
        %vm1040 = vcmp.le.f32.partialorder %v1024, 31.0
        %vm1041 = vcmp.le.f32.partialorder %v1025, 31.0
        %vm1042 = vmand %vm1026, %vm1034
        %vm1043 = vmand %vm1027, %vm1035
        %vm1044 = vmand %vm1028, %vm1036
        %vm1045 = vmand %vm1029, %vm1037
        %vm1046 = vmand %vm1030, %vm1038
        %vm1047 = vmand %vm1031, %vm1039
        %vm1048 = vmand %vm1032, %vm1040
        %vm1049 = vmand %vm1033, %vm1041
        %v1050 = vadd.f32 %v738, -1.0
        %v1051 = vadd.f32 %v739, -1.0
        %v1052 = vadd.f32 %v740, -1.0
        %v1053 = vadd.f32 %v741, -1.0
        %v1054 = vadd.f32 %v742, -1.0
        %v1055 = vadd.f32 %v743, -1.0
        %v1056 = vadd.f32 %v744, -1.0
        %v1057 = vadd.f32 %v745, -1.0
        %vm1058 = vcmp.ge.f32.partialorder %v1050, 0.0
        %vm1059 = vcmp.ge.f32.partialorder %v1051, 0.0
        %vm1060 = vcmp.ge.f32.partialorder %v1052, 0.0
        %vm1061 = vcmp.ge.f32.partialorder %v1053, 0.0
        %vm1062 = vcmp.ge.f32.partialorder %v1054, 0.0
        %vm1063 = vcmp.ge.f32.partialorder %v1055, 0.0
        %vm1064 = vcmp.ge.f32.partialorder %v1056, 0.0
        %vm1065 = vcmp.ge.f32.partialorder %v1057, 0.0
        %vm1066 = vcmp.le.f32.partialorder %v1050, 31.0
        %vm1067 = vcmp.le.f32.partialorder %v1051, 31.0
        %vm1068 = vcmp.le.f32.partialorder %v1052, 31.0
        %vm1069 = vcmp.le.f32.partialorder %v1053, 31.0
        %vm1070 = vcmp.le.f32.partialorder %v1054, 31.0
        %vm1071 = vcmp.le.f32.partialorder %v1055, 31.0
        %vm1072 = vcmp.le.f32.partialorder %v1056, 31.0
        %vm1073 = vcmp.le.f32.partialorder %v1057, 31.0
        %vm1074 = vmand %vm1058, %vm1066
        %vm1075 = vmand %vm1059, %vm1067
        %vm1076 = vmand %vm1060, %vm1068
        %vm1077 = vmand %vm1061, %vm1069
        %vm1078 = vmand %vm1062, %vm1070
        %vm1079 = vmand %vm1063, %vm1071
        %vm1080 = vmand %vm1064, %vm1072
        %vm1081 = vmand %vm1065, %vm1073
        %v1082 = vadd.f32 %v738, 0.0
        %v1083 = vadd.f32 %v739, 0.0
        %v1084 = vadd.f32 %v740, 0.0
        %v1085 = vadd.f32 %v741, 0.0
        %v1086 = vadd.f32 %v742, 0.0
        %v1087 = vadd.f32 %v743, 0.0
        %v1088 = vadd.f32 %v744, 0.0
        %v1089 = vadd.f32 %v745, 0.0
        %vm1090 = vcmp.ge.f32.partialorder %v1082, 0.0
        %vm1091 = vcmp.ge.f32.partialorder %v1083, 0.0
        %vm1092 = vcmp.ge.f32.partialorder %v1084, 0.0
        %vm1093 = vcmp.ge.f32.partialorder %v1085, 0.0
        %vm1094 = vcmp.ge.f32.partialorder %v1086, 0.0
        %vm1095 = vcmp.ge.f32.partialorder %v1087, 0.0
        %vm1096 = vcmp.ge.f32.partialorder %v1088, 0.0
        %vm1097 = vcmp.ge.f32.partialorder %v1089, 0.0
        %vm1098 = vcmp.le.f32.partialorder %v1082, 31.0
        %vm1099 = vcmp.le.f32.partialorder %v1083, 31.0
        %vm1100 = vcmp.le.f32.partialorder %v1084, 31.0
        %vm1101 = vcmp.le.f32.partialorder %v1085, 31.0
        %vm1102 = vcmp.le.f32.partialorder %v1086, 31.0
        %vm1103 = vcmp.le.f32.partialorder %v1087, 31.0
        %vm1104 = vcmp.le.f32.partialorder %v1088, 31.0
        %vm1105 = vcmp.le.f32.partialorder %v1089, 31.0
        %vm1106 = vmand %vm1090, %vm1098
        %vm1107 = vmand %vm1091, %vm1099
        %vm1108 = vmand %vm1092, %vm1100
        %vm1109 = vmand %vm1093, %vm1101
        %vm1110 = vmand %vm1094, %vm1102
        %vm1111 = vmand %vm1095, %vm1103
        %vm1112 = vmand %vm1096, %vm1104
        %vm1113 = vmand %vm1097, %vm1105
        %v1114 = vadd.f32 %v738, 1.0
        %v1115 = vadd.f32 %v739, 1.0
        %v1116 = vadd.f32 %v740, 1.0
        %v1117 = vadd.f32 %v741, 1.0
        %v1118 = vadd.f32 %v742, 1.0
        %v1119 = vadd.f32 %v743, 1.0
        %v1120 = vadd.f32 %v744, 1.0
        %v1121 = vadd.f32 %v745, 1.0
        %vm1122 = vcmp.ge.f32.partialorder %v1114, 0.0
        %vm1123 = vcmp.ge.f32.partialorder %v1115, 0.0
        %vm1124 = vcmp.ge.f32.partialorder %v1116, 0.0
        %vm1125 = vcmp.ge.f32.partialorder %v1117, 0.0
        %vm1126 = vcmp.ge.f32.partialorder %v1118, 0.0
        %vm1127 = vcmp.ge.f32.partialorder %v1119, 0.0
        %vm1128 = vcmp.ge.f32.partialorder %v1120, 0.0
        %vm1129 = vcmp.ge.f32.partialorder %v1121, 0.0
        %vm1130 = vcmp.le.f32.partialorder %v1114, 31.0
        %vm1131 = vcmp.le.f32.partialorder %v1115, 31.0
        %vm1132 = vcmp.le.f32.partialorder %v1116, 31.0
        %vm1133 = vcmp.le.f32.partialorder %v1117, 31.0
        %vm1134 = vcmp.le.f32.partialorder %v1118, 31.0
        %vm1135 = vcmp.le.f32.partialorder %v1119, 31.0
        %vm1136 = vcmp.le.f32.partialorder %v1120, 31.0
        %vm1137 = vcmp.le.f32.partialorder %v1121, 31.0
        %vm1138 = vmand %vm1122, %vm1130
        %vm1139 = vmand %vm1123, %vm1131
        %vm1140 = vmand %vm1124, %vm1132
        %vm1141 = vmand %vm1125, %vm1133
        %vm1142 = vmand %vm1126, %vm1134
        %vm1143 = vmand %vm1127, %vm1135
        %vm1144 = vmand %vm1128, %vm1136
        %vm1145 = vmand %vm1129, %vm1137
        %v1146 = vadd.f32 %v738, 2.0
        %v1147 = vadd.f32 %v739, 2.0
        %v1148 = vadd.f32 %v740, 2.0
        %v1149 = vadd.f32 %v741, 2.0
        %v1150 = vadd.f32 %v742, 2.0
        %v1151 = vadd.f32 %v743, 2.0
        %v1152 = vadd.f32 %v744, 2.0
        %v1153 = vadd.f32 %v745, 2.0
        %vm1154 = vcmp.ge.f32.partialorder %v1146, 0.0
        %vm1155 = vcmp.ge.f32.partialorder %v1147, 0.0
        %vm1156 = vcmp.ge.f32.partialorder %v1148, 0.0
        %vm1157 = vcmp.ge.f32.partialorder %v1149, 0.0
        %vm1158 = vcmp.ge.f32.partialorder %v1150, 0.0
        %vm1159 = vcmp.ge.f32.partialorder %v1151, 0.0
        %vm1160 = vcmp.ge.f32.partialorder %v1152, 0.0
        %vm1161 = vcmp.ge.f32.partialorder %v1153, 0.0
        %vm1162 = vcmp.le.f32.partialorder %v1146, 31.0
        %vm1163 = vcmp.le.f32.partialorder %v1147, 31.0
        %vm1164 = vcmp.le.f32.partialorder %v1148, 31.0
        %vm1165 = vcmp.le.f32.partialorder %v1149, 31.0
        %vm1166 = vcmp.le.f32.partialorder %v1150, 31.0
        %vm1167 = vcmp.le.f32.partialorder %v1151, 31.0
        %vm1168 = vcmp.le.f32.partialorder %v1152, 31.0
        %vm1169 = vcmp.le.f32.partialorder %v1153, 31.0
        %vm1170 = vmand %vm1154, %vm1162
        %vm1171 = vmand %vm1155, %vm1163
        %vm1172 = vmand %vm1156, %vm1164
        %vm1173 = vmand %vm1157, %vm1165
        %vm1174 = vmand %vm1158, %vm1166
        %vm1175 = vmand %vm1159, %vm1167
        %vm1176 = vmand %vm1160, %vm1168
        %vm1177 = vmand %vm1161, %vm1169
        %v1178 = vadd.f32 %v738, 3.0
        %v1179 = vadd.f32 %v739, 3.0
        %v1180 = vadd.f32 %v740, 3.0
        %v1181 = vadd.f32 %v741, 3.0
        %v1182 = vadd.f32 %v742, 3.0
        %v1183 = vadd.f32 %v743, 3.0
        %v1184 = vadd.f32 %v744, 3.0
        %v1185 = vadd.f32 %v745, 3.0
        %vm1186 = vcmp.ge.f32.partialorder %v1178, 0.0
        %vm1187 = vcmp.ge.f32.partialorder %v1179, 0.0
        %vm1188 = vcmp.ge.f32.partialorder %v1180, 0.0
        %vm1189 = vcmp.ge.f32.partialorder %v1181, 0.0
        %vm1190 = vcmp.ge.f32.partialorder %v1182, 0.0
        %vm1191 = vcmp.ge.f32.partialorder %v1183, 0.0
        %vm1192 = vcmp.ge.f32.partialorder %v1184, 0.0
        %vm1193 = vcmp.ge.f32.partialorder %v1185, 0.0
        %vm1194 = vcmp.le.f32.partialorder %v1178, 31.0
        %vm1195 = vcmp.le.f32.partialorder %v1179, 31.0
        %vm1196 = vcmp.le.f32.partialorder %v1180, 31.0
        %vm1197 = vcmp.le.f32.partialorder %v1181, 31.0
        %vm1198 = vcmp.le.f32.partialorder %v1182, 31.0
        %vm1199 = vcmp.le.f32.partialorder %v1183, 31.0
        %vm1200 = vcmp.le.f32.partialorder %v1184, 31.0
        %vm1201 = vcmp.le.f32.partialorder %v1185, 31.0
        %vm1202 = vmand %vm1186, %vm1194
        %vm1203 = vmand %vm1187, %vm1195
        %vm1204 = vmand %vm1188, %vm1196
        %vm1205 = vmand %vm1189, %vm1197
        %vm1206 = vmand %vm1190, %vm1198
        %vm1207 = vmand %vm1191, %vm1199
        %vm1208 = vmand %vm1192, %vm1200
        %vm1209 = vmand %vm1193, %vm1201
        %s1210 = sld [smem:[#allocation2]]
        %v1211 = vstv %s1210
        %1212 = vrot.lane.b32.xlu0 %v699, 3
        %v1213 = vpop.permute.xlu0 %1212
        %1214 = vrot.lane.b32.xlu0 %v700, 3
        %v1215 = vpop.permute.xlu0 %1214
        %1216 = vrot.lane.b32.xlu0 %v701, 3
        %v1217 = vpop.permute.xlu0 %1216
        %1218 = vrot.lane.b32.xlu0 %v702, 3
        %v1219 = vpop.permute.xlu0 %1218
        %1220 = vrot.lane.b32.xlu0 %v703, 3
        %v1221 = vpop.permute.xlu0 %1220
        %1222 = vrot.lane.b32.xlu0 %v704, 3
        %v1223 = vpop.permute.xlu0 %1222
        %1224 = vrot.lane.b32.xlu0 %v705, 3
        %v1225 = vpop.permute.xlu0 %1224
        %1226 = vrot.lane.b32.xlu0 %v706, 3
        %v1227 = vpop.permute.xlu0 %1226
        %vm1228 = vcmp.lt.s32.totalorder %v363, 3
        %v1229 = vsel %vm1228, %v1225, %v1227
        %v1230 = vsel %vm1228, %v1223, %v1225
        %v1231 = vsel %vm1228, %v1221, %v1223
        %v1232 = vsel %vm1228, %v1219, %v1221
        %v1233 = vsel %vm1228, %v1217, %v1219
        %v1234 = vsel %vm1228, %v1215, %v1217
        %v1235 = vsel %vm1228, %v1213, %v1215
        %v1236 = vsel %vm1228, %v1227, %v1213
        %v1237 = vsel %vm786, 1, 0
        %v1238 = vsel %vm787, 1, 0
        %v1239 = vsel %vm788, 1, 0
        %v1240 = vsel %vm789, 1, 0
        %v1241 = vsel %vm790, 1, 0
        %v1242 = vsel %vm791, 1, 0
        %v1243 = vsel %vm792, 1, 0
        %v1244 = vsel %vm793, 1, 0
        %vm1245 = vcmp.eq.s32.totalorder %v1237, 1
        %vm1246 = vcmp.eq.s32.totalorder %v1238, 1
        %vm1247 = vcmp.eq.s32.totalorder %v1239, 1
        %vm1248 = vcmp.eq.s32.totalorder %v1240, 1
        %vm1249 = vcmp.eq.s32.totalorder %v1241, 1
        %vm1250 = vcmp.eq.s32.totalorder %v1242, 1
        %vm1251 = vcmp.eq.s32.totalorder %v1243, 1
        %vm1252 = vcmp.eq.s32.totalorder %v1244, 1
        %v1253 = vsel %vm1245, %v1236, 0.0
        %v1254 = vsel %vm1246, %v1235, 0.0
        %v1255 = vsel %vm1247, %v1234, 0.0
        %v1256 = vsel %vm1248, %v1233, 0.0
        %v1257 = vsel %vm1249, %v1232, 0.0
        %v1258 = vsel %vm1250, %v1231, 0.0
        %v1259 = vsel %vm1251, %v1230, 0.0
        %v1260 = vsel %vm1252, %v1229, 0.0
        %1261 = vrot.lane.b32.xlu0 %v1253, 96
        %v1262 = vpop.permute.xlu0 %1261
        %1263 = vrot.lane.b32.xlu0 %v1254, 96
        %v1264 = vpop.permute.xlu0 %1263
        %1265 = vrot.lane.b32.xlu0 %v1255, 96
        %v1266 = vpop.permute.xlu0 %1265
        %1267 = vrot.lane.b32.xlu0 %v1256, 96
        %v1268 = vpop.permute.xlu0 %1267
        %1269 = vrot.lane.b32.xlu0 %v1257, 96
        %v1270 = vpop.permute.xlu0 %1269
        %1271 = vrot.lane.b32.xlu0 %v1258, 96
        %v1272 = vpop.permute.xlu0 %1271
        %1273 = vrot.lane.b32.xlu0 %v1259, 96
        %v1274 = vpop.permute.xlu0 %1273
        %1275 = vrot.lane.b32.xlu0 %v1260, 96
        %v1276 = vpop.permute.xlu0 %1275
        %vm1277 = vcmp.lt.s32.totalorder %v363, 96
        %v1278 = vsel %vm1277, %v1274, %v1276
        %v1279 = vsel %vm1277, %v1272, %v1274
        %v1280 = vsel %vm1277, %v1270, %v1272
        %v1281 = vsel %vm1277, %v1268, %v1270
        %v1282 = vsel %vm1277, %v1266, %v1268
        %v1283 = vsel %vm1277, %v1264, %v1266
        %v1284 = vsel %vm1277, %v1262, %v1264
        %v1285 = vsel %vm1277, %v1276, %v1262
        %v1286 = vsel %vm1010, 1, 0
        %v1287 = vsel %vm1011, 1, 0
        %v1288 = vsel %vm1012, 1, 0
        %v1289 = vsel %vm1013, 1, 0
        %v1290 = vsel %vm1014, 1, 0
        %v1291 = vsel %vm1015, 1, 0
        %v1292 = vsel %vm1016, 1, 0
        %v1293 = vsel %vm1017, 1, 0
        %vm1294 = vcmp.eq.s32.totalorder %v1286, 1
        %vm1295 = vcmp.eq.s32.totalorder %v1287, 1
        %vm1296 = vcmp.eq.s32.totalorder %v1288, 1
        %vm1297 = vcmp.eq.s32.totalorder %v1289, 1
        %vm1298 = vcmp.eq.s32.totalorder %v1290, 1
        %vm1299 = vcmp.eq.s32.totalorder %v1291, 1
        %vm1300 = vcmp.eq.s32.totalorder %v1292, 1
        %vm1301 = vcmp.eq.s32.totalorder %v1293, 1
        %v1302 = vsel %vm1294, %v1285, 0.0
        %v1303 = vsel %vm1295, %v1284, 0.0
        %v1304 = vsel %vm1296, %v1283, 0.0
        %v1305 = vsel %vm1297, %v1282, 0.0
        %v1306 = vsel %vm1298, %v1281, 0.0
        %v1307 = vsel %vm1299, %v1280, 0.0
        %v1308 = vsel %vm1300, %v1279, 0.0
        %v1309 = vsel %vm1301, %v1278, 0.0
        %s1310 = sld [smem:[#allocation7]]
        %s1311 = sld [smem:[#allocation7 + $0x31]]
        %v1312 = vstv %s1310
        %v1313 = vmul.f32 %v1312, %v1302
        %v1314 = vmul.f32 %v1312, %v1303
        %v1315 = vmul.f32 %v1312, %v1304
        %v1316 = vmul.f32 %v1312, %v1305
        %v1317 = vmul.f32 %v1312, %v1306
        %v1318 = vmul.f32 %v1312, %v1307
        %v1319 = vmul.f32 %v1312, %v1308
        %v1320 = vmul.f32 %v1312, %v1309
        %v1321 = vadd.f32 %v1211, %v1313
        %v1322 = vadd.f32 %v1211, %v1314
        %v1323 = vadd.f32 %v1211, %v1315
        %v1324 = vadd.f32 %v1211, %v1316
        %v1325 = vadd.f32 %v1211, %v1317
        %v1326 = vadd.f32 %v1211, %v1318
        %v1327 = vadd.f32 %v1211, %v1319
        %v1328 = vadd.f32 %v1211, %v1320
        %v1329 = vstv %s1311
        %v1330 = vmul.f32 %v1329, %v1302
        %v1331 = vmul.f32 %v1329, %v1303
        %v1332 = vmul.f32 %v1329, %v1304
        %v1333 = vmul.f32 %v1329, %v1305
        %v1334 = vmul.f32 %v1329, %v1306
        %v1335 = vmul.f32 %v1329, %v1307
        %v1336 = vmul.f32 %v1329, %v1308
        %v1337 = vmul.f32 %v1329, %v1309
        %v1346 = vrot.slane %v1330, 1
        %v1347 = vrot.slane %v1331, 1
        %v1348 = vrot.slane %v1332, 1
        %v1349 = vrot.slane %v1333, 1
        %v1350 = vrot.slane %v1334, 1
        %v1351 = vrot.slane %v1335, 1
        %v1352 = vrot.slane %v1336, 1
        %v1353 = vrot.slane %v1337, 1
        %v1362 = vadd.f32 %v1321, %v1346
        %v1363 = vadd.f32 %v1322, %v1347
        %v1364 = vadd.f32 %v1323, %v1348
        %v1365 = vadd.f32 %v1324, %v1349
        %v1366 = vadd.f32 %v1325, %v1350
        %v1367 = vadd.f32 %v1326, %v1351
        %v1368 = vadd.f32 %v1327, %v1352
        %v1369 = vadd.f32 %v1328, %v1353
        %1370 = vrot.lane.b32.xlu0 %v1253, 64
        %v1371 = vpop.permute.xlu0 %1370
        %1372 = vrot.lane.b32.xlu0 %v1254, 64
        %v1373 = vpop.permute.xlu0 %1372
        %1374 = vrot.lane.b32.xlu0 %v1255, 64
        %v1375 = vpop.permute.xlu0 %1374
        %1376 = vrot.lane.b32.xlu0 %v1256, 64
        %v1377 = vpop.permute.xlu0 %1376
        %1378 = vrot.lane.b32.xlu0 %v1257, 64
        %v1379 = vpop.permute.xlu0 %1378
        %1380 = vrot.lane.b32.xlu0 %v1258, 64
        %v1381 = vpop.permute.xlu0 %1380
        %1382 = vrot.lane.b32.xlu0 %v1259, 64
        %v1383 = vpop.permute.xlu0 %1382
        %1384 = vrot.lane.b32.xlu0 %v1260, 64
        %v1385 = vpop.permute.xlu0 %1384
        %vm1386 = vcmp.lt.s32.totalorder %v363, 64
        %v1387 = vsel %vm1386, %v1383, %v1385
        %v1388 = vsel %vm1386, %v1381, %v1383
        %v1389 = vsel %vm1386, %v1379, %v1381
        %v1390 = vsel %vm1386, %v1377, %v1379
        %v1391 = vsel %vm1386, %v1375, %v1377
        %v1392 = vsel %vm1386, %v1373, %v1375
        %v1393 = vsel %vm1386, %v1371, %v1373
        %v1394 = vsel %vm1386, %v1385, %v1371
        %v1395 = vsel %vm1042, 1, 0
        %v1396 = vsel %vm1043, 1, 0
        %v1397 = vsel %vm1044, 1, 0
        %v1398 = vsel %vm1045, 1, 0
        %v1399 = vsel %vm1046, 1, 0
        %v1400 = vsel %vm1047, 1, 0
        %v1401 = vsel %vm1048, 1, 0
        %v1402 = vsel %vm1049, 1, 0
        %vm1403 = vcmp.eq.s32.totalorder %v1395, 1
        %vm1404 = vcmp.eq.s32.totalorder %v1396, 1
        %vm1405 = vcmp.eq.s32.totalorder %v1397, 1
        %vm1406 = vcmp.eq.s32.totalorder %v1398, 1
        %vm1407 = vcmp.eq.s32.totalorder %v1399, 1
        %vm1408 = vcmp.eq.s32.totalorder %v1400, 1
        %vm1409 = vcmp.eq.s32.totalorder %v1401, 1
        %vm1410 = vcmp.eq.s32.totalorder %v1402, 1
        %v1411 = vsel %vm1403, %v1394, 0.0
        %v1412 = vsel %vm1404, %v1393, 0.0
        %v1413 = vsel %vm1405, %v1392, 0.0
        %v1414 = vsel %vm1406, %v1391, 0.0
        %v1415 = vsel %vm1407, %v1390, 0.0
        %v1416 = vsel %vm1408, %v1389, 0.0
        %v1417 = vsel %vm1409, %v1388, 0.0
        %v1418 = vsel %vm1410, %v1387, 0.0
        %s1419 = sld [smem:[#allocation7 + $0x7]]
        %s1420 = sld [smem:[#allocation7 + $0x38]]
        %v1421 = vstv %s1419
        %v1422 = vmul.f32 %v1421, %v1411
        %v1423 = vmul.f32 %v1421, %v1412
        %v1424 = vmul.f32 %v1421, %v1413
        %v1425 = vmul.f32 %v1421, %v1414
        %v1426 = vmul.f32 %v1421, %v1415
        %v1427 = vmul.f32 %v1421, %v1416
        %v1428 = vmul.f32 %v1421, %v1417
        %v1429 = vmul.f32 %v1421, %v1418
        %v1430 = vadd.f32 %v1362, %v1422
        %v1431 = vadd.f32 %v1363, %v1423
        %v1432 = vadd.f32 %v1364, %v1424
        %v1433 = vadd.f32 %v1365, %v1425
        %v1434 = vadd.f32 %v1366, %v1426
        %v1435 = vadd.f32 %v1367, %v1427
        %v1436 = vadd.f32 %v1368, %v1428
        %v1437 = vadd.f32 %v1369, %v1429
        %v1438 = vstv %s1420
        %v1439 = vmul.f32 %v1438, %v1411
        %v1440 = vmul.f32 %v1438, %v1412
        %v1441 = vmul.f32 %v1438, %v1413
        %v1442 = vmul.f32 %v1438, %v1414
        %v1443 = vmul.f32 %v1438, %v1415
        %v1444 = vmul.f32 %v1438, %v1416
        %v1445 = vmul.f32 %v1438, %v1417
        %v1446 = vmul.f32 %v1438, %v1418
        %v1455 = vrot.slane %v1439, 1
        %v1456 = vrot.slane %v1440, 1
        %v1457 = vrot.slane %v1441, 1
        %v1458 = vrot.slane %v1442, 1
        %v1459 = vrot.slane %v1443, 1
        %v1460 = vrot.slane %v1444, 1
        %v1461 = vrot.slane %v1445, 1
        %v1462 = vrot.slane %v1446, 1
        %v1471 = vadd.f32 %v1430, %v1455
        %v1472 = vadd.f32 %v1431, %v1456
        %v1473 = vadd.f32 %v1432, %v1457
        %v1474 = vadd.f32 %v1433, %v1458
        %v1475 = vadd.f32 %v1434, %v1459
        %v1476 = vadd.f32 %v1435, %v1460
        %v1477 = vadd.f32 %v1436, %v1461
        %v1478 = vadd.f32 %v1437, %v1462
        %1479 = vrot.lane.b32.xlu0 %v1253, 32
        %v1480 = vpop.permute.xlu0 %1479
        %1481 = vrot.lane.b32.xlu0 %v1254, 32
        %v1482 = vpop.permute.xlu0 %1481
        %1483 = vrot.lane.b32.xlu0 %v1255, 32
        %v1484 = vpop.permute.xlu0 %1483
        %1485 = vrot.lane.b32.xlu0 %v1256, 32
        %v1486 = vpop.permute.xlu0 %1485
        %1487 = vrot.lane.b32.xlu0 %v1257, 32
        %v1488 = vpop.permute.xlu0 %1487
        %1489 = vrot.lane.b32.xlu0 %v1258, 32
        %v1490 = vpop.permute.xlu0 %1489
        %1491 = vrot.lane.b32.xlu0 %v1259, 32
        %v1492 = vpop.permute.xlu0 %1491
        %1493 = vrot.lane.b32.xlu0 %v1260, 32
        %v1494 = vpop.permute.xlu0 %1493
        %vm1495 = vcmp.lt.s32.totalorder %v363, 32
        %v1496 = vsel %vm1495, %v1492, %v1494
        %v1497 = vsel %vm1495, %v1490, %v1492
        %v1498 = vsel %vm1495, %v1488, %v1490
        %v1499 = vsel %vm1495, %v1486, %v1488
        %v1500 = vsel %vm1495, %v1484, %v1486
        %v1501 = vsel %vm1495, %v1482, %v1484
        %v1502 = vsel %vm1495, %v1480, %v1482
        %v1503 = vsel %vm1495, %v1494, %v1480
        %v1504 = vsel %vm1074, 1, 0
        %v1505 = vsel %vm1075, 1, 0
        %v1506 = vsel %vm1076, 1, 0
        %v1507 = vsel %vm1077, 1, 0
        %v1508 = vsel %vm1078, 1, 0
        %v1509 = vsel %vm1079, 1, 0
        %v1510 = vsel %vm1080, 1, 0
        %v1511 = vsel %vm1081, 1, 0
        %vm1512 = vcmp.eq.s32.totalorder %v1504, 1
        %vm1513 = vcmp.eq.s32.totalorder %v1505, 1
        %vm1514 = vcmp.eq.s32.totalorder %v1506, 1
        %vm1515 = vcmp.eq.s32.totalorder %v1507, 1
        %vm1516 = vcmp.eq.s32.totalorder %v1508, 1
        %vm1517 = vcmp.eq.s32.totalorder %v1509, 1
        %vm1518 = vcmp.eq.s32.totalorder %v1510, 1
        %vm1519 = vcmp.eq.s32.totalorder %v1511, 1
        %v1520 = vsel %vm1512, %v1503, 0.0
        %v1521 = vsel %vm1513, %v1502, 0.0
        %v1522 = vsel %vm1514, %v1501, 0.0
        %v1523 = vsel %vm1515, %v1500, 0.0
        %v1524 = vsel %vm1516, %v1499, 0.0
        %v1525 = vsel %vm1517, %v1498, 0.0
        %v1526 = vsel %vm1518, %v1497, 0.0
        %v1527 = vsel %vm1519, %v1496, 0.0
        %s1528 = sld [smem:[#allocation7 + $0xe]]
        %s1529 = sld [smem:[#allocation7 + $0x3f]]
        %v1530 = vstv %s1528
        %v1531 = vmul.f32 %v1530, %v1520
        %v1532 = vmul.f32 %v1530, %v1521
        %v1533 = vmul.f32 %v1530, %v1522
        %v1534 = vmul.f32 %v1530, %v1523
        %v1535 = vmul.f32 %v1530, %v1524
        %v1536 = vmul.f32 %v1530, %v1525
        %v1537 = vmul.f32 %v1530, %v1526
        %v1538 = vmul.f32 %v1530, %v1527
        %v1539 = vadd.f32 %v1471, %v1531
        %v1540 = vadd.f32 %v1472, %v1532
        %v1541 = vadd.f32 %v1473, %v1533
        %v1542 = vadd.f32 %v1474, %v1534
        %v1543 = vadd.f32 %v1475, %v1535
        %v1544 = vadd.f32 %v1476, %v1536
        %v1545 = vadd.f32 %v1477, %v1537
        %v1546 = vadd.f32 %v1478, %v1538
        %v1547 = vstv %s1529
        %v1548 = vmul.f32 %v1547, %v1520
        %v1549 = vmul.f32 %v1547, %v1521
        %v1550 = vmul.f32 %v1547, %v1522
        %v1551 = vmul.f32 %v1547, %v1523
        %v1552 = vmul.f32 %v1547, %v1524
        %v1553 = vmul.f32 %v1547, %v1525
        %v1554 = vmul.f32 %v1547, %v1526
        %v1555 = vmul.f32 %v1547, %v1527
        %v1564 = vrot.slane %v1548, 1
        %v1565 = vrot.slane %v1549, 1
        %v1566 = vrot.slane %v1550, 1
        %v1567 = vrot.slane %v1551, 1
        %v1568 = vrot.slane %v1552, 1
        %v1569 = vrot.slane %v1553, 1
        %v1570 = vrot.slane %v1554, 1
        %v1571 = vrot.slane %v1555, 1
        %v1580 = vadd.f32 %v1539, %v1564
        %v1581 = vadd.f32 %v1540, %v1565
        %v1582 = vadd.f32 %v1541, %v1566
        %v1583 = vadd.f32 %v1542, %v1567
        %v1584 = vadd.f32 %v1543, %v1568
        %v1585 = vadd.f32 %v1544, %v1569
        %v1586 = vadd.f32 %v1545, %v1570
        %v1587 = vadd.f32 %v1546, %v1571
        %v1588 = vsel %vm1106, 1, 0
        %v1589 = vsel %vm1107, 1, 0
        %v1590 = vsel %vm1108, 1, 0
        %v1591 = vsel %vm1109, 1, 0
        %v1592 = vsel %vm1110, 1, 0
        %v1593 = vsel %vm1111, 1, 0
        %v1594 = vsel %vm1112, 1, 0
        %v1595 = vsel %vm1113, 1, 0
        %vm1596 = vcmp.eq.s32.totalorder %v1588, 1
        %vm1597 = vcmp.eq.s32.totalorder %v1589, 1
        %vm1598 = vcmp.eq.s32.totalorder %v1590, 1
        %vm1599 = vcmp.eq.s32.totalorder %v1591, 1
        %vm1600 = vcmp.eq.s32.totalorder %v1592, 1
        %vm1601 = vcmp.eq.s32.totalorder %v1593, 1
        %vm1602 = vcmp.eq.s32.totalorder %v1594, 1
        %vm1603 = vcmp.eq.s32.totalorder %v1595, 1
        %v1604 = vsel %vm1596, %v1253, 0.0
        %v1605 = vsel %vm1597, %v1254, 0.0
        %v1606 = vsel %vm1598, %v1255, 0.0
        %v1607 = vsel %vm1599, %v1256, 0.0
        %v1608 = vsel %vm1600, %v1257, 0.0
        %v1609 = vsel %vm1601, %v1258, 0.0
        %v1610 = vsel %vm1602, %v1259, 0.0
        %v1611 = vsel %vm1603, %v1260, 0.0
        %s1612 = sld [smem:[#allocation7 + $0x15]]
        %s1613 = sld [smem:[#allocation7 + $0x46]]
        %v1614 = vstv %s1612
        %v1615 = vmul.f32 %v1614, %v1604
        %v1616 = vmul.f32 %v1614, %v1605
        %v1617 = vmul.f32 %v1614, %v1606
        %v1618 = vmul.f32 %v1614, %v1607
        %v1619 = vmul.f32 %v1614, %v1608
        %v1620 = vmul.f32 %v1614, %v1609
        %v1621 = vmul.f32 %v1614, %v1610
        %v1622 = vmul.f32 %v1614, %v1611
        %v1623 = vadd.f32 %v1580, %v1615
        %v1624 = vadd.f32 %v1581, %v1616
        %v1625 = vadd.f32 %v1582, %v1617
        %v1626 = vadd.f32 %v1583, %v1618
        %v1627 = vadd.f32 %v1584, %v1619
        %v1628 = vadd.f32 %v1585, %v1620
        %v1629 = vadd.f32 %v1586, %v1621
        %v1630 = vadd.f32 %v1587, %v1622
        %v1631 = vstv %s1613
        %v1632 = vmul.f32 %v1631, %v1604
        %v1633 = vmul.f32 %v1631, %v1605
        %v1634 = vmul.f32 %v1631, %v1606
        %v1635 = vmul.f32 %v1631, %v1607
        %v1636 = vmul.f32 %v1631, %v1608
        %v1637 = vmul.f32 %v1631, %v1609
        %v1638 = vmul.f32 %v1631, %v1610
        %v1639 = vmul.f32 %v1631, %v1611
        %v1648 = vrot.slane %v1632, 1
        %v1649 = vrot.slane %v1633, 1
        %v1650 = vrot.slane %v1634, 1
        %v1651 = vrot.slane %v1635, 1
        %v1652 = vrot.slane %v1636, 1
        %v1653 = vrot.slane %v1637, 1
        %v1654 = vrot.slane %v1638, 1
        %v1655 = vrot.slane %v1639, 1
        %v1664 = vadd.f32 %v1623, %v1648
        %v1665 = vadd.f32 %v1624, %v1649
        %v1666 = vadd.f32 %v1625, %v1650
        %v1667 = vadd.f32 %v1626, %v1651
        %v1668 = vadd.f32 %v1627, %v1652
        %v1669 = vadd.f32 %v1628, %v1653
        %v1670 = vadd.f32 %v1629, %v1654
        %v1671 = vadd.f32 %v1630, %v1655
        %v1672 = vsel %vm1138, 1, 0
        %v1673 = vsel %vm1139, 1, 0
        %v1674 = vsel %vm1140, 1, 0
        %v1675 = vsel %vm1141, 1, 0
        %v1676 = vsel %vm1142, 1, 0
        %v1677 = vsel %vm1143, 1, 0
        %v1678 = vsel %vm1144, 1, 0
        %v1679 = vsel %vm1145, 1, 0
        %vm1680 = vcmp.eq.s32.totalorder %v1672, 1
        %vm1681 = vcmp.eq.s32.totalorder %v1673, 1
        %vm1682 = vcmp.eq.s32.totalorder %v1674, 1
        %vm1683 = vcmp.eq.s32.totalorder %v1675, 1
        %vm1684 = vcmp.eq.s32.totalorder %v1676, 1
        %vm1685 = vcmp.eq.s32.totalorder %v1677, 1
        %vm1686 = vcmp.eq.s32.totalorder %v1678, 1
        %vm1687 = vcmp.eq.s32.totalorder %v1679, 1
        %v1688 = vsel %vm1680, %v1284, 0.0
        %v1689 = vsel %vm1681, %v1283, 0.0
        %v1690 = vsel %vm1682, %v1282, 0.0
        %v1691 = vsel %vm1683, %v1281, 0.0
        %v1692 = vsel %vm1684, %v1280, 0.0
        %v1693 = vsel %vm1685, %v1279, 0.0
        %v1694 = vsel %vm1686, %v1278, 0.0
        %v1695 = vsel %vm1687, %v1285, 0.0
        %s1696 = sld [smem:[#allocation7 + $0x1c]]
        %s1697 = sld [smem:[#allocation7 + $0x4d]]
        %v1698 = vstv %s1696
        %v1699 = vmul.f32 %v1698, %v1688
        %v1700 = vmul.f32 %v1698, %v1689
        %v1701 = vmul.f32 %v1698, %v1690
        %v1702 = vmul.f32 %v1698, %v1691
        %v1703 = vmul.f32 %v1698, %v1692
        %v1704 = vmul.f32 %v1698, %v1693
        %v1705 = vmul.f32 %v1698, %v1694
        %v1706 = vmul.f32 %v1698, %v1695
        %v1707 = vadd.f32 %v1664, %v1699
        %v1708 = vadd.f32 %v1665, %v1700
        %v1709 = vadd.f32 %v1666, %v1701
        %v1710 = vadd.f32 %v1667, %v1702
        %v1711 = vadd.f32 %v1668, %v1703
        %v1712 = vadd.f32 %v1669, %v1704
        %v1713 = vadd.f32 %v1670, %v1705
        %v1714 = vadd.f32 %v1671, %v1706
        %v1715 = vstv %s1697
        %v1716 = vmul.f32 %v1715, %v1688
        %v1717 = vmul.f32 %v1715, %v1689
        %v1718 = vmul.f32 %v1715, %v1690
        %v1719 = vmul.f32 %v1715, %v1691
        %v1720 = vmul.f32 %v1715, %v1692
        %v1721 = vmul.f32 %v1715, %v1693
        %v1722 = vmul.f32 %v1715, %v1694
        %v1723 = vmul.f32 %v1715, %v1695
        %v1732 = vrot.slane %v1716, 1
        %v1733 = vrot.slane %v1717, 1
        %v1734 = vrot.slane %v1718, 1
        %v1735 = vrot.slane %v1719, 1
        %v1736 = vrot.slane %v1720, 1
        %v1737 = vrot.slane %v1721, 1
        %v1738 = vrot.slane %v1722, 1
        %v1739 = vrot.slane %v1723, 1
        %v1748 = vadd.f32 %v1707, %v1732
        %v1749 = vadd.f32 %v1708, %v1733
        %v1750 = vadd.f32 %v1709, %v1734
        %v1751 = vadd.f32 %v1710, %v1735
        %v1752 = vadd.f32 %v1711, %v1736
        %v1753 = vadd.f32 %v1712, %v1737
        %v1754 = vadd.f32 %v1713, %v1738
        %v1755 = vadd.f32 %v1714, %v1739
        %v1756 = vsel %vm1170, 1, 0
        %v1757 = vsel %vm1171, 1, 0
        %v1758 = vsel %vm1172, 1, 0
        %v1759 = vsel %vm1173, 1, 0
        %v1760 = vsel %vm1174, 1, 0
        %v1761 = vsel %vm1175, 1, 0
        %v1762 = vsel %vm1176, 1, 0
        %v1763 = vsel %vm1177, 1, 0
        %vm1764 = vcmp.eq.s32.totalorder %v1756, 1
        %vm1765 = vcmp.eq.s32.totalorder %v1757, 1
        %vm1766 = vcmp.eq.s32.totalorder %v1758, 1
        %vm1767 = vcmp.eq.s32.totalorder %v1759, 1
        %vm1768 = vcmp.eq.s32.totalorder %v1760, 1
        %vm1769 = vcmp.eq.s32.totalorder %v1761, 1
        %vm1770 = vcmp.eq.s32.totalorder %v1762, 1
        %vm1771 = vcmp.eq.s32.totalorder %v1763, 1
        %v1772 = vsel %vm1764, %v1393, 0.0
        %v1773 = vsel %vm1765, %v1392, 0.0
        %v1774 = vsel %vm1766, %v1391, 0.0
        %v1775 = vsel %vm1767, %v1390, 0.0
        %v1776 = vsel %vm1768, %v1389, 0.0
        %v1777 = vsel %vm1769, %v1388, 0.0
        %v1778 = vsel %vm1770, %v1387, 0.0
        %v1779 = vsel %vm1771, %v1394, 0.0
        %s1780 = sld [smem:[#allocation7 + $0x23]]
        %s1781 = sld [smem:[#allocation7 + $0x54]]
        %v1782 = vstv %s1780
        %v1783 = vmul.f32 %v1782, %v1772
        %v1784 = vmul.f32 %v1782, %v1773
        %v1785 = vmul.f32 %v1782, %v1774
        %v1786 = vmul.f32 %v1782, %v1775
        %v1787 = vmul.f32 %v1782, %v1776
        %v1788 = vmul.f32 %v1782, %v1777
        %v1789 = vmul.f32 %v1782, %v1778
        %v1790 = vmul.f32 %v1782, %v1779
        %v1791 = vadd.f32 %v1748, %v1783
        %v1792 = vadd.f32 %v1749, %v1784
        %v1793 = vadd.f32 %v1750, %v1785
        %v1794 = vadd.f32 %v1751, %v1786
        %v1795 = vadd.f32 %v1752, %v1787
        %v1796 = vadd.f32 %v1753, %v1788
        %v1797 = vadd.f32 %v1754, %v1789
        %v1798 = vadd.f32 %v1755, %v1790
        %v1799 = vstv %s1781
        %v1800 = vmul.f32 %v1799, %v1772
        %v1801 = vmul.f32 %v1799, %v1773
        %v1802 = vmul.f32 %v1799, %v1774
        %v1803 = vmul.f32 %v1799, %v1775
        %v1804 = vmul.f32 %v1799, %v1776
        %v1805 = vmul.f32 %v1799, %v1777
        %v1806 = vmul.f32 %v1799, %v1778
        %v1807 = vmul.f32 %v1799, %v1779
        %v1816 = vrot.slane %v1800, 1
        %v1817 = vrot.slane %v1801, 1
        %v1818 = vrot.slane %v1802, 1
        %v1819 = vrot.slane %v1803, 1
        %v1820 = vrot.slane %v1804, 1
        %v1821 = vrot.slane %v1805, 1
        %v1822 = vrot.slane %v1806, 1
        %v1823 = vrot.slane %v1807, 1
        %v1832 = vadd.f32 %v1791, %v1816
        %v1833 = vadd.f32 %v1792, %v1817
        %v1834 = vadd.f32 %v1793, %v1818
        %v1835 = vadd.f32 %v1794, %v1819
        %v1836 = vadd.f32 %v1795, %v1820
        %v1837 = vadd.f32 %v1796, %v1821
        %v1838 = vadd.f32 %v1797, %v1822
        %v1839 = vadd.f32 %v1798, %v1823
        %v1840 = vsel %vm1202, 1, 0
        %v1841 = vsel %vm1203, 1, 0
        %v1842 = vsel %vm1204, 1, 0
        %v1843 = vsel %vm1205, 1, 0
        %v1844 = vsel %vm1206, 1, 0
        %v1845 = vsel %vm1207, 1, 0
        %v1846 = vsel %vm1208, 1, 0
        %v1847 = vsel %vm1209, 1, 0
        %vm1848 = vcmp.eq.s32.totalorder %v1840, 1
        %vm1849 = vcmp.eq.s32.totalorder %v1841, 1
        %vm1850 = vcmp.eq.s32.totalorder %v1842, 1
        %vm1851 = vcmp.eq.s32.totalorder %v1843, 1
        %vm1852 = vcmp.eq.s32.totalorder %v1844, 1
        %vm1853 = vcmp.eq.s32.totalorder %v1845, 1
        %vm1854 = vcmp.eq.s32.totalorder %v1846, 1
        %vm1855 = vcmp.eq.s32.totalorder %v1847, 1
        %v1856 = vsel %vm1848, %v1502, 0.0
        %v1857 = vsel %vm1849, %v1501, 0.0
        %v1858 = vsel %vm1850, %v1500, 0.0
        %v1859 = vsel %vm1851, %v1499, 0.0
        %v1860 = vsel %vm1852, %v1498, 0.0
        %v1861 = vsel %vm1853, %v1497, 0.0
        %v1862 = vsel %vm1854, %v1496, 0.0
        %v1863 = vsel %vm1855, %v1503, 0.0
        %s1864 = sld [smem:[#allocation7 + $0x2a]]
        %s1865 = sld [smem:[#allocation7 + $0x5b]]
        %v1866 = vstv %s1864
        %v1867 = vmul.f32 %v1866, %v1856
        %v1868 = vmul.f32 %v1866, %v1857
        %v1869 = vmul.f32 %v1866, %v1858
        %v1870 = vmul.f32 %v1866, %v1859
        %v1871 = vmul.f32 %v1866, %v1860
        %v1872 = vmul.f32 %v1866, %v1861
        %v1873 = vmul.f32 %v1866, %v1862
        %v1874 = vmul.f32 %v1866, %v1863
        %v1875 = vadd.f32 %v1832, %v1867
        %v1876 = vadd.f32 %v1833, %v1868
        %v1877 = vadd.f32 %v1834, %v1869
        %v1878 = vadd.f32 %v1835, %v1870
        %v1879 = vadd.f32 %v1836, %v1871
        %v1880 = vadd.f32 %v1837, %v1872
        %v1881 = vadd.f32 %v1838, %v1873
        %v1882 = vadd.f32 %v1839, %v1874
        %v1883 = vstv %s1865
        %v1884 = vmul.f32 %v1883, %v1856
        %v1885 = vmul.f32 %v1883, %v1857
        %v1886 = vmul.f32 %v1883, %v1858
        %v1887 = vmul.f32 %v1883, %v1859
        %v1888 = vmul.f32 %v1883, %v1860
        %v1889 = vmul.f32 %v1883, %v1861
        %v1890 = vmul.f32 %v1883, %v1862
        %v1891 = vmul.f32 %v1883, %v1863
        %v1900 = vrot.slane %v1884, 1
        %v1901 = vrot.slane %v1885, 1
        %v1902 = vrot.slane %v1886, 1
        %v1903 = vrot.slane %v1887, 1
        %v1904 = vrot.slane %v1888, 1
        %v1905 = vrot.slane %v1889, 1
        %v1906 = vrot.slane %v1890, 1
        %v1907 = vrot.slane %v1891, 1
        %v1916 = vadd.f32 %v1875, %v1900
        %v1917 = vadd.f32 %v1876, %v1901
        %v1918 = vadd.f32 %v1877, %v1902
        %v1919 = vadd.f32 %v1878, %v1903
        %v1920 = vadd.f32 %v1879, %v1904
        %v1921 = vadd.f32 %v1880, %v1905
        %v1922 = vadd.f32 %v1881, %v1906
        %v1923 = vadd.f32 %v1882, %v1907
        %1924 = vrot.lane.b32.xlu0 %v699, 2
        %v1925 = vpop.permute.xlu0 %1924
        %1926 = vrot.lane.b32.xlu0 %v700, 2
        %v1927 = vpop.permute.xlu0 %1926
        %1928 = vrot.lane.b32.xlu0 %v701, 2
        %v1929 = vpop.permute.xlu0 %1928
        %1930 = vrot.lane.b32.xlu0 %v702, 2
        %v1931 = vpop.permute.xlu0 %1930
        %1932 = vrot.lane.b32.xlu0 %v703, 2
        %v1933 = vpop.permute.xlu0 %1932
        %1934 = vrot.lane.b32.xlu0 %v704, 2
        %v1935 = vpop.permute.xlu0 %1934
        %1936 = vrot.lane.b32.xlu0 %v705, 2
        %v1937 = vpop.permute.xlu0 %1936
        %1938 = vrot.lane.b32.xlu0 %v706, 2
        %v1939 = vpop.permute.xlu0 %1938
        %vm1940 = vcmp.lt.s32.totalorder %v363, 2
        %v1941 = vsel %vm1940, %v1937, %v1939
        %v1942 = vsel %vm1940, %v1935, %v1937
        %v1943 = vsel %vm1940, %v1933, %v1935
        %v1944 = vsel %vm1940, %v1931, %v1933
        %v1945 = vsel %vm1940, %v1929, %v1931
        %v1946 = vsel %vm1940, %v1927, %v1929
        %v1947 = vsel %vm1940, %v1925, %v1927
        %v1948 = vsel %vm1940, %v1939, %v1925
        %v1949 = vsel %vm818, 1, 0
        %v1950 = vsel %vm819, 1, 0
        %v1951 = vsel %vm820, 1, 0
        %v1952 = vsel %vm821, 1, 0
        %v1953 = vsel %vm822, 1, 0
        %v1954 = vsel %vm823, 1, 0
        %v1955 = vsel %vm824, 1, 0
        %v1956 = vsel %vm825, 1, 0
        %vm1957 = vcmp.eq.s32.totalorder %v1949, 1
        %vm1958 = vcmp.eq.s32.totalorder %v1950, 1
        %vm1959 = vcmp.eq.s32.totalorder %v1951, 1
        %vm1960 = vcmp.eq.s32.totalorder %v1952, 1
        %vm1961 = vcmp.eq.s32.totalorder %v1953, 1
        %vm1962 = vcmp.eq.s32.totalorder %v1954, 1
        %vm1963 = vcmp.eq.s32.totalorder %v1955, 1
        %vm1964 = vcmp.eq.s32.totalorder %v1956, 1
        %v1965 = vsel %vm1957, %v1948, 0.0
        %v1966 = vsel %vm1958, %v1947, 0.0
        %v1967 = vsel %vm1959, %v1946, 0.0
        %v1968 = vsel %vm1960, %v1945, 0.0
        %v1969 = vsel %vm1961, %v1944, 0.0
        %v1970 = vsel %vm1962, %v1943, 0.0
        %v1971 = vsel %vm1963, %v1942, 0.0
        %v1972 = vsel %vm1964, %v1941, 0.0
        %1973 = vrot.lane.b32.xlu0 %v1965, 96
        %v1974 = vpop.permute.xlu0 %1973
        %1975 = vrot.lane.b32.xlu0 %v1966, 96
        %v1976 = vpop.permute.xlu0 %1975
        %1977 = vrot.lane.b32.xlu0 %v1967, 96
        %v1978 = vpop.permute.xlu0 %1977
        %1979 = vrot.lane.b32.xlu0 %v1968, 96
        %v1980 = vpop.permute.xlu0 %1979
        %1981 = vrot.lane.b32.xlu0 %v1969, 96
        %v1982 = vpop.permute.xlu0 %1981
        %1983 = vrot.lane.b32.xlu0 %v1970, 96
        %v1984 = vpop.permute.xlu0 %1983
        %1985 = vrot.lane.b32.xlu0 %v1971, 96
        %v1986 = vpop.permute.xlu0 %1985
        %1987 = vrot.lane.b32.xlu0 %v1972, 96
        %v1988 = vpop.permute.xlu0 %1987
        %v1989 = vsel %vm1277, %v1986, %v1988
        %v1990 = vsel %vm1277, %v1984, %v1986
        %v1991 = vsel %vm1277, %v1982, %v1984
        %v1992 = vsel %vm1277, %v1980, %v1982
        %v1993 = vsel %vm1277, %v1978, %v1980
        %v1994 = vsel %vm1277, %v1976, %v1978
        %v1995 = vsel %vm1277, %v1974, %v1976
        %v1996 = vsel %vm1277, %v1988, %v1974
        %v1997 = vsel %vm1294, %v1996, 0.0
        %v1998 = vsel %vm1295, %v1995, 0.0
        %v1999 = vsel %vm1296, %v1994, 0.0
        %v2000 = vsel %vm1297, %v1993, 0.0
        %v2001 = vsel %vm1298, %v1992, 0.0
        %v2002 = vsel %vm1299, %v1991, 0.0
        %v2003 = vsel %vm1300, %v1990, 0.0
        %v2004 = vsel %vm1301, %v1989, 0.0
        %s2005 = sld [smem:[#allocation7 + $0x1]]
        %s2006 = sld [smem:[#allocation7 + $0x32]]
        %v2007 = vstv %s2005
        %v2008 = vmul.f32 %v2007, %v1997
        %v2009 = vmul.f32 %v2007, %v1998
        %v2010 = vmul.f32 %v2007, %v1999
        %v2011 = vmul.f32 %v2007, %v2000
        %v2012 = vmul.f32 %v2007, %v2001
        %v2013 = vmul.f32 %v2007, %v2002
        %v2014 = vmul.f32 %v2007, %v2003
        %v2015 = vmul.f32 %v2007, %v2004
        %v2016 = vadd.f32 %v1916, %v2008
        %v2017 = vadd.f32 %v1917, %v2009
        %v2018 = vadd.f32 %v1918, %v2010
        %v2019 = vadd.f32 %v1919, %v2011
        %v2020 = vadd.f32 %v1920, %v2012
        %v2021 = vadd.f32 %v1921, %v2013
        %v2022 = vadd.f32 %v1922, %v2014
        %v2023 = vadd.f32 %v1923, %v2015
        %v2024 = vstv %s2006
        %v2025 = vmul.f32 %v2024, %v1997
        %v2026 = vmul.f32 %v2024, %v1998
        %v2027 = vmul.f32 %v2024, %v1999
        %v2028 = vmul.f32 %v2024, %v2000
        %v2029 = vmul.f32 %v2024, %v2001
        %v2030 = vmul.f32 %v2024, %v2002
        %v2031 = vmul.f32 %v2024, %v2003
        %v2032 = vmul.f32 %v2024, %v2004
        %v2041 = vrot.slane %v2025, 1
        %v2042 = vrot.slane %v2026, 1
        %v2043 = vrot.slane %v2027, 1
        %v2044 = vrot.slane %v2028, 1
        %v2045 = vrot.slane %v2029, 1
        %v2046 = vrot.slane %v2030, 1
        %v2047 = vrot.slane %v2031, 1
        %v2048 = vrot.slane %v2032, 1
        %v2057 = vadd.f32 %v2016, %v2041
        %v2058 = vadd.f32 %v2017, %v2042
        %v2059 = vadd.f32 %v2018, %v2043
        %v2060 = vadd.f32 %v2019, %v2044
        %v2061 = vadd.f32 %v2020, %v2045
        %v2062 = vadd.f32 %v2021, %v2046
        %v2063 = vadd.f32 %v2022, %v2047
        %v2064 = vadd.f32 %v2023, %v2048
        %2065 = vrot.lane.b32.xlu0 %v1965, 64
        %v2066 = vpop.permute.xlu0 %2065
        %2067 = vrot.lane.b32.xlu0 %v1966, 64
        %v2068 = vpop.permute.xlu0 %2067
        %2069 = vrot.lane.b32.xlu0 %v1967, 64
        %v2070 = vpop.permute.xlu0 %2069
        %2071 = vrot.lane.b32.xlu0 %v1968, 64
        %v2072 = vpop.permute.xlu0 %2071
        %2073 = vrot.lane.b32.xlu0 %v1969, 64
        %v2074 = vpop.permute.xlu0 %2073
        %2075 = vrot.lane.b32.xlu0 %v1970, 64
        %v2076 = vpop.permute.xlu0 %2075
        %2077 = vrot.lane.b32.xlu0 %v1971, 64
        %v2078 = vpop.permute.xlu0 %2077
        %2079 = vrot.lane.b32.xlu0 %v1972, 64
        %v2080 = vpop.permute.xlu0 %2079
        %v2081 = vsel %vm1386, %v2078, %v2080
        %v2082 = vsel %vm1386, %v2076, %v2078
        %v2083 = vsel %vm1386, %v2074, %v2076
        %v2084 = vsel %vm1386, %v2072, %v2074
        %v2085 = vsel %vm1386, %v2070, %v2072
        %v2086 = vsel %vm1386, %v2068, %v2070
        %v2087 = vsel %vm1386, %v2066, %v2068
        %v2088 = vsel %vm1386, %v2080, %v2066
        %v2089 = vsel %vm1403, %v2088, 0.0
        %v2090 = vsel %vm1404, %v2087, 0.0
        %v2091 = vsel %vm1405, %v2086, 0.0
        %v2092 = vsel %vm1406, %v2085, 0.0
        %v2093 = vsel %vm1407, %v2084, 0.0
        %v2094 = vsel %vm1408, %v2083, 0.0
        %v2095 = vsel %vm1409, %v2082, 0.0
        %v2096 = vsel %vm1410, %v2081, 0.0
        %s2097 = sld [smem:[#allocation7 + $0x8]]
        %s2098 = sld [smem:[#allocation7 + $0x39]]
        %v2099 = vstv %s2097
        %v2100 = vmul.f32 %v2099, %v2089
        %v2101 = vmul.f32 %v2099, %v2090
        %v2102 = vmul.f32 %v2099, %v2091
        %v2103 = vmul.f32 %v2099, %v2092
        %v2104 = vmul.f32 %v2099, %v2093
        %v2105 = vmul.f32 %v2099, %v2094
        %v2106 = vmul.f32 %v2099, %v2095
        %v2107 = vmul.f32 %v2099, %v2096
        %v2108 = vadd.f32 %v2057, %v2100
        %v2109 = vadd.f32 %v2058, %v2101
        %v2110 = vadd.f32 %v2059, %v2102
        %v2111 = vadd.f32 %v2060, %v2103
        %v2112 = vadd.f32 %v2061, %v2104
        %v2113 = vadd.f32 %v2062, %v2105
        %v2114 = vadd.f32 %v2063, %v2106
        %v2115 = vadd.f32 %v2064, %v2107
        %v2116 = vstv %s2098
        %v2117 = vmul.f32 %v2116, %v2089
        %v2118 = vmul.f32 %v2116, %v2090
        %v2119 = vmul.f32 %v2116, %v2091
        %v2120 = vmul.f32 %v2116, %v2092
        %v2121 = vmul.f32 %v2116, %v2093
        %v2122 = vmul.f32 %v2116, %v2094
        %v2123 = vmul.f32 %v2116, %v2095
        %v2124 = vmul.f32 %v2116, %v2096
        %v2133 = vrot.slane %v2117, 1
        %v2134 = vrot.slane %v2118, 1
        %v2135 = vrot.slane %v2119, 1
        %v2136 = vrot.slane %v2120, 1
        %v2137 = vrot.slane %v2121, 1
        %v2138 = vrot.slane %v2122, 1
        %v2139 = vrot.slane %v2123, 1
        %v2140 = vrot.slane %v2124, 1
        %v2149 = vadd.f32 %v2108, %v2133
        %v2150 = vadd.f32 %v2109, %v2134
        %v2151 = vadd.f32 %v2110, %v2135
        %v2152 = vadd.f32 %v2111, %v2136
        %v2153 = vadd.f32 %v2112, %v2137
        %v2154 = vadd.f32 %v2113, %v2138
        %v2155 = vadd.f32 %v2114, %v2139
        %v2156 = vadd.f32 %v2115, %v2140
        %2157 = vrot.lane.b32.xlu0 %v1965, 32
        %v2158 = vpop.permute.xlu0 %2157
        %2159 = vrot.lane.b32.xlu0 %v1966, 32
        %v2160 = vpop.permute.xlu0 %2159
        %2161 = vrot.lane.b32.xlu0 %v1967, 32
        %v2162 = vpop.permute.xlu0 %2161
        %2163 = vrot.lane.b32.xlu0 %v1968, 32
        %v2164 = vpop.permute.xlu0 %2163
        %2165 = vrot.lane.b32.xlu0 %v1969, 32
        %v2166 = vpop.permute.xlu0 %2165
        %2167 = vrot.lane.b32.xlu0 %v1970, 32
        %v2168 = vpop.permute.xlu0 %2167
        %2169 = vrot.lane.b32.xlu0 %v1971, 32
        %v2170 = vpop.permute.xlu0 %2169
        %2171 = vrot.lane.b32.xlu0 %v1972, 32
        %v2172 = vpop.permute.xlu0 %2171
        %v2173 = vsel %vm1495, %v2170, %v2172
        %v2174 = vsel %vm1495, %v2168, %v2170
        %v2175 = vsel %vm1495, %v2166, %v2168
        %v2176 = vsel %vm1495, %v2164, %v2166
        %v2177 = vsel %vm1495, %v2162, %v2164
        %v2178 = vsel %vm1495, %v2160, %v2162
        %v2179 = vsel %vm1495, %v2158, %v2160
        %v2180 = vsel %vm1495, %v2172, %v2158
        %v2181 = vsel %vm1512, %v2180, 0.0
        %v2182 = vsel %vm1513, %v2179, 0.0
        %v2183 = vsel %vm1514, %v2178, 0.0
        %v2184 = vsel %vm1515, %v2177, 0.0
        %v2185 = vsel %vm1516, %v2176, 0.0
        %v2186 = vsel %vm1517, %v2175, 0.0
        %v2187 = vsel %vm1518, %v2174, 0.0
        %v2188 = vsel %vm1519, %v2173, 0.0
        %s2189 = sld [smem:[#allocation7 + $0xf]]
        %s2190 = sld [smem:[#allocation7 + $0x40]]
        %v2191 = vstv %s2189
        %v2192 = vmul.f32 %v2191, %v2181
        %v2193 = vmul.f32 %v2191, %v2182
        %v2194 = vmul.f32 %v2191, %v2183
        %v2195 = vmul.f32 %v2191, %v2184
        %v2196 = vmul.f32 %v2191, %v2185
        %v2197 = vmul.f32 %v2191, %v2186
        %v2198 = vmul.f32 %v2191, %v2187
        %v2199 = vmul.f32 %v2191, %v2188
        %v2200 = vadd.f32 %v2149, %v2192
        %v2201 = vadd.f32 %v2150, %v2193
        %v2202 = vadd.f32 %v2151, %v2194
        %v2203 = vadd.f32 %v2152, %v2195
        %v2204 = vadd.f32 %v2153, %v2196
        %v2205 = vadd.f32 %v2154, %v2197
        %v2206 = vadd.f32 %v2155, %v2198
        %v2207 = vadd.f32 %v2156, %v2199
        %v2208 = vstv %s2190
        %v2209 = vmul.f32 %v2208, %v2181
        %v2210 = vmul.f32 %v2208, %v2182
        %v2211 = vmul.f32 %v2208, %v2183
        %v2212 = vmul.f32 %v2208, %v2184
        %v2213 = vmul.f32 %v2208, %v2185
        %v2214 = vmul.f32 %v2208, %v2186
        %v2215 = vmul.f32 %v2208, %v2187
        %v2216 = vmul.f32 %v2208, %v2188
        %v2225 = vrot.slane %v2209, 1
        %v2226 = vrot.slane %v2210, 1
        %v2227 = vrot.slane %v2211, 1
        %v2228 = vrot.slane %v2212, 1
        %v2229 = vrot.slane %v2213, 1
        %v2230 = vrot.slane %v2214, 1
        %v2231 = vrot.slane %v2215, 1
        %v2232 = vrot.slane %v2216, 1
        %v2241 = vadd.f32 %v2200, %v2225
        %v2242 = vadd.f32 %v2201, %v2226
        %v2243 = vadd.f32 %v2202, %v2227
        %v2244 = vadd.f32 %v2203, %v2228
        %v2245 = vadd.f32 %v2204, %v2229
        %v2246 = vadd.f32 %v2205, %v2230
        %v2247 = vadd.f32 %v2206, %v2231
        %v2248 = vadd.f32 %v2207, %v2232
        %v2249 = vsel %vm1596, %v1965, 0.0
        %v2250 = vsel %vm1597, %v1966, 0.0
        %v2251 = vsel %vm1598, %v1967, 0.0
        %v2252 = vsel %vm1599, %v1968, 0.0
        %v2253 = vsel %vm1600, %v1969, 0.0
        %v2254 = vsel %vm1601, %v1970, 0.0
        %v2255 = vsel %vm1602, %v1971, 0.0
        %v2256 = vsel %vm1603, %v1972, 0.0
        %s2257 = sld [smem:[#allocation7 + $0x16]]
        %s2258 = sld [smem:[#allocation7 + $0x47]]
        %v2259 = vstv %s2257
        %v2260 = vmul.f32 %v2259, %v2249
        %v2261 = vmul.f32 %v2259, %v2250
        %v2262 = vmul.f32 %v2259, %v2251
        %v2263 = vmul.f32 %v2259, %v2252
        %v2264 = vmul.f32 %v2259, %v2253
        %v2265 = vmul.f32 %v2259, %v2254
        %v2266 = vmul.f32 %v2259, %v2255
        %v2267 = vmul.f32 %v2259, %v2256
        %v2268 = vadd.f32 %v2241, %v2260
        %v2269 = vadd.f32 %v2242, %v2261
        %v2270 = vadd.f32 %v2243, %v2262
        %v2271 = vadd.f32 %v2244, %v2263
        %v2272 = vadd.f32 %v2245, %v2264
        %v2273 = vadd.f32 %v2246, %v2265
        %v2274 = vadd.f32 %v2247, %v2266
        %v2275 = vadd.f32 %v2248, %v2267
        %v2276 = vstv %s2258
        %v2277 = vmul.f32 %v2276, %v2249
        %v2278 = vmul.f32 %v2276, %v2250
        %v2279 = vmul.f32 %v2276, %v2251
        %v2280 = vmul.f32 %v2276, %v2252
        %v2281 = vmul.f32 %v2276, %v2253
        %v2282 = vmul.f32 %v2276, %v2254
        %v2283 = vmul.f32 %v2276, %v2255
        %v2284 = vmul.f32 %v2276, %v2256
        %v2293 = vrot.slane %v2277, 1
        %v2294 = vrot.slane %v2278, 1
        %v2295 = vrot.slane %v2279, 1
        %v2296 = vrot.slane %v2280, 1
        %v2297 = vrot.slane %v2281, 1
        %v2298 = vrot.slane %v2282, 1
        %v2299 = vrot.slane %v2283, 1
        %v2300 = vrot.slane %v2284, 1
        %v2309 = vadd.f32 %v2268, %v2293
        %v2310 = vadd.f32 %v2269, %v2294
        %v2311 = vadd.f32 %v2270, %v2295
        %v2312 = vadd.f32 %v2271, %v2296
        %v2313 = vadd.f32 %v2272, %v2297
        %v2314 = vadd.f32 %v2273, %v2298
        %v2315 = vadd.f32 %v2274, %v2299
        %v2316 = vadd.f32 %v2275, %v2300
        %v2317 = vsel %vm1680, %v1995, 0.0
        %v2318 = vsel %vm1681, %v1994, 0.0
        %v2319 = vsel %vm1682, %v1993, 0.0
        %v2320 = vsel %vm1683, %v1992, 0.0
        %v2321 = vsel %vm1684, %v1991, 0.0
        %v2322 = vsel %vm1685, %v1990, 0.0
        %v2323 = vsel %vm1686, %v1989, 0.0
        %v2324 = vsel %vm1687, %v1996, 0.0
        %s2325 = sld [smem:[#allocation7 + $0x1d]]
        %s2326 = sld [smem:[#allocation7 + $0x4e]]
        %v2327 = vstv %s2325
        %v2328 = vmul.f32 %v2327, %v2317
        %v2329 = vmul.f32 %v2327, %v2318
        %v2330 = vmul.f32 %v2327, %v2319
        %v2331 = vmul.f32 %v2327, %v2320
        %v2332 = vmul.f32 %v2327, %v2321
        %v2333 = vmul.f32 %v2327, %v2322
        %v2334 = vmul.f32 %v2327, %v2323
        %v2335 = vmul.f32 %v2327, %v2324
        %v2336 = vadd.f32 %v2309, %v2328
        %v2337 = vadd.f32 %v2310, %v2329
        %v2338 = vadd.f32 %v2311, %v2330
        %v2339 = vadd.f32 %v2312, %v2331
        %v2340 = vadd.f32 %v2313, %v2332
        %v2341 = vadd.f32 %v2314, %v2333
        %v2342 = vadd.f32 %v2315, %v2334
        %v2343 = vadd.f32 %v2316, %v2335
        %v2344 = vstv %s2326
        %v2345 = vmul.f32 %v2344, %v2317
        %v2346 = vmul.f32 %v2344, %v2318
        %v2347 = vmul.f32 %v2344, %v2319
        %v2348 = vmul.f32 %v2344, %v2320
        %v2349 = vmul.f32 %v2344, %v2321
        %v2350 = vmul.f32 %v2344, %v2322
        %v2351 = vmul.f32 %v2344, %v2323
        %v2352 = vmul.f32 %v2344, %v2324
        %v2361 = vrot.slane %v2345, 1
        %v2362 = vrot.slane %v2346, 1
        %v2363 = vrot.slane %v2347, 1
        %v2364 = vrot.slane %v2348, 1
        %v2365 = vrot.slane %v2349, 1
        %v2366 = vrot.slane %v2350, 1
        %v2367 = vrot.slane %v2351, 1
        %v2368 = vrot.slane %v2352, 1
        %v2377 = vadd.f32 %v2336, %v2361
        %v2378 = vadd.f32 %v2337, %v2362
        %v2379 = vadd.f32 %v2338, %v2363
        %v2380 = vadd.f32 %v2339, %v2364
        %v2381 = vadd.f32 %v2340, %v2365
        %v2382 = vadd.f32 %v2341, %v2366
        %v2383 = vadd.f32 %v2342, %v2367
        %v2384 = vadd.f32 %v2343, %v2368
        %v2385 = vsel %vm1764, %v2087, 0.0
        %v2386 = vsel %vm1765, %v2086, 0.0
        %v2387 = vsel %vm1766, %v2085, 0.0
        %v2388 = vsel %vm1767, %v2084, 0.0
        %v2389 = vsel %vm1768, %v2083, 0.0
        %v2390 = vsel %vm1769, %v2082, 0.0
        %v2391 = vsel %vm1770, %v2081, 0.0
        %v2392 = vsel %vm1771, %v2088, 0.0
        %s2393 = sld [smem:[#allocation7 + $0x24]]
        %s2394 = sld [smem:[#allocation7 + $0x55]]
        %v2395 = vstv %s2393
        %v2396 = vmul.f32 %v2395, %v2385
        %v2397 = vmul.f32 %v2395, %v2386
        %v2398 = vmul.f32 %v2395, %v2387
        %v2399 = vmul.f32 %v2395, %v2388
        %v2400 = vmul.f32 %v2395, %v2389
        %v2401 = vmul.f32 %v2395, %v2390
        %v2402 = vmul.f32 %v2395, %v2391
        %v2403 = vmul.f32 %v2395, %v2392
        %v2404 = vadd.f32 %v2377, %v2396
        %v2405 = vadd.f32 %v2378, %v2397
        %v2406 = vadd.f32 %v2379, %v2398
        %v2407 = vadd.f32 %v2380, %v2399
        %v2408 = vadd.f32 %v2381, %v2400
        %v2409 = vadd.f32 %v2382, %v2401
        %v2410 = vadd.f32 %v2383, %v2402
        %v2411 = vadd.f32 %v2384, %v2403
        %v2412 = vstv %s2394
        %v2413 = vmul.f32 %v2412, %v2385
        %v2414 = vmul.f32 %v2412, %v2386
        %v2415 = vmul.f32 %v2412, %v2387
        %v2416 = vmul.f32 %v2412, %v2388
        %v2417 = vmul.f32 %v2412, %v2389
        %v2418 = vmul.f32 %v2412, %v2390
        %v2419 = vmul.f32 %v2412, %v2391
        %v2420 = vmul.f32 %v2412, %v2392
        %v2429 = vrot.slane %v2413, 1
        %v2430 = vrot.slane %v2414, 1
        %v2431 = vrot.slane %v2415, 1
        %v2432 = vrot.slane %v2416, 1
        %v2433 = vrot.slane %v2417, 1
        %v2434 = vrot.slane %v2418, 1
        %v2435 = vrot.slane %v2419, 1
        %v2436 = vrot.slane %v2420, 1
        %v2445 = vadd.f32 %v2404, %v2429
        %v2446 = vadd.f32 %v2405, %v2430
        %v2447 = vadd.f32 %v2406, %v2431
        %v2448 = vadd.f32 %v2407, %v2432
        %v2449 = vadd.f32 %v2408, %v2433
        %v2450 = vadd.f32 %v2409, %v2434
        %v2451 = vadd.f32 %v2410, %v2435
        %v2452 = vadd.f32 %v2411, %v2436
        %v2453 = vsel %vm1848, %v2179, 0.0
        %v2454 = vsel %vm1849, %v2178, 0.0
        %v2455 = vsel %vm1850, %v2177, 0.0
        %v2456 = vsel %vm1851, %v2176, 0.0
        %v2457 = vsel %vm1852, %v2175, 0.0
        %v2458 = vsel %vm1853, %v2174, 0.0
        %v2459 = vsel %vm1854, %v2173, 0.0
        %v2460 = vsel %vm1855, %v2180, 0.0
        %s2461 = sld [smem:[#allocation7 + $0x2b]]
        %s2462 = sld [smem:[#allocation7 + $0x5c]]
        %v2463 = vstv %s2461
        %v2464 = vmul.f32 %v2463, %v2453
        %v2465 = vmul.f32 %v2463, %v2454
        %v2466 = vmul.f32 %v2463, %v2455
        %v2467 = vmul.f32 %v2463, %v2456
        %v2468 = vmul.f32 %v2463, %v2457
        %v2469 = vmul.f32 %v2463, %v2458
        %v2470 = vmul.f32 %v2463, %v2459
        %v2471 = vmul.f32 %v2463, %v2460
        %v2472 = vadd.f32 %v2445, %v2464
        %v2473 = vadd.f32 %v2446, %v2465
        %v2474 = vadd.f32 %v2447, %v2466
        %v2475 = vadd.f32 %v2448, %v2467
        %v2476 = vadd.f32 %v2449, %v2468
        %v2477 = vadd.f32 %v2450, %v2469
        %v2478 = vadd.f32 %v2451, %v2470
        %v2479 = vadd.f32 %v2452, %v2471
        %v2480 = vstv %s2462
        %v2481 = vmul.f32 %v2480, %v2453
        %v2482 = vmul.f32 %v2480, %v2454
        %v2483 = vmul.f32 %v2480, %v2455
        %v2484 = vmul.f32 %v2480, %v2456
        %v2485 = vmul.f32 %v2480, %v2457
        %v2486 = vmul.f32 %v2480, %v2458
        %v2487 = vmul.f32 %v2480, %v2459
        %v2488 = vmul.f32 %v2480, %v2460
        %v2497 = vrot.slane %v2481, 1
        %v2498 = vrot.slane %v2482, 1
        %v2499 = vrot.slane %v2483, 1
        %v2500 = vrot.slane %v2484, 1
        %v2501 = vrot.slane %v2485, 1
        %v2502 = vrot.slane %v2486, 1
        %v2503 = vrot.slane %v2487, 1
        %v2504 = vrot.slane %v2488, 1
        %v2513 = vadd.f32 %v2472, %v2497
        %v2514 = vadd.f32 %v2473, %v2498
        %v2515 = vadd.f32 %v2474, %v2499
        %v2516 = vadd.f32 %v2475, %v2500
        %v2517 = vadd.f32 %v2476, %v2501
        %v2518 = vadd.f32 %v2477, %v2502
        %v2519 = vadd.f32 %v2478, %v2503
        %v2520 = vadd.f32 %v2479, %v2504
        %2521 = vrot.lane.b32.xlu0 %v699, 1
        %v2522 = vpop.permute.xlu0 %2521
        %2523 = vrot.lane.b32.xlu0 %v700, 1
        %v2524 = vpop.permute.xlu0 %2523
        %2525 = vrot.lane.b32.xlu0 %v701, 1
        %v2526 = vpop.permute.xlu0 %2525
        %2527 = vrot.lane.b32.xlu0 %v702, 1
        %v2528 = vpop.permute.xlu0 %2527
        %2529 = vrot.lane.b32.xlu0 %v703, 1
        %v2530 = vpop.permute.xlu0 %2529
        %2531 = vrot.lane.b32.xlu0 %v704, 1
        %v2532 = vpop.permute.xlu0 %2531
        %2533 = vrot.lane.b32.xlu0 %v705, 1
        %v2534 = vpop.permute.xlu0 %2533
        %2535 = vrot.lane.b32.xlu0 %v706, 1
        %v2536 = vpop.permute.xlu0 %2535
        %vm2537 = vcmp.lt.s32.totalorder %v363, 1
        %v2538 = vsel %vm2537, %v2534, %v2536
        %v2539 = vsel %vm2537, %v2532, %v2534
        %v2540 = vsel %vm2537, %v2530, %v2532
        %v2541 = vsel %vm2537, %v2528, %v2530
        %v2542 = vsel %vm2537, %v2526, %v2528
        %v2543 = vsel %vm2537, %v2524, %v2526
        %v2544 = vsel %vm2537, %v2522, %v2524
        %v2545 = vsel %vm2537, %v2536, %v2522
        %v2546 = vsel %vm850, 1, 0
        %v2547 = vsel %vm851, 1, 0
        %v2548 = vsel %vm852, 1, 0
        %v2549 = vsel %vm853, 1, 0
        %v2550 = vsel %vm854, 1, 0
        %v2551 = vsel %vm855, 1, 0
        %v2552 = vsel %vm856, 1, 0
        %v2553 = vsel %vm857, 1, 0
        %vm2554 = vcmp.eq.s32.totalorder %v2546, 1
        %vm2555 = vcmp.eq.s32.totalorder %v2547, 1
        %vm2556 = vcmp.eq.s32.totalorder %v2548, 1
        %vm2557 = vcmp.eq.s32.totalorder %v2549, 1
        %vm2558 = vcmp.eq.s32.totalorder %v2550, 1
        %vm2559 = vcmp.eq.s32.totalorder %v2551, 1
        %vm2560 = vcmp.eq.s32.totalorder %v2552, 1
        %vm2561 = vcmp.eq.s32.totalorder %v2553, 1
        %v2562 = vsel %vm2554, %v2545, 0.0
        %v2563 = vsel %vm2555, %v2544, 0.0
        %v2564 = vsel %vm2556, %v2543, 0.0
        %v2565 = vsel %vm2557, %v2542, 0.0
        %v2566 = vsel %vm2558, %v2541, 0.0
        %v2567 = vsel %vm2559, %v2540, 0.0
        %v2568 = vsel %vm2560, %v2539, 0.0
        %v2569 = vsel %vm2561, %v2538, 0.0
        %2570 = vrot.lane.b32.xlu0 %v2562, 96
        %v2571 = vpop.permute.xlu0 %2570
        %2572 = vrot.lane.b32.xlu0 %v2563, 96
        %v2573 = vpop.permute.xlu0 %2572
        %2574 = vrot.lane.b32.xlu0 %v2564, 96
        %v2575 = vpop.permute.xlu0 %2574
        %2576 = vrot.lane.b32.xlu0 %v2565, 96
        %v2577 = vpop.permute.xlu0 %2576
        %2578 = vrot.lane.b32.xlu0 %v2566, 96
        %v2579 = vpop.permute.xlu0 %2578
        %2580 = vrot.lane.b32.xlu0 %v2567, 96
        %v2581 = vpop.permute.xlu0 %2580
        %2582 = vrot.lane.b32.xlu0 %v2568, 96
        %v2583 = vpop.permute.xlu0 %2582
        %2584 = vrot.lane.b32.xlu0 %v2569, 96
        %v2585 = vpop.permute.xlu0 %2584
        %v2586 = vsel %vm1277, %v2583, %v2585
        %v2587 = vsel %vm1277, %v2581, %v2583
        %v2588 = vsel %vm1277, %v2579, %v2581
        %v2589 = vsel %vm1277, %v2577, %v2579
        %v2590 = vsel %vm1277, %v2575, %v2577
        %v2591 = vsel %vm1277, %v2573, %v2575
        %v2592 = vsel %vm1277, %v2571, %v2573
        %v2593 = vsel %vm1277, %v2585, %v2571
        %v2594 = vsel %vm1294, %v2593, 0.0
        %v2595 = vsel %vm1295, %v2592, 0.0
        %v2596 = vsel %vm1296, %v2591, 0.0
        %v2597 = vsel %vm1297, %v2590, 0.0
        %v2598 = vsel %vm1298, %v2589, 0.0
        %v2599 = vsel %vm1299, %v2588, 0.0
        %v2600 = vsel %vm1300, %v2587, 0.0
        %v2601 = vsel %vm1301, %v2586, 0.0
        %s2602 = sld [smem:[#allocation7 + $0x2]]
        %s2603 = sld [smem:[#allocation7 + $0x33]]
        %v2604 = vstv %s2602
        %v2605 = vmul.f32 %v2604, %v2594
        %v2606 = vmul.f32 %v2604, %v2595
        %v2607 = vmul.f32 %v2604, %v2596
        %v2608 = vmul.f32 %v2604, %v2597
        %v2609 = vmul.f32 %v2604, %v2598
        %v2610 = vmul.f32 %v2604, %v2599
        %v2611 = vmul.f32 %v2604, %v2600
        %v2612 = vmul.f32 %v2604, %v2601
        %v2613 = vadd.f32 %v2513, %v2605
        %v2614 = vadd.f32 %v2514, %v2606
        %v2615 = vadd.f32 %v2515, %v2607
        %v2616 = vadd.f32 %v2516, %v2608
        %v2617 = vadd.f32 %v2517, %v2609
        %v2618 = vadd.f32 %v2518, %v2610
        %v2619 = vadd.f32 %v2519, %v2611
        %v2620 = vadd.f32 %v2520, %v2612
        %v2621 = vstv %s2603
        %v2622 = vmul.f32 %v2621, %v2594
        %v2623 = vmul.f32 %v2621, %v2595
        %v2624 = vmul.f32 %v2621, %v2596
        %v2625 = vmul.f32 %v2621, %v2597
        %v2626 = vmul.f32 %v2621, %v2598
        %v2627 = vmul.f32 %v2621, %v2599
        %v2628 = vmul.f32 %v2621, %v2600
        %v2629 = vmul.f32 %v2621, %v2601
        %v2638 = vrot.slane %v2622, 1
        %v2639 = vrot.slane %v2623, 1
        %v2640 = vrot.slane %v2624, 1
        %v2641 = vrot.slane %v2625, 1
        %v2642 = vrot.slane %v2626, 1
        %v2643 = vrot.slane %v2627, 1
        %v2644 = vrot.slane %v2628, 1
        %v2645 = vrot.slane %v2629, 1
        %v2654 = vadd.f32 %v2613, %v2638
        %v2655 = vadd.f32 %v2614, %v2639
        %v2656 = vadd.f32 %v2615, %v2640
        %v2657 = vadd.f32 %v2616, %v2641
        %v2658 = vadd.f32 %v2617, %v2642
        %v2659 = vadd.f32 %v2618, %v2643
        %v2660 = vadd.f32 %v2619, %v2644
        %v2661 = vadd.f32 %v2620, %v2645
        %2662 = vrot.lane.b32.xlu0 %v2562, 64
        %v2663 = vpop.permute.xlu0 %2662
        %2664 = vrot.lane.b32.xlu0 %v2563, 64
        %v2665 = vpop.permute.xlu0 %2664
        %2666 = vrot.lane.b32.xlu0 %v2564, 64
        %v2667 = vpop.permute.xlu0 %2666
        %2668 = vrot.lane.b32.xlu0 %v2565, 64
        %v2669 = vpop.permute.xlu0 %2668
        %2670 = vrot.lane.b32.xlu0 %v2566, 64
        %v2671 = vpop.permute.xlu0 %2670
        %2672 = vrot.lane.b32.xlu0 %v2567, 64
        %v2673 = vpop.permute.xlu0 %2672
        %2674 = vrot.lane.b32.xlu0 %v2568, 64
        %v2675 = vpop.permute.xlu0 %2674
        %2676 = vrot.lane.b32.xlu0 %v2569, 64
        %v2677 = vpop.permute.xlu0 %2676
        %v2678 = vsel %vm1386, %v2675, %v2677
        %v2679 = vsel %vm1386, %v2673, %v2675
        %v2680 = vsel %vm1386, %v2671, %v2673
        %v2681 = vsel %vm1386, %v2669, %v2671
        %v2682 = vsel %vm1386, %v2667, %v2669
        %v2683 = vsel %vm1386, %v2665, %v2667
        %v2684 = vsel %vm1386, %v2663, %v2665
        %v2685 = vsel %vm1386, %v2677, %v2663
        %v2686 = vsel %vm1403, %v2685, 0.0
        %v2687 = vsel %vm1404, %v2684, 0.0
        %v2688 = vsel %vm1405, %v2683, 0.0
        %v2689 = vsel %vm1406, %v2682, 0.0
        %v2690 = vsel %vm1407, %v2681, 0.0
        %v2691 = vsel %vm1408, %v2680, 0.0
        %v2692 = vsel %vm1409, %v2679, 0.0
        %v2693 = vsel %vm1410, %v2678, 0.0
        %s2694 = sld [smem:[#allocation7 + $0x9]]
        %s2695 = sld [smem:[#allocation7 + $0x3a]]
        %v2696 = vstv %s2694
        %v2697 = vmul.f32 %v2696, %v2686
        %v2698 = vmul.f32 %v2696, %v2687
        %v2699 = vmul.f32 %v2696, %v2688
        %v2700 = vmul.f32 %v2696, %v2689
        %v2701 = vmul.f32 %v2696, %v2690
        %v2702 = vmul.f32 %v2696, %v2691
        %v2703 = vmul.f32 %v2696, %v2692
        %v2704 = vmul.f32 %v2696, %v2693
        %v2705 = vadd.f32 %v2654, %v2697
        %v2706 = vadd.f32 %v2655, %v2698
        %v2707 = vadd.f32 %v2656, %v2699
        %v2708 = vadd.f32 %v2657, %v2700
        %v2709 = vadd.f32 %v2658, %v2701
        %v2710 = vadd.f32 %v2659, %v2702
        %v2711 = vadd.f32 %v2660, %v2703
        %v2712 = vadd.f32 %v2661, %v2704
        %v2713 = vstv %s2695
        %v2714 = vmul.f32 %v2713, %v2686
        %v2715 = vmul.f32 %v2713, %v2687
        %v2716 = vmul.f32 %v2713, %v2688
        %v2717 = vmul.f32 %v2713, %v2689
        %v2718 = vmul.f32 %v2713, %v2690
        %v2719 = vmul.f32 %v2713, %v2691
        %v2720 = vmul.f32 %v2713, %v2692
        %v2721 = vmul.f32 %v2713, %v2693
        %v2730 = vrot.slane %v2714, 1
        %v2731 = vrot.slane %v2715, 1
        %v2732 = vrot.slane %v2716, 1
        %v2733 = vrot.slane %v2717, 1
        %v2734 = vrot.slane %v2718, 1
        %v2735 = vrot.slane %v2719, 1
        %v2736 = vrot.slane %v2720, 1
        %v2737 = vrot.slane %v2721, 1
        %v2746 = vadd.f32 %v2705, %v2730
        %v2747 = vadd.f32 %v2706, %v2731
        %v2748 = vadd.f32 %v2707, %v2732
        %v2749 = vadd.f32 %v2708, %v2733
        %v2750 = vadd.f32 %v2709, %v2734
        %v2751 = vadd.f32 %v2710, %v2735
        %v2752 = vadd.f32 %v2711, %v2736
        %v2753 = vadd.f32 %v2712, %v2737
        %2754 = vrot.lane.b32.xlu0 %v2562, 32
        %v2755 = vpop.permute.xlu0 %2754
        %2756 = vrot.lane.b32.xlu0 %v2563, 32
        %v2757 = vpop.permute.xlu0 %2756
        %2758 = vrot.lane.b32.xlu0 %v2564, 32
        %v2759 = vpop.permute.xlu0 %2758
        %2760 = vrot.lane.b32.xlu0 %v2565, 32
        %v2761 = vpop.permute.xlu0 %2760
        %2762 = vrot.lane.b32.xlu0 %v2566, 32
        %v2763 = vpop.permute.xlu0 %2762
        %2764 = vrot.lane.b32.xlu0 %v2567, 32
        %v2765 = vpop.permute.xlu0 %2764
        %2766 = vrot.lane.b32.xlu0 %v2568, 32
        %v2767 = vpop.permute.xlu0 %2766
        %2768 = vrot.lane.b32.xlu0 %v2569, 32
        %v2769 = vpop.permute.xlu0 %2768
        %v2770 = vsel %vm1495, %v2767, %v2769
        %v2771 = vsel %vm1495, %v2765, %v2767
        %v2772 = vsel %vm1495, %v2763, %v2765
        %v2773 = vsel %vm1495, %v2761, %v2763
        %v2774 = vsel %vm1495, %v2759, %v2761
        %v2775 = vsel %vm1495, %v2757, %v2759
        %v2776 = vsel %vm1495, %v2755, %v2757
        %v2777 = vsel %vm1495, %v2769, %v2755
        %v2778 = vsel %vm1512, %v2777, 0.0
        %v2779 = vsel %vm1513, %v2776, 0.0
        %v2780 = vsel %vm1514, %v2775, 0.0
        %v2781 = vsel %vm1515, %v2774, 0.0
        %v2782 = vsel %vm1516, %v2773, 0.0
        %v2783 = vsel %vm1517, %v2772, 0.0
        %v2784 = vsel %vm1518, %v2771, 0.0
        %v2785 = vsel %vm1519, %v2770, 0.0
        %s2786 = sld [smem:[#allocation7 + $0x10]]
        %s2787 = sld [smem:[#allocation7 + $0x41]]
        %v2788 = vstv %s2786
        %v2789 = vmul.f32 %v2788, %v2778
        %v2790 = vmul.f32 %v2788, %v2779
        %v2791 = vmul.f32 %v2788, %v2780
        %v2792 = vmul.f32 %v2788, %v2781
        %v2793 = vmul.f32 %v2788, %v2782
        %v2794 = vmul.f32 %v2788, %v2783
        %v2795 = vmul.f32 %v2788, %v2784
        %v2796 = vmul.f32 %v2788, %v2785
        %v2797 = vadd.f32 %v2746, %v2789
        %v2798 = vadd.f32 %v2747, %v2790
        %v2799 = vadd.f32 %v2748, %v2791
        %v2800 = vadd.f32 %v2749, %v2792
        %v2801 = vadd.f32 %v2750, %v2793
        %v2802 = vadd.f32 %v2751, %v2794
        %v2803 = vadd.f32 %v2752, %v2795
        %v2804 = vadd.f32 %v2753, %v2796
        %v2805 = vstv %s2787
        %v2806 = vmul.f32 %v2805, %v2778
        %v2807 = vmul.f32 %v2805, %v2779
        %v2808 = vmul.f32 %v2805, %v2780
        %v2809 = vmul.f32 %v2805, %v2781
        %v2810 = vmul.f32 %v2805, %v2782
        %v2811 = vmul.f32 %v2805, %v2783
        %v2812 = vmul.f32 %v2805, %v2784
        %v2813 = vmul.f32 %v2805, %v2785
        %v2822 = vrot.slane %v2806, 1
        %v2823 = vrot.slane %v2807, 1
        %v2824 = vrot.slane %v2808, 1
        %v2825 = vrot.slane %v2809, 1
        %v2826 = vrot.slane %v2810, 1
        %v2827 = vrot.slane %v2811, 1
        %v2828 = vrot.slane %v2812, 1
        %v2829 = vrot.slane %v2813, 1
        %v2838 = vadd.f32 %v2797, %v2822
        %v2839 = vadd.f32 %v2798, %v2823
        %v2840 = vadd.f32 %v2799, %v2824
        %v2841 = vadd.f32 %v2800, %v2825
        %v2842 = vadd.f32 %v2801, %v2826
        %v2843 = vadd.f32 %v2802, %v2827
        %v2844 = vadd.f32 %v2803, %v2828
        %v2845 = vadd.f32 %v2804, %v2829
        %v2846 = vsel %vm1596, %v2562, 0.0
        %v2847 = vsel %vm1597, %v2563, 0.0
        %v2848 = vsel %vm1598, %v2564, 0.0
        %v2849 = vsel %vm1599, %v2565, 0.0
        %v2850 = vsel %vm1600, %v2566, 0.0
        %v2851 = vsel %vm1601, %v2567, 0.0
        %v2852 = vsel %vm1602, %v2568, 0.0
        %v2853 = vsel %vm1603, %v2569, 0.0
        %s2854 = sld [smem:[#allocation7 + $0x17]]
        %s2855 = sld [smem:[#allocation7 + $0x48]]
        %v2856 = vstv %s2854
        %v2857 = vmul.f32 %v2856, %v2846
        %v2858 = vmul.f32 %v2856, %v2847
        %v2859 = vmul.f32 %v2856, %v2848
        %v2860 = vmul.f32 %v2856, %v2849
        %v2861 = vmul.f32 %v2856, %v2850
        %v2862 = vmul.f32 %v2856, %v2851
        %v2863 = vmul.f32 %v2856, %v2852
        %v2864 = vmul.f32 %v2856, %v2853
        %v2865 = vadd.f32 %v2838, %v2857
        %v2866 = vadd.f32 %v2839, %v2858
        %v2867 = vadd.f32 %v2840, %v2859
        %v2868 = vadd.f32 %v2841, %v2860
        %v2869 = vadd.f32 %v2842, %v2861
        %v2870 = vadd.f32 %v2843, %v2862
        %v2871 = vadd.f32 %v2844, %v2863
        %v2872 = vadd.f32 %v2845, %v2864
        %v2873 = vstv %s2855
        %v2874 = vmul.f32 %v2873, %v2846
        %v2875 = vmul.f32 %v2873, %v2847
        %v2876 = vmul.f32 %v2873, %v2848
        %v2877 = vmul.f32 %v2873, %v2849
        %v2878 = vmul.f32 %v2873, %v2850
        %v2879 = vmul.f32 %v2873, %v2851
        %v2880 = vmul.f32 %v2873, %v2852
        %v2881 = vmul.f32 %v2873, %v2853
        %v2890 = vrot.slane %v2874, 1
        %v2891 = vrot.slane %v2875, 1
        %v2892 = vrot.slane %v2876, 1
        %v2893 = vrot.slane %v2877, 1
        %v2894 = vrot.slane %v2878, 1
        %v2895 = vrot.slane %v2879, 1
        %v2896 = vrot.slane %v2880, 1
        %v2897 = vrot.slane %v2881, 1
        %v2906 = vadd.f32 %v2865, %v2890
        %v2907 = vadd.f32 %v2866, %v2891
        %v2908 = vadd.f32 %v2867, %v2892
        %v2909 = vadd.f32 %v2868, %v2893
        %v2910 = vadd.f32 %v2869, %v2894
        %v2911 = vadd.f32 %v2870, %v2895
        %v2912 = vadd.f32 %v2871, %v2896
        %v2913 = vadd.f32 %v2872, %v2897
        %v2914 = vsel %vm1680, %v2592, 0.0
        %v2915 = vsel %vm1681, %v2591, 0.0
        %v2916 = vsel %vm1682, %v2590, 0.0
        %v2917 = vsel %vm1683, %v2589, 0.0
        %v2918 = vsel %vm1684, %v2588, 0.0
        %v2919 = vsel %vm1685, %v2587, 0.0
        %v2920 = vsel %vm1686, %v2586, 0.0
        %v2921 = vsel %vm1687, %v2593, 0.0
        %s2922 = sld [smem:[#allocation7 + $0x1e]]
        %s2923 = sld [smem:[#allocation7 + $0x4f]]
        %v2924 = vstv %s2922
        %v2925 = vmul.f32 %v2924, %v2914
        %v2926 = vmul.f32 %v2924, %v2915
        %v2927 = vmul.f32 %v2924, %v2916
        %v2928 = vmul.f32 %v2924, %v2917
        %v2929 = vmul.f32 %v2924, %v2918
        %v2930 = vmul.f32 %v2924, %v2919
        %v2931 = vmul.f32 %v2924, %v2920
        %v2932 = vmul.f32 %v2924, %v2921
        %v2933 = vadd.f32 %v2906, %v2925
        %v2934 = vadd.f32 %v2907, %v2926
        %v2935 = vadd.f32 %v2908, %v2927
        %v2936 = vadd.f32 %v2909, %v2928
        %v2937 = vadd.f32 %v2910, %v2929
        %v2938 = vadd.f32 %v2911, %v2930
        %v2939 = vadd.f32 %v2912, %v2931
        %v2940 = vadd.f32 %v2913, %v2932
        %v2941 = vstv %s2923
        %v2942 = vmul.f32 %v2941, %v2914
        %v2943 = vmul.f32 %v2941, %v2915
        %v2944 = vmul.f32 %v2941, %v2916
        %v2945 = vmul.f32 %v2941, %v2917
        %v2946 = vmul.f32 %v2941, %v2918
        %v2947 = vmul.f32 %v2941, %v2919
        %v2948 = vmul.f32 %v2941, %v2920
        %v2949 = vmul.f32 %v2941, %v2921
        %v2958 = vrot.slane %v2942, 1
        %v2959 = vrot.slane %v2943, 1
        %v2960 = vrot.slane %v2944, 1
        %v2961 = vrot.slane %v2945, 1
        %v2962 = vrot.slane %v2946, 1
        %v2963 = vrot.slane %v2947, 1
        %v2964 = vrot.slane %v2948, 1
        %v2965 = vrot.slane %v2949, 1
        %v2974 = vadd.f32 %v2933, %v2958
        %v2975 = vadd.f32 %v2934, %v2959
        %v2976 = vadd.f32 %v2935, %v2960
        %v2977 = vadd.f32 %v2936, %v2961
        %v2978 = vadd.f32 %v2937, %v2962
        %v2979 = vadd.f32 %v2938, %v2963
        %v2980 = vadd.f32 %v2939, %v2964
        %v2981 = vadd.f32 %v2940, %v2965
        %v2982 = vsel %vm1764, %v2684, 0.0
        %v2983 = vsel %vm1765, %v2683, 0.0
        %v2984 = vsel %vm1766, %v2682, 0.0
        %v2985 = vsel %vm1767, %v2681, 0.0
        %v2986 = vsel %vm1768, %v2680, 0.0
        %v2987 = vsel %vm1769, %v2679, 0.0
        %v2988 = vsel %vm1770, %v2678, 0.0
        %v2989 = vsel %vm1771, %v2685, 0.0
        %s2990 = sld [smem:[#allocation7 + $0x25]]
        %s2991 = sld [smem:[#allocation7 + $0x56]]
        %v2992 = vstv %s2990
        %v2993 = vmul.f32 %v2992, %v2982
        %v2994 = vmul.f32 %v2992, %v2983
        %v2995 = vmul.f32 %v2992, %v2984
        %v2996 = vmul.f32 %v2992, %v2985
        %v2997 = vmul.f32 %v2992, %v2986
        %v2998 = vmul.f32 %v2992, %v2987
        %v2999 = vmul.f32 %v2992, %v2988
        %v3000 = vmul.f32 %v2992, %v2989
        %v3001 = vadd.f32 %v2974, %v2993
        %v3002 = vadd.f32 %v2975, %v2994
        %v3003 = vadd.f32 %v2976, %v2995
        %v3004 = vadd.f32 %v2977, %v2996
        %v3005 = vadd.f32 %v2978, %v2997
        %v3006 = vadd.f32 %v2979, %v2998
        %v3007 = vadd.f32 %v2980, %v2999
        %v3008 = vadd.f32 %v2981, %v3000
        %v3009 = vstv %s2991
        %v3010 = vmul.f32 %v3009, %v2982
        %v3011 = vmul.f32 %v3009, %v2983
        %v3012 = vmul.f32 %v3009, %v2984
        %v3013 = vmul.f32 %v3009, %v2985
        %v3014 = vmul.f32 %v3009, %v2986
        %v3015 = vmul.f32 %v3009, %v2987
        %v3016 = vmul.f32 %v3009, %v2988
        %v3017 = vmul.f32 %v3009, %v2989
        %v3026 = vrot.slane %v3010, 1
        %v3027 = vrot.slane %v3011, 1
        %v3028 = vrot.slane %v3012, 1
        %v3029 = vrot.slane %v3013, 1
        %v3030 = vrot.slane %v3014, 1
        %v3031 = vrot.slane %v3015, 1
        %v3032 = vrot.slane %v3016, 1
        %v3033 = vrot.slane %v3017, 1
        %v3042 = vadd.f32 %v3001, %v3026
        %v3043 = vadd.f32 %v3002, %v3027
        %v3044 = vadd.f32 %v3003, %v3028
        %v3045 = vadd.f32 %v3004, %v3029
        %v3046 = vadd.f32 %v3005, %v3030
        %v3047 = vadd.f32 %v3006, %v3031
        %v3048 = vadd.f32 %v3007, %v3032
        %v3049 = vadd.f32 %v3008, %v3033
        %v3050 = vsel %vm1848, %v2776, 0.0
        %v3051 = vsel %vm1849, %v2775, 0.0
        %v3052 = vsel %vm1850, %v2774, 0.0
        %v3053 = vsel %vm1851, %v2773, 0.0
        %v3054 = vsel %vm1852, %v2772, 0.0
        %v3055 = vsel %vm1853, %v2771, 0.0
        %v3056 = vsel %vm1854, %v2770, 0.0
        %v3057 = vsel %vm1855, %v2777, 0.0
        %s3058 = sld [smem:[#allocation7 + $0x2c]]
        %s3059 = sld [smem:[#allocation7 + $0x5d]]
        %v3060 = vstv %s3058
        %v3061 = vmul.f32 %v3060, %v3050
        %v3062 = vmul.f32 %v3060, %v3051
        %v3063 = vmul.f32 %v3060, %v3052
        %v3064 = vmul.f32 %v3060, %v3053
        %v3065 = vmul.f32 %v3060, %v3054
        %v3066 = vmul.f32 %v3060, %v3055
        %v3067 = vmul.f32 %v3060, %v3056
        %v3068 = vmul.f32 %v3060, %v3057
        %v3069 = vadd.f32 %v3042, %v3061
        %v3070 = vadd.f32 %v3043, %v3062
        %v3071 = vadd.f32 %v3044, %v3063
        %v3072 = vadd.f32 %v3045, %v3064
        %v3073 = vadd.f32 %v3046, %v3065
        %v3074 = vadd.f32 %v3047, %v3066
        %v3075 = vadd.f32 %v3048, %v3067
        %v3076 = vadd.f32 %v3049, %v3068
        %v3077 = vstv %s3059
        %v3078 = vmul.f32 %v3077, %v3050
        %v3079 = vmul.f32 %v3077, %v3051
        %v3080 = vmul.f32 %v3077, %v3052
        %v3081 = vmul.f32 %v3077, %v3053
        %v3082 = vmul.f32 %v3077, %v3054
        %v3083 = vmul.f32 %v3077, %v3055
        %v3084 = vmul.f32 %v3077, %v3056
        %v3085 = vmul.f32 %v3077, %v3057
        %v3094 = vrot.slane %v3078, 1
        %v3095 = vrot.slane %v3079, 1
        %v3096 = vrot.slane %v3080, 1
        %v3097 = vrot.slane %v3081, 1
        %v3098 = vrot.slane %v3082, 1
        %v3099 = vrot.slane %v3083, 1
        %v3100 = vrot.slane %v3084, 1
        %v3101 = vrot.slane %v3085, 1
        %v3110 = vadd.f32 %v3069, %v3094
        %v3111 = vadd.f32 %v3070, %v3095
        %v3112 = vadd.f32 %v3071, %v3096
        %v3113 = vadd.f32 %v3072, %v3097
        %v3114 = vadd.f32 %v3073, %v3098
        %v3115 = vadd.f32 %v3074, %v3099
        %v3116 = vadd.f32 %v3075, %v3100
        %v3117 = vadd.f32 %v3076, %v3101
        %v3118 = vsel %vm882, 1, 0
        %v3119 = vsel %vm883, 1, 0
        %v3120 = vsel %vm884, 1, 0
        %v3121 = vsel %vm885, 1, 0
        %v3122 = vsel %vm886, 1, 0
        %v3123 = vsel %vm887, 1, 0
        %v3124 = vsel %vm888, 1, 0
        %v3125 = vsel %vm889, 1, 0
        %vm3126 = vcmp.eq.s32.totalorder %v3118, 1
        %vm3127 = vcmp.eq.s32.totalorder %v3119, 1
        %vm3128 = vcmp.eq.s32.totalorder %v3120, 1
        %vm3129 = vcmp.eq.s32.totalorder %v3121, 1
        %vm3130 = vcmp.eq.s32.totalorder %v3122, 1
        %vm3131 = vcmp.eq.s32.totalorder %v3123, 1
        %vm3132 = vcmp.eq.s32.totalorder %v3124, 1
        %vm3133 = vcmp.eq.s32.totalorder %v3125, 1
        %v3134 = vsel %vm3126, %v699, 0.0
        %v3135 = vsel %vm3127, %v700, 0.0
        %v3136 = vsel %vm3128, %v701, 0.0
        %v3137 = vsel %vm3129, %v702, 0.0
        %v3138 = vsel %vm3130, %v703, 0.0
        %v3139 = vsel %vm3131, %v704, 0.0
        %v3140 = vsel %vm3132, %v705, 0.0
        %v3141 = vsel %vm3133, %v706, 0.0
        %3142 = vrot.lane.b32.xlu0 %v3134, 96
        %v3143 = vpop.permute.xlu0 %3142
        %3144 = vrot.lane.b32.xlu0 %v3135, 96
        %v3145 = vpop.permute.xlu0 %3144
        %3146 = vrot.lane.b32.xlu0 %v3136, 96
        %v3147 = vpop.permute.xlu0 %3146
        %3148 = vrot.lane.b32.xlu0 %v3137, 96
        %v3149 = vpop.permute.xlu0 %3148
        %3150 = vrot.lane.b32.xlu0 %v3138, 96
        %v3151 = vpop.permute.xlu0 %3150
        %3152 = vrot.lane.b32.xlu0 %v3139, 96
        %v3153 = vpop.permute.xlu0 %3152
        %3154 = vrot.lane.b32.xlu0 %v3140, 96
        %v3155 = vpop.permute.xlu0 %3154
        %3156 = vrot.lane.b32.xlu0 %v3141, 96
        %v3157 = vpop.permute.xlu0 %3156
        %v3158 = vsel %vm1277, %v3155, %v3157
        %v3159 = vsel %vm1277, %v3153, %v3155
        %v3160 = vsel %vm1277, %v3151, %v3153
        %v3161 = vsel %vm1277, %v3149, %v3151
        %v3162 = vsel %vm1277, %v3147, %v3149
        %v3163 = vsel %vm1277, %v3145, %v3147
        %v3164 = vsel %vm1277, %v3143, %v3145
        %v3165 = vsel %vm1277, %v3157, %v3143
        %v3166 = vsel %vm1294, %v3165, 0.0
        %v3167 = vsel %vm1295, %v3164, 0.0
        %v3168 = vsel %vm1296, %v3163, 0.0
        %v3169 = vsel %vm1297, %v3162, 0.0
        %v3170 = vsel %vm1298, %v3161, 0.0
        %v3171 = vsel %vm1299, %v3160, 0.0
        %v3172 = vsel %vm1300, %v3159, 0.0
        %v3173 = vsel %vm1301, %v3158, 0.0
        %s3174 = sld [smem:[#allocation7 + $0x3]]
        %s3175 = sld [smem:[#allocation7 + $0x34]]
        %v3176 = vstv %s3174
        %v3177 = vmul.f32 %v3176, %v3166
        %v3178 = vmul.f32 %v3176, %v3167
        %v3179 = vmul.f32 %v3176, %v3168
        %v3180 = vmul.f32 %v3176, %v3169
        %v3181 = vmul.f32 %v3176, %v3170
        %v3182 = vmul.f32 %v3176, %v3171
        %v3183 = vmul.f32 %v3176, %v3172
        %v3184 = vmul.f32 %v3176, %v3173
        %v3185 = vadd.f32 %v3110, %v3177
        %v3186 = vadd.f32 %v3111, %v3178
        %v3187 = vadd.f32 %v3112, %v3179
        %v3188 = vadd.f32 %v3113, %v3180
        %v3189 = vadd.f32 %v3114, %v3181
        %v3190 = vadd.f32 %v3115, %v3182
        %v3191 = vadd.f32 %v3116, %v3183
        %v3192 = vadd.f32 %v3117, %v3184
        %v3193 = vstv %s3175
        %v3194 = vmul.f32 %v3193, %v3166
        %v3195 = vmul.f32 %v3193, %v3167
        %v3196 = vmul.f32 %v3193, %v3168
        %v3197 = vmul.f32 %v3193, %v3169
        %v3198 = vmul.f32 %v3193, %v3170
        %v3199 = vmul.f32 %v3193, %v3171
        %v3200 = vmul.f32 %v3193, %v3172
        %v3201 = vmul.f32 %v3193, %v3173
        %v3210 = vrot.slane %v3194, 1
        %v3211 = vrot.slane %v3195, 1
        %v3212 = vrot.slane %v3196, 1
        %v3213 = vrot.slane %v3197, 1
        %v3214 = vrot.slane %v3198, 1
        %v3215 = vrot.slane %v3199, 1
        %v3216 = vrot.slane %v3200, 1
        %v3217 = vrot.slane %v3201, 1
        %v3226 = vadd.f32 %v3185, %v3210
        %v3227 = vadd.f32 %v3186, %v3211
        %v3228 = vadd.f32 %v3187, %v3212
        %v3229 = vadd.f32 %v3188, %v3213
        %v3230 = vadd.f32 %v3189, %v3214
        %v3231 = vadd.f32 %v3190, %v3215
        %v3232 = vadd.f32 %v3191, %v3216
        %v3233 = vadd.f32 %v3192, %v3217
        %3234 = vrot.lane.b32.xlu0 %v3134, 64
        %v3235 = vpop.permute.xlu0 %3234
        %3236 = vrot.lane.b32.xlu0 %v3135, 64
        %v3237 = vpop.permute.xlu0 %3236
        %3238 = vrot.lane.b32.xlu0 %v3136, 64
        %v3239 = vpop.permute.xlu0 %3238
        %3240 = vrot.lane.b32.xlu0 %v3137, 64
        %v3241 = vpop.permute.xlu0 %3240
        %3242 = vrot.lane.b32.xlu0 %v3138, 64
        %v3243 = vpop.permute.xlu0 %3242
        %3244 = vrot.lane.b32.xlu0 %v3139, 64
        %v3245 = vpop.permute.xlu0 %3244
        %3246 = vrot.lane.b32.xlu0 %v3140, 64
        %v3247 = vpop.permute.xlu0 %3246
        %3248 = vrot.lane.b32.xlu0 %v3141, 64
        %v3249 = vpop.permute.xlu0 %3248
        %v3250 = vsel %vm1386, %v3247, %v3249
        %v3251 = vsel %vm1386, %v3245, %v3247
        %v3252 = vsel %vm1386, %v3243, %v3245
        %v3253 = vsel %vm1386, %v3241, %v3243
        %v3254 = vsel %vm1386, %v3239, %v3241
        %v3255 = vsel %vm1386, %v3237, %v3239
        %v3256 = vsel %vm1386, %v3235, %v3237
        %v3257 = vsel %vm1386, %v3249, %v3235
        %v3258 = vsel %vm1403, %v3257, 0.0
        %v3259 = vsel %vm1404, %v3256, 0.0
        %v3260 = vsel %vm1405, %v3255, 0.0
        %v3261 = vsel %vm1406, %v3254, 0.0
        %v3262 = vsel %vm1407, %v3253, 0.0
        %v3263 = vsel %vm1408, %v3252, 0.0
        %v3264 = vsel %vm1409, %v3251, 0.0
        %v3265 = vsel %vm1410, %v3250, 0.0
        %s3266 = sld [smem:[#allocation7 + $0xa]]
        %s3267 = sld [smem:[#allocation7 + $0x3b]]
        %v3268 = vstv %s3266
        %v3269 = vmul.f32 %v3268, %v3258
        %v3270 = vmul.f32 %v3268, %v3259
        %v3271 = vmul.f32 %v3268, %v3260
        %v3272 = vmul.f32 %v3268, %v3261
        %v3273 = vmul.f32 %v3268, %v3262
        %v3274 = vmul.f32 %v3268, %v3263
        %v3275 = vmul.f32 %v3268, %v3264
        %v3276 = vmul.f32 %v3268, %v3265
        %v3277 = vadd.f32 %v3226, %v3269
        %v3278 = vadd.f32 %v3227, %v3270
        %v3279 = vadd.f32 %v3228, %v3271
        %v3280 = vadd.f32 %v3229, %v3272
        %v3281 = vadd.f32 %v3230, %v3273
        %v3282 = vadd.f32 %v3231, %v3274
        %v3283 = vadd.f32 %v3232, %v3275
        %v3284 = vadd.f32 %v3233, %v3276
        %v3285 = vstv %s3267
        %v3286 = vmul.f32 %v3285, %v3258
        %v3287 = vmul.f32 %v3285, %v3259
        %v3288 = vmul.f32 %v3285, %v3260
        %v3289 = vmul.f32 %v3285, %v3261
        %v3290 = vmul.f32 %v3285, %v3262
        %v3291 = vmul.f32 %v3285, %v3263
        %v3292 = vmul.f32 %v3285, %v3264
        %v3293 = vmul.f32 %v3285, %v3265
        %v3302 = vrot.slane %v3286, 1
        %v3303 = vrot.slane %v3287, 1
        %v3304 = vrot.slane %v3288, 1
        %v3305 = vrot.slane %v3289, 1
        %v3306 = vrot.slane %v3290, 1
        %v3307 = vrot.slane %v3291, 1
        %v3308 = vrot.slane %v3292, 1
        %v3309 = vrot.slane %v3293, 1
        %v3318 = vadd.f32 %v3277, %v3302
        %v3319 = vadd.f32 %v3278, %v3303
        %v3320 = vadd.f32 %v3279, %v3304
        %v3321 = vadd.f32 %v3280, %v3305
        %v3322 = vadd.f32 %v3281, %v3306
        %v3323 = vadd.f32 %v3282, %v3307
        %v3324 = vadd.f32 %v3283, %v3308
        %v3325 = vadd.f32 %v3284, %v3309
        %3326 = vrot.lane.b32.xlu0 %v3134, 32
        %v3327 = vpop.permute.xlu0 %3326
        %3328 = vrot.lane.b32.xlu0 %v3135, 32
        %v3329 = vpop.permute.xlu0 %3328
        %3330 = vrot.lane.b32.xlu0 %v3136, 32
        %v3331 = vpop.permute.xlu0 %3330
        %3332 = vrot.lane.b32.xlu0 %v3137, 32
        %v3333 = vpop.permute.xlu0 %3332
        %3334 = vrot.lane.b32.xlu0 %v3138, 32
        %v3335 = vpop.permute.xlu0 %3334
        %3336 = vrot.lane.b32.xlu0 %v3139, 32
        %v3337 = vpop.permute.xlu0 %3336
        %3338 = vrot.lane.b32.xlu0 %v3140, 32
        %v3339 = vpop.permute.xlu0 %3338
        %3340 = vrot.lane.b32.xlu0 %v3141, 32
        %v3341 = vpop.permute.xlu0 %3340
        %v3342 = vsel %vm1495, %v3339, %v3341
        %v3343 = vsel %vm1495, %v3337, %v3339
        %v3344 = vsel %vm1495, %v3335, %v3337
        %v3345 = vsel %vm1495, %v3333, %v3335
        %v3346 = vsel %vm1495, %v3331, %v3333
        %v3347 = vsel %vm1495, %v3329, %v3331
        %v3348 = vsel %vm1495, %v3327, %v3329
        %v3349 = vsel %vm1495, %v3341, %v3327
        %v3350 = vsel %vm1512, %v3349, 0.0
        %v3351 = vsel %vm1513, %v3348, 0.0
        %v3352 = vsel %vm1514, %v3347, 0.0
        %v3353 = vsel %vm1515, %v3346, 0.0
        %v3354 = vsel %vm1516, %v3345, 0.0
        %v3355 = vsel %vm1517, %v3344, 0.0
        %v3356 = vsel %vm1518, %v3343, 0.0
        %v3357 = vsel %vm1519, %v3342, 0.0
        %s3358 = sld [smem:[#allocation7 + $0x11]]
        %s3359 = sld [smem:[#allocation7 + $0x42]]
        %v3360 = vstv %s3358
        %v3361 = vmul.f32 %v3360, %v3350
        %v3362 = vmul.f32 %v3360, %v3351
        %v3363 = vmul.f32 %v3360, %v3352
        %v3364 = vmul.f32 %v3360, %v3353
        %v3365 = vmul.f32 %v3360, %v3354
        %v3366 = vmul.f32 %v3360, %v3355
        %v3367 = vmul.f32 %v3360, %v3356
        %v3368 = vmul.f32 %v3360, %v3357
        %v3369 = vadd.f32 %v3318, %v3361
        %v3370 = vadd.f32 %v3319, %v3362
        %v3371 = vadd.f32 %v3320, %v3363
        %v3372 = vadd.f32 %v3321, %v3364
        %v3373 = vadd.f32 %v3322, %v3365
        %v3374 = vadd.f32 %v3323, %v3366
        %v3375 = vadd.f32 %v3324, %v3367
        %v3376 = vadd.f32 %v3325, %v3368
        %v3377 = vstv %s3359
        %v3378 = vmul.f32 %v3377, %v3350
        %v3379 = vmul.f32 %v3377, %v3351
        %v3380 = vmul.f32 %v3377, %v3352
        %v3381 = vmul.f32 %v3377, %v3353
        %v3382 = vmul.f32 %v3377, %v3354
        %v3383 = vmul.f32 %v3377, %v3355
        %v3384 = vmul.f32 %v3377, %v3356
        %v3385 = vmul.f32 %v3377, %v3357
        %v3394 = vrot.slane %v3378, 1
        %v3395 = vrot.slane %v3379, 1
        %v3396 = vrot.slane %v3380, 1
        %v3397 = vrot.slane %v3381, 1
        %v3398 = vrot.slane %v3382, 1
        %v3399 = vrot.slane %v3383, 1
        %v3400 = vrot.slane %v3384, 1
        %v3401 = vrot.slane %v3385, 1
        %v3410 = vadd.f32 %v3369, %v3394
        %v3411 = vadd.f32 %v3370, %v3395
        %v3412 = vadd.f32 %v3371, %v3396
        %v3413 = vadd.f32 %v3372, %v3397
        %v3414 = vadd.f32 %v3373, %v3398
        %v3415 = vadd.f32 %v3374, %v3399
        %v3416 = vadd.f32 %v3375, %v3400
        %v3417 = vadd.f32 %v3376, %v3401
        %v3418 = vsel %vm1596, %v3134, 0.0
        %v3419 = vsel %vm1597, %v3135, 0.0
        %v3420 = vsel %vm1598, %v3136, 0.0
        %v3421 = vsel %vm1599, %v3137, 0.0
        %v3422 = vsel %vm1600, %v3138, 0.0
        %v3423 = vsel %vm1601, %v3139, 0.0
        %v3424 = vsel %vm1602, %v3140, 0.0
        %v3425 = vsel %vm1603, %v3141, 0.0
        %s3426 = sld [smem:[#allocation7 + $0x18]]
        %s3427 = sld [smem:[#allocation7 + $0x49]]
        %v3428 = vstv %s3426
        %v3429 = vmul.f32 %v3428, %v3418
        %v3430 = vmul.f32 %v3428, %v3419
        %v3431 = vmul.f32 %v3428, %v3420
        %v3432 = vmul.f32 %v3428, %v3421
        %v3433 = vmul.f32 %v3428, %v3422
        %v3434 = vmul.f32 %v3428, %v3423
        %v3435 = vmul.f32 %v3428, %v3424
        %v3436 = vmul.f32 %v3428, %v3425
        %v3437 = vadd.f32 %v3410, %v3429
        %v3438 = vadd.f32 %v3411, %v3430
        %v3439 = vadd.f32 %v3412, %v3431
        %v3440 = vadd.f32 %v3413, %v3432
        %v3441 = vadd.f32 %v3414, %v3433
        %v3442 = vadd.f32 %v3415, %v3434
        %v3443 = vadd.f32 %v3416, %v3435
        %v3444 = vadd.f32 %v3417, %v3436
        %v3445 = vstv %s3427
        %v3446 = vmul.f32 %v3445, %v3418
        %v3447 = vmul.f32 %v3445, %v3419
        %v3448 = vmul.f32 %v3445, %v3420
        %v3449 = vmul.f32 %v3445, %v3421
        %v3450 = vmul.f32 %v3445, %v3422
        %v3451 = vmul.f32 %v3445, %v3423
        %v3452 = vmul.f32 %v3445, %v3424
        %v3453 = vmul.f32 %v3445, %v3425
        %v3462 = vrot.slane %v3446, 1
        %v3463 = vrot.slane %v3447, 1
        %v3464 = vrot.slane %v3448, 1
        %v3465 = vrot.slane %v3449, 1
        %v3466 = vrot.slane %v3450, 1
        %v3467 = vrot.slane %v3451, 1
        %v3468 = vrot.slane %v3452, 1
        %v3469 = vrot.slane %v3453, 1
        %v3478 = vadd.f32 %v3437, %v3462
        %v3479 = vadd.f32 %v3438, %v3463
        %v3480 = vadd.f32 %v3439, %v3464
        %v3481 = vadd.f32 %v3440, %v3465
        %v3482 = vadd.f32 %v3441, %v3466
        %v3483 = vadd.f32 %v3442, %v3467
        %v3484 = vadd.f32 %v3443, %v3468
        %v3485 = vadd.f32 %v3444, %v3469
        %v3486 = vsel %vm1680, %v3164, 0.0
        %v3487 = vsel %vm1681, %v3163, 0.0
        %v3488 = vsel %vm1682, %v3162, 0.0
        %v3489 = vsel %vm1683, %v3161, 0.0
        %v3490 = vsel %vm1684, %v3160, 0.0
        %v3491 = vsel %vm1685, %v3159, 0.0
        %v3492 = vsel %vm1686, %v3158, 0.0
        %v3493 = vsel %vm1687, %v3165, 0.0
        %s3494 = sld [smem:[#allocation7 + $0x1f]]
        %s3495 = sld [smem:[#allocation7 + $0x50]]
        %v3496 = vstv %s3494
        %v3497 = vmul.f32 %v3496, %v3486
        %v3498 = vmul.f32 %v3496, %v3487
        %v3499 = vmul.f32 %v3496, %v3488
        %v3500 = vmul.f32 %v3496, %v3489
        %v3501 = vmul.f32 %v3496, %v3490
        %v3502 = vmul.f32 %v3496, %v3491
        %v3503 = vmul.f32 %v3496, %v3492
        %v3504 = vmul.f32 %v3496, %v3493
        %v3505 = vadd.f32 %v3478, %v3497
        %v3506 = vadd.f32 %v3479, %v3498
        %v3507 = vadd.f32 %v3480, %v3499
        %v3508 = vadd.f32 %v3481, %v3500
        %v3509 = vadd.f32 %v3482, %v3501
        %v3510 = vadd.f32 %v3483, %v3502
        %v3511 = vadd.f32 %v3484, %v3503
        %v3512 = vadd.f32 %v3485, %v3504
        %v3513 = vstv %s3495
        %v3514 = vmul.f32 %v3513, %v3486
        %v3515 = vmul.f32 %v3513, %v3487
        %v3516 = vmul.f32 %v3513, %v3488
        %v3517 = vmul.f32 %v3513, %v3489
        %v3518 = vmul.f32 %v3513, %v3490
        %v3519 = vmul.f32 %v3513, %v3491
        %v3520 = vmul.f32 %v3513, %v3492
        %v3521 = vmul.f32 %v3513, %v3493
        %v3530 = vrot.slane %v3514, 1
        %v3531 = vrot.slane %v3515, 1
        %v3532 = vrot.slane %v3516, 1
        %v3533 = vrot.slane %v3517, 1
        %v3534 = vrot.slane %v3518, 1
        %v3535 = vrot.slane %v3519, 1
        %v3536 = vrot.slane %v3520, 1
        %v3537 = vrot.slane %v3521, 1
        %v3546 = vadd.f32 %v3505, %v3530
        %v3547 = vadd.f32 %v3506, %v3531
        %v3548 = vadd.f32 %v3507, %v3532
        %v3549 = vadd.f32 %v3508, %v3533
        %v3550 = vadd.f32 %v3509, %v3534
        %v3551 = vadd.f32 %v3510, %v3535
        %v3552 = vadd.f32 %v3511, %v3536
        %v3553 = vadd.f32 %v3512, %v3537
        %v3554 = vsel %vm1764, %v3256, 0.0
        %v3555 = vsel %vm1765, %v3255, 0.0
        %v3556 = vsel %vm1766, %v3254, 0.0
        %v3557 = vsel %vm1767, %v3253, 0.0
        %v3558 = vsel %vm1768, %v3252, 0.0
        %v3559 = vsel %vm1769, %v3251, 0.0
        %v3560 = vsel %vm1770, %v3250, 0.0
        %v3561 = vsel %vm1771, %v3257, 0.0
        %s3562 = sld [smem:[#allocation7 + $0x26]]
        %s3563 = sld [smem:[#allocation7 + $0x57]]
        %v3564 = vstv %s3562
        %v3565 = vmul.f32 %v3564, %v3554
        %v3566 = vmul.f32 %v3564, %v3555
        %v3567 = vmul.f32 %v3564, %v3556
        %v3568 = vmul.f32 %v3564, %v3557
        %v3569 = vmul.f32 %v3564, %v3558
        %v3570 = vmul.f32 %v3564, %v3559
        %v3571 = vmul.f32 %v3564, %v3560
        %v3572 = vmul.f32 %v3564, %v3561
        %v3573 = vadd.f32 %v3546, %v3565
        %v3574 = vadd.f32 %v3547, %v3566
        %v3575 = vadd.f32 %v3548, %v3567
        %v3576 = vadd.f32 %v3549, %v3568
        %v3577 = vadd.f32 %v3550, %v3569
        %v3578 = vadd.f32 %v3551, %v3570
        %v3579 = vadd.f32 %v3552, %v3571
        %v3580 = vadd.f32 %v3553, %v3572
        %v3581 = vstv %s3563
        %v3582 = vmul.f32 %v3581, %v3554
        %v3583 = vmul.f32 %v3581, %v3555
        %v3584 = vmul.f32 %v3581, %v3556
        %v3585 = vmul.f32 %v3581, %v3557
        %v3586 = vmul.f32 %v3581, %v3558
        %v3587 = vmul.f32 %v3581, %v3559
        %v3588 = vmul.f32 %v3581, %v3560
        %v3589 = vmul.f32 %v3581, %v3561
        %v3598 = vrot.slane %v3582, 1
        %v3599 = vrot.slane %v3583, 1
        %v3600 = vrot.slane %v3584, 1
        %v3601 = vrot.slane %v3585, 1
        %v3602 = vrot.slane %v3586, 1
        %v3603 = vrot.slane %v3587, 1
        %v3604 = vrot.slane %v3588, 1
        %v3605 = vrot.slane %v3589, 1
        %v3614 = vadd.f32 %v3573, %v3598
        %v3615 = vadd.f32 %v3574, %v3599
        %v3616 = vadd.f32 %v3575, %v3600
        %v3617 = vadd.f32 %v3576, %v3601
        %v3618 = vadd.f32 %v3577, %v3602
        %v3619 = vadd.f32 %v3578, %v3603
        %v3620 = vadd.f32 %v3579, %v3604
        %v3621 = vadd.f32 %v3580, %v3605
        %v3622 = vsel %vm1848, %v3348, 0.0
        %v3623 = vsel %vm1849, %v3347, 0.0
        %v3624 = vsel %vm1850, %v3346, 0.0
        %v3625 = vsel %vm1851, %v3345, 0.0
        %v3626 = vsel %vm1852, %v3344, 0.0
        %v3627 = vsel %vm1853, %v3343, 0.0
        %v3628 = vsel %vm1854, %v3342, 0.0
        %v3629 = vsel %vm1855, %v3349, 0.0
        %s3630 = sld [smem:[#allocation7 + $0x2d]]
        %s3631 = sld [smem:[#allocation7 + $0x5e]]
        %v3632 = vstv %s3630
        %v3633 = vmul.f32 %v3632, %v3622
        %v3634 = vmul.f32 %v3632, %v3623
        %v3635 = vmul.f32 %v3632, %v3624
        %v3636 = vmul.f32 %v3632, %v3625
        %v3637 = vmul.f32 %v3632, %v3626
        %v3638 = vmul.f32 %v3632, %v3627
        %v3639 = vmul.f32 %v3632, %v3628
        %v3640 = vmul.f32 %v3632, %v3629
        %v3641 = vadd.f32 %v3614, %v3633
        %v3642 = vadd.f32 %v3615, %v3634
        %v3643 = vadd.f32 %v3616, %v3635
        %v3644 = vadd.f32 %v3617, %v3636
        %v3645 = vadd.f32 %v3618, %v3637
        %v3646 = vadd.f32 %v3619, %v3638
        %v3647 = vadd.f32 %v3620, %v3639
        %v3648 = vadd.f32 %v3621, %v3640
        %v3649 = vstv %s3631
        %v3650 = vmul.f32 %v3649, %v3622
        %v3651 = vmul.f32 %v3649, %v3623
        %v3652 = vmul.f32 %v3649, %v3624
        %v3653 = vmul.f32 %v3649, %v3625
        %v3654 = vmul.f32 %v3649, %v3626
        %v3655 = vmul.f32 %v3649, %v3627
        %v3656 = vmul.f32 %v3649, %v3628
        %v3657 = vmul.f32 %v3649, %v3629
        %v3666 = vrot.slane %v3650, 1
        %v3667 = vrot.slane %v3651, 1
        %v3668 = vrot.slane %v3652, 1
        %v3669 = vrot.slane %v3653, 1
        %v3670 = vrot.slane %v3654, 1
        %v3671 = vrot.slane %v3655, 1
        %v3672 = vrot.slane %v3656, 1
        %v3673 = vrot.slane %v3657, 1
        %v3682 = vadd.f32 %v3641, %v3666
        %v3683 = vadd.f32 %v3642, %v3667
        %v3684 = vadd.f32 %v3643, %v3668
        %v3685 = vadd.f32 %v3644, %v3669
        %v3686 = vadd.f32 %v3645, %v3670
        %v3687 = vadd.f32 %v3646, %v3671
        %v3688 = vadd.f32 %v3647, %v3672
        %v3689 = vadd.f32 %v3648, %v3673
        %3690 = vrot.lane.b32.xlu0 %v699, 127
        %v3691 = vpop.permute.xlu0 %3690
        %3692 = vrot.lane.b32.xlu0 %v700, 127
        %v3693 = vpop.permute.xlu0 %3692
        %3694 = vrot.lane.b32.xlu0 %v701, 127
        %v3695 = vpop.permute.xlu0 %3694
        %3696 = vrot.lane.b32.xlu0 %v702, 127
        %v3697 = vpop.permute.xlu0 %3696
        %3698 = vrot.lane.b32.xlu0 %v703, 127
        %v3699 = vpop.permute.xlu0 %3698
        %3700 = vrot.lane.b32.xlu0 %v704, 127
        %v3701 = vpop.permute.xlu0 %3700
        %3702 = vrot.lane.b32.xlu0 %v705, 127
        %v3703 = vpop.permute.xlu0 %3702
        %3704 = vrot.lane.b32.xlu0 %v706, 127
        %v3705 = vpop.permute.xlu0 %3704
        %vm3706 = vcmp.lt.s32.totalorder %v363, 127
        %v3707 = vsel %vm3706, %v3703, %v3705
        %v3708 = vsel %vm3706, %v3701, %v3703
        %v3709 = vsel %vm3706, %v3699, %v3701
        %v3710 = vsel %vm3706, %v3697, %v3699
        %v3711 = vsel %vm3706, %v3695, %v3697
        %v3712 = vsel %vm3706, %v3693, %v3695
        %v3713 = vsel %vm3706, %v3691, %v3693
        %v3714 = vsel %vm3706, %v3705, %v3691
        %v3715 = vsel %vm914, 1, 0
        %v3716 = vsel %vm915, 1, 0
        %v3717 = vsel %vm916, 1, 0
        %v3718 = vsel %vm917, 1, 0
        %v3719 = vsel %vm918, 1, 0
        %v3720 = vsel %vm919, 1, 0
        %v3721 = vsel %vm920, 1, 0
        %v3722 = vsel %vm921, 1, 0
        %vm3723 = vcmp.eq.s32.totalorder %v3715, 1
        %vm3724 = vcmp.eq.s32.totalorder %v3716, 1
        %vm3725 = vcmp.eq.s32.totalorder %v3717, 1
        %vm3726 = vcmp.eq.s32.totalorder %v3718, 1
        %vm3727 = vcmp.eq.s32.totalorder %v3719, 1
        %vm3728 = vcmp.eq.s32.totalorder %v3720, 1
        %vm3729 = vcmp.eq.s32.totalorder %v3721, 1
        %vm3730 = vcmp.eq.s32.totalorder %v3722, 1
        %v3731 = vsel %vm3723, %v3713, 0.0
        %v3732 = vsel %vm3724, %v3712, 0.0
        %v3733 = vsel %vm3725, %v3711, 0.0
        %v3734 = vsel %vm3726, %v3710, 0.0
        %v3735 = vsel %vm3727, %v3709, 0.0
        %v3736 = vsel %vm3728, %v3708, 0.0
        %v3737 = vsel %vm3729, %v3707, 0.0
        %v3738 = vsel %vm3730, %v3714, 0.0
        %3739 = vrot.lane.b32.xlu0 %v3731, 96
        %v3740 = vpop.permute.xlu0 %3739
        %3741 = vrot.lane.b32.xlu0 %v3732, 96
        %v3742 = vpop.permute.xlu0 %3741
        %3743 = vrot.lane.b32.xlu0 %v3733, 96
        %v3744 = vpop.permute.xlu0 %3743
        %3745 = vrot.lane.b32.xlu0 %v3734, 96
        %v3746 = vpop.permute.xlu0 %3745
        %3747 = vrot.lane.b32.xlu0 %v3735, 96
        %v3748 = vpop.permute.xlu0 %3747
        %3749 = vrot.lane.b32.xlu0 %v3736, 96
        %v3750 = vpop.permute.xlu0 %3749
        %3751 = vrot.lane.b32.xlu0 %v3737, 96
        %v3752 = vpop.permute.xlu0 %3751
        %3753 = vrot.lane.b32.xlu0 %v3738, 96
        %v3754 = vpop.permute.xlu0 %3753
        %v3755 = vsel %vm1277, %v3752, %v3754
        %v3756 = vsel %vm1277, %v3750, %v3752
        %v3757 = vsel %vm1277, %v3748, %v3750
        %v3758 = vsel %vm1277, %v3746, %v3748
        %v3759 = vsel %vm1277, %v3744, %v3746
        %v3760 = vsel %vm1277, %v3742, %v3744
        %v3761 = vsel %vm1277, %v3740, %v3742
        %v3762 = vsel %vm1277, %v3754, %v3740
        %v3763 = vsel %vm1294, %v3762, 0.0
        %v3764 = vsel %vm1295, %v3761, 0.0
        %v3765 = vsel %vm1296, %v3760, 0.0
        %v3766 = vsel %vm1297, %v3759, 0.0
        %v3767 = vsel %vm1298, %v3758, 0.0
        %v3768 = vsel %vm1299, %v3757, 0.0
        %v3769 = vsel %vm1300, %v3756, 0.0
        %v3770 = vsel %vm1301, %v3755, 0.0
        %s3771 = sld [smem:[#allocation7 + $0x4]]
        %s3772 = sld [smem:[#allocation7 + $0x35]]
        %v3773 = vstv %s3771
        %v3774 = vmul.f32 %v3773, %v3763
        %v3775 = vmul.f32 %v3773, %v3764
        %v3776 = vmul.f32 %v3773, %v3765
        %v3777 = vmul.f32 %v3773, %v3766
        %v3778 = vmul.f32 %v3773, %v3767
        %v3779 = vmul.f32 %v3773, %v3768
        %v3780 = vmul.f32 %v3773, %v3769
        %v3781 = vmul.f32 %v3773, %v3770
        %v3782 = vadd.f32 %v3682, %v3774
        %v3783 = vadd.f32 %v3683, %v3775
        %v3784 = vadd.f32 %v3684, %v3776
        %v3785 = vadd.f32 %v3685, %v3777
        %v3786 = vadd.f32 %v3686, %v3778
        %v3787 = vadd.f32 %v3687, %v3779
        %v3788 = vadd.f32 %v3688, %v3780
        %v3789 = vadd.f32 %v3689, %v3781
        %v3790 = vstv %s3772
        %v3791 = vmul.f32 %v3790, %v3763
        %v3792 = vmul.f32 %v3790, %v3764
        %v3793 = vmul.f32 %v3790, %v3765
        %v3794 = vmul.f32 %v3790, %v3766
        %v3795 = vmul.f32 %v3790, %v3767
        %v3796 = vmul.f32 %v3790, %v3768
        %v3797 = vmul.f32 %v3790, %v3769
        %v3798 = vmul.f32 %v3790, %v3770
        %v3807 = vrot.slane %v3791, 1
        %v3808 = vrot.slane %v3792, 1
        %v3809 = vrot.slane %v3793, 1
        %v3810 = vrot.slane %v3794, 1
        %v3811 = vrot.slane %v3795, 1
        %v3812 = vrot.slane %v3796, 1
        %v3813 = vrot.slane %v3797, 1
        %v3814 = vrot.slane %v3798, 1
        %v3823 = vadd.f32 %v3782, %v3807
        %v3824 = vadd.f32 %v3783, %v3808
        %v3825 = vadd.f32 %v3784, %v3809
        %v3826 = vadd.f32 %v3785, %v3810
        %v3827 = vadd.f32 %v3786, %v3811
        %v3828 = vadd.f32 %v3787, %v3812
        %v3829 = vadd.f32 %v3788, %v3813
        %v3830 = vadd.f32 %v3789, %v3814
        %3831 = vrot.lane.b32.xlu0 %v3731, 64
        %v3832 = vpop.permute.xlu0 %3831
        %3833 = vrot.lane.b32.xlu0 %v3732, 64
        %v3834 = vpop.permute.xlu0 %3833
        %3835 = vrot.lane.b32.xlu0 %v3733, 64
        %v3836 = vpop.permute.xlu0 %3835
        %3837 = vrot.lane.b32.xlu0 %v3734, 64
        %v3838 = vpop.permute.xlu0 %3837
        %3839 = vrot.lane.b32.xlu0 %v3735, 64
        %v3840 = vpop.permute.xlu0 %3839
        %3841 = vrot.lane.b32.xlu0 %v3736, 64
        %v3842 = vpop.permute.xlu0 %3841
        %3843 = vrot.lane.b32.xlu0 %v3737, 64
        %v3844 = vpop.permute.xlu0 %3843
        %3845 = vrot.lane.b32.xlu0 %v3738, 64
        %v3846 = vpop.permute.xlu0 %3845
        %v3847 = vsel %vm1386, %v3844, %v3846
        %v3848 = vsel %vm1386, %v3842, %v3844
        %v3849 = vsel %vm1386, %v3840, %v3842
        %v3850 = vsel %vm1386, %v3838, %v3840
        %v3851 = vsel %vm1386, %v3836, %v3838
        %v3852 = vsel %vm1386, %v3834, %v3836
        %v3853 = vsel %vm1386, %v3832, %v3834
        %v3854 = vsel %vm1386, %v3846, %v3832
        %v3855 = vsel %vm1403, %v3854, 0.0
        %v3856 = vsel %vm1404, %v3853, 0.0
        %v3857 = vsel %vm1405, %v3852, 0.0
        %v3858 = vsel %vm1406, %v3851, 0.0
        %v3859 = vsel %vm1407, %v3850, 0.0
        %v3860 = vsel %vm1408, %v3849, 0.0
        %v3861 = vsel %vm1409, %v3848, 0.0
        %v3862 = vsel %vm1410, %v3847, 0.0
        %s3863 = sld [smem:[#allocation7 + $0xb]]
        %s3864 = sld [smem:[#allocation7 + $0x3c]]
        %v3865 = vstv %s3863
        %v3866 = vmul.f32 %v3865, %v3855
        %v3867 = vmul.f32 %v3865, %v3856
        %v3868 = vmul.f32 %v3865, %v3857
        %v3869 = vmul.f32 %v3865, %v3858
        %v3870 = vmul.f32 %v3865, %v3859
        %v3871 = vmul.f32 %v3865, %v3860
        %v3872 = vmul.f32 %v3865, %v3861
        %v3873 = vmul.f32 %v3865, %v3862
        %v3874 = vadd.f32 %v3823, %v3866
        %v3875 = vadd.f32 %v3824, %v3867
        %v3876 = vadd.f32 %v3825, %v3868
        %v3877 = vadd.f32 %v3826, %v3869
        %v3878 = vadd.f32 %v3827, %v3870
        %v3879 = vadd.f32 %v3828, %v3871
        %v3880 = vadd.f32 %v3829, %v3872
        %v3881 = vadd.f32 %v3830, %v3873
        %v3882 = vstv %s3864
        %v3883 = vmul.f32 %v3882, %v3855
        %v3884 = vmul.f32 %v3882, %v3856
        %v3885 = vmul.f32 %v3882, %v3857
        %v3886 = vmul.f32 %v3882, %v3858
        %v3887 = vmul.f32 %v3882, %v3859
        %v3888 = vmul.f32 %v3882, %v3860
        %v3889 = vmul.f32 %v3882, %v3861
        %v3890 = vmul.f32 %v3882, %v3862
        %v3899 = vrot.slane %v3883, 1
        %v3900 = vrot.slane %v3884, 1
        %v3901 = vrot.slane %v3885, 1
        %v3902 = vrot.slane %v3886, 1
        %v3903 = vrot.slane %v3887, 1
        %v3904 = vrot.slane %v3888, 1
        %v3905 = vrot.slane %v3889, 1
        %v3906 = vrot.slane %v3890, 1
        %v3915 = vadd.f32 %v3874, %v3899
        %v3916 = vadd.f32 %v3875, %v3900
        %v3917 = vadd.f32 %v3876, %v3901
        %v3918 = vadd.f32 %v3877, %v3902
        %v3919 = vadd.f32 %v3878, %v3903
        %v3920 = vadd.f32 %v3879, %v3904
        %v3921 = vadd.f32 %v3880, %v3905
        %v3922 = vadd.f32 %v3881, %v3906
        %3923 = vrot.lane.b32.xlu0 %v3731, 32
        %v3924 = vpop.permute.xlu0 %3923
        %3925 = vrot.lane.b32.xlu0 %v3732, 32
        %v3926 = vpop.permute.xlu0 %3925
        %3927 = vrot.lane.b32.xlu0 %v3733, 32
        %v3928 = vpop.permute.xlu0 %3927
        %3929 = vrot.lane.b32.xlu0 %v3734, 32
        %v3930 = vpop.permute.xlu0 %3929
        %3931 = vrot.lane.b32.xlu0 %v3735, 32
        %v3932 = vpop.permute.xlu0 %3931
        %3933 = vrot.lane.b32.xlu0 %v3736, 32
        %v3934 = vpop.permute.xlu0 %3933
        %3935 = vrot.lane.b32.xlu0 %v3737, 32
        %v3936 = vpop.permute.xlu0 %3935
        %3937 = vrot.lane.b32.xlu0 %v3738, 32
        %v3938 = vpop.permute.xlu0 %3937
        %v3939 = vsel %vm1495, %v3936, %v3938
        %v3940 = vsel %vm1495, %v3934, %v3936
        %v3941 = vsel %vm1495, %v3932, %v3934
        %v3942 = vsel %vm1495, %v3930, %v3932
        %v3943 = vsel %vm1495, %v3928, %v3930
        %v3944 = vsel %vm1495, %v3926, %v3928
        %v3945 = vsel %vm1495, %v3924, %v3926
        %v3946 = vsel %vm1495, %v3938, %v3924
        %v3947 = vsel %vm1512, %v3946, 0.0
        %v3948 = vsel %vm1513, %v3945, 0.0
        %v3949 = vsel %vm1514, %v3944, 0.0
        %v3950 = vsel %vm1515, %v3943, 0.0
        %v3951 = vsel %vm1516, %v3942, 0.0
        %v3952 = vsel %vm1517, %v3941, 0.0
        %v3953 = vsel %vm1518, %v3940, 0.0
        %v3954 = vsel %vm1519, %v3939, 0.0
        %s3955 = sld [smem:[#allocation7 + $0x12]]
        %s3956 = sld [smem:[#allocation7 + $0x43]]
        %v3957 = vstv %s3955
        %v3958 = vmul.f32 %v3957, %v3947
        %v3959 = vmul.f32 %v3957, %v3948
        %v3960 = vmul.f32 %v3957, %v3949
        %v3961 = vmul.f32 %v3957, %v3950
        %v3962 = vmul.f32 %v3957, %v3951
        %v3963 = vmul.f32 %v3957, %v3952
        %v3964 = vmul.f32 %v3957, %v3953
        %v3965 = vmul.f32 %v3957, %v3954
        %v3966 = vadd.f32 %v3915, %v3958
        %v3967 = vadd.f32 %v3916, %v3959
        %v3968 = vadd.f32 %v3917, %v3960
        %v3969 = vadd.f32 %v3918, %v3961
        %v3970 = vadd.f32 %v3919, %v3962
        %v3971 = vadd.f32 %v3920, %v3963
        %v3972 = vadd.f32 %v3921, %v3964
        %v3973 = vadd.f32 %v3922, %v3965
        %v3974 = vstv %s3956
        %v3975 = vmul.f32 %v3974, %v3947
        %v3976 = vmul.f32 %v3974, %v3948
        %v3977 = vmul.f32 %v3974, %v3949
        %v3978 = vmul.f32 %v3974, %v3950
        %v3979 = vmul.f32 %v3974, %v3951
        %v3980 = vmul.f32 %v3974, %v3952
        %v3981 = vmul.f32 %v3974, %v3953
        %v3982 = vmul.f32 %v3974, %v3954
        %v3991 = vrot.slane %v3975, 1
        %v3992 = vrot.slane %v3976, 1
        %v3993 = vrot.slane %v3977, 1
        %v3994 = vrot.slane %v3978, 1
        %v3995 = vrot.slane %v3979, 1
        %v3996 = vrot.slane %v3980, 1
        %v3997 = vrot.slane %v3981, 1
        %v3998 = vrot.slane %v3982, 1
        %v4007 = vadd.f32 %v3966, %v3991
        %v4008 = vadd.f32 %v3967, %v3992
        %v4009 = vadd.f32 %v3968, %v3993
        %v4010 = vadd.f32 %v3969, %v3994
        %v4011 = vadd.f32 %v3970, %v3995
        %v4012 = vadd.f32 %v3971, %v3996
        %v4013 = vadd.f32 %v3972, %v3997
        %v4014 = vadd.f32 %v3973, %v3998
        %v4015 = vsel %vm1596, %v3731, 0.0
        %v4016 = vsel %vm1597, %v3732, 0.0
        %v4017 = vsel %vm1598, %v3733, 0.0
        %v4018 = vsel %vm1599, %v3734, 0.0
        %v4019 = vsel %vm1600, %v3735, 0.0
        %v4020 = vsel %vm1601, %v3736, 0.0
        %v4021 = vsel %vm1602, %v3737, 0.0
        %v4022 = vsel %vm1603, %v3738, 0.0
        %s4023 = sld [smem:[#allocation7 + $0x19]]
        %s4024 = sld [smem:[#allocation7 + $0x4a]]
        %v4025 = vstv %s4023
        %v4026 = vmul.f32 %v4025, %v4015
        %v4027 = vmul.f32 %v4025, %v4016
        %v4028 = vmul.f32 %v4025, %v4017
        %v4029 = vmul.f32 %v4025, %v4018
        %v4030 = vmul.f32 %v4025, %v4019
        %v4031 = vmul.f32 %v4025, %v4020
        %v4032 = vmul.f32 %v4025, %v4021
        %v4033 = vmul.f32 %v4025, %v4022
        %v4034 = vadd.f32 %v4007, %v4026
        %v4035 = vadd.f32 %v4008, %v4027
        %v4036 = vadd.f32 %v4009, %v4028
        %v4037 = vadd.f32 %v4010, %v4029
        %v4038 = vadd.f32 %v4011, %v4030
        %v4039 = vadd.f32 %v4012, %v4031
        %v4040 = vadd.f32 %v4013, %v4032
        %v4041 = vadd.f32 %v4014, %v4033
        %v4042 = vstv %s4024
        %v4043 = vmul.f32 %v4042, %v4015
        %v4044 = vmul.f32 %v4042, %v4016
        %v4045 = vmul.f32 %v4042, %v4017
        %v4046 = vmul.f32 %v4042, %v4018
        %v4047 = vmul.f32 %v4042, %v4019
        %v4048 = vmul.f32 %v4042, %v4020
        %v4049 = vmul.f32 %v4042, %v4021
        %v4050 = vmul.f32 %v4042, %v4022
        %v4059 = vrot.slane %v4043, 1
        %v4060 = vrot.slane %v4044, 1
        %v4061 = vrot.slane %v4045, 1
        %v4062 = vrot.slane %v4046, 1
        %v4063 = vrot.slane %v4047, 1
        %v4064 = vrot.slane %v4048, 1
        %v4065 = vrot.slane %v4049, 1
        %v4066 = vrot.slane %v4050, 1
        %v4075 = vadd.f32 %v4034, %v4059
        %v4076 = vadd.f32 %v4035, %v4060
        %v4077 = vadd.f32 %v4036, %v4061
        %v4078 = vadd.f32 %v4037, %v4062
        %v4079 = vadd.f32 %v4038, %v4063
        %v4080 = vadd.f32 %v4039, %v4064
        %v4081 = vadd.f32 %v4040, %v4065
        %v4082 = vadd.f32 %v4041, %v4066
        %v4083 = vsel %vm1680, %v3761, 0.0
        %v4084 = vsel %vm1681, %v3760, 0.0
        %v4085 = vsel %vm1682, %v3759, 0.0
        %v4086 = vsel %vm1683, %v3758, 0.0
        %v4087 = vsel %vm1684, %v3757, 0.0
        %v4088 = vsel %vm1685, %v3756, 0.0
        %v4089 = vsel %vm1686, %v3755, 0.0
        %v4090 = vsel %vm1687, %v3762, 0.0
        %s4091 = sld [smem:[#allocation7 + $0x20]]
        %s4092 = sld [smem:[#allocation7 + $0x51]]
        %v4093 = vstv %s4091
        %v4094 = vmul.f32 %v4093, %v4083
        %v4095 = vmul.f32 %v4093, %v4084
        %v4096 = vmul.f32 %v4093, %v4085
        %v4097 = vmul.f32 %v4093, %v4086
        %v4098 = vmul.f32 %v4093, %v4087
        %v4099 = vmul.f32 %v4093, %v4088
        %v4100 = vmul.f32 %v4093, %v4089
        %v4101 = vmul.f32 %v4093, %v4090
        %v4102 = vadd.f32 %v4075, %v4094
        %v4103 = vadd.f32 %v4076, %v4095
        %v4104 = vadd.f32 %v4077, %v4096
        %v4105 = vadd.f32 %v4078, %v4097
        %v4106 = vadd.f32 %v4079, %v4098
        %v4107 = vadd.f32 %v4080, %v4099
        %v4108 = vadd.f32 %v4081, %v4100
        %v4109 = vadd.f32 %v4082, %v4101
        %v4110 = vstv %s4092
        %v4111 = vmul.f32 %v4110, %v4083
        %v4112 = vmul.f32 %v4110, %v4084
        %v4113 = vmul.f32 %v4110, %v4085
        %v4114 = vmul.f32 %v4110, %v4086
        %v4115 = vmul.f32 %v4110, %v4087
        %v4116 = vmul.f32 %v4110, %v4088
        %v4117 = vmul.f32 %v4110, %v4089
        %v4118 = vmul.f32 %v4110, %v4090
        %v4127 = vrot.slane %v4111, 1
        %v4128 = vrot.slane %v4112, 1
        %v4129 = vrot.slane %v4113, 1
        %v4130 = vrot.slane %v4114, 1
        %v4131 = vrot.slane %v4115, 1
        %v4132 = vrot.slane %v4116, 1
        %v4133 = vrot.slane %v4117, 1
        %v4134 = vrot.slane %v4118, 1
        %v4143 = vadd.f32 %v4102, %v4127
        %v4144 = vadd.f32 %v4103, %v4128
        %v4145 = vadd.f32 %v4104, %v4129
        %v4146 = vadd.f32 %v4105, %v4130
        %v4147 = vadd.f32 %v4106, %v4131
        %v4148 = vadd.f32 %v4107, %v4132
        %v4149 = vadd.f32 %v4108, %v4133
        %v4150 = vadd.f32 %v4109, %v4134
        %v4151 = vsel %vm1764, %v3853, 0.0
        %v4152 = vsel %vm1765, %v3852, 0.0
        %v4153 = vsel %vm1766, %v3851, 0.0
        %v4154 = vsel %vm1767, %v3850, 0.0
        %v4155 = vsel %vm1768, %v3849, 0.0
        %v4156 = vsel %vm1769, %v3848, 0.0
        %v4157 = vsel %vm1770, %v3847, 0.0
        %v4158 = vsel %vm1771, %v3854, 0.0
        %s4159 = sld [smem:[#allocation7 + $0x27]]
        %s4160 = sld [smem:[#allocation7 + $0x58]]
        %v4161 = vstv %s4159
        %v4162 = vmul.f32 %v4161, %v4151
        %v4163 = vmul.f32 %v4161, %v4152
        %v4164 = vmul.f32 %v4161, %v4153
        %v4165 = vmul.f32 %v4161, %v4154
        %v4166 = vmul.f32 %v4161, %v4155
        %v4167 = vmul.f32 %v4161, %v4156
        %v4168 = vmul.f32 %v4161, %v4157
        %v4169 = vmul.f32 %v4161, %v4158
        %v4170 = vadd.f32 %v4143, %v4162
        %v4171 = vadd.f32 %v4144, %v4163
        %v4172 = vadd.f32 %v4145, %v4164
        %v4173 = vadd.f32 %v4146, %v4165
        %v4174 = vadd.f32 %v4147, %v4166
        %v4175 = vadd.f32 %v4148, %v4167
        %v4176 = vadd.f32 %v4149, %v4168
        %v4177 = vadd.f32 %v4150, %v4169
        %v4178 = vstv %s4160
        %v4179 = vmul.f32 %v4178, %v4151
        %v4180 = vmul.f32 %v4178, %v4152
        %v4181 = vmul.f32 %v4178, %v4153
        %v4182 = vmul.f32 %v4178, %v4154
        %v4183 = vmul.f32 %v4178, %v4155
        %v4184 = vmul.f32 %v4178, %v4156
        %v4185 = vmul.f32 %v4178, %v4157
        %v4186 = vmul.f32 %v4178, %v4158
        %v4195 = vrot.slane %v4179, 1
        %v4196 = vrot.slane %v4180, 1
        %v4197 = vrot.slane %v4181, 1
        %v4198 = vrot.slane %v4182, 1
        %v4199 = vrot.slane %v4183, 1
        %v4200 = vrot.slane %v4184, 1
        %v4201 = vrot.slane %v4185, 1
        %v4202 = vrot.slane %v4186, 1
        %v4211 = vadd.f32 %v4170, %v4195
        %v4212 = vadd.f32 %v4171, %v4196
        %v4213 = vadd.f32 %v4172, %v4197
        %v4214 = vadd.f32 %v4173, %v4198
        %v4215 = vadd.f32 %v4174, %v4199
        %v4216 = vadd.f32 %v4175, %v4200
        %v4217 = vadd.f32 %v4176, %v4201
        %v4218 = vadd.f32 %v4177, %v4202
        %v4219 = vsel %vm1848, %v3945, 0.0
        %v4220 = vsel %vm1849, %v3944, 0.0
        %v4221 = vsel %vm1850, %v3943, 0.0
        %v4222 = vsel %vm1851, %v3942, 0.0
        %v4223 = vsel %vm1852, %v3941, 0.0
        %v4224 = vsel %vm1853, %v3940, 0.0
        %v4225 = vsel %vm1854, %v3939, 0.0
        %v4226 = vsel %vm1855, %v3946, 0.0
        %s4227 = sld [smem:[#allocation7 + $0x2e]]
        %s4228 = sld [smem:[#allocation7 + $0x5f]]
        %v4229 = vstv %s4227
        %v4230 = vmul.f32 %v4229, %v4219
        %v4231 = vmul.f32 %v4229, %v4220
        %v4232 = vmul.f32 %v4229, %v4221
        %v4233 = vmul.f32 %v4229, %v4222
        %v4234 = vmul.f32 %v4229, %v4223
        %v4235 = vmul.f32 %v4229, %v4224
        %v4236 = vmul.f32 %v4229, %v4225
        %v4237 = vmul.f32 %v4229, %v4226
        %v4238 = vadd.f32 %v4211, %v4230
        %v4239 = vadd.f32 %v4212, %v4231
        %v4240 = vadd.f32 %v4213, %v4232
        %v4241 = vadd.f32 %v4214, %v4233
        %v4242 = vadd.f32 %v4215, %v4234
        %v4243 = vadd.f32 %v4216, %v4235
        %v4244 = vadd.f32 %v4217, %v4236
        %v4245 = vadd.f32 %v4218, %v4237
        %v4246 = vstv %s4228
        %v4247 = vmul.f32 %v4246, %v4219
        %v4248 = vmul.f32 %v4246, %v4220
        %v4249 = vmul.f32 %v4246, %v4221
        %v4250 = vmul.f32 %v4246, %v4222
        %v4251 = vmul.f32 %v4246, %v4223
        %v4252 = vmul.f32 %v4246, %v4224
        %v4253 = vmul.f32 %v4246, %v4225
        %v4254 = vmul.f32 %v4246, %v4226
        %v4263 = vrot.slane %v4247, 1
        %v4264 = vrot.slane %v4248, 1
        %v4265 = vrot.slane %v4249, 1
        %v4266 = vrot.slane %v4250, 1
        %v4267 = vrot.slane %v4251, 1
        %v4268 = vrot.slane %v4252, 1
        %v4269 = vrot.slane %v4253, 1
        %v4270 = vrot.slane %v4254, 1
        %v4279 = vadd.f32 %v4238, %v4263
        %v4280 = vadd.f32 %v4239, %v4264
        %v4281 = vadd.f32 %v4240, %v4265
        %v4282 = vadd.f32 %v4241, %v4266
        %v4283 = vadd.f32 %v4242, %v4267
        %v4284 = vadd.f32 %v4243, %v4268
        %v4285 = vadd.f32 %v4244, %v4269
        %v4286 = vadd.f32 %v4245, %v4270
        %4287 = vrot.lane.b32.xlu0 %v699, 126
        %v4288 = vpop.permute.xlu0 %4287
        %4289 = vrot.lane.b32.xlu0 %v700, 126
        %v4290 = vpop.permute.xlu0 %4289
        %4291 = vrot.lane.b32.xlu0 %v701, 126
        %v4292 = vpop.permute.xlu0 %4291
        %4293 = vrot.lane.b32.xlu0 %v702, 126
        %v4294 = vpop.permute.xlu0 %4293
        %4295 = vrot.lane.b32.xlu0 %v703, 126
        %v4296 = vpop.permute.xlu0 %4295
        %4297 = vrot.lane.b32.xlu0 %v704, 126
        %v4298 = vpop.permute.xlu0 %4297
        %4299 = vrot.lane.b32.xlu0 %v705, 126
        %v4300 = vpop.permute.xlu0 %4299
        %4301 = vrot.lane.b32.xlu0 %v706, 126
        %v4302 = vpop.permute.xlu0 %4301
        %vm4303 = vcmp.lt.s32.totalorder %v363, 126
        %v4304 = vsel %vm4303, %v4300, %v4302
        %v4305 = vsel %vm4303, %v4298, %v4300
        %v4306 = vsel %vm4303, %v4296, %v4298
        %v4307 = vsel %vm4303, %v4294, %v4296
        %v4308 = vsel %vm4303, %v4292, %v4294
        %v4309 = vsel %vm4303, %v4290, %v4292
        %v4310 = vsel %vm4303, %v4288, %v4290
        %v4311 = vsel %vm4303, %v4302, %v4288
        %v4312 = vsel %vm946, 1, 0
        %v4313 = vsel %vm947, 1, 0
        %v4314 = vsel %vm948, 1, 0
        %v4315 = vsel %vm949, 1, 0
        %v4316 = vsel %vm950, 1, 0
        %v4317 = vsel %vm951, 1, 0
        %v4318 = vsel %vm952, 1, 0
        %v4319 = vsel %vm953, 1, 0
        %vm4320 = vcmp.eq.s32.totalorder %v4312, 1
        %vm4321 = vcmp.eq.s32.totalorder %v4313, 1
        %vm4322 = vcmp.eq.s32.totalorder %v4314, 1
        %vm4323 = vcmp.eq.s32.totalorder %v4315, 1
        %vm4324 = vcmp.eq.s32.totalorder %v4316, 1
        %vm4325 = vcmp.eq.s32.totalorder %v4317, 1
        %vm4326 = vcmp.eq.s32.totalorder %v4318, 1
        %vm4327 = vcmp.eq.s32.totalorder %v4319, 1
        %v4328 = vsel %vm4320, %v4310, 0.0
        %v4329 = vsel %vm4321, %v4309, 0.0
        %v4330 = vsel %vm4322, %v4308, 0.0
        %v4331 = vsel %vm4323, %v4307, 0.0
        %v4332 = vsel %vm4324, %v4306, 0.0
        %v4333 = vsel %vm4325, %v4305, 0.0
        %v4334 = vsel %vm4326, %v4304, 0.0
        %v4335 = vsel %vm4327, %v4311, 0.0
        %4336 = vrot.lane.b32.xlu0 %v4328, 96
        %v4337 = vpop.permute.xlu0 %4336
        %4338 = vrot.lane.b32.xlu0 %v4329, 96
        %v4339 = vpop.permute.xlu0 %4338
        %4340 = vrot.lane.b32.xlu0 %v4330, 96
        %v4341 = vpop.permute.xlu0 %4340
        %4342 = vrot.lane.b32.xlu0 %v4331, 96
        %v4343 = vpop.permute.xlu0 %4342
        %4344 = vrot.lane.b32.xlu0 %v4332, 96
        %v4345 = vpop.permute.xlu0 %4344
        %4346 = vrot.lane.b32.xlu0 %v4333, 96
        %v4347 = vpop.permute.xlu0 %4346
        %4348 = vrot.lane.b32.xlu0 %v4334, 96
        %v4349 = vpop.permute.xlu0 %4348
        %4350 = vrot.lane.b32.xlu0 %v4335, 96
        %v4351 = vpop.permute.xlu0 %4350
        %v4352 = vsel %vm1277, %v4349, %v4351
        %v4353 = vsel %vm1277, %v4347, %v4349
        %v4354 = vsel %vm1277, %v4345, %v4347
        %v4355 = vsel %vm1277, %v4343, %v4345
        %v4356 = vsel %vm1277, %v4341, %v4343
        %v4357 = vsel %vm1277, %v4339, %v4341
        %v4358 = vsel %vm1277, %v4337, %v4339
        %v4359 = vsel %vm1277, %v4351, %v4337
        %v4360 = vsel %vm1294, %v4359, 0.0
        %v4361 = vsel %vm1295, %v4358, 0.0
        %v4362 = vsel %vm1296, %v4357, 0.0
        %v4363 = vsel %vm1297, %v4356, 0.0
        %v4364 = vsel %vm1298, %v4355, 0.0
        %v4365 = vsel %vm1299, %v4354, 0.0
        %v4366 = vsel %vm1300, %v4353, 0.0
        %v4367 = vsel %vm1301, %v4352, 0.0
        %s4368 = sld [smem:[#allocation7 + $0x5]]
        %s4369 = sld [smem:[#allocation7 + $0x36]]
        %v4370 = vstv %s4368
        %v4371 = vmul.f32 %v4370, %v4360
        %v4372 = vmul.f32 %v4370, %v4361
        %v4373 = vmul.f32 %v4370, %v4362
        %v4374 = vmul.f32 %v4370, %v4363
        %v4375 = vmul.f32 %v4370, %v4364
        %v4376 = vmul.f32 %v4370, %v4365
        %v4377 = vmul.f32 %v4370, %v4366
        %v4378 = vmul.f32 %v4370, %v4367
        %v4379 = vadd.f32 %v4279, %v4371
        %v4380 = vadd.f32 %v4280, %v4372
        %v4381 = vadd.f32 %v4281, %v4373
        %v4382 = vadd.f32 %v4282, %v4374
        %v4383 = vadd.f32 %v4283, %v4375
        %v4384 = vadd.f32 %v4284, %v4376
        %v4385 = vadd.f32 %v4285, %v4377
        %v4386 = vadd.f32 %v4286, %v4378
        %v4387 = vstv %s4369
        %v4388 = vmul.f32 %v4387, %v4360
        %v4389 = vmul.f32 %v4387, %v4361
        %v4390 = vmul.f32 %v4387, %v4362
        %v4391 = vmul.f32 %v4387, %v4363
        %v4392 = vmul.f32 %v4387, %v4364
        %v4393 = vmul.f32 %v4387, %v4365
        %v4394 = vmul.f32 %v4387, %v4366
        %v4395 = vmul.f32 %v4387, %v4367
        %v4404 = vrot.slane %v4388, 1
        %v4405 = vrot.slane %v4389, 1
        %v4406 = vrot.slane %v4390, 1
        %v4407 = vrot.slane %v4391, 1
        %v4408 = vrot.slane %v4392, 1
        %v4409 = vrot.slane %v4393, 1
        %v4410 = vrot.slane %v4394, 1
        %v4411 = vrot.slane %v4395, 1
        %v4420 = vadd.f32 %v4379, %v4404
        %v4421 = vadd.f32 %v4380, %v4405
        %v4422 = vadd.f32 %v4381, %v4406
        %v4423 = vadd.f32 %v4382, %v4407
        %v4424 = vadd.f32 %v4383, %v4408
        %v4425 = vadd.f32 %v4384, %v4409
        %v4426 = vadd.f32 %v4385, %v4410
        %v4427 = vadd.f32 %v4386, %v4411
        %4428 = vrot.lane.b32.xlu0 %v4328, 64
        %v4429 = vpop.permute.xlu0 %4428
        %4430 = vrot.lane.b32.xlu0 %v4329, 64
        %v4431 = vpop.permute.xlu0 %4430
        %4432 = vrot.lane.b32.xlu0 %v4330, 64
        %v4433 = vpop.permute.xlu0 %4432
        %4434 = vrot.lane.b32.xlu0 %v4331, 64
        %v4435 = vpop.permute.xlu0 %4434
        %4436 = vrot.lane.b32.xlu0 %v4332, 64
        %v4437 = vpop.permute.xlu0 %4436
        %4438 = vrot.lane.b32.xlu0 %v4333, 64
        %v4439 = vpop.permute.xlu0 %4438
        %4440 = vrot.lane.b32.xlu0 %v4334, 64
        %v4441 = vpop.permute.xlu0 %4440
        %4442 = vrot.lane.b32.xlu0 %v4335, 64
        %v4443 = vpop.permute.xlu0 %4442
        %v4444 = vsel %vm1386, %v4441, %v4443
        %v4445 = vsel %vm1386, %v4439, %v4441
        %v4446 = vsel %vm1386, %v4437, %v4439
        %v4447 = vsel %vm1386, %v4435, %v4437
        %v4448 = vsel %vm1386, %v4433, %v4435
        %v4449 = vsel %vm1386, %v4431, %v4433
        %v4450 = vsel %vm1386, %v4429, %v4431
        %v4451 = vsel %vm1386, %v4443, %v4429
        %v4452 = vsel %vm1403, %v4451, 0.0
        %v4453 = vsel %vm1404, %v4450, 0.0
        %v4454 = vsel %vm1405, %v4449, 0.0
        %v4455 = vsel %vm1406, %v4448, 0.0
        %v4456 = vsel %vm1407, %v4447, 0.0
        %v4457 = vsel %vm1408, %v4446, 0.0
        %v4458 = vsel %vm1409, %v4445, 0.0
        %v4459 = vsel %vm1410, %v4444, 0.0
        %s4460 = sld [smem:[#allocation7 + $0xc]]
        %s4461 = sld [smem:[#allocation7 + $0x3d]]
        %v4462 = vstv %s4460
        %v4463 = vmul.f32 %v4462, %v4452
        %v4464 = vmul.f32 %v4462, %v4453
        %v4465 = vmul.f32 %v4462, %v4454
        %v4466 = vmul.f32 %v4462, %v4455
        %v4467 = vmul.f32 %v4462, %v4456
        %v4468 = vmul.f32 %v4462, %v4457
        %v4469 = vmul.f32 %v4462, %v4458
        %v4470 = vmul.f32 %v4462, %v4459
        %v4471 = vadd.f32 %v4420, %v4463
        %v4472 = vadd.f32 %v4421, %v4464
        %v4473 = vadd.f32 %v4422, %v4465
        %v4474 = vadd.f32 %v4423, %v4466
        %v4475 = vadd.f32 %v4424, %v4467
        %v4476 = vadd.f32 %v4425, %v4468
        %v4477 = vadd.f32 %v4426, %v4469
        %v4478 = vadd.f32 %v4427, %v4470
        %v4479 = vstv %s4461
        %v4480 = vmul.f32 %v4479, %v4452
        %v4481 = vmul.f32 %v4479, %v4453
        %v4482 = vmul.f32 %v4479, %v4454
        %v4483 = vmul.f32 %v4479, %v4455
        %v4484 = vmul.f32 %v4479, %v4456
        %v4485 = vmul.f32 %v4479, %v4457
        %v4486 = vmul.f32 %v4479, %v4458
        %v4487 = vmul.f32 %v4479, %v4459
        %v4496 = vrot.slane %v4480, 1
        %v4497 = vrot.slane %v4481, 1
        %v4498 = vrot.slane %v4482, 1
        %v4499 = vrot.slane %v4483, 1
        %v4500 = vrot.slane %v4484, 1
        %v4501 = vrot.slane %v4485, 1
        %v4502 = vrot.slane %v4486, 1
        %v4503 = vrot.slane %v4487, 1
        %v4512 = vadd.f32 %v4471, %v4496
        %v4513 = vadd.f32 %v4472, %v4497
        %v4514 = vadd.f32 %v4473, %v4498
        %v4515 = vadd.f32 %v4474, %v4499
        %v4516 = vadd.f32 %v4475, %v4500
        %v4517 = vadd.f32 %v4476, %v4501
        %v4518 = vadd.f32 %v4477, %v4502
        %v4519 = vadd.f32 %v4478, %v4503
        %4520 = vrot.lane.b32.xlu0 %v4328, 32
        %v4521 = vpop.permute.xlu0 %4520
        %4522 = vrot.lane.b32.xlu0 %v4329, 32
        %v4523 = vpop.permute.xlu0 %4522
        %4524 = vrot.lane.b32.xlu0 %v4330, 32
        %v4525 = vpop.permute.xlu0 %4524
        %4526 = vrot.lane.b32.xlu0 %v4331, 32
        %v4527 = vpop.permute.xlu0 %4526
        %4528 = vrot.lane.b32.xlu0 %v4332, 32
        %v4529 = vpop.permute.xlu0 %4528
        %4530 = vrot.lane.b32.xlu0 %v4333, 32
        %v4531 = vpop.permute.xlu0 %4530
        %4532 = vrot.lane.b32.xlu0 %v4334, 32
        %v4533 = vpop.permute.xlu0 %4532
        %4534 = vrot.lane.b32.xlu0 %v4335, 32
        %v4535 = vpop.permute.xlu0 %4534
        %v4536 = vsel %vm1495, %v4533, %v4535
        %v4537 = vsel %vm1495, %v4531, %v4533
        %v4538 = vsel %vm1495, %v4529, %v4531
        %v4539 = vsel %vm1495, %v4527, %v4529
        %v4540 = vsel %vm1495, %v4525, %v4527
        %v4541 = vsel %vm1495, %v4523, %v4525
        %v4542 = vsel %vm1495, %v4521, %v4523
        %v4543 = vsel %vm1495, %v4535, %v4521
        %v4544 = vsel %vm1512, %v4543, 0.0
        %v4545 = vsel %vm1513, %v4542, 0.0
        %v4546 = vsel %vm1514, %v4541, 0.0
        %v4547 = vsel %vm1515, %v4540, 0.0
        %v4548 = vsel %vm1516, %v4539, 0.0
        %v4549 = vsel %vm1517, %v4538, 0.0
        %v4550 = vsel %vm1518, %v4537, 0.0
        %v4551 = vsel %vm1519, %v4536, 0.0
        %s4552 = sld [smem:[#allocation7 + $0x13]]
        %s4553 = sld [smem:[#allocation7 + $0x44]]
        %v4554 = vstv %s4552
        %v4555 = vmul.f32 %v4554, %v4544
        %v4556 = vmul.f32 %v4554, %v4545
        %v4557 = vmul.f32 %v4554, %v4546
        %v4558 = vmul.f32 %v4554, %v4547
        %v4559 = vmul.f32 %v4554, %v4548
        %v4560 = vmul.f32 %v4554, %v4549
        %v4561 = vmul.f32 %v4554, %v4550
        %v4562 = vmul.f32 %v4554, %v4551
        %v4563 = vadd.f32 %v4512, %v4555
        %v4564 = vadd.f32 %v4513, %v4556
        %v4565 = vadd.f32 %v4514, %v4557
        %v4566 = vadd.f32 %v4515, %v4558
        %v4567 = vadd.f32 %v4516, %v4559
        %v4568 = vadd.f32 %v4517, %v4560
        %v4569 = vadd.f32 %v4518, %v4561
        %v4570 = vadd.f32 %v4519, %v4562
        %v4571 = vstv %s4553
        %v4572 = vmul.f32 %v4571, %v4544
        %v4573 = vmul.f32 %v4571, %v4545
        %v4574 = vmul.f32 %v4571, %v4546
        %v4575 = vmul.f32 %v4571, %v4547
        %v4576 = vmul.f32 %v4571, %v4548
        %v4577 = vmul.f32 %v4571, %v4549
        %v4578 = vmul.f32 %v4571, %v4550
        %v4579 = vmul.f32 %v4571, %v4551
        %v4588 = vrot.slane %v4572, 1
        %v4589 = vrot.slane %v4573, 1
        %v4590 = vrot.slane %v4574, 1
        %v4591 = vrot.slane %v4575, 1
        %v4592 = vrot.slane %v4576, 1
        %v4593 = vrot.slane %v4577, 1
        %v4594 = vrot.slane %v4578, 1
        %v4595 = vrot.slane %v4579, 1
        %v4604 = vadd.f32 %v4563, %v4588
        %v4605 = vadd.f32 %v4564, %v4589
        %v4606 = vadd.f32 %v4565, %v4590
        %v4607 = vadd.f32 %v4566, %v4591
        %v4608 = vadd.f32 %v4567, %v4592
        %v4609 = vadd.f32 %v4568, %v4593
        %v4610 = vadd.f32 %v4569, %v4594
        %v4611 = vadd.f32 %v4570, %v4595
        %v4612 = vsel %vm1596, %v4328, 0.0
        %v4613 = vsel %vm1597, %v4329, 0.0
        %v4614 = vsel %vm1598, %v4330, 0.0
        %v4615 = vsel %vm1599, %v4331, 0.0
        %v4616 = vsel %vm1600, %v4332, 0.0
        %v4617 = vsel %vm1601, %v4333, 0.0
        %v4618 = vsel %vm1602, %v4334, 0.0
        %v4619 = vsel %vm1603, %v4335, 0.0
        %s4620 = sld [smem:[#allocation7 + $0x1a]]
        %s4621 = sld [smem:[#allocation7 + $0x4b]]
        %v4622 = vstv %s4620
        %v4623 = vmul.f32 %v4622, %v4612
        %v4624 = vmul.f32 %v4622, %v4613
        %v4625 = vmul.f32 %v4622, %v4614
        %v4626 = vmul.f32 %v4622, %v4615
        %v4627 = vmul.f32 %v4622, %v4616
        %v4628 = vmul.f32 %v4622, %v4617
        %v4629 = vmul.f32 %v4622, %v4618
        %v4630 = vmul.f32 %v4622, %v4619
        %v4631 = vadd.f32 %v4604, %v4623
        %v4632 = vadd.f32 %v4605, %v4624
        %v4633 = vadd.f32 %v4606, %v4625
        %v4634 = vadd.f32 %v4607, %v4626
        %v4635 = vadd.f32 %v4608, %v4627
        %v4636 = vadd.f32 %v4609, %v4628
        %v4637 = vadd.f32 %v4610, %v4629
        %v4638 = vadd.f32 %v4611, %v4630
        %v4639 = vstv %s4621
        %v4640 = vmul.f32 %v4639, %v4612
        %v4641 = vmul.f32 %v4639, %v4613
        %v4642 = vmul.f32 %v4639, %v4614
        %v4643 = vmul.f32 %v4639, %v4615
        %v4644 = vmul.f32 %v4639, %v4616
        %v4645 = vmul.f32 %v4639, %v4617
        %v4646 = vmul.f32 %v4639, %v4618
        %v4647 = vmul.f32 %v4639, %v4619
        %v4656 = vrot.slane %v4640, 1
        %v4657 = vrot.slane %v4641, 1
        %v4658 = vrot.slane %v4642, 1
        %v4659 = vrot.slane %v4643, 1
        %v4660 = vrot.slane %v4644, 1
        %v4661 = vrot.slane %v4645, 1
        %v4662 = vrot.slane %v4646, 1
        %v4663 = vrot.slane %v4647, 1
        %v4672 = vadd.f32 %v4631, %v4656
        %v4673 = vadd.f32 %v4632, %v4657
        %v4674 = vadd.f32 %v4633, %v4658
        %v4675 = vadd.f32 %v4634, %v4659
        %v4676 = vadd.f32 %v4635, %v4660
        %v4677 = vadd.f32 %v4636, %v4661
        %v4678 = vadd.f32 %v4637, %v4662
        %v4679 = vadd.f32 %v4638, %v4663
        %v4680 = vsel %vm1680, %v4358, 0.0
        %v4681 = vsel %vm1681, %v4357, 0.0
        %v4682 = vsel %vm1682, %v4356, 0.0
        %v4683 = vsel %vm1683, %v4355, 0.0
        %v4684 = vsel %vm1684, %v4354, 0.0
        %v4685 = vsel %vm1685, %v4353, 0.0
        %v4686 = vsel %vm1686, %v4352, 0.0
        %v4687 = vsel %vm1687, %v4359, 0.0
        %s4688 = sld [smem:[#allocation7 + $0x21]]
        %s4689 = sld [smem:[#allocation7 + $0x52]]
        %v4690 = vstv %s4688
        %v4691 = vmul.f32 %v4690, %v4680
        %v4692 = vmul.f32 %v4690, %v4681
        %v4693 = vmul.f32 %v4690, %v4682
        %v4694 = vmul.f32 %v4690, %v4683
        %v4695 = vmul.f32 %v4690, %v4684
        %v4696 = vmul.f32 %v4690, %v4685
        %v4697 = vmul.f32 %v4690, %v4686
        %v4698 = vmul.f32 %v4690, %v4687
        %v4699 = vadd.f32 %v4672, %v4691
        %v4700 = vadd.f32 %v4673, %v4692
        %v4701 = vadd.f32 %v4674, %v4693
        %v4702 = vadd.f32 %v4675, %v4694
        %v4703 = vadd.f32 %v4676, %v4695
        %v4704 = vadd.f32 %v4677, %v4696
        %v4705 = vadd.f32 %v4678, %v4697
        %v4706 = vadd.f32 %v4679, %v4698
        %v4707 = vstv %s4689
        %v4708 = vmul.f32 %v4707, %v4680
        %v4709 = vmul.f32 %v4707, %v4681
        %v4710 = vmul.f32 %v4707, %v4682
        %v4711 = vmul.f32 %v4707, %v4683
        %v4712 = vmul.f32 %v4707, %v4684
        %v4713 = vmul.f32 %v4707, %v4685
        %v4714 = vmul.f32 %v4707, %v4686
        %v4715 = vmul.f32 %v4707, %v4687
        %v4724 = vrot.slane %v4708, 1
        %v4725 = vrot.slane %v4709, 1
        %v4726 = vrot.slane %v4710, 1
        %v4727 = vrot.slane %v4711, 1
        %v4728 = vrot.slane %v4712, 1
        %v4729 = vrot.slane %v4713, 1
        %v4730 = vrot.slane %v4714, 1
        %v4731 = vrot.slane %v4715, 1
        %v4740 = vadd.f32 %v4699, %v4724
        %v4741 = vadd.f32 %v4700, %v4725
        %v4742 = vadd.f32 %v4701, %v4726
        %v4743 = vadd.f32 %v4702, %v4727
        %v4744 = vadd.f32 %v4703, %v4728
        %v4745 = vadd.f32 %v4704, %v4729
        %v4746 = vadd.f32 %v4705, %v4730
        %v4747 = vadd.f32 %v4706, %v4731
        %v4748 = vsel %vm1764, %v4450, 0.0
        %v4749 = vsel %vm1765, %v4449, 0.0
        %v4750 = vsel %vm1766, %v4448, 0.0
        %v4751 = vsel %vm1767, %v4447, 0.0
        %v4752 = vsel %vm1768, %v4446, 0.0
        %v4753 = vsel %vm1769, %v4445, 0.0
        %v4754 = vsel %vm1770, %v4444, 0.0
        %v4755 = vsel %vm1771, %v4451, 0.0
        %s4756 = sld [smem:[#allocation7 + $0x28]]
        %s4757 = sld [smem:[#allocation7 + $0x59]]
        %v4758 = vstv %s4756
        %v4759 = vmul.f32 %v4758, %v4748
        %v4760 = vmul.f32 %v4758, %v4749
        %v4761 = vmul.f32 %v4758, %v4750
        %v4762 = vmul.f32 %v4758, %v4751
        %v4763 = vmul.f32 %v4758, %v4752
        %v4764 = vmul.f32 %v4758, %v4753
        %v4765 = vmul.f32 %v4758, %v4754
        %v4766 = vmul.f32 %v4758, %v4755
        %v4767 = vadd.f32 %v4740, %v4759
        %v4768 = vadd.f32 %v4741, %v4760
        %v4769 = vadd.f32 %v4742, %v4761
        %v4770 = vadd.f32 %v4743, %v4762
        %v4771 = vadd.f32 %v4744, %v4763
        %v4772 = vadd.f32 %v4745, %v4764
        %v4773 = vadd.f32 %v4746, %v4765
        %v4774 = vadd.f32 %v4747, %v4766
        %v4775 = vstv %s4757
        %v4776 = vmul.f32 %v4775, %v4748
        %v4777 = vmul.f32 %v4775, %v4749
        %v4778 = vmul.f32 %v4775, %v4750
        %v4779 = vmul.f32 %v4775, %v4751
        %v4780 = vmul.f32 %v4775, %v4752
        %v4781 = vmul.f32 %v4775, %v4753
        %v4782 = vmul.f32 %v4775, %v4754
        %v4783 = vmul.f32 %v4775, %v4755
        %v4792 = vrot.slane %v4776, 1
        %v4793 = vrot.slane %v4777, 1
        %v4794 = vrot.slane %v4778, 1
        %v4795 = vrot.slane %v4779, 1
        %v4796 = vrot.slane %v4780, 1
        %v4797 = vrot.slane %v4781, 1
        %v4798 = vrot.slane %v4782, 1
        %v4799 = vrot.slane %v4783, 1
        %v4808 = vadd.f32 %v4767, %v4792
        %v4809 = vadd.f32 %v4768, %v4793
        %v4810 = vadd.f32 %v4769, %v4794
        %v4811 = vadd.f32 %v4770, %v4795
        %v4812 = vadd.f32 %v4771, %v4796
        %v4813 = vadd.f32 %v4772, %v4797
        %v4814 = vadd.f32 %v4773, %v4798
        %v4815 = vadd.f32 %v4774, %v4799
        %v4816 = vsel %vm1848, %v4542, 0.0
        %v4817 = vsel %vm1849, %v4541, 0.0
        %v4818 = vsel %vm1850, %v4540, 0.0
        %v4819 = vsel %vm1851, %v4539, 0.0
        %v4820 = vsel %vm1852, %v4538, 0.0
        %v4821 = vsel %vm1853, %v4537, 0.0
        %v4822 = vsel %vm1854, %v4536, 0.0
        %v4823 = vsel %vm1855, %v4543, 0.0
        %s4824 = sld [smem:[#allocation7 + $0x2f]]
        %s4825 = sld [smem:[#allocation7 + $0x60]]
        %v4826 = vstv %s4824
        %v4827 = vmul.f32 %v4826, %v4816
        %v4828 = vmul.f32 %v4826, %v4817
        %v4829 = vmul.f32 %v4826, %v4818
        %v4830 = vmul.f32 %v4826, %v4819
        %v4831 = vmul.f32 %v4826, %v4820
        %v4832 = vmul.f32 %v4826, %v4821
        %v4833 = vmul.f32 %v4826, %v4822
        %v4834 = vmul.f32 %v4826, %v4823
        %v4835 = vadd.f32 %v4808, %v4827
        %v4836 = vadd.f32 %v4809, %v4828
        %v4837 = vadd.f32 %v4810, %v4829
        %v4838 = vadd.f32 %v4811, %v4830
        %v4839 = vadd.f32 %v4812, %v4831
        %v4840 = vadd.f32 %v4813, %v4832
        %v4841 = vadd.f32 %v4814, %v4833
        %v4842 = vadd.f32 %v4815, %v4834
        %v4843 = vstv %s4825
        %v4844 = vmul.f32 %v4843, %v4816
        %v4845 = vmul.f32 %v4843, %v4817
        %v4846 = vmul.f32 %v4843, %v4818
        %v4847 = vmul.f32 %v4843, %v4819
        %v4848 = vmul.f32 %v4843, %v4820
        %v4849 = vmul.f32 %v4843, %v4821
        %v4850 = vmul.f32 %v4843, %v4822
        %v4851 = vmul.f32 %v4843, %v4823
        %v4860 = vrot.slane %v4844, 1
        %v4861 = vrot.slane %v4845, 1
        %v4862 = vrot.slane %v4846, 1
        %v4863 = vrot.slane %v4847, 1
        %v4864 = vrot.slane %v4848, 1
        %v4865 = vrot.slane %v4849, 1
        %v4866 = vrot.slane %v4850, 1
        %v4867 = vrot.slane %v4851, 1
        %v4876 = vadd.f32 %v4835, %v4860
        %v4877 = vadd.f32 %v4836, %v4861
        %v4878 = vadd.f32 %v4837, %v4862
        %v4879 = vadd.f32 %v4838, %v4863
        %v4880 = vadd.f32 %v4839, %v4864
        %v4881 = vadd.f32 %v4840, %v4865
        %v4882 = vadd.f32 %v4841, %v4866
        %v4883 = vadd.f32 %v4842, %v4867
        %4884 = vrot.lane.b32.xlu0 %v699, 125
        %v4885 = vpop.permute.xlu0 %4884
        %4886 = vrot.lane.b32.xlu0 %v700, 125
        %v4887 = vpop.permute.xlu0 %4886
        %4888 = vrot.lane.b32.xlu0 %v701, 125
        %v4889 = vpop.permute.xlu0 %4888
        %4890 = vrot.lane.b32.xlu0 %v702, 125
        %v4891 = vpop.permute.xlu0 %4890
        %4892 = vrot.lane.b32.xlu0 %v703, 125
        %v4893 = vpop.permute.xlu0 %4892
        %4894 = vrot.lane.b32.xlu0 %v704, 125
        %v4895 = vpop.permute.xlu0 %4894
        %4896 = vrot.lane.b32.xlu0 %v705, 125
        %v4897 = vpop.permute.xlu0 %4896
        %4898 = vrot.lane.b32.xlu0 %v706, 125
        %v4899 = vpop.permute.xlu0 %4898
        %vm4900 = vcmp.lt.s32.totalorder %v363, 125
        %v4901 = vsel %vm4900, %v4897, %v4899
        %v4902 = vsel %vm4900, %v4895, %v4897
        %v4903 = vsel %vm4900, %v4893, %v4895
        %v4904 = vsel %vm4900, %v4891, %v4893
        %v4905 = vsel %vm4900, %v4889, %v4891
        %v4906 = vsel %vm4900, %v4887, %v4889
        %v4907 = vsel %vm4900, %v4885, %v4887
        %v4908 = vsel %vm4900, %v4899, %v4885
        %v4909 = vsel %vm978, 1, 0
        %v4910 = vsel %vm979, 1, 0
        %v4911 = vsel %vm980, 1, 0
        %v4912 = vsel %vm981, 1, 0
        %v4913 = vsel %vm982, 1, 0
        %v4914 = vsel %vm983, 1, 0
        %v4915 = vsel %vm984, 1, 0
        %v4916 = vsel %vm985, 1, 0
        %vm4917 = vcmp.eq.s32.totalorder %v4909, 1
        %vm4918 = vcmp.eq.s32.totalorder %v4910, 1
        %vm4919 = vcmp.eq.s32.totalorder %v4911, 1
        %vm4920 = vcmp.eq.s32.totalorder %v4912, 1
        %vm4921 = vcmp.eq.s32.totalorder %v4913, 1
        %vm4922 = vcmp.eq.s32.totalorder %v4914, 1
        %vm4923 = vcmp.eq.s32.totalorder %v4915, 1
        %vm4924 = vcmp.eq.s32.totalorder %v4916, 1
        %v4925 = vsel %vm4917, %v4907, 0.0
        %v4926 = vsel %vm4918, %v4906, 0.0
        %v4927 = vsel %vm4919, %v4905, 0.0
        %v4928 = vsel %vm4920, %v4904, 0.0
        %v4929 = vsel %vm4921, %v4903, 0.0
        %v4930 = vsel %vm4922, %v4902, 0.0
        %v4931 = vsel %vm4923, %v4901, 0.0
        %v4932 = vsel %vm4924, %v4908, 0.0
        %4933 = vrot.lane.b32.xlu0 %v4925, 96
        %v4934 = vpop.permute.xlu0 %4933
        %4935 = vrot.lane.b32.xlu0 %v4926, 96
        %v4936 = vpop.permute.xlu0 %4935
        %4937 = vrot.lane.b32.xlu0 %v4927, 96
        %v4938 = vpop.permute.xlu0 %4937
        %4939 = vrot.lane.b32.xlu0 %v4928, 96
        %v4940 = vpop.permute.xlu0 %4939
        %4941 = vrot.lane.b32.xlu0 %v4929, 96
        %v4942 = vpop.permute.xlu0 %4941
        %4943 = vrot.lane.b32.xlu0 %v4930, 96
        %v4944 = vpop.permute.xlu0 %4943
        %4945 = vrot.lane.b32.xlu0 %v4931, 96
        %v4946 = vpop.permute.xlu0 %4945
        %4947 = vrot.lane.b32.xlu0 %v4932, 96
        %v4948 = vpop.permute.xlu0 %4947
        %v4949 = vsel %vm1277, %v4946, %v4948
        %v4950 = vsel %vm1277, %v4944, %v4946
        %v4951 = vsel %vm1277, %v4942, %v4944
        %v4952 = vsel %vm1277, %v4940, %v4942
        %v4953 = vsel %vm1277, %v4938, %v4940
        %v4954 = vsel %vm1277, %v4936, %v4938
        %v4955 = vsel %vm1277, %v4934, %v4936
        %v4956 = vsel %vm1277, %v4948, %v4934
        %v4957 = vsel %vm1294, %v4956, 0.0
        %v4958 = vsel %vm1295, %v4955, 0.0
        %v4959 = vsel %vm1296, %v4954, 0.0
        %v4960 = vsel %vm1297, %v4953, 0.0
        %v4961 = vsel %vm1298, %v4952, 0.0
        %v4962 = vsel %vm1299, %v4951, 0.0
        %v4963 = vsel %vm1300, %v4950, 0.0
        %v4964 = vsel %vm1301, %v4949, 0.0
        %s4965 = sld [smem:[#allocation7 + $0x6]]
        %s4966 = sld [smem:[#allocation7 + $0x37]]
        %v4967 = vstv %s4965
        %v4968 = vmul.f32 %v4967, %v4957
        %v4969 = vmul.f32 %v4967, %v4958
        %v4970 = vmul.f32 %v4967, %v4959
        %v4971 = vmul.f32 %v4967, %v4960
        %v4972 = vmul.f32 %v4967, %v4961
        %v4973 = vmul.f32 %v4967, %v4962
        %v4974 = vmul.f32 %v4967, %v4963
        %v4975 = vmul.f32 %v4967, %v4964
        %v4976 = vadd.f32 %v4876, %v4968
        %v4977 = vadd.f32 %v4877, %v4969
        %v4978 = vadd.f32 %v4878, %v4970
        %v4979 = vadd.f32 %v4879, %v4971
        %v4980 = vadd.f32 %v4880, %v4972
        %v4981 = vadd.f32 %v4881, %v4973
        %v4982 = vadd.f32 %v4882, %v4974
        %v4983 = vadd.f32 %v4883, %v4975
        %v4984 = vstv %s4966
        %v4985 = vmul.f32 %v4984, %v4957
        %v4986 = vmul.f32 %v4984, %v4958
        %v4987 = vmul.f32 %v4984, %v4959
        %v4988 = vmul.f32 %v4984, %v4960
        %v4989 = vmul.f32 %v4984, %v4961
        %v4990 = vmul.f32 %v4984, %v4962
        %v4991 = vmul.f32 %v4984, %v4963
        %v4992 = vmul.f32 %v4984, %v4964
        %v5001 = vrot.slane %v4985, 1
        %v5002 = vrot.slane %v4986, 1
        %v5003 = vrot.slane %v4987, 1
        %v5004 = vrot.slane %v4988, 1
        %v5005 = vrot.slane %v4989, 1
        %v5006 = vrot.slane %v4990, 1
        %v5007 = vrot.slane %v4991, 1
        %v5008 = vrot.slane %v4992, 1
        %v5017 = vadd.f32 %v4976, %v5001
        %v5018 = vadd.f32 %v4977, %v5002
        %v5019 = vadd.f32 %v4978, %v5003
        %v5020 = vadd.f32 %v4979, %v5004
        %v5021 = vadd.f32 %v4980, %v5005
        %v5022 = vadd.f32 %v4981, %v5006
        %v5023 = vadd.f32 %v4982, %v5007
        %v5024 = vadd.f32 %v4983, %v5008
        %5025 = vrot.lane.b32.xlu0 %v4925, 64
        %v5026 = vpop.permute.xlu0 %5025
        %5027 = vrot.lane.b32.xlu0 %v4926, 64
        %v5028 = vpop.permute.xlu0 %5027
        %5029 = vrot.lane.b32.xlu0 %v4927, 64
        %v5030 = vpop.permute.xlu0 %5029
        %5031 = vrot.lane.b32.xlu0 %v4928, 64
        %v5032 = vpop.permute.xlu0 %5031
        %5033 = vrot.lane.b32.xlu0 %v4929, 64
        %v5034 = vpop.permute.xlu0 %5033
        %5035 = vrot.lane.b32.xlu0 %v4930, 64
        %v5036 = vpop.permute.xlu0 %5035
        %5037 = vrot.lane.b32.xlu0 %v4931, 64
        %v5038 = vpop.permute.xlu0 %5037
        %5039 = vrot.lane.b32.xlu0 %v4932, 64
        %v5040 = vpop.permute.xlu0 %5039
        %v5041 = vsel %vm1386, %v5038, %v5040
        %v5042 = vsel %vm1386, %v5036, %v5038
        %v5043 = vsel %vm1386, %v5034, %v5036
        %v5044 = vsel %vm1386, %v5032, %v5034
        %v5045 = vsel %vm1386, %v5030, %v5032
        %v5046 = vsel %vm1386, %v5028, %v5030
        %v5047 = vsel %vm1386, %v5026, %v5028
        %v5048 = vsel %vm1386, %v5040, %v5026
        %v5049 = vsel %vm1403, %v5048, 0.0
        %v5050 = vsel %vm1404, %v5047, 0.0
        %v5051 = vsel %vm1405, %v5046, 0.0
        %v5052 = vsel %vm1406, %v5045, 0.0
        %v5053 = vsel %vm1407, %v5044, 0.0
        %v5054 = vsel %vm1408, %v5043, 0.0
        %v5055 = vsel %vm1409, %v5042, 0.0
        %v5056 = vsel %vm1410, %v5041, 0.0
        %s5057 = sld [smem:[#allocation7 + $0xd]]
        %s5058 = sld [smem:[#allocation7 + $0x3e]]
        %v5059 = vstv %s5057
        %v5060 = vmul.f32 %v5059, %v5049
        %v5061 = vmul.f32 %v5059, %v5050
        %v5062 = vmul.f32 %v5059, %v5051
        %v5063 = vmul.f32 %v5059, %v5052
        %v5064 = vmul.f32 %v5059, %v5053
        %v5065 = vmul.f32 %v5059, %v5054
        %v5066 = vmul.f32 %v5059, %v5055
        %v5067 = vmul.f32 %v5059, %v5056
        %v5068 = vadd.f32 %v5017, %v5060
        %v5069 = vadd.f32 %v5018, %v5061
        %v5070 = vadd.f32 %v5019, %v5062
        %v5071 = vadd.f32 %v5020, %v5063
        %v5072 = vadd.f32 %v5021, %v5064
        %v5073 = vadd.f32 %v5022, %v5065
        %v5074 = vadd.f32 %v5023, %v5066
        %v5075 = vadd.f32 %v5024, %v5067
        %v5076 = vstv %s5058
        %v5077 = vmul.f32 %v5076, %v5049
        %v5078 = vmul.f32 %v5076, %v5050
        %v5079 = vmul.f32 %v5076, %v5051
        %v5080 = vmul.f32 %v5076, %v5052
        %v5081 = vmul.f32 %v5076, %v5053
        %v5082 = vmul.f32 %v5076, %v5054
        %v5083 = vmul.f32 %v5076, %v5055
        %v5084 = vmul.f32 %v5076, %v5056
        %v5093 = vrot.slane %v5077, 1
        %v5094 = vrot.slane %v5078, 1
        %v5095 = vrot.slane %v5079, 1
        %v5096 = vrot.slane %v5080, 1
        %v5097 = vrot.slane %v5081, 1
        %v5098 = vrot.slane %v5082, 1
        %v5099 = vrot.slane %v5083, 1
        %v5100 = vrot.slane %v5084, 1
        %v5109 = vadd.f32 %v5068, %v5093
        %v5110 = vadd.f32 %v5069, %v5094
        %v5111 = vadd.f32 %v5070, %v5095
        %v5112 = vadd.f32 %v5071, %v5096
        %v5113 = vadd.f32 %v5072, %v5097
        %v5114 = vadd.f32 %v5073, %v5098
        %v5115 = vadd.f32 %v5074, %v5099
        %v5116 = vadd.f32 %v5075, %v5100
        %5117 = vrot.lane.b32.xlu0 %v4925, 32
        %v5118 = vpop.permute.xlu0 %5117
        %5119 = vrot.lane.b32.xlu0 %v4926, 32
        %v5120 = vpop.permute.xlu0 %5119
        %5121 = vrot.lane.b32.xlu0 %v4927, 32
        %v5122 = vpop.permute.xlu0 %5121
        %5123 = vrot.lane.b32.xlu0 %v4928, 32
        %v5124 = vpop.permute.xlu0 %5123
        %5125 = vrot.lane.b32.xlu0 %v4929, 32
        %v5126 = vpop.permute.xlu0 %5125
        %5127 = vrot.lane.b32.xlu0 %v4930, 32
        %v5128 = vpop.permute.xlu0 %5127
        %5129 = vrot.lane.b32.xlu0 %v4931, 32
        %v5130 = vpop.permute.xlu0 %5129
        %5131 = vrot.lane.b32.xlu0 %v4932, 32
        %v5132 = vpop.permute.xlu0 %5131
        %v5133 = vsel %vm1495, %v5130, %v5132
        %v5134 = vsel %vm1495, %v5128, %v5130
        %v5135 = vsel %vm1495, %v5126, %v5128
        %v5136 = vsel %vm1495, %v5124, %v5126
        %v5137 = vsel %vm1495, %v5122, %v5124
        %v5138 = vsel %vm1495, %v5120, %v5122
        %v5139 = vsel %vm1495, %v5118, %v5120
        %v5140 = vsel %vm1495, %v5132, %v5118
        %v5141 = vsel %vm1512, %v5140, 0.0
        %v5142 = vsel %vm1513, %v5139, 0.0
        %v5143 = vsel %vm1514, %v5138, 0.0
        %v5144 = vsel %vm1515, %v5137, 0.0
        %v5145 = vsel %vm1516, %v5136, 0.0
        %v5146 = vsel %vm1517, %v5135, 0.0
        %v5147 = vsel %vm1518, %v5134, 0.0
        %v5148 = vsel %vm1519, %v5133, 0.0
        %s5149 = sld [smem:[#allocation7 + $0x14]]
        %s5150 = sld [smem:[#allocation7 + $0x45]]
        %v5151 = vstv %s5149
        %v5152 = vmul.f32 %v5151, %v5141
        %v5153 = vmul.f32 %v5151, %v5142
        %v5154 = vmul.f32 %v5151, %v5143
        %v5155 = vmul.f32 %v5151, %v5144
        %v5156 = vmul.f32 %v5151, %v5145
        %v5157 = vmul.f32 %v5151, %v5146
        %v5158 = vmul.f32 %v5151, %v5147
        %v5159 = vmul.f32 %v5151, %v5148
        %v5160 = vadd.f32 %v5109, %v5152
        %v5161 = vadd.f32 %v5110, %v5153
        %v5162 = vadd.f32 %v5111, %v5154
        %v5163 = vadd.f32 %v5112, %v5155
        %v5164 = vadd.f32 %v5113, %v5156
        %v5165 = vadd.f32 %v5114, %v5157
        %v5166 = vadd.f32 %v5115, %v5158
        %v5167 = vadd.f32 %v5116, %v5159
        %v5168 = vstv %s5150
        %v5169 = vmul.f32 %v5168, %v5141
        %v5170 = vmul.f32 %v5168, %v5142
        %v5171 = vmul.f32 %v5168, %v5143
        %v5172 = vmul.f32 %v5168, %v5144
        %v5173 = vmul.f32 %v5168, %v5145
        %v5174 = vmul.f32 %v5168, %v5146
        %v5175 = vmul.f32 %v5168, %v5147
        %v5176 = vmul.f32 %v5168, %v5148
        %v5185 = vrot.slane %v5169, 1
        %v5186 = vrot.slane %v5170, 1
        %v5187 = vrot.slane %v5171, 1
        %v5188 = vrot.slane %v5172, 1
        %v5189 = vrot.slane %v5173, 1
        %v5190 = vrot.slane %v5174, 1
        %v5191 = vrot.slane %v5175, 1
        %v5192 = vrot.slane %v5176, 1
        %v5201 = vadd.f32 %v5160, %v5185
        %v5202 = vadd.f32 %v5161, %v5186
        %v5203 = vadd.f32 %v5162, %v5187
        %v5204 = vadd.f32 %v5163, %v5188
        %v5205 = vadd.f32 %v5164, %v5189
        %v5206 = vadd.f32 %v5165, %v5190
        %v5207 = vadd.f32 %v5166, %v5191
        %v5208 = vadd.f32 %v5167, %v5192
        %v5209 = vsel %vm1596, %v4925, 0.0
        %v5210 = vsel %vm1597, %v4926, 0.0
        %v5211 = vsel %vm1598, %v4927, 0.0
        %v5212 = vsel %vm1599, %v4928, 0.0
        %v5213 = vsel %vm1600, %v4929, 0.0
        %v5214 = vsel %vm1601, %v4930, 0.0
        %v5215 = vsel %vm1602, %v4931, 0.0
        %v5216 = vsel %vm1603, %v4932, 0.0
        %s5217 = sld [smem:[#allocation7 + $0x1b]]
        %s5218 = sld [smem:[#allocation7 + $0x4c]]
        %v5219 = vstv %s5217
        %v5220 = vmul.f32 %v5219, %v5209
        %v5221 = vmul.f32 %v5219, %v5210
        %v5222 = vmul.f32 %v5219, %v5211
        %v5223 = vmul.f32 %v5219, %v5212
        %v5224 = vmul.f32 %v5219, %v5213
        %v5225 = vmul.f32 %v5219, %v5214
        %v5226 = vmul.f32 %v5219, %v5215
        %v5227 = vmul.f32 %v5219, %v5216
        %v5228 = vadd.f32 %v5201, %v5220
        %v5229 = vadd.f32 %v5202, %v5221
        %v5230 = vadd.f32 %v5203, %v5222
        %v5231 = vadd.f32 %v5204, %v5223
        %v5232 = vadd.f32 %v5205, %v5224
        %v5233 = vadd.f32 %v5206, %v5225
        %v5234 = vadd.f32 %v5207, %v5226
        %v5235 = vadd.f32 %v5208, %v5227
        %v5236 = vstv %s5218
        %v5237 = vmul.f32 %v5236, %v5209
        %v5238 = vmul.f32 %v5236, %v5210
        %v5239 = vmul.f32 %v5236, %v5211
        %v5240 = vmul.f32 %v5236, %v5212
        %v5241 = vmul.f32 %v5236, %v5213
        %v5242 = vmul.f32 %v5236, %v5214
        %v5243 = vmul.f32 %v5236, %v5215
        %v5244 = vmul.f32 %v5236, %v5216
        %v5253 = vrot.slane %v5237, 1
        %v5254 = vrot.slane %v5238, 1
        %v5255 = vrot.slane %v5239, 1
        %v5256 = vrot.slane %v5240, 1
        %v5257 = vrot.slane %v5241, 1
        %v5258 = vrot.slane %v5242, 1
        %v5259 = vrot.slane %v5243, 1
        %v5260 = vrot.slane %v5244, 1
        %v5269 = vadd.f32 %v5228, %v5253
        %v5270 = vadd.f32 %v5229, %v5254
        %v5271 = vadd.f32 %v5230, %v5255
        %v5272 = vadd.f32 %v5231, %v5256
        %v5273 = vadd.f32 %v5232, %v5257
        %v5274 = vadd.f32 %v5233, %v5258
        %v5275 = vadd.f32 %v5234, %v5259
        %v5276 = vadd.f32 %v5235, %v5260
        %v5277 = vsel %vm1680, %v4955, 0.0
        %v5278 = vsel %vm1681, %v4954, 0.0
        %v5279 = vsel %vm1682, %v4953, 0.0
        %v5280 = vsel %vm1683, %v4952, 0.0
        %v5281 = vsel %vm1684, %v4951, 0.0
        %v5282 = vsel %vm1685, %v4950, 0.0
        %v5283 = vsel %vm1686, %v4949, 0.0
        %v5284 = vsel %vm1687, %v4956, 0.0
        %s5285 = sld [smem:[#allocation7 + $0x22]]
        %s5286 = sld [smem:[#allocation7 + $0x53]]
        %v5287 = vstv %s5285
        %v5288 = vmul.f32 %v5287, %v5277
        %v5289 = vmul.f32 %v5287, %v5278
        %v5290 = vmul.f32 %v5287, %v5279
        %v5291 = vmul.f32 %v5287, %v5280
        %v5292 = vmul.f32 %v5287, %v5281
        %v5293 = vmul.f32 %v5287, %v5282
        %v5294 = vmul.f32 %v5287, %v5283
        %v5295 = vmul.f32 %v5287, %v5284
        %v5296 = vadd.f32 %v5269, %v5288
        %v5297 = vadd.f32 %v5270, %v5289
        %v5298 = vadd.f32 %v5271, %v5290
        %v5299 = vadd.f32 %v5272, %v5291
        %v5300 = vadd.f32 %v5273, %v5292
        %v5301 = vadd.f32 %v5274, %v5293
        %v5302 = vadd.f32 %v5275, %v5294
        %v5303 = vadd.f32 %v5276, %v5295
        %v5304 = vstv %s5286
        %v5305 = vmul.f32 %v5304, %v5277
        %v5306 = vmul.f32 %v5304, %v5278
        %v5307 = vmul.f32 %v5304, %v5279
        %v5308 = vmul.f32 %v5304, %v5280
        %v5309 = vmul.f32 %v5304, %v5281
        %v5310 = vmul.f32 %v5304, %v5282
        %v5311 = vmul.f32 %v5304, %v5283
        %v5312 = vmul.f32 %v5304, %v5284
        %v5321 = vrot.slane %v5305, 1
        %v5322 = vrot.slane %v5306, 1
        %v5323 = vrot.slane %v5307, 1
        %v5324 = vrot.slane %v5308, 1
        %v5325 = vrot.slane %v5309, 1
        %v5326 = vrot.slane %v5310, 1
        %v5327 = vrot.slane %v5311, 1
        %v5328 = vrot.slane %v5312, 1
        %v5337 = vadd.f32 %v5296, %v5321
        %v5338 = vadd.f32 %v5297, %v5322
        %v5339 = vadd.f32 %v5298, %v5323
        %v5340 = vadd.f32 %v5299, %v5324
        %v5341 = vadd.f32 %v5300, %v5325
        %v5342 = vadd.f32 %v5301, %v5326
        %v5343 = vadd.f32 %v5302, %v5327
        %v5344 = vadd.f32 %v5303, %v5328
        %v5345 = vsel %vm1764, %v5047, 0.0
        %v5346 = vsel %vm1765, %v5046, 0.0
        %v5347 = vsel %vm1766, %v5045, 0.0
        %v5348 = vsel %vm1767, %v5044, 0.0
        %v5349 = vsel %vm1768, %v5043, 0.0
        %v5350 = vsel %vm1769, %v5042, 0.0
        %v5351 = vsel %vm1770, %v5041, 0.0
        %v5352 = vsel %vm1771, %v5048, 0.0
        %s5353 = sld [smem:[#allocation7 + $0x29]]
        %s5354 = sld [smem:[#allocation7 + $0x5a]]
        %v5355 = vstv %s5353
        %v5356 = vmul.f32 %v5355, %v5345
        %v5357 = vmul.f32 %v5355, %v5346
        %v5358 = vmul.f32 %v5355, %v5347
        %v5359 = vmul.f32 %v5355, %v5348
        %v5360 = vmul.f32 %v5355, %v5349
        %v5361 = vmul.f32 %v5355, %v5350
        %v5362 = vmul.f32 %v5355, %v5351
        %v5363 = vmul.f32 %v5355, %v5352
        %v5364 = vadd.f32 %v5337, %v5356
        %v5365 = vadd.f32 %v5338, %v5357
        %v5366 = vadd.f32 %v5339, %v5358
        %v5367 = vadd.f32 %v5340, %v5359
        %v5368 = vadd.f32 %v5341, %v5360
        %v5369 = vadd.f32 %v5342, %v5361
        %v5370 = vadd.f32 %v5343, %v5362
        %v5371 = vadd.f32 %v5344, %v5363
        %v5372 = vstv %s5354
        %v5373 = vmul.f32 %v5372, %v5345
        %v5374 = vmul.f32 %v5372, %v5346
        %v5375 = vmul.f32 %v5372, %v5347
        %v5376 = vmul.f32 %v5372, %v5348
        %v5377 = vmul.f32 %v5372, %v5349
        %v5378 = vmul.f32 %v5372, %v5350
        %v5379 = vmul.f32 %v5372, %v5351
        %v5380 = vmul.f32 %v5372, %v5352
        %v5389 = vrot.slane %v5373, 1
        %v5390 = vrot.slane %v5374, 1
        %v5391 = vrot.slane %v5375, 1
        %v5392 = vrot.slane %v5376, 1
        %v5393 = vrot.slane %v5377, 1
        %v5394 = vrot.slane %v5378, 1
        %v5395 = vrot.slane %v5379, 1
        %v5396 = vrot.slane %v5380, 1
        %v5405 = vadd.f32 %v5364, %v5389
        %v5406 = vadd.f32 %v5365, %v5390
        %v5407 = vadd.f32 %v5366, %v5391
        %v5408 = vadd.f32 %v5367, %v5392
        %v5409 = vadd.f32 %v5368, %v5393
        %v5410 = vadd.f32 %v5369, %v5394
        %v5411 = vadd.f32 %v5370, %v5395
        %v5412 = vadd.f32 %v5371, %v5396
        %v5413 = vsel %vm1848, %v5139, 0.0
        %v5414 = vsel %vm1849, %v5138, 0.0
        %v5415 = vsel %vm1850, %v5137, 0.0
        %v5416 = vsel %vm1851, %v5136, 0.0
        %v5417 = vsel %vm1852, %v5135, 0.0
        %v5418 = vsel %vm1853, %v5134, 0.0
        %v5419 = vsel %vm1854, %v5133, 0.0
        %v5420 = vsel %vm1855, %v5140, 0.0
        %s5421 = sld [smem:[#allocation7 + $0x30]]
        %s5422 = sld [smem:[#allocation7 + $0x61]]
        %v5423 = vstv %s5421
        %v5424 = vmul.f32 %v5423, %v5413
        %v5425 = vmul.f32 %v5423, %v5414
        %v5426 = vmul.f32 %v5423, %v5415
        %v5427 = vmul.f32 %v5423, %v5416
        %v5428 = vmul.f32 %v5423, %v5417
        %v5429 = vmul.f32 %v5423, %v5418
        %v5430 = vmul.f32 %v5423, %v5419
        %v5431 = vmul.f32 %v5423, %v5420
        %v5432 = vadd.f32 %v5405, %v5424
        %v5433 = vadd.f32 %v5406, %v5425
        %v5434 = vadd.f32 %v5407, %v5426
        %v5435 = vadd.f32 %v5408, %v5427
        %v5436 = vadd.f32 %v5409, %v5428
        %v5437 = vadd.f32 %v5410, %v5429
        %v5438 = vadd.f32 %v5411, %v5430
        %v5439 = vadd.f32 %v5412, %v5431
        %v5440 = vstv %s5422
        %v5441 = vmul.f32 %v5440, %v5413
        %v5442 = vmul.f32 %v5440, %v5414
        %v5443 = vmul.f32 %v5440, %v5415
        %v5444 = vmul.f32 %v5440, %v5416
        %v5445 = vmul.f32 %v5440, %v5417
        %v5446 = vmul.f32 %v5440, %v5418
        %v5447 = vmul.f32 %v5440, %v5419
        %v5448 = vmul.f32 %v5440, %v5420
        %v5457 = vrot.slane %v5441, 1
        %v5458 = vrot.slane %v5442, 1
        %v5459 = vrot.slane %v5443, 1
        %v5460 = vrot.slane %v5444, 1
        %v5461 = vrot.slane %v5445, 1
        %v5462 = vrot.slane %v5446, 1
        %v5463 = vrot.slane %v5447, 1
        %v5464 = vrot.slane %v5448, 1
        %v5473 = vadd.f32 %v5432, %v5457
        %v5474 = vadd.f32 %v5433, %v5458
        %v5475 = vadd.f32 %v5434, %v5459
        %v5476 = vadd.f32 %v5435, %v5460
        %v5477 = vadd.f32 %v5436, %v5461
        %v5478 = vadd.f32 %v5437, %v5462
        %v5479 = vadd.f32 %v5438, %v5463
        %v5480 = vadd.f32 %v5439, %v5464
        %v5481 = vxor.u32 %v5473, 2147483648
        %v5482 = vxor.u32 %v5474, 2147483648
        %v5483 = vxor.u32 %v5475, 2147483648
        %v5484 = vxor.u32 %v5476, 2147483648
        %v5485 = vxor.u32 %v5477, 2147483648
        %v5486 = vxor.u32 %v5478, 2147483648
        %v5487 = vxor.u32 %v5479, 2147483648
        %v5488 = vxor.u32 %v5480, 2147483648
        %v5489 = vmul.f32 %v5481, 1.442695
        %v5490 = vpow.pop %v5489
        %v5491 = vmul.f32 %v5482, 1.442695
        %v5492 = vpow.pop %v5491
        %v5493 = vmul.f32 %v5483, 1.442695
        %v5494 = vpow.pop %v5493
        %v5495 = vmul.f32 %v5484, 1.442695
        %v5496 = vpow.pop %v5495
        %v5497 = vmul.f32 %v5485, 1.442695
        %v5498 = vpow.pop %v5497
        %v5499 = vmul.f32 %v5486, 1.442695
        %v5500 = vpow.pop %v5499
        %v5501 = vmul.f32 %v5487, 1.442695
        %v5502 = vpow.pop %v5501
        %v5503 = vmul.f32 %v5488, 1.442695
        %v5504 = vpow.pop %v5503
        %v5505 = vadd.f32 %v5490, 1.0
        %v5506 = vadd.f32 %v5492, 1.0
        %v5507 = vadd.f32 %v5494, 1.0
        %v5508 = vadd.f32 %v5496, 1.0
        %v5509 = vadd.f32 %v5498, 1.0
        %v5510 = vadd.f32 %v5500, 1.0
        %v5511 = vadd.f32 %v5502, 1.0
        %v5512 = vadd.f32 %v5504, 1.0
        %v5513 = vrcp.pop %v5505
        %v5514 = vmul.f32 1.0, %v5513
        %v5515 = vrcp.pop %v5506
        %v5516 = vmul.f32 1.0, %v5515
        %v5517 = vrcp.pop %v5507
        %v5518 = vmul.f32 1.0, %v5517
        %v5519 = vrcp.pop %v5508
        %v5520 = vmul.f32 1.0, %v5519
        %v5521 = vrcp.pop %v5509
        %v5522 = vmul.f32 1.0, %v5521
        %v5523 = vrcp.pop %v5510
        %v5524 = vmul.f32 1.0, %v5523
        %v5525 = vrcp.pop %v5511
        %v5526 = vmul.f32 1.0, %v5525
        %v5527 = vrcp.pop %v5512
        %v5528 = vmul.f32 1.0, %v5527
        %v5529 = vlaneseq
        %v5530 = vshrl.u32 %v5529, 7
        %v5531 = vsub.s32 0, %v5530
        %v5532 = vrot.slane %v5514, %v5531
        %v5533 = vlaneseq
        %v5534 = vshrl.u32 %v5533, 7
        %v5535 = vsub.s32 0, %v5534
        %v5536 = vrot.slane %v5516, %v5535
        %v5537 = vlaneseq
        %v5538 = vshrl.u32 %v5537, 7
        %v5539 = vsub.s32 0, %v5538
        %v5540 = vrot.slane %v5518, %v5539
        %v5541 = vlaneseq
        %v5542 = vshrl.u32 %v5541, 7
        %v5543 = vsub.s32 0, %v5542
        %v5544 = vrot.slane %v5520, %v5543
        %v5545 = vlaneseq
        %v5546 = vshrl.u32 %v5545, 7
        %v5547 = vsub.s32 0, %v5546
        %v5548 = vrot.slane %v5522, %v5547
        %v5549 = vlaneseq
        %v5550 = vshrl.u32 %v5549, 7
        %v5551 = vsub.s32 0, %v5550
        %v5552 = vrot.slane %v5524, %v5551
        %v5553 = vlaneseq
        %v5554 = vshrl.u32 %v5553, 7
        %v5555 = vsub.s32 0, %v5554
        %v5556 = vrot.slane %v5526, %v5555
        %v5557 = vlaneseq
        %v5558 = vshrl.u32 %v5557, 7
        %v5559 = vsub.s32 0, %v5558
        %v5560 = vrot.slane %v5528, %v5559
        %v5569 = vcombine.low %v5532, %v5536
        %v5570 = vcombine.low %v5540, %v5544
        %v5571 = vcombine.low %v5548, %v5552
        %v5572 = vcombine.low %v5556, %v5560
        %v5577 = vmul.f32 %v559, %v5569
        %v5578 = vmul.f32 %v560, %v5570
        %v5579 = vmul.f32 %v561, %v5571
        %v5580 = vmul.f32 %v562, %v5572
        %5581 = vst [vmem:[%s309] sm:$0xff] %v5577
        %5582 = vst [vmem:[%s309 + $0x8] sm:$0xff] %v5578
        %5583 = vst [vmem:[%s309 + $0x10] sm:$0xff] %v5579
        %5584 = vst [vmem:[%s309 + $0x18] sm:$0xff] %v5580
        %s5585 = sand.u32 %s186, 1
        %s5586 = scalar_lea.sflag [#allocation5], %s5585
        %s5587 = sand.u32 %s186, 1
        %s5588 = smul.addr %s5587, 32
        %s5589 = scalar_lea.vmem [#allocation8], %s5588
        // Predicated region
        $region57: #{tpu_custom_call.1} parent=47 // pred_check
          %p5590 = pneg %p196
        $region58: #{tpu_custom_call.1} parent=47 // pred_check_branch
          %5592 = sbr.rel (%p5590) target = $region60
        $region59: #{tpu_custom_call.1} parent=47 // pred_region
          %s5594 = ssub.s32 512, 512
          %5595 = vsyncadd %s5586, %s5594
          %s5596 = smul.addr %s26, 8
          %s5597 = smul.addr %s5596, 64
          %s5598 = scalar_lea.hbm %s7, %s5597
          %s5600 = sshll.u32 %s5589, 4
          %s5601 = int_to_ptr.vmem [resolvable:$true] %s5600
          %5603 = dma.vmem_to_hbm [thread:$0]  %s5601, 512, %s5598, %s5586
        $region60: #{tpu_custom_call.1} parent=47 // pred_fallthru
          _
      $region48: #{tpu_custom_call.1} parent=5 // pred_fallthru
        _
      %p5604 = scmp.le.s32.totalorder 2, %s21
      // Predicated region
      $region61: #{tpu_custom_call.1} parent=5 // pred_check
        %p5605 = pneg %p5604
      $region62: #{tpu_custom_call.1} parent=5 // pred_check_branch
        %5607 = sbr.rel (%p5605) target = $region64
      $region63: #{tpu_custom_call.1} parent=5 // pred_region
        %s5608 = ssub.s32 %s21, 2
        // Predicated region
        $region65: #{tpu_custom_call.1} parent=63 // pred_check
          %p5609 = pneg %p202
        $region66: #{tpu_custom_call.1} parent=63 // pred_check_branch
          %5611 = sbr.rel (%p5609) target = $region68
        $region67: #{tpu_custom_call.1} parent=63 // pred_region
          %s5612 = sand.u32 %s187, 1
          %s5613 = scalar_lea.sflag [#allocation5], %s5612
          %s5614 = sand.u32 %s187, 1
          %s5615 = smul.addr %s5614, 32
          %s5616 = scalar_lea.vmem [#allocation8], %s5615
          %5617 = dma.done %s5613, 512
        $region68: #{tpu_custom_call.1} parent=63 // pred_fallthru
          _
      $region64: #{tpu_custom_call.1} parent=5 // pred_fallthru
        _
    $region6: #{tpu_custom_call.1} parent=1 // loop_footer
      %s25 = sadd.s32 1, %s21
    $region7: #{tpu_custom_call.1} parent=1 // loop_footer_branch
      %20 = sbr.rel target = $region3
    $region8: #{tpu_custom_call.1} parent=1 // loop_exit
      _
    %5618 = vsyncpa [#allocation4], 1
    %s5619 = scalar_lea.sflag [#allocation4], 1
    %5620 = vsyncpa %s5619, 1
    %5621 = vsyncpa [#allocation5], 1
    %s5622 = scalar_lea.sflag [#allocation5], 1
    %5623 = vsyncpa %s5622, 1
    %5624 = vsyncpa [#allocation6], 1
    %s5625 = scalar_lea.sflag [#allocation6], 1
    %5626 = vsyncpa %s5625, 1

</llo_original>
